<compile_context>
chip_gen: v5e
topology: v5e:2x2
jax: 0.10.0
libtpu: 0.0.40
codegen_flags: <defaults>
</compile_context>

<pallas_src>
import functools

import jax
import jax.numpy as jnp
from jax.experimental import pallas as pl
from jax.experimental.pallas import tpu as pltpu


# ----------------------------------------------------------------------------
# Glue: PyTorch-exact bilinear interpolation (align_corners=False, no antialias)
# ----------------------------------------------------------------------------
def _src_coords(out_size, in_size):
    scale = in_size / out_size
    src = (jnp.arange(out_size, dtype=jnp.float32) + 0.5) * scale - 0.5
    src = jnp.maximum(src, 0.0)                      # PyTorch clamps negatives to 0
    i0 = jnp.floor(src).astype(jnp.int32)
    i0 = jnp.minimum(i0, in_size - 1)
    i1 = jnp.minimum(i0 + 1, in_size - 1)
    frac = src - i0.astype(jnp.float32)
    return i0, i1, frac


def bilinear_resize_nchw(x, out_h, out_w):
    """F.interpolate(x, size=(out_h, out_w), mode='bilinear', align_corners=False)."""
    y0, y1, fy = _src_coords(out_h, x.shape[2])
    x0, x1, fx = _src_coords(out_w, x.shape[3])
    top = x[:, :, y0, :]
    bot = x[:, :, y1, :]
    rows = top * (1.0 - fy)[None, None, :, None] + bot * fy[None, None, :, None]
    left = rows[:, :, :, x0]
    right = rows[:, :, :, x1]
    return left * (1.0 - fx)[None, None, None, :] + right * fx[None, None, None, :]


# ----------------------------------------------------------------------------
# Pallas kernel: one batch-block (Bt elements) per grid step
# ----------------------------------------------------------------------------
def sbba_kernel(x_ref, psd_ref,
                wpe_ref, bpe_ref, gamma_ref, beta_ref,
                wqkv_ref, wo_ref, bo_ref,
                o_ref, *, heads, eps, matmul_dtype, approx_recip):
    bt, c, n = x_ref.shape
    d_seq = n // heads
    g = bt * heads

    # --- patch_embed (1x1 conv) fused with the (C, N) -> (N, C) layout change:
    # contract the channel (sublane) axis of the input block on the MXU, so no
    # explicit transpose (and no wrapper HBM transpose) is needed.
    # NOTE: the reference adds the resized boundary mask here; it is a per-token
    # constant over channels and is exactly cancelled by the LayerNorm mean
    # subtraction below, so it is omitted (dead work in the reference).
    x_cn = x_ref[...].astype(matmul_dtype)                          # (Bt, C, N)
    wpe_b = jnp.broadcast_to(wpe_ref[...][None], (bt, c, c))        # (Bt, Cin, Cout)
    pe = jax.lax.dot_general(
        x_cn, wpe_b,
        dimension_numbers=(((1,), (1,)), ((0,), (0,))),
        preferred_element_type=jnp.float32)                         # (Bt, N, Cout)
    xa = pe.reshape(bt * n, c) + bpe_ref[...]

    # --- LayerNorm over channels (fp32, PyTorch eps).
    mu = jnp.mean(xa, axis=-1, keepdims=True)
    xc = xa - mu
    var = jnp.mean(xc * xc, axis=-1, keepdims=True)
    xn = xc * jax.lax.rsqrt(var + eps) * gamma_ref[...] + beta_ref[...]

    # --- Fused Q/K/V projection: one (Bt*N, C) @ (C, 3C) MXU matmul.
    # scale is folded into the Wq columns wrapper-side; psd is a per-row scalar,
    # so it is applied once to the 2C tail after the matmul.
    qkv = jnp.dot(xn.astype(matmul_dtype), wqkv_ref[...],
                  preferred_element_type=jnp.float32)               # (Bt*N, 3C)
    psd = psd_ref[...].reshape(bt * n, 1)
    q = qkv[:, :c]
    kv = psd * qkv[:, c:]                                           # single 2C-wide mul
    k = kv[:, :c]
    v = kv[:, c:]

    # --- Heads split the SEQUENCE axis ('b (h d) ... -> b h (...) d');
    # attention runs over the channel axis, batched over g = Bt*heads.
    q3 = q.reshape(g, d_seq, c)
    k3 = k.reshape(g, d_seq, c)
    v3 = v.reshape(g, d_seq, c)

    # dots[g, i, j] = sum_d q3[g, d, i] * k3[g, d, j]  (no explicit transpose).
    # NOTE(perf): depth-d_seq MXU contraction; if a bundle dump shows it
    # serializing into tiny per-g matmuls, a VPU outer-product accumulation is
    # the structural alternative.
    dots = jax.lax.dot_general(
        q3.astype(matmul_dtype), k3.astype(matmul_dtype),
        dimension_numbers=(((1,), (1,)), ((0,), (0,))),
        preferred_element_type=jnp.float32)                         # (g, C, C)

    # softmax over the last axis (fp32).
    dots = dots - jnp.max(dots, axis=-1, keepdims=True)
    e = jnp.exp(dots)
    s = jnp.sum(e, axis=-1, keepdims=True)
    if approx_recip:
        attn = e * pl.reciprocal(s, approx=True)    # EUP slot; gated (not bit-exact)
    else:
        attn = e / s
    # dropout(p=0) is identity

    # out3[g, d, i] = sum_j v3[g, d, j] * attn[g, i, j]
    out3 = jax.lax.dot_general(
        v3.astype(matmul_dtype), attn.astype(matmul_dtype),
        dimension_numbers=(((2,), (2,)), ((0,), (0,))),
        preferred_element_type=jnp.float32)                         # (g, d_seq, C)
    out_tok = out3.reshape(bt, n, c)                # 'b h n d -> b (h d) n' per block

    # --- to_out, fused with the token -> (C, N) layout change so the output
    # store is lane-dense in N: y[b, co, m] = sum_ci Wo[co, ci] * out_tok[b, m, ci]
    wo_b = jnp.broadcast_to(wo_ref[...][None], (bt, c, c))          # PyTorch (out, in)
    y_cn = jax.lax.dot_general(
        wo_b, out_tok.astype(matmul_dtype),
        dimension_numbers=(((2,), (2,)), ((0,), (0,))),
        preferred_element_type=jnp.float32)                         # (Bt, C, N)
    o_ref[...] = (y_cn + bo_ref[...]).astype(o_ref.dtype)


# ----------------------------------------------------------------------------
# Generation-aware tiling / VMEM helpers
# ----------------------------------------------------------------------------
def _tpu_generation_info():
    """Returns (tensorcores_per_device, vmem_limit_bytes) for the local chip."""
    try:
        kind = jax.devices()[0].device_kind.lower()
    except Exception:
        kind = ""
    if "v7" in kind or "7x" in kind:
        return 2, 48 * 1024 * 1024       # 64 MiB/TC physical on v7x: leave headroom
    if "v6" in kind:
        return 1, 96 * 1024 * 1024       # 128 MiB physical, 1 TC
    if "v5e" in kind or "v5 lite" in kind or "v5litepod" in kind:
        return 1, 96 * 1024 * 1024       # 128 MiB physical, 1 TC
    return 1, 32 * 1024 * 1024           # unknown chip: conservative default


def _block_vmem_estimate(bt, n, c, heads, weight_bytes):
    """Rough per-grid-step VMEM footprint (bytes) for Bt batch elements."""
    f32 = 4
    db = 2  # BlockSpec double-buffering
    est = db * bt * c * n * f32            # x input block
    est += db * bt * n * 1 * f32           # pseudo-mask block
    est += db * bt * c * n * f32           # output block
    est += db * (5 * c * c) * weight_bytes  # wpe + wqkv(3) + wo
    est += db * 5 * c * f32                 # biases / LN params
    # live fp32 intermediates: tokens, qkv, dots/exp/attn, out
    est += bt * n * c * f32 * 3
    est += bt * n * 3 * c * f32
    est += bt * heads * c * c * f32 * 3
    return est


def _choose_block_b(b, n, c, heads, num_tc, vmem_budget, weight_bytes):
    """Largest divisor of b that keeps >= num_tc grid steps and fits VMEM."""
    divisors = sorted((d for d in range(1, b + 1) if b % d == 0), reverse=True)
    candidates = [d for d in divisors if (b // d) >= num_tc] or [1]
    for d in candidates:
        if _block_vmem_estimate(d, n, c, heads, weight_bytes) <= 0.75 * vmem_budget:
            return d
    return 1


# ----------------------------------------------------------------------------
# Wrapper
# ----------------------------------------------------------------------------
def sbba_forward(x, pseudo_mask, boundary_mask, params, heads,
                 use_bf16_matmul=False):
    # boundary_mask is accepted for API parity with the PyTorch module but is
    # mathematically a no-op (per-token constant cancelled by the channel LN).
    del boundary_mask
    b, c, h, w = x.shape
    n = h * w
    assert n % heads == 0, "sequence length must be divisible by heads"
    scale = c ** (-0.5)             # module overrides head_dim**-0.5 with dim**-0.5

    num_tc, vmem_budget = _tpu_generation_info()
    matmul_dtype = jnp.bfloat16 if use_bf16_matmul else jnp.float32
    weight_bytes = 2 if use_bf16_matmul else 4
    bt = _choose_block_b(b, n, c, heads, num_tc, vmem_budget, weight_bytes)
    grid = (b // bt,)

    # NCHW -> (B, C, N) is a free reshape (no HBM transpose); the kernel folds
    # the layout change into its first / last MXU matmuls.
    x_cn = x.reshape(b, c, n)
    # PyTorch-exact bilinear resize of the pseudo mask; (B,1,h,w)->(B,N,1) is free.
    psd_seq = bilinear_resize_nchw(pseudo_mask, h, w).reshape(b, n, 1)

    # Weights cast to the matmul dtype once here (not per grid step).
    # PyTorch Linear/Conv weights are (out, in); transpose where the kernel does
    # x @ W; Wo stays (out, in) because the kernel emits (C, N) directly.
    wpe_t = params['w_pe'].T.astype(matmul_dtype)
    wqkv_t = jnp.concatenate(
        [params['w_q'].T * scale, params['w_k'].T, params['w_v'].T],
        axis=1).astype(matmul_dtype)
    wo = params['w_o'].astype(matmul_dtype)
    bpe = params['b_pe'].reshape(1, c)
    gamma = params['gamma'].reshape(1, c)
    beta = params['beta'].reshape(1, c)
    bo = params['b_o'].reshape(c, 1)

    def full(shape):
        return pl.BlockSpec(shape, lambda i: (0,) * len(shape))

    out_cn = pl.pallas_call(
        functools.partial(sbba_kernel, heads=heads, eps=1e-5,
                          matmul_dtype=matmul_dtype,
                          approx_recip=use_bf16_matmul),
        out_shape=jax.ShapeDtypeStruct((b, c, n), jnp.float32),
        grid_spec=pltpu.PrefetchScalarGridSpec(
            num_scalar_prefetch=0,
            grid=grid,
            in_specs=[
                pl.BlockSpec((bt, c, n), lambda i: (i, 0, 0)),   # x, (B, C, N)
                pl.BlockSpec((bt, n, 1), lambda i: (i, 0, 0)),   # pseudo mask / token
                full((c, c)), full((1, c)),                      # patch_embed W, b
                full((1, c)), full((1, c)),                      # LayerNorm gamma, beta
                full((c, 3 * c)),                                # fused scale*Wq|Wk|Wv
                full((c, c)), full((c, 1)),                      # Wo (out,in), bo
            ],
            out_specs=pl.BlockSpec((bt, c, n), lambda i: (i, 0, 0)),
        ),
        compiler_params=pltpu.CompilerParams(
            # "parallel" lets Mosaic shard the batch axis across v7x's 2 TCs;
            # on single-TC chips the grid is (1,) so it is irrelevant.
            # NOTE: if an xprof trace on v7x shows no cross-TC split, switch
            # this axis to pltpu.CORE_PARALLEL.
            dimension_semantics=("parallel",),
            vmem_limit_bytes=vmem_budget,
        ),
    )(x_cn, psd_seq, wpe_t, bpe, gamma, beta, wqkv_t, wo, bo)

    return out_cn.reshape(b, c, h, w)


# ----------------------------------------------------------------------------
# Plain-JAX reference (faithful transcription of the PyTorch forward, fp32)
# ----------------------------------------------------------------------------
def sbba_reference(x, pseudo_mask, boundary_mask, params, heads):
    b, c, h, w = x.shape
    n = h * w
    d_seq = n // heads
    scale = c ** (-0.5)
    rb = bilinear_resize_nchw(boundary_mask, h, w)                    # (b,1,h,w)
    rp = bilinear_resize_nchw(pseudo_mask, h, w).reshape(b, n, 1)     # (b,n,1)
    pe = jnp.einsum('oi,bihw->bohw', params['w_pe'], x) \
        + params['b_pe'][None, :, None, None]
    xs = (rb + pe).reshape(b, c, n).transpose(0, 2, 1)                # (b,n,c)
    mu = xs.mean(-1, keepdims=True)
    var = ((xs - mu) ** 2).mean(-1, keepdims=True)
    xn = (xs - mu) / jnp.sqrt(var + 1e-5) * params['gamma'] + params['beta']
    q = xn @ params['w_q'].T
    k = (rp * xn) @ params['w_k'].T
    v = (rp * xn) @ params['w_v'].T

    def split(t):  # 'b (h d) c -> b h c d'
        return t.reshape(b, heads, d_seq, c).transpose(0, 1, 3, 2)

    q, k, v = split(q), split(k), split(v)                            # (b,h,c,d)
    dots = jnp.einsum('bhid,bhjd->bhij', q, k) * scale
    attn = jax.nn.softmax(dots, axis=-1)
    out = jnp.einsum('bhij,bhjd->bhid', attn, v)                      # (b,h,c,d)
    out = out.transpose(0, 1, 3, 2).reshape(b, n, c)                  # 'b h n d -> b (h d) n'
    y = out @ params['w_o'].T + params['b_o']
    return y.transpose(0, 2, 1).reshape(b, c, h, w)


def init_params(key, dim):
    ks = jax.random.split(key, 6)
    s = 0.05
    return {
        'w_pe': s * jax.random.normal(ks[0], (dim, dim), jnp.float32),  # 1x1 conv (out,in)
        'b_pe': jnp.zeros((dim,), jnp.float32),
        'gamma': jnp.ones((dim,), jnp.float32),
        'beta': jnp.zeros((dim,), jnp.float32),
        'w_q': s * jax.random.normal(ks[1], (dim, dim), jnp.float32),
        'w_k': s * jax.random.normal(ks[2], (dim, dim), jnp.float32),
        'w_v': s * jax.random.normal(ks[3], (dim, dim), jnp.float32),
        'w_o': s * jax.random.normal(ks[4], (dim, dim), jnp.float32),
        'b_o': s * jax.random.normal(ks[5], (dim,), jnp.float32),
    }


if __name__ == "__main__":
    dim, heads = 32, 8
    b, h, w = 4, 8, 8                      # N = 64, divisible by heads

    key = jax.random.PRNGKey(0)
    kx, kp, kb, kw = jax.random.split(key, 4)
    x = jax.random.normal(kx, (b, dim, h, w), jnp.float32)
    pseudo_mask = jax.random.uniform(kp, (b, 1, 4, 4), jnp.float32)
    boundary_mask = jax.random.uniform(kb, (b, 1, 4, 4), jnp.float32)
    params = init_params(kw, dim)

    out = sbba_forward(x, pseudo_mask, boundary_mask, params, heads)
    jax.block_until_ready(out)
    assert out.shape == (b, dim, h, w) and out.dtype == jnp.float32

    ref = sbba_reference(x, pseudo_mask, boundary_mask, params, heads)
    max_err = float(jnp.max(jnp.abs(out - ref)))
    assert max_err < 1e-3, f"max abs error vs reference: {max_err}"
    print("KERNEL_OK")
</pallas_src>

<mosaic_0001>
module attributes {stable_mosaic.version = 11 : i64} {
  func.func @sbba_kernel(%arg0: i32, %arg1: memref<4x32x64xf32, #tpu.memory_space<vmem>>, %arg2: memref<4x64x1xf32, #tpu.memory_space<vmem>>, %arg3: memref<32x32xf32, #tpu.memory_space<vmem>>, %arg4: memref<1x32xf32, #tpu.memory_space<vmem>>, %arg5: memref<1x32xf32, #tpu.memory_space<vmem>>, %arg6: memref<1x32xf32, #tpu.memory_space<vmem>>, %arg7: memref<32x96xf32, #tpu.memory_space<vmem>>, %arg8: memref<32x32xf32, #tpu.memory_space<vmem>>, %arg9: memref<32x1xf32, #tpu.memory_space<vmem>>, %arg10: memref<4x32x64xf32, #tpu.memory_space<vmem>>) attributes {dimension_semantics = [#tpu.dimension_semantics<parallel>], iteration_bounds = array<i64: 1>, scalar_prefetch = 0 : i64, scratch_operands = 0 : i64, tpu.core_type = #tpu.core_type<tc>, window_params = [{transform_indices = @transform_0, window_bounds = array<i64: 4, 32, 64>}, {transform_indices = @transform_1, window_bounds = array<i64: 4, 64, 1>}, {pipeline_mode = #tpu.pipeline_mode<synchronous>, transform_indices = @transform_2, window_bounds = array<i64: 32, 32>}, {pipeline_mode = #tpu.pipeline_mode<synchronous>, transform_indices = @transform_3, window_bounds = array<i64: 1, 32>}, {pipeline_mode = #tpu.pipeline_mode<synchronous>, transform_indices = @transform_4, window_bounds = array<i64: 1, 32>}, {pipeline_mode = #tpu.pipeline_mode<synchronous>, transform_indices = @transform_5, window_bounds = array<i64: 1, 32>}, {pipeline_mode = #tpu.pipeline_mode<synchronous>, transform_indices = @transform_6, window_bounds = array<i64: 32, 96>}, {pipeline_mode = #tpu.pipeline_mode<synchronous>, transform_indices = @transform_7, window_bounds = array<i64: 32, 32>}, {pipeline_mode = #tpu.pipeline_mode<synchronous>, transform_indices = @transform_8, window_bounds = array<i64: 32, 1>}, {transform_indices = @transform_9, window_bounds = array<i64: 4, 32, 64>}]} {
    %c0 = arith.constant 0 : index
    %c0_0 = arith.constant 0 : index
    %c0_1 = arith.constant 0 : index
    %0 = vector.load %arg1[%c0, %c0_0, %c0_1] : memref<4x32x64xf32, #tpu.memory_space<vmem>>, vector<4x32x64xf32>
    %c0_2 = arith.constant 0 : index
    %c0_3 = arith.constant 0 : index
    %1 = vector.load %arg3[%c0_2, %c0_3] : memref<32x32xf32, #tpu.memory_space<vmem>>, vector<32x32xf32>
    %2 = vector.shape_cast %1 : vector<32x32xf32> to vector<1x32x32xf32>
    %3 = vector.shape_cast %2 : vector<1x32x32xf32> to vector<1x32x32xf32>
    %4 = vector.broadcast %3 : vector<1x32x32xf32> to vector<4x32x32xf32>
    %cst = arith.constant dense<0.000000e+00> : vector<4x64x32xf32>
    %5 = tpu.matmul %0, %4, %cst {dimension_numbers = #tpu.dot_dimension_numbers<[1], [1], [2], [2], [0, 0, 0, 2, 1, 2], [0], [0]>} : vector<4x32x64xf32>, vector<4x32x32xf32>, vector<4x64x32xf32> -> vector<4x64x32xf32>
    %6 = vector.shape_cast %5 : vector<4x64x32xf32> to vector<256x32xf32>
    %c0_4 = arith.constant 0 : index
    %c0_5 = arith.constant 0 : index
    %7 = vector.load %arg4[%c0_4, %c0_5] : memref<1x32xf32, #tpu.memory_space<vmem>>, vector<1x32xf32>
    %8 = vector.broadcast %7 : vector<1x32xf32> to vector<256x32xf32>
    %9 = arith.addf %6, %8 : vector<256x32xf32>
    %cst_6 = arith.constant dense<0.000000e+00> : vector<256xf32>
    %10 = vector.multi_reduction <add>, %9, %cst_6 [1] : vector<256x32xf32> to vector<256xf32>
    %11 = vector.shape_cast %10 : vector<256xf32> to vector<256x1xf32>
    %cst_7 = arith.constant 3.200000e+01 : f32
    %12 = vector.broadcast %cst_7 : f32 to vector<256x1xf32>
    %13 = arith.divf %11, %12 : vector<256x1xf32>
    %14 = vector.broadcast %13 : vector<256x1xf32> to vector<256x32xf32>
    %15 = arith.subf %9, %14 : vector<256x32xf32>
    %16 = arith.mulf %15, %15 : vector<256x32xf32>
    %cst_8 = arith.constant dense<0.000000e+00> : vector<256xf32>
    %17 = vector.multi_reduction <add>, %16, %cst_8 [1] : vector<256x32xf32> to vector<256xf32>
    %18 = vector.shape_cast %17 : vector<256xf32> to vector<256x1xf32>
    %cst_9 = arith.constant 3.200000e+01 : f32
    %19 = vector.broadcast %cst_9 : f32 to vector<256x1xf32>
    %20 = arith.divf %18, %19 : vector<256x1xf32>
    %cst_10 = arith.constant 9.99999974E-6 : f32
    %21 = vector.broadcast %cst_10 : f32 to vector<256x1xf32>
    %22 = arith.addf %20, %21 : vector<256x1xf32>
    %23 = math.rsqrt %22 : vector<256x1xf32>
    %24 = vector.broadcast %23 : vector<256x1xf32> to vector<256x32xf32>
    %25 = arith.mulf %15, %24 : vector<256x32xf32>
    %c0_11 = arith.constant 0 : index
    %c0_12 = arith.constant 0 : index
    %26 = vector.load %arg5[%c0_11, %c0_12] : memref<1x32xf32, #tpu.memory_space<vmem>>, vector<1x32xf32>
    %27 = vector.broadcast %26 : vector<1x32xf32> to vector<256x32xf32>
    %28 = arith.mulf %25, %27 : vector<256x32xf32>
    %c0_13 = arith.constant 0 : index
    %c0_14 = arith.constant 0 : index
    %29 = vector.load %arg6[%c0_13, %c0_14] : memref<1x32xf32, #tpu.memory_space<vmem>>, vector<1x32xf32>
    %30 = vector.broadcast %29 : vector<1x32xf32> to vector<256x32xf32>
    %31 = arith.addf %28, %30 : vector<256x32xf32>
    %c0_15 = arith.constant 0 : index
    %c0_16 = arith.constant 0 : index
    %32 = vector.load %arg7[%c0_15, %c0_16] : memref<32x96xf32, #tpu.memory_space<vmem>>, vector<32x96xf32>
    %cst_17 = arith.constant dense<0.000000e+00> : vector<256x96xf32>
    %33 = tpu.matmul %31, %32, %cst_17 {dimension_numbers = #tpu.dot_dimension_numbers<[1], [0], [0], [1], [0, 0, 1, 1], [], []>} : vector<256x32xf32>, vector<32x96xf32>, vector<256x96xf32> -> vector<256x96xf32>
    %c0_18 = arith.constant 0 : index
    %c0_19 = arith.constant 0 : index
    %c0_20 = arith.constant 0 : index
    %34 = vector.load %arg2[%c0_18, %c0_19, %c0_20] : memref<4x64x1xf32, #tpu.memory_space<vmem>>, vector<4x64x1xf32>
    %35 = vector.shape_cast %34 : vector<4x64x1xf32> to vector<256x1xf32>
    %36 = vector.extract_strided_slice %33 {offsets = [0, 0], sizes = [256, 32], strides = [1, 1]} : vector<256x96xf32> to vector<256x32xf32>
    %37 = vector.extract_strided_slice %33 {offsets = [0, 32], sizes = [256, 64], strides = [1, 1]} : vector<256x96xf32> to vector<256x64xf32>
    %38 = vector.broadcast %35 : vector<256x1xf32> to vector<256x64xf32>
    %39 = arith.mulf %38, %37 : vector<256x64xf32>
    %40 = vector.extract_strided_slice %39 {offsets = [0, 0], sizes = [256, 32], strides = [1, 1]} : vector<256x64xf32> to vector<256x32xf32>
    %41 = vector.extract_strided_slice %39 {offsets = [0, 32], sizes = [256, 32], strides = [1, 1]} : vector<256x64xf32> to vector<256x32xf32>
    %42 = vector.shape_cast %36 : vector<256x32xf32> to vector<32x8x32xf32>
    %43 = vector.shape_cast %40 : vector<256x32xf32> to vector<32x8x32xf32>
    %44 = vector.shape_cast %41 : vector<256x32xf32> to vector<32x8x32xf32>
    %cst_21 = arith.constant dense<0.000000e+00> : vector<32x32x32xf32>
    %45 = tpu.matmul %42, %43, %cst_21 {dimension_numbers = #tpu.dot_dimension_numbers<[1], [1], [2], [2], [0, 0, 0, 2, 1, 2], [0], [0]>} : vector<32x8x32xf32>, vector<32x8x32xf32>, vector<32x32x32xf32> -> vector<32x32x32xf32>
    %cst_22 = arith.constant dense<0xFF800000> : vector<32x32xf32>
    %46 = vector.multi_reduction <maximumf>, %45, %cst_22 [2] : vector<32x32x32xf32> to vector<32x32xf32>
    %47 = vector.shape_cast %46 : vector<32x32xf32> to vector<32x32x1xf32>
    %48 = vector.broadcast %47 : vector<32x32x1xf32> to vector<32x32x32xf32>
    %49 = arith.subf %45, %48 : vector<32x32x32xf32>
    %50 = math.exp %49 : vector<32x32x32xf32>
    %cst_23 = arith.constant dense<0.000000e+00> : vector<32x32xf32>
    %51 = vector.multi_reduction <add>, %50, %cst_23 [2] : vector<32x32x32xf32> to vector<32x32xf32>
    %52 = vector.shape_cast %51 : vector<32x32xf32> to vector<32x32x1xf32>
    %53 = vector.broadcast %52 : vector<32x32x1xf32> to vector<32x32x32xf32>
    %54 = arith.divf %50, %53 : vector<32x32x32xf32>
    %cst_24 = arith.constant dense<0.000000e+00> : vector<32x8x32xf32>
    %55 = tpu.matmul %44, %54, %cst_24 {dimension_numbers = #tpu.dot_dimension_numbers<[2], [2], [1], [1], [0, 0, 0, 1, 1, 1], [0], [0]>} : vector<32x8x32xf32>, vector<32x32x32xf32>, vector<32x8x32xf32> -> vector<32x8x32xf32>
    %56 = vector.shape_cast %55 : vector<32x8x32xf32> to vector<4x64x32xf32>
    %c0_25 = arith.constant 0 : index
    %c0_26 = arith.constant 0 : index
    %57 = vector.load %arg8[%c0_25, %c0_26] : memref<32x32xf32, #tpu.memory_space<vmem>>, vector<32x32xf32>
    %58 = vector.shape_cast %57 : vector<32x32xf32> to vector<1x32x32xf32>
    %59 = vector.shape_cast %58 : vector<1x32x32xf32> to vector<1x32x32xf32>
    %60 = vector.broadcast %59 : vector<1x32x32xf32> to vector<4x32x32xf32>
    %cst_27 = arith.constant dense<0.000000e+00> : vector<4x32x64xf32>
    %61 = tpu.matmul %60, %56, %cst_27 {dimension_numbers = #tpu.dot_dimension_numbers<[2], [2], [1], [1], [0, 0, 0, 1, 1, 1], [0], [0]>} : vector<4x32x32xf32>, vector<4x64x32xf32>, vector<4x32x64xf32> -> vector<4x32x64xf32>
    %c0_28 = arith.constant 0 : index
    %c0_29 = arith.constant 0 : index
    %62 = vector.load %arg9[%c0_28, %c0_29] : memref<32x1xf32, #tpu.memory_space<vmem>>, vector<32x1xf32>
    %63 = vector.shape_cast %62 : vector<32x1xf32> to vector<1x32x1xf32>
    %64 = vector.broadcast %63 : vector<1x32x1xf32> to vector<4x32x64xf32>
    %65 = arith.addf %61, %64 : vector<4x32x64xf32>
    %c0_30 = arith.constant 0 : index
    %c0_31 = arith.constant 0 : index
    %c0_32 = arith.constant 0 : index
    %66 = vector.load %arg10[%c0_30, %c0_31, %c0_32] : memref<4x32x64xf32, #tpu.memory_space<vmem>>, vector<4x32x64xf32>
    tpu.vector_store %arg10[%c0_30, %c0_31, %c0_32], %65 {strides = array<i32>} : memref<4x32x64xf32, #tpu.memory_space<vmem>>, vector<4x32x64xf32>,
    return
  }
  func.func @transform_0(%arg0: i32) -> (i32, i32, i32) {
    %c0_i32 = arith.constant 0 : i32
    %c0_i32_0 = arith.constant 0 : i32
    %c0_i32_1 = arith.constant 0 : i32
    return %arg0, %c0_i32, %c0_i32_0 : i32, i32, i32
  }
  func.func @transform_1(%arg0: i32) -> (i32, i32, i32) {
    %c0_i32 = arith.constant 0 : i32
    %c0_i32_0 = arith.constant 0 : i32
    %c0_i32_1 = arith.constant 0 : i32
    return %arg0, %c0_i32, %c0_i32_0 : i32, i32, i32
  }
  func.func @transform_2(%arg0: i32) -> (i32, i32) {
    %c0_i32 = arith.constant 0 : i32
    %c0_i32_0 = arith.constant 0 : i32
    %c0_i32_1 = arith.constant 0 : i32
    return %c0_i32, %c0_i32_0 : i32, i32
  }
  func.func @transform_3(%arg0: i32) -> (i32, i32) {
    %c0_i32 = arith.constant 0 : i32
    %c0_i32_0 = arith.constant 0 : i32
    %c0_i32_1 = arith.constant 0 : i32
    return %c0_i32, %c0_i32_0 : i32, i32
  }
  func.func @transform_4(%arg0: i32) -> (i32, i32) {
    %c0_i32 = arith.constant 0 : i32
    %c0_i32_0 = arith.constant 0 : i32
    %c0_i32_1 = arith.constant 0 : i32
    return %c0_i32, %c0_i32_0 : i32, i32
  }
  func.func @transform_5(%arg0: i32) -> (i32, i32) {
    %c0_i32 = arith.constant 0 : i32
    %c0_i32_0 = arith.constant 0 : i32
    %c0_i32_1 = arith.constant 0 : i32
    return %c0_i32, %c0_i32_0 : i32, i32
  }
  func.func @transform_6(%arg0: i32) -> (i32, i32) {
    %c0_i32 = arith.constant 0 : i32
    %c0_i32_0 = arith.constant 0 : i32
    %c0_i32_1 = arith.constant 0 : i32
    return %c0_i32, %c0_i32_0 : i32, i32
  }
  func.func @transform_7(%arg0: i32) -> (i32, i32) {
    %c0_i32 = arith.constant 0 : i32
    %c0_i32_0 = arith.constant 0 : i32
    %c0_i32_1 = arith.constant 0 : i32
    return %c0_i32, %c0_i32_0 : i32, i32
  }
  func.func @transform_8(%arg0: i32) -> (i32, i32) {
    %c0_i32 = arith.constant 0 : i32
    %c0_i32_0 = arith.constant 0 : i32
    %c0_i32_1 = arith.constant 0 : i32
    return %c0_i32, %c0_i32_0 : i32, i32
  }
  func.func @transform_9(%arg0: i32) -> (i32, i32, i32) {
    %c0_i32 = arith.constant 0 : i32
    %c0_i32_0 = arith.constant 0 : i32
    %c0_i32_1 = arith.constant 0 : i32
    return %arg0, %c0_i32, %c0_i32_0 : i32, i32, i32
  }
}

</mosaic_0001>

<llo_original>
// kernel: tpu_custom_call.1
$region0: #{tpu_custom_call.1}
  #allocation0 [shape = 'u32[]', space=smem, size = 0x4, offset = 0x4, fixed_abs, tag = 'smem constant byte address 0x4 - core index']
  #allocation1 [shape = 'u32[72,128]{1,0:T(1,128)}', space=vmem, size = 0x9000, scoped, tag = 'internal scratch']
  %s0 = inlined_call_operand.vmem [shape: f32[4,32,64], index: 0, kind: input, shape index: {}]
  %s1 = inlined_call_operand.vmem [shape: f32[4,64,1], index: 1, kind: input, shape index: {}]
  %s2 = inlined_call_operand.vmem [shape: f32[32,32], index: 2, kind: input, shape index: {}]
  %s3 = inlined_call_operand.vmem [shape: f32[1,32], index: 3, kind: input, shape index: {}]
  %s4 = inlined_call_operand.vmem [shape: f32[1,32], index: 4, kind: input, shape index: {}]
  %s5 = inlined_call_operand.vmem [shape: f32[1,32], index: 5, kind: input, shape index: {}]
  %s6 = inlined_call_operand.vmem [shape: f32[32,96], index: 6, kind: input, shape index: {}]
  %s7 = inlined_call_operand.vmem [shape: f32[32,32], index: 7, kind: input, shape index: {}]
  %s8 = inlined_call_operand.vmem [shape: f32[32,1], index: 8, kind: input, shape index: {}]
  %s9 = inlined_call_operand.hbm [shape: f32[4,32,64], index: 9, kind: output, shape index: {}]
  %s10 = sld [smem:[#allocation0]]
  $region46: #{tpu_custom_call.1} parent=0
    _
  %s12 = ssub.s32 1, %s10
  %s13 = scalar_select 0, %s12, %s10
  $region1: #{tpu_custom_call.1} parent=0
    #allocation2 [shape = 'u8[65536]{0}', space=vmem, size = 0x10000, scoped, tag = 'output window, operand 0, single buffered']
    #allocation3 [shape = 's32[1]{0}', space=sflag, size = 0x4, scoped, tag = 'scoped memory for tpu_custom_call.1']
    %14 = vsyncpa [#allocation3], 0
    // Predicated region
    $region2: #{tpu_custom_call.1} parent=1 // pred_check
      _
    $region3: #{tpu_custom_call.1} parent=1 // pred_check_branch
      %16 = sbr.rel (0) target = $region5
    $region4: #{tpu_custom_call.1} parent=1 // pred_region
      _
    $region5: #{tpu_custom_call.1} parent=1 // pred_fallthru
      _
    // Predicated region
    $region6: #{tpu_custom_call.1} parent=1 // pred_check
      _
    $region7: #{tpu_custom_call.1} parent=1 // pred_check_branch
      %18 = sbr.rel (0) target = $region9
    $region8: #{tpu_custom_call.1} parent=1 // pred_region
      _
    $region9: #{tpu_custom_call.1} parent=1 // pred_fallthru
      _
    // Predicated region
    $region10: #{tpu_custom_call.1} parent=1 // pred_check
      _
    $region11: #{tpu_custom_call.1} parent=1 // pred_check_branch
      %20 = sbr.rel (0) target = $region13
    $region12: #{tpu_custom_call.1} parent=1 // pred_region
      _
    $region13: #{tpu_custom_call.1} parent=1 // pred_fallthru
      _
    // Predicated region
    $region14: #{tpu_custom_call.1} parent=1 // pred_check
      _
    $region15: #{tpu_custom_call.1} parent=1 // pred_check_branch
      %22 = sbr.rel (0) target = $region17
    $region16: #{tpu_custom_call.1} parent=1 // pred_region
      _
    $region17: #{tpu_custom_call.1} parent=1 // pred_fallthru
      _
    // Predicated region
    $region18: #{tpu_custom_call.1} parent=1 // pred_check
      _
    $region19: #{tpu_custom_call.1} parent=1 // pred_check_branch
      %24 = sbr.rel (0) target = $region21
    $region20: #{tpu_custom_call.1} parent=1 // pred_region
      _
    $region21: #{tpu_custom_call.1} parent=1 // pred_fallthru
      _
    // Predicated region
    $region22: #{tpu_custom_call.1} parent=1 // pred_check
      _
    $region23: #{tpu_custom_call.1} parent=1 // pred_check_branch
      %26 = sbr.rel (0) target = $region25
    $region24: #{tpu_custom_call.1} parent=1 // pred_region
      _
    $region25: #{tpu_custom_call.1} parent=1 // pred_fallthru
      _
    // Predicated region
    $region26: #{tpu_custom_call.1} parent=1 // pred_check
      _
    $region27: #{tpu_custom_call.1} parent=1 // pred_check_branch
      %28 = sbr.rel (0) target = $region29
    $region28: #{tpu_custom_call.1} parent=1 // pred_region
      _
    $region29: #{tpu_custom_call.1} parent=1 // pred_fallthru
      _
    // Predicated region
    $region30: #{tpu_custom_call.1} parent=1 // pred_check
      _
    $region31: #{tpu_custom_call.1} parent=1 // pred_check_branch
      %30 = sbr.rel (0) target = $region33
    $region32: #{tpu_custom_call.1} parent=1 // pred_region
      _
    $region33: #{tpu_custom_call.1} parent=1 // pred_fallthru
      _
    // Predicated region
    $region34: #{tpu_custom_call.1} parent=1 // pred_check
      _
    $region35: #{tpu_custom_call.1} parent=1 // pred_check_branch
      %32 = sbr.rel (0) target = $region37
    $region36: #{tpu_custom_call.1} parent=1 // pred_region
      _
    $region37: #{tpu_custom_call.1} parent=1 // pred_fallthru
      _
    %v33 = vld [vmem:[%s0] sm:$0xff]
    %v34 = vld [vmem:[%s0 + $0x8] sm:$0xff]
    %v35 = vld [vmem:[%s0 + $0x10] sm:$0xff]
    %v36 = vld [vmem:[%s0 + $0x18] sm:$0xff]
    %v37 = vld [vmem:[%s0 + $0x20] sm:$0xff]
    %v38 = vld [vmem:[%s0 + $0x28] sm:$0xff]
    %v39 = vld [vmem:[%s0 + $0x30] sm:$0xff]
    %v40 = vld [vmem:[%s0 + $0x38] sm:$0xff]
    %v41 = vld [vmem:[%s0 + $0x40] sm:$0xff]
    %v42 = vld [vmem:[%s0 + $0x48] sm:$0xff]
    %v43 = vld [vmem:[%s0 + $0x50] sm:$0xff]
    %v44 = vld [vmem:[%s0 + $0x58] sm:$0xff]
    %v45 = vld [vmem:[%s0 + $0x60] sm:$0xff]
    %v46 = vld [vmem:[%s0 + $0x68] sm:$0xff]
    %v47 = vld [vmem:[%s0 + $0x70] sm:$0xff]
    %v48 = vld [vmem:[%s0 + $0x78] sm:$0xff]
    %v49 = vld [vmem:[%s2] sm:$0xff]
    %v50 = vld [vmem:[%s2 + $0x8] sm:$0xff]
    %v51 = vld [vmem:[%s2 + $0x10] sm:$0xff]
    %v52 = vld [vmem:[%s2 + $0x18] sm:$0xff]
    %53 = vxpose.xlu0.b32.start [1/16] %v33, 128
    %54 = vxpose.xlu0.b32.cont [2/16] %v34, 128
    %55 = vxpose.xlu0.b32.cont [3/16] %v35, 128
    %56 = vxpose.xlu0.b32.cont [4/16] %v36, 128
    %57 = vxpose.xlu0.b32.cont [5/16] 0.0, 128
    %58 = vxpose.xlu0.b32.cont [6/16] 0.0, 128
    %59 = vxpose.xlu0.b32.cont [7/16] 0.0, 128
    %60 = vxpose.xlu0.b32.cont [8/16] 0.0, 128
    %61 = vxpose.xlu0.b32.cont [9/16] 0.0, 128
    %62 = vxpose.xlu0.b32.cont [10/16] 0.0, 128
    %63 = vxpose.xlu0.b32.cont [11/16] 0.0, 128
    %64 = vxpose.xlu0.b32.cont [12/16] 0.0, 128
    %65 = vxpose.xlu0.b32.cont [13/16] 0.0, 128
    %66 = vxpose.xlu0.b32.cont [14/16] 0.0, 128
    %67 = vxpose.xlu0.b32.cont [15/16] 0.0, 128
    %68 = vxpose.xlu0.b32.end [16/16] 0.0, 128
    %v69 = vpop.trf.xlu0
    %v70 = vpop.trf.xlu0
    %v71 = vpop.trf.xlu0
    %v72 = vpop.trf.xlu0
    %v73 = vpop.trf.xlu0
    %v74 = vpop.trf.xlu0
    %v75 = vpop.trf.xlu0
    %v76 = vpop.trf.xlu0
    %v77 = vpop.trf.xlu0
    %v78 = vpop.trf.xlu0
    %v79 = vpop.trf.xlu0
    %v80 = vpop.trf.xlu0
    %v81 = vpop.trf.xlu0
    %v82 = vpop.trf.xlu0
    %v83 = vpop.trf.xlu0
    %v84 = vpop.trf.xlu0
    %vm85 = vcmask 261120
    %v87 = vsel %vm85, %v69, 0
    %v90 = vsel %vm85, %v70, 0
    %v93 = vsel %vm85, %v71, 0
    %v96 = vsel %vm85, %v72, 0
    %v99 = vsel %vm85, %v73, 0
    %v102 = vsel %vm85, %v74, 0
    %v105 = vsel %vm85, %v75, 0
    %v108 = vsel %vm85, %v76, 0
    %110 = vmatpush.msra.mxu0 0.0
    %111 = vmatpush.msra.mxu0 0.0
    %112 = vmatpush.msra.mxu0 0.0
    %113 = vmatpush.msra.mxu0 0.0
    %114 = vmatpush.msra.mxu0 0.0
    %115 = vmatpush.msra.mxu0 0.0
    %116 = vmatpush.msra.mxu0 0.0
    %117 = vmatpush.msra.mxu0 0.0
    %118 = vmatpush.msra.mxu0 0.0
    %119 = vmatpush.msra.mxu0 0.0
    %120 = vmatpush.msra.mxu0 0.0
    %121 = vmatpush.msra.mxu0 0.0
    %122 = vmatpush.msra.mxu0 %v52
    %123 = vmatpush.msra.mxu0 %v51
    %124 = vmatpush.msra.mxu0 %v50
    %125 = vmatpush.msra.mxu0 %v49
    %126 = vmatmul.f32.gmra.mxu0 %v87
    %v127 = vpop.f32.mrf.mxu0
    %v128 = vadd.f32 0.0, %v127
    %129 = vmatmul.f32.gmra.mxu0 %v90
    %v130 = vpop.f32.mrf.mxu0
    %v131 = vadd.f32 0.0, %v130
    %132 = vmatmul.f32.gmra.mxu0 %v93
    %v133 = vpop.f32.mrf.mxu0
    %v134 = vadd.f32 0.0, %v133
    %135 = vmatmul.f32.gmra.mxu0 %v96
    %v136 = vpop.f32.mrf.mxu0
    %v137 = vadd.f32 0.0, %v136
    %138 = vmatmul.f32.gmra.mxu0 %v99
    %v139 = vpop.f32.mrf.mxu0
    %v140 = vadd.f32 0.0, %v139
    %141 = vmatmul.f32.gmra.mxu0 %v102
    %v142 = vpop.f32.mrf.mxu0
    %v143 = vadd.f32 0.0, %v142
    %144 = vmatmul.f32.gmra.mxu0 %v105
    %v145 = vpop.f32.mrf.mxu0
    %v146 = vadd.f32 0.0, %v145
    %147 = vmatmul.f32.gmra.mxu0 %v108
    %v148 = vpop.f32.mrf.mxu0
    %v149 = vadd.f32 0.0, %v148
    %150 = vdwg.mxu0
    %151 = vxpose.xlu0.b32.start [1/16] %v37, 128
    %152 = vxpose.xlu0.b32.cont [2/16] %v38, 128
    %153 = vxpose.xlu0.b32.cont [3/16] %v39, 128
    %154 = vxpose.xlu0.b32.cont [4/16] %v40, 128
    %155 = vxpose.xlu0.b32.cont [5/16] 0.0, 128
    %156 = vxpose.xlu0.b32.cont [6/16] 0.0, 128
    %157 = vxpose.xlu0.b32.cont [7/16] 0.0, 128
    %158 = vxpose.xlu0.b32.cont [8/16] 0.0, 128
    %159 = vxpose.xlu0.b32.cont [9/16] 0.0, 128
    %160 = vxpose.xlu0.b32.cont [10/16] 0.0, 128
    %161 = vxpose.xlu0.b32.cont [11/16] 0.0, 128
    %162 = vxpose.xlu0.b32.cont [12/16] 0.0, 128
    %163 = vxpose.xlu0.b32.cont [13/16] 0.0, 128
    %164 = vxpose.xlu0.b32.cont [14/16] 0.0, 128
    %165 = vxpose.xlu0.b32.cont [15/16] 0.0, 128
    %166 = vxpose.xlu0.b32.end [16/16] 0.0, 128
    %v167 = vpop.trf.xlu0
    %v168 = vpop.trf.xlu0
    %v169 = vpop.trf.xlu0
    %v170 = vpop.trf.xlu0
    %v171 = vpop.trf.xlu0
    %v172 = vpop.trf.xlu0
    %v173 = vpop.trf.xlu0
    %v174 = vpop.trf.xlu0
    %v175 = vpop.trf.xlu0
    %v176 = vpop.trf.xlu0
    %v177 = vpop.trf.xlu0
    %v178 = vpop.trf.xlu0
    %v179 = vpop.trf.xlu0
    %v180 = vpop.trf.xlu0
    %v181 = vpop.trf.xlu0
    %v182 = vpop.trf.xlu0
    %v184 = vsel %vm85, %v167, 0
    %v187 = vsel %vm85, %v168, 0
    %v190 = vsel %vm85, %v169, 0
    %v193 = vsel %vm85, %v170, 0
    %v196 = vsel %vm85, %v171, 0
    %v199 = vsel %vm85, %v172, 0
    %v202 = vsel %vm85, %v173, 0
    %v205 = vsel %vm85, %v174, 0
    %207 = vmatpush.msra.mxu0 0.0
    %208 = vmatpush.msra.mxu0 0.0
    %209 = vmatpush.msra.mxu0 0.0
    %210 = vmatpush.msra.mxu0 0.0
    %211 = vmatpush.msra.mxu0 0.0
    %212 = vmatpush.msra.mxu0 0.0
    %213 = vmatpush.msra.mxu0 0.0
    %214 = vmatpush.msra.mxu0 0.0
    %215 = vmatpush.msra.mxu0 0.0
    %216 = vmatpush.msra.mxu0 0.0
    %217 = vmatpush.msra.mxu0 0.0
    %218 = vmatpush.msra.mxu0 0.0
    %219 = vmatpush.msra.mxu0 %v52
    %220 = vmatpush.msra.mxu0 %v51
    %221 = vmatpush.msra.mxu0 %v50
    %222 = vmatpush.msra.mxu0 %v49
    %223 = vmatmul.f32.gmra.mxu0 %v184
    %v224 = vpop.f32.mrf.mxu0
    %v225 = vadd.f32 0.0, %v224
    %226 = vmatmul.f32.gmra.mxu0 %v187
    %v227 = vpop.f32.mrf.mxu0
    %v228 = vadd.f32 0.0, %v227
    %229 = vmatmul.f32.gmra.mxu0 %v190
    %v230 = vpop.f32.mrf.mxu0
    %v231 = vadd.f32 0.0, %v230
    %232 = vmatmul.f32.gmra.mxu0 %v193
    %v233 = vpop.f32.mrf.mxu0
    %v234 = vadd.f32 0.0, %v233
    %235 = vmatmul.f32.gmra.mxu0 %v196
    %v236 = vpop.f32.mrf.mxu0
    %v237 = vadd.f32 0.0, %v236
    %238 = vmatmul.f32.gmra.mxu0 %v199
    %v239 = vpop.f32.mrf.mxu0
    %v240 = vadd.f32 0.0, %v239
    %241 = vmatmul.f32.gmra.mxu0 %v202
    %v242 = vpop.f32.mrf.mxu0
    %v243 = vadd.f32 0.0, %v242
    %244 = vmatmul.f32.gmra.mxu0 %v205
    %v245 = vpop.f32.mrf.mxu0
    %v246 = vadd.f32 0.0, %v245
    %247 = vdwg.mxu0
    %248 = vxpose.xlu0.b32.start [1/16] %v41, 128
    %249 = vxpose.xlu0.b32.cont [2/16] %v42, 128
    %250 = vxpose.xlu0.b32.cont [3/16] %v43, 128
    %251 = vxpose.xlu0.b32.cont [4/16] %v44, 128
    %252 = vxpose.xlu0.b32.cont [5/16] 0.0, 128
    %253 = vxpose.xlu0.b32.cont [6/16] 0.0, 128
    %254 = vxpose.xlu0.b32.cont [7/16] 0.0, 128
    %255 = vxpose.xlu0.b32.cont [8/16] 0.0, 128
    %256 = vxpose.xlu0.b32.cont [9/16] 0.0, 128
    %257 = vxpose.xlu0.b32.cont [10/16] 0.0, 128
    %258 = vxpose.xlu0.b32.cont [11/16] 0.0, 128
    %259 = vxpose.xlu0.b32.cont [12/16] 0.0, 128
    %260 = vxpose.xlu0.b32.cont [13/16] 0.0, 128
    %261 = vxpose.xlu0.b32.cont [14/16] 0.0, 128
    %262 = vxpose.xlu0.b32.cont [15/16] 0.0, 128
    %263 = vxpose.xlu0.b32.end [16/16] 0.0, 128
    %v264 = vpop.trf.xlu0
    %v265 = vpop.trf.xlu0
    %v266 = vpop.trf.xlu0
    %v267 = vpop.trf.xlu0
    %v268 = vpop.trf.xlu0
    %v269 = vpop.trf.xlu0
    %v270 = vpop.trf.xlu0
    %v271 = vpop.trf.xlu0
    %v272 = vpop.trf.xlu0
    %v273 = vpop.trf.xlu0
    %v274 = vpop.trf.xlu0
    %v275 = vpop.trf.xlu0
    %v276 = vpop.trf.xlu0
    %v277 = vpop.trf.xlu0
    %v278 = vpop.trf.xlu0
    %v279 = vpop.trf.xlu0
    %v281 = vsel %vm85, %v264, 0
    %v284 = vsel %vm85, %v265, 0
    %v287 = vsel %vm85, %v266, 0
    %v290 = vsel %vm85, %v267, 0
    %v293 = vsel %vm85, %v268, 0
    %v296 = vsel %vm85, %v269, 0
    %v299 = vsel %vm85, %v270, 0
    %v302 = vsel %vm85, %v271, 0
    %304 = vmatpush.msra.mxu0 0.0
    %305 = vmatpush.msra.mxu0 0.0
    %306 = vmatpush.msra.mxu0 0.0
    %307 = vmatpush.msra.mxu0 0.0
    %308 = vmatpush.msra.mxu0 0.0
    %309 = vmatpush.msra.mxu0 0.0
    %310 = vmatpush.msra.mxu0 0.0
    %311 = vmatpush.msra.mxu0 0.0
    %312 = vmatpush.msra.mxu0 0.0
    %313 = vmatpush.msra.mxu0 0.0
    %314 = vmatpush.msra.mxu0 0.0
    %315 = vmatpush.msra.mxu0 0.0
    %316 = vmatpush.msra.mxu0 %v52
    %317 = vmatpush.msra.mxu0 %v51
    %318 = vmatpush.msra.mxu0 %v50
    %319 = vmatpush.msra.mxu0 %v49
    %320 = vmatmul.f32.gmra.mxu0 %v281
    %v321 = vpop.f32.mrf.mxu0
    %v322 = vadd.f32 0.0, %v321
    %323 = vmatmul.f32.gmra.mxu0 %v284
    %v324 = vpop.f32.mrf.mxu0
    %v325 = vadd.f32 0.0, %v324
    %326 = vmatmul.f32.gmra.mxu0 %v287
    %v327 = vpop.f32.mrf.mxu0
    %v328 = vadd.f32 0.0, %v327
    %329 = vmatmul.f32.gmra.mxu0 %v290
    %v330 = vpop.f32.mrf.mxu0
    %v331 = vadd.f32 0.0, %v330
    %332 = vmatmul.f32.gmra.mxu0 %v293
    %v333 = vpop.f32.mrf.mxu0
    %v334 = vadd.f32 0.0, %v333
    %335 = vmatmul.f32.gmra.mxu0 %v296
    %v336 = vpop.f32.mrf.mxu0
    %v337 = vadd.f32 0.0, %v336
    %338 = vmatmul.f32.gmra.mxu0 %v299
    %v339 = vpop.f32.mrf.mxu0
    %v340 = vadd.f32 0.0, %v339
    %341 = vmatmul.f32.gmra.mxu0 %v302
    %v342 = vpop.f32.mrf.mxu0
    %v343 = vadd.f32 0.0, %v342
    %344 = vdwg.mxu0
    %345 = vxpose.xlu0.b32.start [1/16] %v45, 128
    %346 = vxpose.xlu0.b32.cont [2/16] %v46, 128
    %347 = vxpose.xlu0.b32.cont [3/16] %v47, 128
    %348 = vxpose.xlu0.b32.cont [4/16] %v48, 128
    %349 = vxpose.xlu0.b32.cont [5/16] 0.0, 128
    %350 = vxpose.xlu0.b32.cont [6/16] 0.0, 128
    %351 = vxpose.xlu0.b32.cont [7/16] 0.0, 128
    %352 = vxpose.xlu0.b32.cont [8/16] 0.0, 128
    %353 = vxpose.xlu0.b32.cont [9/16] 0.0, 128
    %354 = vxpose.xlu0.b32.cont [10/16] 0.0, 128
    %355 = vxpose.xlu0.b32.cont [11/16] 0.0, 128
    %356 = vxpose.xlu0.b32.cont [12/16] 0.0, 128
    %357 = vxpose.xlu0.b32.cont [13/16] 0.0, 128
    %358 = vxpose.xlu0.b32.cont [14/16] 0.0, 128
    %359 = vxpose.xlu0.b32.cont [15/16] 0.0, 128
    %360 = vxpose.xlu0.b32.end [16/16] 0.0, 128
    %v361 = vpop.trf.xlu0
    %v362 = vpop.trf.xlu0
    %v363 = vpop.trf.xlu0
    %v364 = vpop.trf.xlu0
    %v365 = vpop.trf.xlu0
    %v366 = vpop.trf.xlu0
    %v367 = vpop.trf.xlu0
    %v368 = vpop.trf.xlu0
    %v369 = vpop.trf.xlu0
    %v370 = vpop.trf.xlu0
    %v371 = vpop.trf.xlu0
    %v372 = vpop.trf.xlu0
    %v373 = vpop.trf.xlu0
    %v374 = vpop.trf.xlu0
    %v375 = vpop.trf.xlu0
    %v376 = vpop.trf.xlu0
    %v378 = vsel %vm85, %v361, 0
    %v381 = vsel %vm85, %v362, 0
    %v384 = vsel %vm85, %v363, 0
    %v387 = vsel %vm85, %v364, 0
    %v390 = vsel %vm85, %v365, 0
    %v393 = vsel %vm85, %v366, 0
    %v396 = vsel %vm85, %v367, 0
    %v399 = vsel %vm85, %v368, 0
    %401 = vmatpush.msra.mxu0 0.0
    %402 = vmatpush.msra.mxu0 0.0
    %403 = vmatpush.msra.mxu0 0.0
    %404 = vmatpush.msra.mxu0 0.0
    %405 = vmatpush.msra.mxu0 0.0
    %406 = vmatpush.msra.mxu0 0.0
    %407 = vmatpush.msra.mxu0 0.0
    %408 = vmatpush.msra.mxu0 0.0
    %409 = vmatpush.msra.mxu0 0.0
    %410 = vmatpush.msra.mxu0 0.0
    %411 = vmatpush.msra.mxu0 0.0
    %412 = vmatpush.msra.mxu0 0.0
    %413 = vmatpush.msra.mxu0 %v52
    %414 = vmatpush.msra.mxu0 %v51
    %415 = vmatpush.msra.mxu0 %v50
    %416 = vmatpush.msra.mxu0 %v49
    %417 = vmatmul.f32.gmra.mxu0 %v378
    %v418 = vpop.f32.mrf.mxu0
    %v419 = vadd.f32 0.0, %v418
    %420 = vmatmul.f32.gmra.mxu0 %v381
    %v421 = vpop.f32.mrf.mxu0
    %v422 = vadd.f32 0.0, %v421
    %423 = vmatmul.f32.gmra.mxu0 %v384
    %v424 = vpop.f32.mrf.mxu0
    %v425 = vadd.f32 0.0, %v424
    %426 = vmatmul.f32.gmra.mxu0 %v387
    %v427 = vpop.f32.mrf.mxu0
    %v428 = vadd.f32 0.0, %v427
    %429 = vmatmul.f32.gmra.mxu0 %v390
    %v430 = vpop.f32.mrf.mxu0
    %v431 = vadd.f32 0.0, %v430
    %432 = vmatmul.f32.gmra.mxu0 %v393
    %v433 = vpop.f32.mrf.mxu0
    %v434 = vadd.f32 0.0, %v433
    %435 = vmatmul.f32.gmra.mxu0 %v396
    %v436 = vpop.f32.mrf.mxu0
    %v437 = vadd.f32 0.0, %v436
    %438 = vmatmul.f32.gmra.mxu0 %v399
    %v439 = vpop.f32.mrf.mxu0
    %v440 = vadd.f32 0.0, %v439
    %441 = vdwg.mxu0
    %v442 = vld [vmem:[%s3] sm:$0x1]
    %v444 = vperm.slane %v442, 0
    %v446 = vadd.f32 %v128, %v444
    %v447 = vadd.f32 %v131, %v444
    %v448 = vadd.f32 %v134, %v444
    %v449 = vadd.f32 %v137, %v444
    %v450 = vadd.f32 %v140, %v444
    %v451 = vadd.f32 %v143, %v444
    %v452 = vadd.f32 %v146, %v444
    %v453 = vadd.f32 %v149, %v444
    %v454 = vadd.f32 %v225, %v444
    %v455 = vadd.f32 %v228, %v444
    %v456 = vadd.f32 %v231, %v444
    %v457 = vadd.f32 %v234, %v444
    %v458 = vadd.f32 %v237, %v444
    %v459 = vadd.f32 %v240, %v444
    %v460 = vadd.f32 %v243, %v444
    %v461 = vadd.f32 %v246, %v444
    %v462 = vadd.f32 %v322, %v444
    %v463 = vadd.f32 %v325, %v444
    %v464 = vadd.f32 %v328, %v444
    %v465 = vadd.f32 %v331, %v444
    %v466 = vadd.f32 %v334, %v444
    %v467 = vadd.f32 %v337, %v444
    %v468 = vadd.f32 %v340, %v444
    %v469 = vadd.f32 %v343, %v444
    %v470 = vadd.f32 %v419, %v444
    %v471 = vadd.f32 %v422, %v444
    %v472 = vadd.f32 %v425, %v444
    %v473 = vadd.f32 %v428, %v444
    %v474 = vadd.f32 %v431, %v444
    %v475 = vadd.f32 %v434, %v444
    %v476 = vadd.f32 %v437, %v444
    %v477 = vadd.f32 %v440, %v444
    %v478 = vsel %vm85, %v446, 0.0
    %479 = vadd.xlane.f32.xlu0 %v478
    %v480 = vpop.xlane.xlu0 %479
    %v481 = vsel %vm85, %v447, 0.0
    %482 = vadd.xlane.f32.xlu0 %v481
    %v483 = vpop.xlane.xlu0 %482
    %v484 = vsel %vm85, %v448, 0.0
    %485 = vadd.xlane.f32.xlu0 %v484
    %v486 = vpop.xlane.xlu0 %485
    %v487 = vsel %vm85, %v449, 0.0
    %488 = vadd.xlane.f32.xlu0 %v487
    %v489 = vpop.xlane.xlu0 %488
    %v490 = vsel %vm85, %v450, 0.0
    %491 = vadd.xlane.f32.xlu0 %v490
    %v492 = vpop.xlane.xlu0 %491
    %v493 = vsel %vm85, %v451, 0.0
    %494 = vadd.xlane.f32.xlu0 %v493
    %v495 = vpop.xlane.xlu0 %494
    %v496 = vsel %vm85, %v452, 0.0
    %497 = vadd.xlane.f32.xlu0 %v496
    %v498 = vpop.xlane.xlu0 %497
    %v499 = vsel %vm85, %v453, 0.0
    %500 = vadd.xlane.f32.xlu0 %v499
    %v501 = vpop.xlane.xlu0 %500
    %v502 = vsel %vm85, %v454, 0.0
    %503 = vadd.xlane.f32.xlu0 %v502
    %v504 = vpop.xlane.xlu0 %503
    %v505 = vsel %vm85, %v455, 0.0
    %506 = vadd.xlane.f32.xlu0 %v505
    %v507 = vpop.xlane.xlu0 %506
    %v508 = vsel %vm85, %v456, 0.0
    %509 = vadd.xlane.f32.xlu0 %v508
    %v510 = vpop.xlane.xlu0 %509
    %v511 = vsel %vm85, %v457, 0.0
    %512 = vadd.xlane.f32.xlu0 %v511
    %v513 = vpop.xlane.xlu0 %512
    %v514 = vsel %vm85, %v458, 0.0
    %515 = vadd.xlane.f32.xlu0 %v514
    %v516 = vpop.xlane.xlu0 %515
    %v517 = vsel %vm85, %v459, 0.0
    %518 = vadd.xlane.f32.xlu0 %v517
    %v519 = vpop.xlane.xlu0 %518
    %v520 = vsel %vm85, %v460, 0.0
    %521 = vadd.xlane.f32.xlu0 %v520
    %v522 = vpop.xlane.xlu0 %521
    %v523 = vsel %vm85, %v461, 0.0
    %524 = vadd.xlane.f32.xlu0 %v523
    %v525 = vpop.xlane.xlu0 %524
    %v526 = vsel %vm85, %v462, 0.0
    %527 = vadd.xlane.f32.xlu0 %v526
    %v528 = vpop.xlane.xlu0 %527
    %v529 = vsel %vm85, %v463, 0.0
    %530 = vadd.xlane.f32.xlu0 %v529
    %v531 = vpop.xlane.xlu0 %530
    %v532 = vsel %vm85, %v464, 0.0
    %533 = vadd.xlane.f32.xlu0 %v532
    %v534 = vpop.xlane.xlu0 %533
    %v535 = vsel %vm85, %v465, 0.0
    %536 = vadd.xlane.f32.xlu0 %v535
    %v537 = vpop.xlane.xlu0 %536
    %v538 = vsel %vm85, %v466, 0.0
    %539 = vadd.xlane.f32.xlu0 %v538
    %v540 = vpop.xlane.xlu0 %539
    %v541 = vsel %vm85, %v467, 0.0
    %542 = vadd.xlane.f32.xlu0 %v541
    %v543 = vpop.xlane.xlu0 %542
    %v544 = vsel %vm85, %v468, 0.0
    %545 = vadd.xlane.f32.xlu0 %v544
    %v546 = vpop.xlane.xlu0 %545
    %v547 = vsel %vm85, %v469, 0.0
    %548 = vadd.xlane.f32.xlu0 %v547
    %v549 = vpop.xlane.xlu0 %548
    %v550 = vsel %vm85, %v470, 0.0
    %551 = vadd.xlane.f32.xlu0 %v550
    %v552 = vpop.xlane.xlu0 %551
    %v553 = vsel %vm85, %v471, 0.0
    %554 = vadd.xlane.f32.xlu0 %v553
    %v555 = vpop.xlane.xlu0 %554
    %v556 = vsel %vm85, %v472, 0.0
    %557 = vadd.xlane.f32.xlu0 %v556
    %v558 = vpop.xlane.xlu0 %557
    %v559 = vsel %vm85, %v473, 0.0
    %560 = vadd.xlane.f32.xlu0 %v559
    %v561 = vpop.xlane.xlu0 %560
    %v562 = vsel %vm85, %v474, 0.0
    %563 = vadd.xlane.f32.xlu0 %v562
    %v564 = vpop.xlane.xlu0 %563
    %v565 = vsel %vm85, %v475, 0.0
    %566 = vadd.xlane.f32.xlu0 %v565
    %v567 = vpop.xlane.xlu0 %566
    %v568 = vsel %vm85, %v476, 0.0
    %569 = vadd.xlane.f32.xlu0 %v568
    %v570 = vpop.xlane.xlu0 %569
    %v571 = vsel %vm85, %v477, 0.0
    %572 = vadd.xlane.f32.xlu0 %v571
    %v573 = vpop.xlane.xlu0 %572
    %v574 = vrcp.pop 32.0
    %v575 = vmul.f32 32.0, %v574
    %v576 = vsub.f32 1.0, %v575
    %v577 = vmul.f32 %v574, %v576
    %v578 = vadd.f32 %v574, %v577
    %vm579 = vweird.f32 %v574
    %v580 = vsel %vm579, %v574, %v578
    %v581 = vmul.f32 %v480, %v580
    %v582 = vmul.f32 %v483, %v580
    %v583 = vmul.f32 %v486, %v580
    %v584 = vmul.f32 %v489, %v580
    %v585 = vmul.f32 %v492, %v580
    %v586 = vmul.f32 %v495, %v580
    %v587 = vmul.f32 %v498, %v580
    %v588 = vmul.f32 %v501, %v580
    %v589 = vmul.f32 %v504, %v580
    %v590 = vmul.f32 %v507, %v580
    %v591 = vmul.f32 %v510, %v580
    %v592 = vmul.f32 %v513, %v580
    %v593 = vmul.f32 %v516, %v580
    %v594 = vmul.f32 %v519, %v580
    %v595 = vmul.f32 %v522, %v580
    %v596 = vmul.f32 %v525, %v580
    %v597 = vmul.f32 %v528, %v580
    %v598 = vmul.f32 %v531, %v580
    %v599 = vmul.f32 %v534, %v580
    %v600 = vmul.f32 %v537, %v580
    %v601 = vmul.f32 %v540, %v580
    %v602 = vmul.f32 %v543, %v580
    %v603 = vmul.f32 %v546, %v580
    %v604 = vmul.f32 %v549, %v580
    %v605 = vmul.f32 %v552, %v580
    %v606 = vmul.f32 %v555, %v580
    %v607 = vmul.f32 %v558, %v580
    %v608 = vmul.f32 %v561, %v580
    %v609 = vmul.f32 %v564, %v580
    %v610 = vmul.f32 %v567, %v580
    %v611 = vmul.f32 %v570, %v580
    %v612 = vmul.f32 %v573, %v580
    %v613 = vsub.f32 %v446, %v581
    %v614 = vsub.f32 %v447, %v582
    %v615 = vsub.f32 %v448, %v583
    %v616 = vsub.f32 %v449, %v584
    %v617 = vsub.f32 %v450, %v585
    %v618 = vsub.f32 %v451, %v586
    %v619 = vsub.f32 %v452, %v587
    %v620 = vsub.f32 %v453, %v588
    %v621 = vsub.f32 %v454, %v589
    %v622 = vsub.f32 %v455, %v590
    %v623 = vsub.f32 %v456, %v591
    %v624 = vsub.f32 %v457, %v592
    %v625 = vsub.f32 %v458, %v593
    %v626 = vsub.f32 %v459, %v594
    %v627 = vsub.f32 %v460, %v595
    %v628 = vsub.f32 %v461, %v596
    %v629 = vsub.f32 %v462, %v597
    %v630 = vsub.f32 %v463, %v598
    %v631 = vsub.f32 %v464, %v599
    %v632 = vsub.f32 %v465, %v600
    %v633 = vsub.f32 %v466, %v601
    %v634 = vsub.f32 %v467, %v602
    %v635 = vsub.f32 %v468, %v603
    %v636 = vsub.f32 %v469, %v604
    %v637 = vsub.f32 %v470, %v605
    %v638 = vsub.f32 %v471, %v606
    %v639 = vsub.f32 %v472, %v607
    %v640 = vsub.f32 %v473, %v608
    %v641 = vsub.f32 %v474, %v609
    %v642 = vsub.f32 %v475, %v610
    %v643 = vsub.f32 %v476, %v611
    %v644 = vsub.f32 %v477, %v612
    %v645 = vmul.f32 %v613, %v613
    %v646 = vmul.f32 %v614, %v614
    %v647 = vmul.f32 %v615, %v615
    %v648 = vmul.f32 %v616, %v616
    %v649 = vmul.f32 %v617, %v617
    %v650 = vmul.f32 %v618, %v618
    %v651 = vmul.f32 %v619, %v619
    %v652 = vmul.f32 %v620, %v620
    %v653 = vmul.f32 %v621, %v621
    %v654 = vmul.f32 %v622, %v622
    %v655 = vmul.f32 %v623, %v623
    %v656 = vmul.f32 %v624, %v624
    %v657 = vmul.f32 %v625, %v625
    %v658 = vmul.f32 %v626, %v626
    %v659 = vmul.f32 %v627, %v627
    %v660 = vmul.f32 %v628, %v628
    %v661 = vmul.f32 %v629, %v629
    %v662 = vmul.f32 %v630, %v630
    %v663 = vmul.f32 %v631, %v631
    %v664 = vmul.f32 %v632, %v632
    %v665 = vmul.f32 %v633, %v633
    %v666 = vmul.f32 %v634, %v634
    %v667 = vmul.f32 %v635, %v635
    %v668 = vmul.f32 %v636, %v636
    %v669 = vmul.f32 %v637, %v637
    %v670 = vmul.f32 %v638, %v638
    %v671 = vmul.f32 %v639, %v639
    %v672 = vmul.f32 %v640, %v640
    %v673 = vmul.f32 %v641, %v641
    %v674 = vmul.f32 %v642, %v642
    %v675 = vmul.f32 %v643, %v643
    %v676 = vmul.f32 %v644, %v644
    %v677 = vsel %vm85, %v645, 0.0
    %678 = vadd.xlane.f32.xlu0 %v677
    %v679 = vpop.xlane.xlu0 %678
    %v680 = vsel %vm85, %v646, 0.0
    %681 = vadd.xlane.f32.xlu0 %v680
    %v682 = vpop.xlane.xlu0 %681
    %v683 = vsel %vm85, %v647, 0.0
    %684 = vadd.xlane.f32.xlu0 %v683
    %v685 = vpop.xlane.xlu0 %684
    %v686 = vsel %vm85, %v648, 0.0
    %687 = vadd.xlane.f32.xlu0 %v686
    %v688 = vpop.xlane.xlu0 %687
    %v689 = vsel %vm85, %v649, 0.0
    %690 = vadd.xlane.f32.xlu0 %v689
    %v691 = vpop.xlane.xlu0 %690
    %v692 = vsel %vm85, %v650, 0.0
    %693 = vadd.xlane.f32.xlu0 %v692
    %v694 = vpop.xlane.xlu0 %693
    %v695 = vsel %vm85, %v651, 0.0
    %696 = vadd.xlane.f32.xlu0 %v695
    %v697 = vpop.xlane.xlu0 %696
    %v698 = vsel %vm85, %v652, 0.0
    %699 = vadd.xlane.f32.xlu0 %v698
    %v700 = vpop.xlane.xlu0 %699
    %v701 = vsel %vm85, %v653, 0.0
    %702 = vadd.xlane.f32.xlu0 %v701
    %v703 = vpop.xlane.xlu0 %702
    %v704 = vsel %vm85, %v654, 0.0
    %705 = vadd.xlane.f32.xlu0 %v704
    %v706 = vpop.xlane.xlu0 %705
    %v707 = vsel %vm85, %v655, 0.0
    %708 = vadd.xlane.f32.xlu0 %v707
    %v709 = vpop.xlane.xlu0 %708
    %v710 = vsel %vm85, %v656, 0.0
    %711 = vadd.xlane.f32.xlu0 %v710
    %v712 = vpop.xlane.xlu0 %711
    %v713 = vsel %vm85, %v657, 0.0
    %714 = vadd.xlane.f32.xlu0 %v713
    %v715 = vpop.xlane.xlu0 %714
    %v716 = vsel %vm85, %v658, 0.0
    %717 = vadd.xlane.f32.xlu0 %v716
    %v718 = vpop.xlane.xlu0 %717
    %v719 = vsel %vm85, %v659, 0.0
    %720 = vadd.xlane.f32.xlu0 %v719
    %v721 = vpop.xlane.xlu0 %720
    %v722 = vsel %vm85, %v660, 0.0
    %723 = vadd.xlane.f32.xlu0 %v722
    %v724 = vpop.xlane.xlu0 %723
    %v725 = vsel %vm85, %v661, 0.0
    %726 = vadd.xlane.f32.xlu0 %v725
    %v727 = vpop.xlane.xlu0 %726
    %v728 = vsel %vm85, %v662, 0.0
    %729 = vadd.xlane.f32.xlu0 %v728
    %v730 = vpop.xlane.xlu0 %729
    %v731 = vsel %vm85, %v663, 0.0
    %732 = vadd.xlane.f32.xlu0 %v731
    %v733 = vpop.xlane.xlu0 %732
    %v734 = vsel %vm85, %v664, 0.0
    %735 = vadd.xlane.f32.xlu0 %v734
    %v736 = vpop.xlane.xlu0 %735
    %v737 = vsel %vm85, %v665, 0.0
    %738 = vadd.xlane.f32.xlu0 %v737
    %v739 = vpop.xlane.xlu0 %738
    %v740 = vsel %vm85, %v666, 0.0
    %741 = vadd.xlane.f32.xlu0 %v740
    %v742 = vpop.xlane.xlu0 %741
    %v743 = vsel %vm85, %v667, 0.0
    %744 = vadd.xlane.f32.xlu0 %v743
    %v745 = vpop.xlane.xlu0 %744
    %v746 = vsel %vm85, %v668, 0.0
    %747 = vadd.xlane.f32.xlu0 %v746
    %v748 = vpop.xlane.xlu0 %747
    %v749 = vsel %vm85, %v669, 0.0
    %750 = vadd.xlane.f32.xlu0 %v749
    %v751 = vpop.xlane.xlu0 %750
    %v752 = vsel %vm85, %v670, 0.0
    %753 = vadd.xlane.f32.xlu0 %v752
    %v754 = vpop.xlane.xlu0 %753
    %v755 = vsel %vm85, %v671, 0.0
    %756 = vadd.xlane.f32.xlu0 %v755
    %v757 = vpop.xlane.xlu0 %756
    %v758 = vsel %vm85, %v672, 0.0
    %759 = vadd.xlane.f32.xlu0 %v758
    %v760 = vpop.xlane.xlu0 %759
    %v761 = vsel %vm85, %v673, 0.0
    %762 = vadd.xlane.f32.xlu0 %v761
    %v763 = vpop.xlane.xlu0 %762
    %v764 = vsel %vm85, %v674, 0.0
    %765 = vadd.xlane.f32.xlu0 %v764
    %v766 = vpop.xlane.xlu0 %765
    %v767 = vsel %vm85, %v675, 0.0
    %768 = vadd.xlane.f32.xlu0 %v767
    %v769 = vpop.xlane.xlu0 %768
    %v770 = vsel %vm85, %v676, 0.0
    %771 = vadd.xlane.f32.xlu0 %v770
    %v772 = vpop.xlane.xlu0 %771
    %v773 = vmul.f32 %v679, %v580
    %v774 = vmul.f32 %v682, %v580
    %v775 = vmul.f32 %v685, %v580
    %v776 = vmul.f32 %v688, %v580
    %v777 = vmul.f32 %v691, %v580
    %v778 = vmul.f32 %v694, %v580
    %v779 = vmul.f32 %v697, %v580
    %v780 = vmul.f32 %v700, %v580
    %v781 = vmul.f32 %v703, %v580
    %v782 = vmul.f32 %v706, %v580
    %v783 = vmul.f32 %v709, %v580
    %v784 = vmul.f32 %v712, %v580
    %v785 = vmul.f32 %v715, %v580
    %v786 = vmul.f32 %v718, %v580
    %v787 = vmul.f32 %v721, %v580
    %v788 = vmul.f32 %v724, %v580
    %v789 = vmul.f32 %v727, %v580
    %v790 = vmul.f32 %v730, %v580
    %v791 = vmul.f32 %v733, %v580
    %v792 = vmul.f32 %v736, %v580
    %v793 = vmul.f32 %v739, %v580
    %v794 = vmul.f32 %v742, %v580
    %v795 = vmul.f32 %v745, %v580
    %v796 = vmul.f32 %v748, %v580
    %v797 = vmul.f32 %v751, %v580
    %v798 = vmul.f32 %v754, %v580
    %v799 = vmul.f32 %v757, %v580
    %v800 = vmul.f32 %v760, %v580
    %v801 = vmul.f32 %v763, %v580
    %v802 = vmul.f32 %v766, %v580
    %v803 = vmul.f32 %v769, %v580
    %v804 = vmul.f32 %v772, %v580
    %v805 = vadd.f32 %v773, 1e-05
    %v806 = vadd.f32 %v774, 1e-05
    %v807 = vadd.f32 %v775, 1e-05
    %v808 = vadd.f32 %v776, 1e-05
    %v809 = vadd.f32 %v777, 1e-05
    %v810 = vadd.f32 %v778, 1e-05
    %v811 = vadd.f32 %v779, 1e-05
    %v812 = vadd.f32 %v780, 1e-05
    %v813 = vadd.f32 %v781, 1e-05
    %v814 = vadd.f32 %v782, 1e-05
    %v815 = vadd.f32 %v783, 1e-05
    %v816 = vadd.f32 %v784, 1e-05
    %v817 = vadd.f32 %v785, 1e-05
    %v818 = vadd.f32 %v786, 1e-05
    %v819 = vadd.f32 %v787, 1e-05
    %v820 = vadd.f32 %v788, 1e-05
    %v821 = vadd.f32 %v789, 1e-05
    %v822 = vadd.f32 %v790, 1e-05
    %v823 = vadd.f32 %v791, 1e-05
    %v824 = vadd.f32 %v792, 1e-05
    %v825 = vadd.f32 %v793, 1e-05
    %v826 = vadd.f32 %v794, 1e-05
    %v827 = vadd.f32 %v795, 1e-05
    %v828 = vadd.f32 %v796, 1e-05
    %v829 = vadd.f32 %v797, 1e-05
    %v830 = vadd.f32 %v798, 1e-05
    %v831 = vadd.f32 %v799, 1e-05
    %v832 = vadd.f32 %v800, 1e-05
    %v833 = vadd.f32 %v801, 1e-05
    %v834 = vadd.f32 %v802, 1e-05
    %v835 = vadd.f32 %v803, 1e-05
    %v836 = vadd.f32 %v804, 1e-05
    %v837 = vrsqrt.pop %v805
    %v838 = vmul.f32 %v837, %v805
    %v839 = vmul.f32 %v838, %v837
    %v840 = vmul.f32 0.5, %v839
    %v841 = vsub.f32 1.5, %v840
    %v842 = vmul.f32 %v837, %v841
    %vm843 = vweird.f32 %v805
    %vm844 = vweird.f32 %v837
    %vm845 = vmor %vm843, %vm844
    %v846 = vsel %vm845, %v837, %v842
    %v847 = vrsqrt.pop %v806
    %v848 = vmul.f32 %v847, %v806
    %v849 = vmul.f32 %v848, %v847
    %v850 = vmul.f32 0.5, %v849
    %v851 = vsub.f32 1.5, %v850
    %v852 = vmul.f32 %v847, %v851
    %vm853 = vweird.f32 %v806
    %vm854 = vweird.f32 %v847
    %vm855 = vmor %vm853, %vm854
    %v856 = vsel %vm855, %v847, %v852
    %v857 = vrsqrt.pop %v807
    %v858 = vmul.f32 %v857, %v807
    %v859 = vmul.f32 %v858, %v857
    %v860 = vmul.f32 0.5, %v859
    %v861 = vsub.f32 1.5, %v860
    %v862 = vmul.f32 %v857, %v861
    %vm863 = vweird.f32 %v807
    %vm864 = vweird.f32 %v857
    %vm865 = vmor %vm863, %vm864
    %v866 = vsel %vm865, %v857, %v862
    %v867 = vrsqrt.pop %v808
    %v868 = vmul.f32 %v867, %v808
    %v869 = vmul.f32 %v868, %v867
    %v870 = vmul.f32 0.5, %v869
    %v871 = vsub.f32 1.5, %v870
    %v872 = vmul.f32 %v867, %v871
    %vm873 = vweird.f32 %v808
    %vm874 = vweird.f32 %v867
    %vm875 = vmor %vm873, %vm874
    %v876 = vsel %vm875, %v867, %v872
    %v877 = vrsqrt.pop %v809
    %v878 = vmul.f32 %v877, %v809
    %v879 = vmul.f32 %v878, %v877
    %v880 = vmul.f32 0.5, %v879
    %v881 = vsub.f32 1.5, %v880
    %v882 = vmul.f32 %v877, %v881
    %vm883 = vweird.f32 %v809
    %vm884 = vweird.f32 %v877
    %vm885 = vmor %vm883, %vm884
    %v886 = vsel %vm885, %v877, %v882
    %v887 = vrsqrt.pop %v810
    %v888 = vmul.f32 %v887, %v810
    %v889 = vmul.f32 %v888, %v887
    %v890 = vmul.f32 0.5, %v889
    %v891 = vsub.f32 1.5, %v890
    %v892 = vmul.f32 %v887, %v891
    %vm893 = vweird.f32 %v810
    %vm894 = vweird.f32 %v887
    %vm895 = vmor %vm893, %vm894
    %v896 = vsel %vm895, %v887, %v892
    %v897 = vrsqrt.pop %v811
    %v898 = vmul.f32 %v897, %v811
    %v899 = vmul.f32 %v898, %v897
    %v900 = vmul.f32 0.5, %v899
    %v901 = vsub.f32 1.5, %v900
    %v902 = vmul.f32 %v897, %v901
    %vm903 = vweird.f32 %v811
    %vm904 = vweird.f32 %v897
    %vm905 = vmor %vm903, %vm904
    %v906 = vsel %vm905, %v897, %v902
    %v907 = vrsqrt.pop %v812
    %v908 = vmul.f32 %v907, %v812
    %v909 = vmul.f32 %v908, %v907
    %v910 = vmul.f32 0.5, %v909
    %v911 = vsub.f32 1.5, %v910
    %v912 = vmul.f32 %v907, %v911
    %vm913 = vweird.f32 %v812
    %vm914 = vweird.f32 %v907
    %vm915 = vmor %vm913, %vm914
    %v916 = vsel %vm915, %v907, %v912
    %v917 = vrsqrt.pop %v813
    %v918 = vmul.f32 %v917, %v813
    %v919 = vmul.f32 %v918, %v917
    %v920 = vmul.f32 0.5, %v919
    %v921 = vsub.f32 1.5, %v920
    %v922 = vmul.f32 %v917, %v921
    %vm923 = vweird.f32 %v813
    %vm924 = vweird.f32 %v917
    %vm925 = vmor %vm923, %vm924
    %v926 = vsel %vm925, %v917, %v922
    %v927 = vrsqrt.pop %v814
    %v928 = vmul.f32 %v927, %v814
    %v929 = vmul.f32 %v928, %v927
    %v930 = vmul.f32 0.5, %v929
    %v931 = vsub.f32 1.5, %v930
    %v932 = vmul.f32 %v927, %v931
    %vm933 = vweird.f32 %v814
    %vm934 = vweird.f32 %v927
    %vm935 = vmor %vm933, %vm934
    %v936 = vsel %vm935, %v927, %v932
    %v937 = vrsqrt.pop %v815
    %v938 = vmul.f32 %v937, %v815
    %v939 = vmul.f32 %v938, %v937
    %v940 = vmul.f32 0.5, %v939
    %v941 = vsub.f32 1.5, %v940
    %v942 = vmul.f32 %v937, %v941
    %vm943 = vweird.f32 %v815
    %vm944 = vweird.f32 %v937
    %vm945 = vmor %vm943, %vm944
    %v946 = vsel %vm945, %v937, %v942
    %v947 = vrsqrt.pop %v816
    %v948 = vmul.f32 %v947, %v816
    %v949 = vmul.f32 %v948, %v947
    %v950 = vmul.f32 0.5, %v949
    %v951 = vsub.f32 1.5, %v950
    %v952 = vmul.f32 %v947, %v951
    %vm953 = vweird.f32 %v816
    %vm954 = vweird.f32 %v947
    %vm955 = vmor %vm953, %vm954
    %v956 = vsel %vm955, %v947, %v952
    %v957 = vrsqrt.pop %v817
    %v958 = vmul.f32 %v957, %v817
    %v959 = vmul.f32 %v958, %v957
    %v960 = vmul.f32 0.5, %v959
    %v961 = vsub.f32 1.5, %v960
    %v962 = vmul.f32 %v957, %v961
    %vm963 = vweird.f32 %v817
    %vm964 = vweird.f32 %v957
    %vm965 = vmor %vm963, %vm964
    %v966 = vsel %vm965, %v957, %v962
    %v967 = vrsqrt.pop %v818
    %v968 = vmul.f32 %v967, %v818
    %v969 = vmul.f32 %v968, %v967
    %v970 = vmul.f32 0.5, %v969
    %v971 = vsub.f32 1.5, %v970
    %v972 = vmul.f32 %v967, %v971
    %vm973 = vweird.f32 %v818
    %vm974 = vweird.f32 %v967
    %vm975 = vmor %vm973, %vm974
    %v976 = vsel %vm975, %v967, %v972
    %v977 = vrsqrt.pop %v819
    %v978 = vmul.f32 %v977, %v819
    %v979 = vmul.f32 %v978, %v977
    %v980 = vmul.f32 0.5, %v979
    %v981 = vsub.f32 1.5, %v980
    %v982 = vmul.f32 %v977, %v981
    %vm983 = vweird.f32 %v819
    %vm984 = vweird.f32 %v977
    %vm985 = vmor %vm983, %vm984
    %v986 = vsel %vm985, %v977, %v982
    %v987 = vrsqrt.pop %v820
    %v988 = vmul.f32 %v987, %v820
    %v989 = vmul.f32 %v988, %v987
    %v990 = vmul.f32 0.5, %v989
    %v991 = vsub.f32 1.5, %v990
    %v992 = vmul.f32 %v987, %v991
    %vm993 = vweird.f32 %v820
    %vm994 = vweird.f32 %v987
    %vm995 = vmor %vm993, %vm994
    %v996 = vsel %vm995, %v987, %v992
    %v997 = vrsqrt.pop %v821
    %v998 = vmul.f32 %v997, %v821
    %v999 = vmul.f32 %v998, %v997
    %v1000 = vmul.f32 0.5, %v999
    %v1001 = vsub.f32 1.5, %v1000
    %v1002 = vmul.f32 %v997, %v1001
    %vm1003 = vweird.f32 %v821
    %vm1004 = vweird.f32 %v997
    %vm1005 = vmor %vm1003, %vm1004
    %v1006 = vsel %vm1005, %v997, %v1002
    %v1007 = vrsqrt.pop %v822
    %v1008 = vmul.f32 %v1007, %v822
    %v1009 = vmul.f32 %v1008, %v1007
    %v1010 = vmul.f32 0.5, %v1009
    %v1011 = vsub.f32 1.5, %v1010
    %v1012 = vmul.f32 %v1007, %v1011
    %vm1013 = vweird.f32 %v822
    %vm1014 = vweird.f32 %v1007
    %vm1015 = vmor %vm1013, %vm1014
    %v1016 = vsel %vm1015, %v1007, %v1012
    %v1017 = vrsqrt.pop %v823
    %v1018 = vmul.f32 %v1017, %v823
    %v1019 = vmul.f32 %v1018, %v1017
    %v1020 = vmul.f32 0.5, %v1019
    %v1021 = vsub.f32 1.5, %v1020
    %v1022 = vmul.f32 %v1017, %v1021
    %vm1023 = vweird.f32 %v823
    %vm1024 = vweird.f32 %v1017
    %vm1025 = vmor %vm1023, %vm1024
    %v1026 = vsel %vm1025, %v1017, %v1022
    %v1027 = vrsqrt.pop %v824
    %v1028 = vmul.f32 %v1027, %v824
    %v1029 = vmul.f32 %v1028, %v1027
    %v1030 = vmul.f32 0.5, %v1029
    %v1031 = vsub.f32 1.5, %v1030
    %v1032 = vmul.f32 %v1027, %v1031
    %vm1033 = vweird.f32 %v824
    %vm1034 = vweird.f32 %v1027
    %vm1035 = vmor %vm1033, %vm1034
    %v1036 = vsel %vm1035, %v1027, %v1032
    %v1037 = vrsqrt.pop %v825
    %v1038 = vmul.f32 %v1037, %v825
    %v1039 = vmul.f32 %v1038, %v1037
    %v1040 = vmul.f32 0.5, %v1039
    %v1041 = vsub.f32 1.5, %v1040
    %v1042 = vmul.f32 %v1037, %v1041
    %vm1043 = vweird.f32 %v825
    %vm1044 = vweird.f32 %v1037
    %vm1045 = vmor %vm1043, %vm1044
    %v1046 = vsel %vm1045, %v1037, %v1042
    %v1047 = vrsqrt.pop %v826
    %v1048 = vmul.f32 %v1047, %v826
    %v1049 = vmul.f32 %v1048, %v1047
    %v1050 = vmul.f32 0.5, %v1049
    %v1051 = vsub.f32 1.5, %v1050
    %v1052 = vmul.f32 %v1047, %v1051
    %vm1053 = vweird.f32 %v826
    %vm1054 = vweird.f32 %v1047
    %vm1055 = vmor %vm1053, %vm1054
    %v1056 = vsel %vm1055, %v1047, %v1052
    %v1057 = vrsqrt.pop %v827
    %v1058 = vmul.f32 %v1057, %v827
    %v1059 = vmul.f32 %v1058, %v1057
    %v1060 = vmul.f32 0.5, %v1059
    %v1061 = vsub.f32 1.5, %v1060
    %v1062 = vmul.f32 %v1057, %v1061
    %vm1063 = vweird.f32 %v827
    %vm1064 = vweird.f32 %v1057
    %vm1065 = vmor %vm1063, %vm1064
    %v1066 = vsel %vm1065, %v1057, %v1062
    %v1067 = vrsqrt.pop %v828
    %v1068 = vmul.f32 %v1067, %v828
    %v1069 = vmul.f32 %v1068, %v1067
    %v1070 = vmul.f32 0.5, %v1069
    %v1071 = vsub.f32 1.5, %v1070
    %v1072 = vmul.f32 %v1067, %v1071
    %vm1073 = vweird.f32 %v828
    %vm1074 = vweird.f32 %v1067
    %vm1075 = vmor %vm1073, %vm1074
    %v1076 = vsel %vm1075, %v1067, %v1072
    %v1077 = vrsqrt.pop %v829
    %v1078 = vmul.f32 %v1077, %v829
    %v1079 = vmul.f32 %v1078, %v1077
    %v1080 = vmul.f32 0.5, %v1079
    %v1081 = vsub.f32 1.5, %v1080
    %v1082 = vmul.f32 %v1077, %v1081
    %vm1083 = vweird.f32 %v829
    %vm1084 = vweird.f32 %v1077
    %vm1085 = vmor %vm1083, %vm1084
    %v1086 = vsel %vm1085, %v1077, %v1082
    %v1087 = vrsqrt.pop %v830
    %v1088 = vmul.f32 %v1087, %v830
    %v1089 = vmul.f32 %v1088, %v1087
    %v1090 = vmul.f32 0.5, %v1089
    %v1091 = vsub.f32 1.5, %v1090
    %v1092 = vmul.f32 %v1087, %v1091
    %vm1093 = vweird.f32 %v830
    %vm1094 = vweird.f32 %v1087
    %vm1095 = vmor %vm1093, %vm1094
    %v1096 = vsel %vm1095, %v1087, %v1092
    %v1097 = vrsqrt.pop %v831
    %v1098 = vmul.f32 %v1097, %v831
    %v1099 = vmul.f32 %v1098, %v1097
    %v1100 = vmul.f32 0.5, %v1099
    %v1101 = vsub.f32 1.5, %v1100
    %v1102 = vmul.f32 %v1097, %v1101
    %vm1103 = vweird.f32 %v831
    %vm1104 = vweird.f32 %v1097
    %vm1105 = vmor %vm1103, %vm1104
    %v1106 = vsel %vm1105, %v1097, %v1102
    %v1107 = vrsqrt.pop %v832
    %v1108 = vmul.f32 %v1107, %v832
    %v1109 = vmul.f32 %v1108, %v1107
    %v1110 = vmul.f32 0.5, %v1109
    %v1111 = vsub.f32 1.5, %v1110
    %v1112 = vmul.f32 %v1107, %v1111
    %vm1113 = vweird.f32 %v832
    %vm1114 = vweird.f32 %v1107
    %vm1115 = vmor %vm1113, %vm1114
    %v1116 = vsel %vm1115, %v1107, %v1112
    %v1117 = vrsqrt.pop %v833
    %v1118 = vmul.f32 %v1117, %v833
    %v1119 = vmul.f32 %v1118, %v1117
    %v1120 = vmul.f32 0.5, %v1119
    %v1121 = vsub.f32 1.5, %v1120
    %v1122 = vmul.f32 %v1117, %v1121
    %vm1123 = vweird.f32 %v833
    %vm1124 = vweird.f32 %v1117
    %vm1125 = vmor %vm1123, %vm1124
    %v1126 = vsel %vm1125, %v1117, %v1122
    %v1127 = vrsqrt.pop %v834
    %v1128 = vmul.f32 %v1127, %v834
    %v1129 = vmul.f32 %v1128, %v1127
    %v1130 = vmul.f32 0.5, %v1129
    %v1131 = vsub.f32 1.5, %v1130
    %v1132 = vmul.f32 %v1127, %v1131
    %vm1133 = vweird.f32 %v834
    %vm1134 = vweird.f32 %v1127
    %vm1135 = vmor %vm1133, %vm1134
    %v1136 = vsel %vm1135, %v1127, %v1132
    %v1137 = vrsqrt.pop %v835
    %v1138 = vmul.f32 %v1137, %v835
    %v1139 = vmul.f32 %v1138, %v1137
    %v1140 = vmul.f32 0.5, %v1139
    %v1141 = vsub.f32 1.5, %v1140
    %v1142 = vmul.f32 %v1137, %v1141
    %vm1143 = vweird.f32 %v835
    %vm1144 = vweird.f32 %v1137
    %vm1145 = vmor %vm1143, %vm1144
    %v1146 = vsel %vm1145, %v1137, %v1142
    %v1147 = vrsqrt.pop %v836
    %v1148 = vmul.f32 %v1147, %v836
    %v1149 = vmul.f32 %v1148, %v1147
    %v1150 = vmul.f32 0.5, %v1149
    %v1151 = vsub.f32 1.5, %v1150
    %v1152 = vmul.f32 %v1147, %v1151
    %vm1153 = vweird.f32 %v836
    %vm1154 = vweird.f32 %v1147
    %vm1155 = vmor %vm1153, %vm1154
    %v1156 = vsel %vm1155, %v1147, %v1152
    %v1157 = vmul.f32 %v613, %v846
    %v1158 = vmul.f32 %v614, %v856
    %v1159 = vmul.f32 %v615, %v866
    %v1160 = vmul.f32 %v616, %v876
    %v1161 = vmul.f32 %v617, %v886
    %v1162 = vmul.f32 %v618, %v896
    %v1163 = vmul.f32 %v619, %v906
    %v1164 = vmul.f32 %v620, %v916
    %v1165 = vmul.f32 %v621, %v926
    %v1166 = vmul.f32 %v622, %v936
    %v1167 = vmul.f32 %v623, %v946
    %v1168 = vmul.f32 %v624, %v956
    %v1169 = vmul.f32 %v625, %v966
    %v1170 = vmul.f32 %v626, %v976
    %v1171 = vmul.f32 %v627, %v986
    %v1172 = vmul.f32 %v628, %v996
    %v1173 = vmul.f32 %v629, %v1006
    %v1174 = vmul.f32 %v630, %v1016
    %v1175 = vmul.f32 %v631, %v1026
    %v1176 = vmul.f32 %v632, %v1036
    %v1177 = vmul.f32 %v633, %v1046
    %v1178 = vmul.f32 %v634, %v1056
    %v1179 = vmul.f32 %v635, %v1066
    %v1180 = vmul.f32 %v636, %v1076
    %v1181 = vmul.f32 %v637, %v1086
    %v1182 = vmul.f32 %v638, %v1096
    %v1183 = vmul.f32 %v639, %v1106
    %v1184 = vmul.f32 %v640, %v1116
    %v1185 = vmul.f32 %v641, %v1126
    %v1186 = vmul.f32 %v642, %v1136
    %v1187 = vmul.f32 %v643, %v1146
    %v1188 = vmul.f32 %v644, %v1156
    %v1189 = vld [vmem:[%s4] sm:$0x1]
    %v1191 = vperm.slane %v1189, 0
    %v1193 = vmul.f32 %v1157, %v1191
    %v1194 = vmul.f32 %v1158, %v1191
    %v1195 = vmul.f32 %v1159, %v1191
    %v1196 = vmul.f32 %v1160, %v1191
    %v1197 = vmul.f32 %v1161, %v1191
    %v1198 = vmul.f32 %v1162, %v1191
    %v1199 = vmul.f32 %v1163, %v1191
    %v1200 = vmul.f32 %v1164, %v1191
    %v1201 = vmul.f32 %v1165, %v1191
    %v1202 = vmul.f32 %v1166, %v1191
    %v1203 = vmul.f32 %v1167, %v1191
    %v1204 = vmul.f32 %v1168, %v1191
    %v1205 = vmul.f32 %v1169, %v1191
    %v1206 = vmul.f32 %v1170, %v1191
    %v1207 = vmul.f32 %v1171, %v1191
    %v1208 = vmul.f32 %v1172, %v1191
    %v1209 = vmul.f32 %v1173, %v1191
    %v1210 = vmul.f32 %v1174, %v1191
    %v1211 = vmul.f32 %v1175, %v1191
    %v1212 = vmul.f32 %v1176, %v1191
    %v1213 = vmul.f32 %v1177, %v1191
    %v1214 = vmul.f32 %v1178, %v1191
    %v1215 = vmul.f32 %v1179, %v1191
    %v1216 = vmul.f32 %v1180, %v1191
    %v1217 = vmul.f32 %v1181, %v1191
    %v1218 = vmul.f32 %v1182, %v1191
    %v1219 = vmul.f32 %v1183, %v1191
    %v1220 = vmul.f32 %v1184, %v1191
    %v1221 = vmul.f32 %v1185, %v1191
    %v1222 = vmul.f32 %v1186, %v1191
    %v1223 = vmul.f32 %v1187, %v1191
    %v1224 = vmul.f32 %v1188, %v1191
    %v1225 = vld [vmem:[%s5] sm:$0x1]
    %v1227 = vperm.slane %v1225, 0
    %v1229 = vadd.f32 %v1193, %v1227
    %v1230 = vadd.f32 %v1194, %v1227
    %v1231 = vadd.f32 %v1195, %v1227
    %v1232 = vadd.f32 %v1196, %v1227
    %v1233 = vadd.f32 %v1197, %v1227
    %v1234 = vadd.f32 %v1198, %v1227
    %v1235 = vadd.f32 %v1199, %v1227
    %v1236 = vadd.f32 %v1200, %v1227
    %v1237 = vadd.f32 %v1201, %v1227
    %v1238 = vadd.f32 %v1202, %v1227
    %v1239 = vadd.f32 %v1203, %v1227
    %v1240 = vadd.f32 %v1204, %v1227
    %v1241 = vadd.f32 %v1205, %v1227
    %v1242 = vadd.f32 %v1206, %v1227
    %v1243 = vadd.f32 %v1207, %v1227
    %v1244 = vadd.f32 %v1208, %v1227
    %v1245 = vadd.f32 %v1209, %v1227
    %v1246 = vadd.f32 %v1210, %v1227
    %v1247 = vadd.f32 %v1211, %v1227
    %v1248 = vadd.f32 %v1212, %v1227
    %v1249 = vadd.f32 %v1213, %v1227
    %v1250 = vadd.f32 %v1214, %v1227
    %v1251 = vadd.f32 %v1215, %v1227
    %v1252 = vadd.f32 %v1216, %v1227
    %v1253 = vadd.f32 %v1217, %v1227
    %v1254 = vadd.f32 %v1218, %v1227
    %v1255 = vadd.f32 %v1219, %v1227
    %v1256 = vadd.f32 %v1220, %v1227
    %v1257 = vadd.f32 %v1221, %v1227
    %v1258 = vadd.f32 %v1222, %v1227
    %v1259 = vadd.f32 %v1223, %v1227
    %v1260 = vadd.f32 %v1224, %v1227
    %v1261 = vld [vmem:[%s6] sm:$0xff]
    %v1262 = vld [vmem:[%s6 + $0x8] sm:$0xff]
    %v1263 = vld [vmem:[%s6 + $0x10] sm:$0xff]
    %v1264 = vld [vmem:[%s6 + $0x18] sm:$0xff]
    %v1266 = vsel %vm85, %v1229, 0
    %v1269 = vsel %vm85, %v1230, 0
    %v1272 = vsel %vm85, %v1231, 0
    %v1275 = vsel %vm85, %v1232, 0
    %v1278 = vsel %vm85, %v1233, 0
    %v1281 = vsel %vm85, %v1234, 0
    %v1284 = vsel %vm85, %v1235, 0
    %v1287 = vsel %vm85, %v1236, 0
    %v1290 = vsel %vm85, %v1237, 0
    %v1293 = vsel %vm85, %v1238, 0
    %v1296 = vsel %vm85, %v1239, 0
    %v1299 = vsel %vm85, %v1240, 0
    %v1302 = vsel %vm85, %v1241, 0
    %v1305 = vsel %vm85, %v1242, 0
    %v1308 = vsel %vm85, %v1243, 0
    %v1311 = vsel %vm85, %v1244, 0
    %v1314 = vsel %vm85, %v1245, 0
    %v1317 = vsel %vm85, %v1246, 0
    %v1320 = vsel %vm85, %v1247, 0
    %v1323 = vsel %vm85, %v1248, 0
    %v1326 = vsel %vm85, %v1249, 0
    %v1329 = vsel %vm85, %v1250, 0
    %v1332 = vsel %vm85, %v1251, 0
    %v1335 = vsel %vm85, %v1252, 0
    %v1338 = vsel %vm85, %v1253, 0
    %v1341 = vsel %vm85, %v1254, 0
    %v1344 = vsel %vm85, %v1255, 0
    %v1347 = vsel %vm85, %v1256, 0
    %v1350 = vsel %vm85, %v1257, 0
    %v1353 = vsel %vm85, %v1258, 0
    %v1356 = vsel %vm85, %v1259, 0
    %v1359 = vsel %vm85, %v1260, 0
    %1361 = vmatpush.msra.mxu0 0.0
    %1362 = vmatpush.msra.mxu0 0.0
    %1363 = vmatpush.msra.mxu0 0.0
    %1364 = vmatpush.msra.mxu0 0.0
    %1365 = vmatpush.msra.mxu0 0.0
    %1366 = vmatpush.msra.mxu0 0.0
    %1367 = vmatpush.msra.mxu0 0.0
    %1368 = vmatpush.msra.mxu0 0.0
    %1369 = vmatpush.msra.mxu0 0.0
    %1370 = vmatpush.msra.mxu0 0.0
    %1371 = vmatpush.msra.mxu0 0.0
    %1372 = vmatpush.msra.mxu0 0.0
    %1373 = vmatpush.msra.mxu0 %v1264
    %1374 = vmatpush.msra.mxu0 %v1263
    %1375 = vmatpush.msra.mxu0 %v1262
    %1376 = vmatpush.msra.mxu0 %v1261
    %1377 = vmatmul.f32.gmra.mxu0 %v1266
    %v1378 = vpop.f32.mrf.mxu0
    %v1379 = vadd.f32 0.0, %v1378
    %1380 = vmatmul.f32.gmra.mxu0 %v1269
    %v1381 = vpop.f32.mrf.mxu0
    %v1382 = vadd.f32 0.0, %v1381
    %1383 = vmatmul.f32.gmra.mxu0 %v1272
    %v1384 = vpop.f32.mrf.mxu0
    %v1385 = vadd.f32 0.0, %v1384
    %1386 = vmatmul.f32.gmra.mxu0 %v1275
    %v1387 = vpop.f32.mrf.mxu0
    %v1388 = vadd.f32 0.0, %v1387
    %1389 = vmatmul.f32.gmra.mxu0 %v1278
    %v1390 = vpop.f32.mrf.mxu0
    %v1391 = vadd.f32 0.0, %v1390
    %1392 = vmatmul.f32.gmra.mxu0 %v1281
    %v1393 = vpop.f32.mrf.mxu0
    %v1394 = vadd.f32 0.0, %v1393
    %1395 = vmatmul.f32.gmra.mxu0 %v1284
    %v1396 = vpop.f32.mrf.mxu0
    %v1397 = vadd.f32 0.0, %v1396
    %1398 = vmatmul.f32.gmra.mxu0 %v1287
    %v1399 = vpop.f32.mrf.mxu0
    %v1400 = vadd.f32 0.0, %v1399
    %1401 = vmatmul.f32.gmra.mxu0 %v1290
    %v1402 = vpop.f32.mrf.mxu0
    %v1403 = vadd.f32 0.0, %v1402
    %1404 = vmatmul.f32.gmra.mxu0 %v1293
    %v1405 = vpop.f32.mrf.mxu0
    %v1406 = vadd.f32 0.0, %v1405
    %1407 = vmatmul.f32.gmra.mxu0 %v1296
    %v1408 = vpop.f32.mrf.mxu0
    %v1409 = vadd.f32 0.0, %v1408
    %1410 = vmatmul.f32.gmra.mxu0 %v1299
    %v1411 = vpop.f32.mrf.mxu0
    %v1412 = vadd.f32 0.0, %v1411
    %1413 = vmatmul.f32.gmra.mxu0 %v1302
    %v1414 = vpop.f32.mrf.mxu0
    %v1415 = vadd.f32 0.0, %v1414
    %1416 = vmatmul.f32.gmra.mxu0 %v1305
    %v1417 = vpop.f32.mrf.mxu0
    %v1418 = vadd.f32 0.0, %v1417
    %1419 = vmatmul.f32.gmra.mxu0 %v1308
    %v1420 = vpop.f32.mrf.mxu0
    %v1421 = vadd.f32 0.0, %v1420
    %1422 = vmatmul.f32.gmra.mxu0 %v1311
    %v1423 = vpop.f32.mrf.mxu0
    %v1424 = vadd.f32 0.0, %v1423
    %1425 = vmatmul.f32.gmra.mxu0 %v1314
    %v1426 = vpop.f32.mrf.mxu0
    %v1427 = vadd.f32 0.0, %v1426
    %1428 = vmatmul.f32.gmra.mxu0 %v1317
    %v1429 = vpop.f32.mrf.mxu0
    %v1430 = vadd.f32 0.0, %v1429
    %1431 = vmatmul.f32.gmra.mxu0 %v1320
    %v1432 = vpop.f32.mrf.mxu0
    %v1433 = vadd.f32 0.0, %v1432
    %1434 = vmatmul.f32.gmra.mxu0 %v1323
    %v1435 = vpop.f32.mrf.mxu0
    %v1436 = vadd.f32 0.0, %v1435
    %1437 = vmatmul.f32.gmra.mxu0 %v1326
    %v1438 = vpop.f32.mrf.mxu0
    %v1439 = vadd.f32 0.0, %v1438
    %1440 = vmatmul.f32.gmra.mxu0 %v1329
    %v1441 = vpop.f32.mrf.mxu0
    %v1442 = vadd.f32 0.0, %v1441
    %1443 = vmatmul.f32.gmra.mxu0 %v1332
    %v1444 = vpop.f32.mrf.mxu0
    %v1445 = vadd.f32 0.0, %v1444
    %1446 = vmatmul.f32.gmra.mxu0 %v1335
    %v1447 = vpop.f32.mrf.mxu0
    %v1448 = vadd.f32 0.0, %v1447
    %1449 = vmatmul.f32.gmra.mxu0 %v1338
    %v1450 = vpop.f32.mrf.mxu0
    %v1451 = vadd.f32 0.0, %v1450
    %1452 = vmatmul.f32.gmra.mxu0 %v1341
    %v1453 = vpop.f32.mrf.mxu0
    %v1454 = vadd.f32 0.0, %v1453
    %1455 = vmatmul.f32.gmra.mxu0 %v1344
    %v1456 = vpop.f32.mrf.mxu0
    %v1457 = vadd.f32 0.0, %v1456
    %1458 = vmatmul.f32.gmra.mxu0 %v1347
    %v1459 = vpop.f32.mrf.mxu0
    %v1460 = vadd.f32 0.0, %v1459
    %1461 = vmatmul.f32.gmra.mxu0 %v1350
    %v1462 = vpop.f32.mrf.mxu0
    %v1463 = vadd.f32 0.0, %v1462
    %1464 = vmatmul.f32.gmra.mxu0 %v1353
    %v1465 = vpop.f32.mrf.mxu0
    %v1466 = vadd.f32 0.0, %v1465
    %1467 = vmatmul.f32.gmra.mxu0 %v1356
    %v1468 = vpop.f32.mrf.mxu0
    %v1469 = vadd.f32 0.0, %v1468
    %1470 = vmatmul.f32.gmra.mxu0 %v1359
    %v1471 = vpop.f32.mrf.mxu0
    %v1472 = vadd.f32 0.0, %v1471
    %1473 = vdwg.mxu0
    %v1474 = vld [vmem:[%s1] sm:$0xff]
    %v1475 = vld [vmem:[%s1 + $0x8] sm:$0xff]
    %v1476 = vld [vmem:[%s1 + $0x10] sm:$0xff]
    %v1477 = vld [vmem:[%s1 + $0x18] sm:$0xff]
    %v1478 = vld [vmem:[%s1 + $0x20] sm:$0xff]
    %v1479 = vld [vmem:[%s1 + $0x28] sm:$0xff]
    %v1480 = vld [vmem:[%s1 + $0x30] sm:$0xff]
    %v1481 = vld [vmem:[%s1 + $0x38] sm:$0xff]
    %v1482 = vld [vmem:[%s1 + $0x40] sm:$0xff]
    %v1483 = vld [vmem:[%s1 + $0x48] sm:$0xff]
    %v1484 = vld [vmem:[%s1 + $0x50] sm:$0xff]
    %v1485 = vld [vmem:[%s1 + $0x58] sm:$0xff]
    %v1486 = vld [vmem:[%s1 + $0x60] sm:$0xff]
    %v1487 = vld [vmem:[%s1 + $0x68] sm:$0xff]
    %v1488 = vld [vmem:[%s1 + $0x70] sm:$0xff]
    %v1489 = vld [vmem:[%s1 + $0x78] sm:$0xff]
    %v1490 = vld [vmem:[%s1 + $0x80] sm:$0xff]
    %v1491 = vld [vmem:[%s1 + $0x88] sm:$0xff]
    %v1492 = vld [vmem:[%s1 + $0x90] sm:$0xff]
    %v1493 = vld [vmem:[%s1 + $0x98] sm:$0xff]
    %v1494 = vld [vmem:[%s1 + $0xa0] sm:$0xff]
    %v1495 = vld [vmem:[%s1 + $0xa8] sm:$0xff]
    %v1496 = vld [vmem:[%s1 + $0xb0] sm:$0xff]
    %v1497 = vld [vmem:[%s1 + $0xb8] sm:$0xff]
    %v1498 = vld [vmem:[%s1 + $0xc0] sm:$0xff]
    %v1499 = vld [vmem:[%s1 + $0xc8] sm:$0xff]
    %v1500 = vld [vmem:[%s1 + $0xd0] sm:$0xff]
    %v1501 = vld [vmem:[%s1 + $0xd8] sm:$0xff]
    %v1502 = vld [vmem:[%s1 + $0xe0] sm:$0xff]
    %v1503 = vld [vmem:[%s1 + $0xe8] sm:$0xff]
    %v1504 = vld [vmem:[%s1 + $0xf0] sm:$0xff]
    %v1505 = vld [vmem:[%s1 + $0xf8] sm:$0xff]
    %1507 = vset.pattern.permute.xlu0 0
    %1508 = vperm.xlu0 %1507, %v1474
    %v1509 = vpop.permute.xlu0 %1508
    %1512 = vset.pattern.permute.xlu0 0
    %1513 = vperm.xlu0 %1512, %v1475
    %v1514 = vpop.permute.xlu0 %1513
    %1517 = vset.pattern.permute.xlu0 0
    %1518 = vperm.xlu0 %1517, %v1476
    %v1519 = vpop.permute.xlu0 %1518
    %1522 = vset.pattern.permute.xlu0 0
    %1523 = vperm.xlu0 %1522, %v1477
    %v1524 = vpop.permute.xlu0 %1523
    %1527 = vset.pattern.permute.xlu0 0
    %1528 = vperm.xlu0 %1527, %v1478
    %v1529 = vpop.permute.xlu0 %1528
    %1532 = vset.pattern.permute.xlu0 0
    %1533 = vperm.xlu0 %1532, %v1479
    %v1534 = vpop.permute.xlu0 %1533
    %1537 = vset.pattern.permute.xlu0 0
    %1538 = vperm.xlu0 %1537, %v1480
    %v1539 = vpop.permute.xlu0 %1538
    %1542 = vset.pattern.permute.xlu0 0
    %1543 = vperm.xlu0 %1542, %v1481
    %v1544 = vpop.permute.xlu0 %1543
    %1547 = vset.pattern.permute.xlu0 0
    %1548 = vperm.xlu0 %1547, %v1482
    %v1549 = vpop.permute.xlu0 %1548
    %1552 = vset.pattern.permute.xlu0 0
    %1553 = vperm.xlu0 %1552, %v1483
    %v1554 = vpop.permute.xlu0 %1553
    %1557 = vset.pattern.permute.xlu0 0
    %1558 = vperm.xlu0 %1557, %v1484
    %v1559 = vpop.permute.xlu0 %1558
    %1562 = vset.pattern.permute.xlu0 0
    %1563 = vperm.xlu0 %1562, %v1485
    %v1564 = vpop.permute.xlu0 %1563
    %1567 = vset.pattern.permute.xlu0 0
    %1568 = vperm.xlu0 %1567, %v1486
    %v1569 = vpop.permute.xlu0 %1568
    %1572 = vset.pattern.permute.xlu0 0
    %1573 = vperm.xlu0 %1572, %v1487
    %v1574 = vpop.permute.xlu0 %1573
    %1577 = vset.pattern.permute.xlu0 0
    %1578 = vperm.xlu0 %1577, %v1488
    %v1579 = vpop.permute.xlu0 %1578
    %1582 = vset.pattern.permute.xlu0 0
    %1583 = vperm.xlu0 %1582, %v1489
    %v1584 = vpop.permute.xlu0 %1583
    %1587 = vset.pattern.permute.xlu0 0
    %1588 = vperm.xlu0 %1587, %v1490
    %v1589 = vpop.permute.xlu0 %1588
    %1592 = vset.pattern.permute.xlu0 0
    %1593 = vperm.xlu0 %1592, %v1491
    %v1594 = vpop.permute.xlu0 %1593
    %1597 = vset.pattern.permute.xlu0 0
    %1598 = vperm.xlu0 %1597, %v1492
    %v1599 = vpop.permute.xlu0 %1598
    %1602 = vset.pattern.permute.xlu0 0
    %1603 = vperm.xlu0 %1602, %v1493
    %v1604 = vpop.permute.xlu0 %1603
    %1607 = vset.pattern.permute.xlu0 0
    %1608 = vperm.xlu0 %1607, %v1494
    %v1609 = vpop.permute.xlu0 %1608
    %1612 = vset.pattern.permute.xlu0 0
    %1613 = vperm.xlu0 %1612, %v1495
    %v1614 = vpop.permute.xlu0 %1613
    %1617 = vset.pattern.permute.xlu0 0
    %1618 = vperm.xlu0 %1617, %v1496
    %v1619 = vpop.permute.xlu0 %1618
    %1622 = vset.pattern.permute.xlu0 0
    %1623 = vperm.xlu0 %1622, %v1497
    %v1624 = vpop.permute.xlu0 %1623
    %1627 = vset.pattern.permute.xlu0 0
    %1628 = vperm.xlu0 %1627, %v1498
    %v1629 = vpop.permute.xlu0 %1628
    %1632 = vset.pattern.permute.xlu0 0
    %1633 = vperm.xlu0 %1632, %v1499
    %v1634 = vpop.permute.xlu0 %1633
    %1637 = vset.pattern.permute.xlu0 0
    %1638 = vperm.xlu0 %1637, %v1500
    %v1639 = vpop.permute.xlu0 %1638
    %1642 = vset.pattern.permute.xlu0 0
    %1643 = vperm.xlu0 %1642, %v1501
    %v1644 = vpop.permute.xlu0 %1643
    %1647 = vset.pattern.permute.xlu0 0
    %1648 = vperm.xlu0 %1647, %v1502
    %v1649 = vpop.permute.xlu0 %1648
    %1652 = vset.pattern.permute.xlu0 0
    %1653 = vperm.xlu0 %1652, %v1503
    %v1654 = vpop.permute.xlu0 %1653
    %1657 = vset.pattern.permute.xlu0 0
    %1658 = vperm.xlu0 %1657, %v1504
    %v1659 = vpop.permute.xlu0 %1658
    %1662 = vset.pattern.permute.xlu0 0
    %1663 = vperm.xlu0 %1662, %v1505
    %v1664 = vpop.permute.xlu0 %1663
    %v1666 = vmul.f32 %v1509, %v1379
    %v1667 = vmul.f32 %v1514, %v1382
    %v1668 = vmul.f32 %v1519, %v1385
    %v1669 = vmul.f32 %v1524, %v1388
    %v1670 = vmul.f32 %v1529, %v1391
    %v1671 = vmul.f32 %v1534, %v1394
    %v1672 = vmul.f32 %v1539, %v1397
    %v1673 = vmul.f32 %v1544, %v1400
    %v1674 = vmul.f32 %v1549, %v1403
    %v1675 = vmul.f32 %v1554, %v1406
    %v1676 = vmul.f32 %v1559, %v1409
    %v1677 = vmul.f32 %v1564, %v1412
    %v1678 = vmul.f32 %v1569, %v1415
    %v1679 = vmul.f32 %v1574, %v1418
    %v1680 = vmul.f32 %v1579, %v1421
    %v1681 = vmul.f32 %v1584, %v1424
    %v1682 = vmul.f32 %v1589, %v1427
    %v1683 = vmul.f32 %v1594, %v1430
    %v1684 = vmul.f32 %v1599, %v1433
    %v1685 = vmul.f32 %v1604, %v1436
    %v1686 = vmul.f32 %v1609, %v1439
    %v1687 = vmul.f32 %v1614, %v1442
    %v1688 = vmul.f32 %v1619, %v1445
    %v1689 = vmul.f32 %v1624, %v1448
    %v1690 = vmul.f32 %v1629, %v1451
    %v1691 = vmul.f32 %v1634, %v1454
    %v1692 = vmul.f32 %v1639, %v1457
    %v1693 = vmul.f32 %v1644, %v1460
    %v1694 = vmul.f32 %v1649, %v1463
    %v1695 = vmul.f32 %v1654, %v1466
    %v1696 = vmul.f32 %v1659, %v1469
    %v1697 = vmul.f32 %v1664, %v1472
    %1698 = vxpose.xlu0.b32.start [1/16] %v1379, 128
    %1699 = vxpose.xlu0.b32.cont [2/16] 0.0, 128
    %1700 = vxpose.xlu0.b32.cont [3/16] 0.0, 128
    %1701 = vxpose.xlu0.b32.cont [4/16] 0.0, 128
    %1702 = vxpose.xlu0.b32.cont [5/16] 0.0, 128
    %1703 = vxpose.xlu0.b32.cont [6/16] 0.0, 128
    %1704 = vxpose.xlu0.b32.cont [7/16] 0.0, 128
    %1705 = vxpose.xlu0.b32.cont [8/16] 0.0, 128
    %1706 = vxpose.xlu0.b32.cont [9/16] 0.0, 128
    %1707 = vxpose.xlu0.b32.cont [10/16] 0.0, 128
    %1708 = vxpose.xlu0.b32.cont [11/16] 0.0, 128
    %1709 = vxpose.xlu0.b32.cont [12/16] 0.0, 128
    %1710 = vxpose.xlu0.b32.cont [13/16] 0.0, 128
    %1711 = vxpose.xlu0.b32.cont [14/16] 0.0, 128
    %1712 = vxpose.xlu0.b32.cont [15/16] 0.0, 128
    %1713 = vxpose.xlu0.b32.end [16/16] 0.0, 128
    %v1714 = vpop.trf.xlu0
    %v1715 = vpop.trf.xlu0
    %v1716 = vpop.trf.xlu0
    %v1717 = vpop.trf.xlu0
    %v1718 = vpop.trf.xlu0
    %v1719 = vpop.trf.xlu0
    %v1720 = vpop.trf.xlu0
    %v1721 = vpop.trf.xlu0
    %v1722 = vpop.trf.xlu0
    %v1723 = vpop.trf.xlu0
    %v1724 = vpop.trf.xlu0
    %v1725 = vpop.trf.xlu0
    %v1726 = vpop.trf.xlu0
    %v1727 = vpop.trf.xlu0
    %v1728 = vpop.trf.xlu0
    %v1729 = vpop.trf.xlu0
    %1731 = vrot.lane.b32.xlu0 %v1666, 96
    %v1732 = vpop.permute.xlu0 %1731
    %vm1734 = vcmask 64512
    %v1736 = vsel %vm1734, %v1714, 0
    %v1739 = vsel %vm1734, %v1715, 0
    %v1742 = vsel %vm1734, %v1716, 0
    %v1745 = vsel %vm1734, %v1717, 0
    %1747 = vmatpush.msra.mxu0 0.0
    %1748 = vmatpush.msra.mxu0 0.0
    %1749 = vmatpush.msra.mxu0 0.0
    %1750 = vmatpush.msra.mxu0 0.0
    %1751 = vmatpush.msra.mxu0 0.0
    %1752 = vmatpush.msra.mxu0 0.0
    %1753 = vmatpush.msra.mxu0 0.0
    %1754 = vmatpush.msra.mxu0 0.0
    %1755 = vmatpush.msra.mxu0 0.0
    %1756 = vmatpush.msra.mxu0 0.0
    %1757 = vmatpush.msra.mxu0 0.0
    %1758 = vmatpush.msra.mxu0 0.0
    %1759 = vmatpush.msra.mxu0 0.0
    %1760 = vmatpush.msra.mxu0 0.0
    %1761 = vmatpush.msra.mxu0 0.0
    %1762 = vmatpush.msra.mxu0 %v1732
    %1763 = vmatmul.f32.gmra.mxu0 %v1736
    %v1764 = vpop.f32.mrf.mxu0
    %v1765 = vadd.f32 0.0, %v1764
    %1766 = vmatmul.f32.gmra.mxu0 %v1739
    %v1767 = vpop.f32.mrf.mxu0
    %v1768 = vadd.f32 0.0, %v1767
    %1769 = vmatmul.f32.gmra.mxu0 %v1742
    %v1770 = vpop.f32.mrf.mxu0
    %v1771 = vadd.f32 0.0, %v1770
    %1772 = vmatmul.f32.gmra.mxu0 %v1745
    %v1773 = vpop.f32.mrf.mxu0
    %v1774 = vadd.f32 0.0, %v1773
    %1775 = vdwg.mxu0
    %1776 = vxpose.xlu0.b32.start [1/16] %v1382, 128
    %1777 = vxpose.xlu0.b32.cont [2/16] 0.0, 128
    %1778 = vxpose.xlu0.b32.cont [3/16] 0.0, 128
    %1779 = vxpose.xlu0.b32.cont [4/16] 0.0, 128
    %1780 = vxpose.xlu0.b32.cont [5/16] 0.0, 128
    %1781 = vxpose.xlu0.b32.cont [6/16] 0.0, 128
    %1782 = vxpose.xlu0.b32.cont [7/16] 0.0, 128
    %1783 = vxpose.xlu0.b32.cont [8/16] 0.0, 128
    %1784 = vxpose.xlu0.b32.cont [9/16] 0.0, 128
    %1785 = vxpose.xlu0.b32.cont [10/16] 0.0, 128
    %1786 = vxpose.xlu0.b32.cont [11/16] 0.0, 128
    %1787 = vxpose.xlu0.b32.cont [12/16] 0.0, 128
    %1788 = vxpose.xlu0.b32.cont [13/16] 0.0, 128
    %1789 = vxpose.xlu0.b32.cont [14/16] 0.0, 128
    %1790 = vxpose.xlu0.b32.cont [15/16] 0.0, 128
    %1791 = vxpose.xlu0.b32.end [16/16] 0.0, 128
    %v1792 = vpop.trf.xlu0
    %v1793 = vpop.trf.xlu0
    %v1794 = vpop.trf.xlu0
    %v1795 = vpop.trf.xlu0
    %v1796 = vpop.trf.xlu0
    %v1797 = vpop.trf.xlu0
    %v1798 = vpop.trf.xlu0
    %v1799 = vpop.trf.xlu0
    %v1800 = vpop.trf.xlu0
    %v1801 = vpop.trf.xlu0
    %v1802 = vpop.trf.xlu0
    %v1803 = vpop.trf.xlu0
    %v1804 = vpop.trf.xlu0
    %v1805 = vpop.trf.xlu0
    %v1806 = vpop.trf.xlu0
    %v1807 = vpop.trf.xlu0
    %1809 = vrot.lane.b32.xlu0 %v1667, 96
    %v1810 = vpop.permute.xlu0 %1809
    %v1813 = vsel %vm1734, %v1792, 0
    %v1816 = vsel %vm1734, %v1793, 0
    %v1819 = vsel %vm1734, %v1794, 0
    %v1822 = vsel %vm1734, %v1795, 0
    %1824 = vmatpush.msra.mxu0 0.0
    %1825 = vmatpush.msra.mxu0 0.0
    %1826 = vmatpush.msra.mxu0 0.0
    %1827 = vmatpush.msra.mxu0 0.0
    %1828 = vmatpush.msra.mxu0 0.0
    %1829 = vmatpush.msra.mxu0 0.0
    %1830 = vmatpush.msra.mxu0 0.0
    %1831 = vmatpush.msra.mxu0 0.0
    %1832 = vmatpush.msra.mxu0 0.0
    %1833 = vmatpush.msra.mxu0 0.0
    %1834 = vmatpush.msra.mxu0 0.0
    %1835 = vmatpush.msra.mxu0 0.0
    %1836 = vmatpush.msra.mxu0 0.0
    %1837 = vmatpush.msra.mxu0 0.0
    %1838 = vmatpush.msra.mxu0 0.0
    %1839 = vmatpush.msra.mxu0 %v1810
    %1840 = vmatmul.f32.gmra.mxu0 %v1813
    %v1841 = vpop.f32.mrf.mxu0
    %v1842 = vadd.f32 0.0, %v1841
    %1843 = vmatmul.f32.gmra.mxu0 %v1816
    %v1844 = vpop.f32.mrf.mxu0
    %v1845 = vadd.f32 0.0, %v1844
    %1846 = vmatmul.f32.gmra.mxu0 %v1819
    %v1847 = vpop.f32.mrf.mxu0
    %v1848 = vadd.f32 0.0, %v1847
    %1849 = vmatmul.f32.gmra.mxu0 %v1822
    %v1850 = vpop.f32.mrf.mxu0
    %v1851 = vadd.f32 0.0, %v1850
    %1852 = vdwg.mxu0
    %1853 = vxpose.xlu0.b32.start [1/16] %v1385, 128
    %1854 = vxpose.xlu0.b32.cont [2/16] 0.0, 128
    %1855 = vxpose.xlu0.b32.cont [3/16] 0.0, 128
    %1856 = vxpose.xlu0.b32.cont [4/16] 0.0, 128
    %1857 = vxpose.xlu0.b32.cont [5/16] 0.0, 128
    %1858 = vxpose.xlu0.b32.cont [6/16] 0.0, 128
    %1859 = vxpose.xlu0.b32.cont [7/16] 0.0, 128
    %1860 = vxpose.xlu0.b32.cont [8/16] 0.0, 128
    %1861 = vxpose.xlu0.b32.cont [9/16] 0.0, 128
    %1862 = vxpose.xlu0.b32.cont [10/16] 0.0, 128
    %1863 = vxpose.xlu0.b32.cont [11/16] 0.0, 128
    %1864 = vxpose.xlu0.b32.cont [12/16] 0.0, 128
    %1865 = vxpose.xlu0.b32.cont [13/16] 0.0, 128
    %1866 = vxpose.xlu0.b32.cont [14/16] 0.0, 128
    %1867 = vxpose.xlu0.b32.cont [15/16] 0.0, 128
    %1868 = vxpose.xlu0.b32.end [16/16] 0.0, 128
    %v1869 = vpop.trf.xlu0
    %v1870 = vpop.trf.xlu0
    %v1871 = vpop.trf.xlu0
    %v1872 = vpop.trf.xlu0
    %v1873 = vpop.trf.xlu0
    %v1874 = vpop.trf.xlu0
    %v1875 = vpop.trf.xlu0
    %v1876 = vpop.trf.xlu0
    %v1877 = vpop.trf.xlu0
    %v1878 = vpop.trf.xlu0
    %v1879 = vpop.trf.xlu0
    %v1880 = vpop.trf.xlu0
    %v1881 = vpop.trf.xlu0
    %v1882 = vpop.trf.xlu0
    %v1883 = vpop.trf.xlu0
    %v1884 = vpop.trf.xlu0
    %1886 = vrot.lane.b32.xlu0 %v1668, 96
    %v1887 = vpop.permute.xlu0 %1886
    %v1890 = vsel %vm1734, %v1869, 0
    %v1893 = vsel %vm1734, %v1870, 0
    %v1896 = vsel %vm1734, %v1871, 0
    %v1899 = vsel %vm1734, %v1872, 0
    %1901 = vmatpush.msra.mxu0 0.0
    %1902 = vmatpush.msra.mxu0 0.0
    %1903 = vmatpush.msra.mxu0 0.0
    %1904 = vmatpush.msra.mxu0 0.0
    %1905 = vmatpush.msra.mxu0 0.0
    %1906 = vmatpush.msra.mxu0 0.0
    %1907 = vmatpush.msra.mxu0 0.0
    %1908 = vmatpush.msra.mxu0 0.0
    %1909 = vmatpush.msra.mxu0 0.0
    %1910 = vmatpush.msra.mxu0 0.0
    %1911 = vmatpush.msra.mxu0 0.0
    %1912 = vmatpush.msra.mxu0 0.0
    %1913 = vmatpush.msra.mxu0 0.0
    %1914 = vmatpush.msra.mxu0 0.0
    %1915 = vmatpush.msra.mxu0 0.0
    %1916 = vmatpush.msra.mxu0 %v1887
    %1917 = vmatmul.f32.gmra.mxu0 %v1890
    %v1918 = vpop.f32.mrf.mxu0
    %v1919 = vadd.f32 0.0, %v1918
    %1920 = vmatmul.f32.gmra.mxu0 %v1893
    %v1921 = vpop.f32.mrf.mxu0
    %v1922 = vadd.f32 0.0, %v1921
    %1923 = vmatmul.f32.gmra.mxu0 %v1896
    %v1924 = vpop.f32.mrf.mxu0
    %v1925 = vadd.f32 0.0, %v1924
    %1926 = vmatmul.f32.gmra.mxu0 %v1899
    %v1927 = vpop.f32.mrf.mxu0
    %v1928 = vadd.f32 0.0, %v1927
    %1929 = vdwg.mxu0
    %1930 = vxpose.xlu0.b32.start [1/16] %v1388, 128
    %1931 = vxpose.xlu0.b32.cont [2/16] 0.0, 128
    %1932 = vxpose.xlu0.b32.cont [3/16] 0.0, 128
    %1933 = vxpose.xlu0.b32.cont [4/16] 0.0, 128
    %1934 = vxpose.xlu0.b32.cont [5/16] 0.0, 128
    %1935 = vxpose.xlu0.b32.cont [6/16] 0.0, 128
    %1936 = vxpose.xlu0.b32.cont [7/16] 0.0, 128
    %1937 = vxpose.xlu0.b32.cont [8/16] 0.0, 128
    %1938 = vxpose.xlu0.b32.cont [9/16] 0.0, 128
    %1939 = vxpose.xlu0.b32.cont [10/16] 0.0, 128
    %1940 = vxpose.xlu0.b32.cont [11/16] 0.0, 128
    %1941 = vxpose.xlu0.b32.cont [12/16] 0.0, 128
    %1942 = vxpose.xlu0.b32.cont [13/16] 0.0, 128
    %1943 = vxpose.xlu0.b32.cont [14/16] 0.0, 128
    %1944 = vxpose.xlu0.b32.cont [15/16] 0.0, 128
    %1945 = vxpose.xlu0.b32.end [16/16] 0.0, 128
    %v1946 = vpop.trf.xlu0
    %v1947 = vpop.trf.xlu0
    %v1948 = vpop.trf.xlu0
    %v1949 = vpop.trf.xlu0
    %v1950 = vpop.trf.xlu0
    %v1951 = vpop.trf.xlu0
    %v1952 = vpop.trf.xlu0
    %v1953 = vpop.trf.xlu0
    %v1954 = vpop.trf.xlu0
    %v1955 = vpop.trf.xlu0
    %v1956 = vpop.trf.xlu0
    %v1957 = vpop.trf.xlu0
    %v1958 = vpop.trf.xlu0
    %v1959 = vpop.trf.xlu0
    %v1960 = vpop.trf.xlu0
    %v1961 = vpop.trf.xlu0
    %1963 = vrot.lane.b32.xlu0 %v1669, 96
    %v1964 = vpop.permute.xlu0 %1963
    %v1967 = vsel %vm1734, %v1946, 0
    %v1970 = vsel %vm1734, %v1947, 0
    %v1973 = vsel %vm1734, %v1948, 0
    %v1976 = vsel %vm1734, %v1949, 0
    %1978 = vmatpush.msra.mxu0 0.0
    %1979 = vmatpush.msra.mxu0 0.0
    %1980 = vmatpush.msra.mxu0 0.0
    %1981 = vmatpush.msra.mxu0 0.0
    %1982 = vmatpush.msra.mxu0 0.0
    %1983 = vmatpush.msra.mxu0 0.0
    %1984 = vmatpush.msra.mxu0 0.0
    %1985 = vmatpush.msra.mxu0 0.0
    %1986 = vmatpush.msra.mxu0 0.0
    %1987 = vmatpush.msra.mxu0 0.0
    %1988 = vmatpush.msra.mxu0 0.0
    %1989 = vmatpush.msra.mxu0 0.0
    %1990 = vmatpush.msra.mxu0 0.0
    %1991 = vmatpush.msra.mxu0 0.0
    %1992 = vmatpush.msra.mxu0 0.0
    %1993 = vmatpush.msra.mxu0 %v1964
    %1994 = vmatmul.f32.gmra.mxu0 %v1967
    %v1995 = vpop.f32.mrf.mxu0
    %v1996 = vadd.f32 0.0, %v1995
    %1997 = vmatmul.f32.gmra.mxu0 %v1970
    %v1998 = vpop.f32.mrf.mxu0
    %v1999 = vadd.f32 0.0, %v1998
    %2000 = vmatmul.f32.gmra.mxu0 %v1973
    %v2001 = vpop.f32.mrf.mxu0
    %v2002 = vadd.f32 0.0, %v2001
    %2003 = vmatmul.f32.gmra.mxu0 %v1976
    %v2004 = vpop.f32.mrf.mxu0
    %v2005 = vadd.f32 0.0, %v2004
    %2006 = vdwg.mxu0
    %2007 = vxpose.xlu0.b32.start [1/16] %v1391, 128
    %2008 = vxpose.xlu0.b32.cont [2/16] 0.0, 128
    %2009 = vxpose.xlu0.b32.cont [3/16] 0.0, 128
    %2010 = vxpose.xlu0.b32.cont [4/16] 0.0, 128
    %2011 = vxpose.xlu0.b32.cont [5/16] 0.0, 128
    %2012 = vxpose.xlu0.b32.cont [6/16] 0.0, 128
    %2013 = vxpose.xlu0.b32.cont [7/16] 0.0, 128
    %2014 = vxpose.xlu0.b32.cont [8/16] 0.0, 128
    %2015 = vxpose.xlu0.b32.cont [9/16] 0.0, 128
    %2016 = vxpose.xlu0.b32.cont [10/16] 0.0, 128
    %2017 = vxpose.xlu0.b32.cont [11/16] 0.0, 128
    %2018 = vxpose.xlu0.b32.cont [12/16] 0.0, 128
    %2019 = vxpose.xlu0.b32.cont [13/16] 0.0, 128
    %2020 = vxpose.xlu0.b32.cont [14/16] 0.0, 128
    %2021 = vxpose.xlu0.b32.cont [15/16] 0.0, 128
    %2022 = vxpose.xlu0.b32.end [16/16] 0.0, 128
    %v2023 = vpop.trf.xlu0
    %v2024 = vpop.trf.xlu0
    %v2025 = vpop.trf.xlu0
    %v2026 = vpop.trf.xlu0
    %v2027 = vpop.trf.xlu0
    %v2028 = vpop.trf.xlu0
    %v2029 = vpop.trf.xlu0
    %v2030 = vpop.trf.xlu0
    %v2031 = vpop.trf.xlu0
    %v2032 = vpop.trf.xlu0
    %v2033 = vpop.trf.xlu0
    %v2034 = vpop.trf.xlu0
    %v2035 = vpop.trf.xlu0
    %v2036 = vpop.trf.xlu0
    %v2037 = vpop.trf.xlu0
    %v2038 = vpop.trf.xlu0
    %2040 = vrot.lane.b32.xlu0 %v1670, 96
    %v2041 = vpop.permute.xlu0 %2040
    %v2044 = vsel %vm1734, %v2023, 0
    %v2047 = vsel %vm1734, %v2024, 0
    %v2050 = vsel %vm1734, %v2025, 0
    %v2053 = vsel %vm1734, %v2026, 0
    %2055 = vmatpush.msra.mxu0 0.0
    %2056 = vmatpush.msra.mxu0 0.0
    %2057 = vmatpush.msra.mxu0 0.0
    %2058 = vmatpush.msra.mxu0 0.0
    %2059 = vmatpush.msra.mxu0 0.0
    %2060 = vmatpush.msra.mxu0 0.0
    %2061 = vmatpush.msra.mxu0 0.0
    %2062 = vmatpush.msra.mxu0 0.0
    %2063 = vmatpush.msra.mxu0 0.0
    %2064 = vmatpush.msra.mxu0 0.0
    %2065 = vmatpush.msra.mxu0 0.0
    %2066 = vmatpush.msra.mxu0 0.0
    %2067 = vmatpush.msra.mxu0 0.0
    %2068 = vmatpush.msra.mxu0 0.0
    %2069 = vmatpush.msra.mxu0 0.0
    %2070 = vmatpush.msra.mxu0 %v2041
    %2071 = vmatmul.f32.gmra.mxu0 %v2044
    %v2072 = vpop.f32.mrf.mxu0
    %v2073 = vadd.f32 0.0, %v2072
    %2074 = vmatmul.f32.gmra.mxu0 %v2047
    %v2075 = vpop.f32.mrf.mxu0
    %v2076 = vadd.f32 0.0, %v2075
    %2077 = vmatmul.f32.gmra.mxu0 %v2050
    %v2078 = vpop.f32.mrf.mxu0
    %v2079 = vadd.f32 0.0, %v2078
    %2080 = vmatmul.f32.gmra.mxu0 %v2053
    %v2081 = vpop.f32.mrf.mxu0
    %v2082 = vadd.f32 0.0, %v2081
    %2083 = vdwg.mxu0
    %2084 = vxpose.xlu0.b32.start [1/16] %v1394, 128
    %2085 = vxpose.xlu0.b32.cont [2/16] 0.0, 128
    %2086 = vxpose.xlu0.b32.cont [3/16] 0.0, 128
    %2087 = vxpose.xlu0.b32.cont [4/16] 0.0, 128
    %2088 = vxpose.xlu0.b32.cont [5/16] 0.0, 128
    %2089 = vxpose.xlu0.b32.cont [6/16] 0.0, 128
    %2090 = vxpose.xlu0.b32.cont [7/16] 0.0, 128
    %2091 = vxpose.xlu0.b32.cont [8/16] 0.0, 128
    %2092 = vxpose.xlu0.b32.cont [9/16] 0.0, 128
    %2093 = vxpose.xlu0.b32.cont [10/16] 0.0, 128
    %2094 = vxpose.xlu0.b32.cont [11/16] 0.0, 128
    %2095 = vxpose.xlu0.b32.cont [12/16] 0.0, 128
    %2096 = vxpose.xlu0.b32.cont [13/16] 0.0, 128
    %2097 = vxpose.xlu0.b32.cont [14/16] 0.0, 128
    %2098 = vxpose.xlu0.b32.cont [15/16] 0.0, 128
    %2099 = vxpose.xlu0.b32.end [16/16] 0.0, 128
    %v2100 = vpop.trf.xlu0
    %v2101 = vpop.trf.xlu0
    %v2102 = vpop.trf.xlu0
    %v2103 = vpop.trf.xlu0
    %v2104 = vpop.trf.xlu0
    %v2105 = vpop.trf.xlu0
    %v2106 = vpop.trf.xlu0
    %v2107 = vpop.trf.xlu0
    %v2108 = vpop.trf.xlu0
    %v2109 = vpop.trf.xlu0
    %v2110 = vpop.trf.xlu0
    %v2111 = vpop.trf.xlu0
    %v2112 = vpop.trf.xlu0
    %v2113 = vpop.trf.xlu0
    %v2114 = vpop.trf.xlu0
    %v2115 = vpop.trf.xlu0
    %2117 = vrot.lane.b32.xlu0 %v1671, 96
    %v2118 = vpop.permute.xlu0 %2117
    %v2121 = vsel %vm1734, %v2100, 0
    %v2124 = vsel %vm1734, %v2101, 0
    %v2127 = vsel %vm1734, %v2102, 0
    %v2130 = vsel %vm1734, %v2103, 0
    %2132 = vmatpush.msra.mxu0 0.0
    %2133 = vmatpush.msra.mxu0 0.0
    %2134 = vmatpush.msra.mxu0 0.0
    %2135 = vmatpush.msra.mxu0 0.0
    %2136 = vmatpush.msra.mxu0 0.0
    %2137 = vmatpush.msra.mxu0 0.0
    %2138 = vmatpush.msra.mxu0 0.0
    %2139 = vmatpush.msra.mxu0 0.0
    %2140 = vmatpush.msra.mxu0 0.0
    %2141 = vmatpush.msra.mxu0 0.0
    %2142 = vmatpush.msra.mxu0 0.0
    %2143 = vmatpush.msra.mxu0 0.0
    %2144 = vmatpush.msra.mxu0 0.0
    %2145 = vmatpush.msra.mxu0 0.0
    %2146 = vmatpush.msra.mxu0 0.0
    %2147 = vmatpush.msra.mxu0 %v2118
    %2148 = vmatmul.f32.gmra.mxu0 %v2121
    %v2149 = vpop.f32.mrf.mxu0
    %v2150 = vadd.f32 0.0, %v2149
    %2151 = vmatmul.f32.gmra.mxu0 %v2124
    %v2152 = vpop.f32.mrf.mxu0
    %v2153 = vadd.f32 0.0, %v2152
    %2154 = vmatmul.f32.gmra.mxu0 %v2127
    %v2155 = vpop.f32.mrf.mxu0
    %v2156 = vadd.f32 0.0, %v2155
    %2157 = vmatmul.f32.gmra.mxu0 %v2130
    %v2158 = vpop.f32.mrf.mxu0
    %v2159 = vadd.f32 0.0, %v2158
    %2160 = vdwg.mxu0
    %2161 = vxpose.xlu0.b32.start [1/16] %v1397, 128
    %2162 = vxpose.xlu0.b32.cont [2/16] 0.0, 128
    %2163 = vxpose.xlu0.b32.cont [3/16] 0.0, 128
    %2164 = vxpose.xlu0.b32.cont [4/16] 0.0, 128
    %2165 = vxpose.xlu0.b32.cont [5/16] 0.0, 128
    %2166 = vxpose.xlu0.b32.cont [6/16] 0.0, 128
    %2167 = vxpose.xlu0.b32.cont [7/16] 0.0, 128
    %2168 = vxpose.xlu0.b32.cont [8/16] 0.0, 128
    %2169 = vxpose.xlu0.b32.cont [9/16] 0.0, 128
    %2170 = vxpose.xlu0.b32.cont [10/16] 0.0, 128
    %2171 = vxpose.xlu0.b32.cont [11/16] 0.0, 128
    %2172 = vxpose.xlu0.b32.cont [12/16] 0.0, 128
    %2173 = vxpose.xlu0.b32.cont [13/16] 0.0, 128
    %2174 = vxpose.xlu0.b32.cont [14/16] 0.0, 128
    %2175 = vxpose.xlu0.b32.cont [15/16] 0.0, 128
    %2176 = vxpose.xlu0.b32.end [16/16] 0.0, 128
    %v2177 = vpop.trf.xlu0
    %v2178 = vpop.trf.xlu0
    %v2179 = vpop.trf.xlu0
    %v2180 = vpop.trf.xlu0
    %v2181 = vpop.trf.xlu0
    %v2182 = vpop.trf.xlu0
    %v2183 = vpop.trf.xlu0
    %v2184 = vpop.trf.xlu0
    %v2185 = vpop.trf.xlu0
    %v2186 = vpop.trf.xlu0
    %v2187 = vpop.trf.xlu0
    %v2188 = vpop.trf.xlu0
    %v2189 = vpop.trf.xlu0
    %v2190 = vpop.trf.xlu0
    %v2191 = vpop.trf.xlu0
    %v2192 = vpop.trf.xlu0
    %2194 = vrot.lane.b32.xlu0 %v1672, 96
    %v2195 = vpop.permute.xlu0 %2194
    %v2198 = vsel %vm1734, %v2177, 0
    %v2201 = vsel %vm1734, %v2178, 0
    %v2204 = vsel %vm1734, %v2179, 0
    %v2207 = vsel %vm1734, %v2180, 0
    %2209 = vmatpush.msra.mxu0 0.0
    %2210 = vmatpush.msra.mxu0 0.0
    %2211 = vmatpush.msra.mxu0 0.0
    %2212 = vmatpush.msra.mxu0 0.0
    %2213 = vmatpush.msra.mxu0 0.0
    %2214 = vmatpush.msra.mxu0 0.0
    %2215 = vmatpush.msra.mxu0 0.0
    %2216 = vmatpush.msra.mxu0 0.0
    %2217 = vmatpush.msra.mxu0 0.0
    %2218 = vmatpush.msra.mxu0 0.0
    %2219 = vmatpush.msra.mxu0 0.0
    %2220 = vmatpush.msra.mxu0 0.0
    %2221 = vmatpush.msra.mxu0 0.0
    %2222 = vmatpush.msra.mxu0 0.0
    %2223 = vmatpush.msra.mxu0 0.0
    %2224 = vmatpush.msra.mxu0 %v2195
    %2225 = vmatmul.f32.gmra.mxu0 %v2198
    %v2226 = vpop.f32.mrf.mxu0
    %v2227 = vadd.f32 0.0, %v2226
    %2228 = vmatmul.f32.gmra.mxu0 %v2201
    %v2229 = vpop.f32.mrf.mxu0
    %v2230 = vadd.f32 0.0, %v2229
    %2231 = vmatmul.f32.gmra.mxu0 %v2204
    %v2232 = vpop.f32.mrf.mxu0
    %v2233 = vadd.f32 0.0, %v2232
    %2234 = vmatmul.f32.gmra.mxu0 %v2207
    %v2235 = vpop.f32.mrf.mxu0
    %v2236 = vadd.f32 0.0, %v2235
    %2237 = vdwg.mxu0
    %2238 = vxpose.xlu0.b32.start [1/16] %v1400, 128
    %2239 = vxpose.xlu0.b32.cont [2/16] 0.0, 128
    %2240 = vxpose.xlu0.b32.cont [3/16] 0.0, 128
    %2241 = vxpose.xlu0.b32.cont [4/16] 0.0, 128
    %2242 = vxpose.xlu0.b32.cont [5/16] 0.0, 128
    %2243 = vxpose.xlu0.b32.cont [6/16] 0.0, 128
    %2244 = vxpose.xlu0.b32.cont [7/16] 0.0, 128
    %2245 = vxpose.xlu0.b32.cont [8/16] 0.0, 128
    %2246 = vxpose.xlu0.b32.cont [9/16] 0.0, 128
    %2247 = vxpose.xlu0.b32.cont [10/16] 0.0, 128
    %2248 = vxpose.xlu0.b32.cont [11/16] 0.0, 128
    %2249 = vxpose.xlu0.b32.cont [12/16] 0.0, 128
    %2250 = vxpose.xlu0.b32.cont [13/16] 0.0, 128
    %2251 = vxpose.xlu0.b32.cont [14/16] 0.0, 128
    %2252 = vxpose.xlu0.b32.cont [15/16] 0.0, 128
    %2253 = vxpose.xlu0.b32.end [16/16] 0.0, 128
    %v2254 = vpop.trf.xlu0
    %v2255 = vpop.trf.xlu0
    %v2256 = vpop.trf.xlu0
    %v2257 = vpop.trf.xlu0
    %v2258 = vpop.trf.xlu0
    %v2259 = vpop.trf.xlu0
    %v2260 = vpop.trf.xlu0
    %v2261 = vpop.trf.xlu0
    %v2262 = vpop.trf.xlu0
    %v2263 = vpop.trf.xlu0
    %v2264 = vpop.trf.xlu0
    %v2265 = vpop.trf.xlu0
    %v2266 = vpop.trf.xlu0
    %v2267 = vpop.trf.xlu0
    %v2268 = vpop.trf.xlu0
    %v2269 = vpop.trf.xlu0
    %2271 = vrot.lane.b32.xlu0 %v1673, 96
    %v2272 = vpop.permute.xlu0 %2271
    %v2275 = vsel %vm1734, %v2254, 0
    %v2278 = vsel %vm1734, %v2255, 0
    %v2281 = vsel %vm1734, %v2256, 0
    %v2284 = vsel %vm1734, %v2257, 0
    %2286 = vmatpush.msra.mxu0 0.0
    %2287 = vmatpush.msra.mxu0 0.0
    %2288 = vmatpush.msra.mxu0 0.0
    %2289 = vmatpush.msra.mxu0 0.0
    %2290 = vmatpush.msra.mxu0 0.0
    %2291 = vmatpush.msra.mxu0 0.0
    %2292 = vmatpush.msra.mxu0 0.0
    %2293 = vmatpush.msra.mxu0 0.0
    %2294 = vmatpush.msra.mxu0 0.0
    %2295 = vmatpush.msra.mxu0 0.0
    %2296 = vmatpush.msra.mxu0 0.0
    %2297 = vmatpush.msra.mxu0 0.0
    %2298 = vmatpush.msra.mxu0 0.0
    %2299 = vmatpush.msra.mxu0 0.0
    %2300 = vmatpush.msra.mxu0 0.0
    %2301 = vmatpush.msra.mxu0 %v2272
    %2302 = vmatmul.f32.gmra.mxu0 %v2275
    %v2303 = vpop.f32.mrf.mxu0
    %v2304 = vadd.f32 0.0, %v2303
    %2305 = vmatmul.f32.gmra.mxu0 %v2278
    %v2306 = vpop.f32.mrf.mxu0
    %v2307 = vadd.f32 0.0, %v2306
    %2308 = vmatmul.f32.gmra.mxu0 %v2281
    %v2309 = vpop.f32.mrf.mxu0
    %v2310 = vadd.f32 0.0, %v2309
    %2311 = vmatmul.f32.gmra.mxu0 %v2284
    %v2312 = vpop.f32.mrf.mxu0
    %v2313 = vadd.f32 0.0, %v2312
    %2314 = vdwg.mxu0
    %2315 = vxpose.xlu0.b32.start [1/16] %v1403, 128
    %2316 = vxpose.xlu0.b32.cont [2/16] 0.0, 128
    %2317 = vxpose.xlu0.b32.cont [3/16] 0.0, 128
    %2318 = vxpose.xlu0.b32.cont [4/16] 0.0, 128
    %2319 = vxpose.xlu0.b32.cont [5/16] 0.0, 128
    %2320 = vxpose.xlu0.b32.cont [6/16] 0.0, 128
    %2321 = vxpose.xlu0.b32.cont [7/16] 0.0, 128
    %2322 = vxpose.xlu0.b32.cont [8/16] 0.0, 128
    %2323 = vxpose.xlu0.b32.cont [9/16] 0.0, 128
    %2324 = vxpose.xlu0.b32.cont [10/16] 0.0, 128
    %2325 = vxpose.xlu0.b32.cont [11/16] 0.0, 128
    %2326 = vxpose.xlu0.b32.cont [12/16] 0.0, 128
    %2327 = vxpose.xlu0.b32.cont [13/16] 0.0, 128
    %2328 = vxpose.xlu0.b32.cont [14/16] 0.0, 128
    %2329 = vxpose.xlu0.b32.cont [15/16] 0.0, 128
    %2330 = vxpose.xlu0.b32.end [16/16] 0.0, 128
    %v2331 = vpop.trf.xlu0
    %v2332 = vpop.trf.xlu0
    %v2333 = vpop.trf.xlu0
    %v2334 = vpop.trf.xlu0
    %v2335 = vpop.trf.xlu0
    %v2336 = vpop.trf.xlu0
    %v2337 = vpop.trf.xlu0
    %v2338 = vpop.trf.xlu0
    %v2339 = vpop.trf.xlu0
    %v2340 = vpop.trf.xlu0
    %v2341 = vpop.trf.xlu0
    %v2342 = vpop.trf.xlu0
    %v2343 = vpop.trf.xlu0
    %v2344 = vpop.trf.xlu0
    %v2345 = vpop.trf.xlu0
    %v2346 = vpop.trf.xlu0
    %2348 = vrot.lane.b32.xlu0 %v1674, 96
    %v2349 = vpop.permute.xlu0 %2348
    %v2352 = vsel %vm1734, %v2331, 0
    %v2355 = vsel %vm1734, %v2332, 0
    %v2358 = vsel %vm1734, %v2333, 0
    %v2361 = vsel %vm1734, %v2334, 0
    %2363 = vmatpush.msra.mxu0 0.0
    %2364 = vmatpush.msra.mxu0 0.0
    %2365 = vmatpush.msra.mxu0 0.0
    %2366 = vmatpush.msra.mxu0 0.0
    %2367 = vmatpush.msra.mxu0 0.0
    %2368 = vmatpush.msra.mxu0 0.0
    %2369 = vmatpush.msra.mxu0 0.0
    %2370 = vmatpush.msra.mxu0 0.0
    %2371 = vmatpush.msra.mxu0 0.0
    %2372 = vmatpush.msra.mxu0 0.0
    %2373 = vmatpush.msra.mxu0 0.0
    %2374 = vmatpush.msra.mxu0 0.0
    %2375 = vmatpush.msra.mxu0 0.0
    %2376 = vmatpush.msra.mxu0 0.0
    %2377 = vmatpush.msra.mxu0 0.0
    %2378 = vmatpush.msra.mxu0 %v2349
    %2379 = vmatmul.f32.gmra.mxu0 %v2352
    %v2380 = vpop.f32.mrf.mxu0
    %v2381 = vadd.f32 0.0, %v2380
    %2382 = vmatmul.f32.gmra.mxu0 %v2355
    %v2383 = vpop.f32.mrf.mxu0
    %v2384 = vadd.f32 0.0, %v2383
    %2385 = vmatmul.f32.gmra.mxu0 %v2358
    %v2386 = vpop.f32.mrf.mxu0
    %v2387 = vadd.f32 0.0, %v2386
    %2388 = vmatmul.f32.gmra.mxu0 %v2361
    %v2389 = vpop.f32.mrf.mxu0
    %v2390 = vadd.f32 0.0, %v2389
    %2391 = vdwg.mxu0
    %2392 = vxpose.xlu0.b32.start [1/16] %v1406, 128
    %2393 = vxpose.xlu0.b32.cont [2/16] 0.0, 128
    %2394 = vxpose.xlu0.b32.cont [3/16] 0.0, 128
    %2395 = vxpose.xlu0.b32.cont [4/16] 0.0, 128
    %2396 = vxpose.xlu0.b32.cont [5/16] 0.0, 128
    %2397 = vxpose.xlu0.b32.cont [6/16] 0.0, 128
    %2398 = vxpose.xlu0.b32.cont [7/16] 0.0, 128
    %2399 = vxpose.xlu0.b32.cont [8/16] 0.0, 128
    %2400 = vxpose.xlu0.b32.cont [9/16] 0.0, 128
    %2401 = vxpose.xlu0.b32.cont [10/16] 0.0, 128
    %2402 = vxpose.xlu0.b32.cont [11/16] 0.0, 128
    %2403 = vxpose.xlu0.b32.cont [12/16] 0.0, 128
    %2404 = vxpose.xlu0.b32.cont [13/16] 0.0, 128
    %2405 = vxpose.xlu0.b32.cont [14/16] 0.0, 128
    %2406 = vxpose.xlu0.b32.cont [15/16] 0.0, 128
    %2407 = vxpose.xlu0.b32.end [16/16] 0.0, 128
    %v2408 = vpop.trf.xlu0
    %v2409 = vpop.trf.xlu0
    %v2410 = vpop.trf.xlu0
    %v2411 = vpop.trf.xlu0
    %v2412 = vpop.trf.xlu0
    %v2413 = vpop.trf.xlu0
    %v2414 = vpop.trf.xlu0
    %v2415 = vpop.trf.xlu0
    %v2416 = vpop.trf.xlu0
    %v2417 = vpop.trf.xlu0
    %v2418 = vpop.trf.xlu0
    %v2419 = vpop.trf.xlu0
    %v2420 = vpop.trf.xlu0
    %v2421 = vpop.trf.xlu0
    %v2422 = vpop.trf.xlu0
    %v2423 = vpop.trf.xlu0
    %2425 = vrot.lane.b32.xlu0 %v1675, 96
    %v2426 = vpop.permute.xlu0 %2425
    %v2429 = vsel %vm1734, %v2408, 0
    %v2432 = vsel %vm1734, %v2409, 0
    %v2435 = vsel %vm1734, %v2410, 0
    %v2438 = vsel %vm1734, %v2411, 0
    %2440 = vmatpush.msra.mxu0 0.0
    %2441 = vmatpush.msra.mxu0 0.0
    %2442 = vmatpush.msra.mxu0 0.0
    %2443 = vmatpush.msra.mxu0 0.0
    %2444 = vmatpush.msra.mxu0 0.0
    %2445 = vmatpush.msra.mxu0 0.0
    %2446 = vmatpush.msra.mxu0 0.0
    %2447 = vmatpush.msra.mxu0 0.0
    %2448 = vmatpush.msra.mxu0 0.0
    %2449 = vmatpush.msra.mxu0 0.0
    %2450 = vmatpush.msra.mxu0 0.0
    %2451 = vmatpush.msra.mxu0 0.0
    %2452 = vmatpush.msra.mxu0 0.0
    %2453 = vmatpush.msra.mxu0 0.0
    %2454 = vmatpush.msra.mxu0 0.0
    %2455 = vmatpush.msra.mxu0 %v2426
    %2456 = vmatmul.f32.gmra.mxu0 %v2429
    %v2457 = vpop.f32.mrf.mxu0
    %v2458 = vadd.f32 0.0, %v2457
    %2459 = vmatmul.f32.gmra.mxu0 %v2432
    %v2460 = vpop.f32.mrf.mxu0
    %v2461 = vadd.f32 0.0, %v2460
    %2462 = vmatmul.f32.gmra.mxu0 %v2435
    %v2463 = vpop.f32.mrf.mxu0
    %v2464 = vadd.f32 0.0, %v2463
    %2465 = vmatmul.f32.gmra.mxu0 %v2438
    %v2466 = vpop.f32.mrf.mxu0
    %v2467 = vadd.f32 0.0, %v2466
    %2468 = vdwg.mxu0
    %2469 = vxpose.xlu0.b32.start [1/16] %v1409, 128
    %2470 = vxpose.xlu0.b32.cont [2/16] 0.0, 128
    %2471 = vxpose.xlu0.b32.cont [3/16] 0.0, 128
    %2472 = vxpose.xlu0.b32.cont [4/16] 0.0, 128
    %2473 = vxpose.xlu0.b32.cont [5/16] 0.0, 128
    %2474 = vxpose.xlu0.b32.cont [6/16] 0.0, 128
    %2475 = vxpose.xlu0.b32.cont [7/16] 0.0, 128
    %2476 = vxpose.xlu0.b32.cont [8/16] 0.0, 128
    %2477 = vxpose.xlu0.b32.cont [9/16] 0.0, 128
    %2478 = vxpose.xlu0.b32.cont [10/16] 0.0, 128
    %2479 = vxpose.xlu0.b32.cont [11/16] 0.0, 128
    %2480 = vxpose.xlu0.b32.cont [12/16] 0.0, 128
    %2481 = vxpose.xlu0.b32.cont [13/16] 0.0, 128
    %2482 = vxpose.xlu0.b32.cont [14/16] 0.0, 128
    %2483 = vxpose.xlu0.b32.cont [15/16] 0.0, 128
    %2484 = vxpose.xlu0.b32.end [16/16] 0.0, 128
    %v2485 = vpop.trf.xlu0
    %v2486 = vpop.trf.xlu0
    %v2487 = vpop.trf.xlu0
    %v2488 = vpop.trf.xlu0
    %v2489 = vpop.trf.xlu0
    %v2490 = vpop.trf.xlu0
    %v2491 = vpop.trf.xlu0
    %v2492 = vpop.trf.xlu0
    %v2493 = vpop.trf.xlu0
    %v2494 = vpop.trf.xlu0
    %v2495 = vpop.trf.xlu0
    %v2496 = vpop.trf.xlu0
    %v2497 = vpop.trf.xlu0
    %v2498 = vpop.trf.xlu0
    %v2499 = vpop.trf.xlu0
    %v2500 = vpop.trf.xlu0
    %2502 = vrot.lane.b32.xlu0 %v1676, 96
    %v2503 = vpop.permute.xlu0 %2502
    %v2506 = vsel %vm1734, %v2485, 0
    %v2509 = vsel %vm1734, %v2486, 0
    %v2512 = vsel %vm1734, %v2487, 0
    %v2515 = vsel %vm1734, %v2488, 0
    %2517 = vmatpush.msra.mxu0 0.0
    %2518 = vmatpush.msra.mxu0 0.0
    %2519 = vmatpush.msra.mxu0 0.0
    %2520 = vmatpush.msra.mxu0 0.0
    %2521 = vmatpush.msra.mxu0 0.0
    %2522 = vmatpush.msra.mxu0 0.0
    %2523 = vmatpush.msra.mxu0 0.0
    %2524 = vmatpush.msra.mxu0 0.0
    %2525 = vmatpush.msra.mxu0 0.0
    %2526 = vmatpush.msra.mxu0 0.0
    %2527 = vmatpush.msra.mxu0 0.0
    %2528 = vmatpush.msra.mxu0 0.0
    %2529 = vmatpush.msra.mxu0 0.0
    %2530 = vmatpush.msra.mxu0 0.0
    %2531 = vmatpush.msra.mxu0 0.0
    %2532 = vmatpush.msra.mxu0 %v2503
    %2533 = vmatmul.f32.gmra.mxu0 %v2506
    %v2534 = vpop.f32.mrf.mxu0
    %v2535 = vadd.f32 0.0, %v2534
    %2536 = vmatmul.f32.gmra.mxu0 %v2509
    %v2537 = vpop.f32.mrf.mxu0
    %v2538 = vadd.f32 0.0, %v2537
    %2539 = vmatmul.f32.gmra.mxu0 %v2512
    %v2540 = vpop.f32.mrf.mxu0
    %v2541 = vadd.f32 0.0, %v2540
    %2542 = vmatmul.f32.gmra.mxu0 %v2515
    %v2543 = vpop.f32.mrf.mxu0
    %v2544 = vadd.f32 0.0, %v2543
    %2545 = vdwg.mxu0
    %2546 = vxpose.xlu0.b32.start [1/16] %v1412, 128
    %2547 = vxpose.xlu0.b32.cont [2/16] 0.0, 128
    %2548 = vxpose.xlu0.b32.cont [3/16] 0.0, 128
    %2549 = vxpose.xlu0.b32.cont [4/16] 0.0, 128
    %2550 = vxpose.xlu0.b32.cont [5/16] 0.0, 128
    %2551 = vxpose.xlu0.b32.cont [6/16] 0.0, 128
    %2552 = vxpose.xlu0.b32.cont [7/16] 0.0, 128
    %2553 = vxpose.xlu0.b32.cont [8/16] 0.0, 128
    %2554 = vxpose.xlu0.b32.cont [9/16] 0.0, 128
    %2555 = vxpose.xlu0.b32.cont [10/16] 0.0, 128
    %2556 = vxpose.xlu0.b32.cont [11/16] 0.0, 128
    %2557 = vxpose.xlu0.b32.cont [12/16] 0.0, 128
    %2558 = vxpose.xlu0.b32.cont [13/16] 0.0, 128
    %2559 = vxpose.xlu0.b32.cont [14/16] 0.0, 128
    %2560 = vxpose.xlu0.b32.cont [15/16] 0.0, 128
    %2561 = vxpose.xlu0.b32.end [16/16] 0.0, 128
    %v2562 = vpop.trf.xlu0
    %v2563 = vpop.trf.xlu0
    %v2564 = vpop.trf.xlu0
    %v2565 = vpop.trf.xlu0
    %v2566 = vpop.trf.xlu0
    %v2567 = vpop.trf.xlu0
    %v2568 = vpop.trf.xlu0
    %v2569 = vpop.trf.xlu0
    %v2570 = vpop.trf.xlu0
    %v2571 = vpop.trf.xlu0
    %v2572 = vpop.trf.xlu0
    %v2573 = vpop.trf.xlu0
    %v2574 = vpop.trf.xlu0
    %v2575 = vpop.trf.xlu0
    %v2576 = vpop.trf.xlu0
    %v2577 = vpop.trf.xlu0
    %2579 = vrot.lane.b32.xlu0 %v1677, 96
    %v2580 = vpop.permute.xlu0 %2579
    %v2583 = vsel %vm1734, %v2562, 0
    %v2586 = vsel %vm1734, %v2563, 0
    %v2589 = vsel %vm1734, %v2564, 0
    %v2592 = vsel %vm1734, %v2565, 0
    %2594 = vmatpush.msra.mxu0 0.0
    %2595 = vmatpush.msra.mxu0 0.0
    %2596 = vmatpush.msra.mxu0 0.0
    %2597 = vmatpush.msra.mxu0 0.0
    %2598 = vmatpush.msra.mxu0 0.0
    %2599 = vmatpush.msra.mxu0 0.0
    %2600 = vmatpush.msra.mxu0 0.0
    %2601 = vmatpush.msra.mxu0 0.0
    %2602 = vmatpush.msra.mxu0 0.0
    %2603 = vmatpush.msra.mxu0 0.0
    %2604 = vmatpush.msra.mxu0 0.0
    %2605 = vmatpush.msra.mxu0 0.0
    %2606 = vmatpush.msra.mxu0 0.0
    %2607 = vmatpush.msra.mxu0 0.0
    %2608 = vmatpush.msra.mxu0 0.0
    %2609 = vmatpush.msra.mxu0 %v2580
    %2610 = vmatmul.f32.gmra.mxu0 %v2583
    %v2611 = vpop.f32.mrf.mxu0
    %v2612 = vadd.f32 0.0, %v2611
    %2613 = vmatmul.f32.gmra.mxu0 %v2586
    %v2614 = vpop.f32.mrf.mxu0
    %v2615 = vadd.f32 0.0, %v2614
    %2616 = vmatmul.f32.gmra.mxu0 %v2589
    %v2617 = vpop.f32.mrf.mxu0
    %v2618 = vadd.f32 0.0, %v2617
    %2619 = vmatmul.f32.gmra.mxu0 %v2592
    %v2620 = vpop.f32.mrf.mxu0
    %v2621 = vadd.f32 0.0, %v2620
    %2622 = vdwg.mxu0
    %2623 = vxpose.xlu0.b32.start [1/16] %v1415, 128
    %2624 = vxpose.xlu0.b32.cont [2/16] 0.0, 128
    %2625 = vxpose.xlu0.b32.cont [3/16] 0.0, 128
    %2626 = vxpose.xlu0.b32.cont [4/16] 0.0, 128
    %2627 = vxpose.xlu0.b32.cont [5/16] 0.0, 128
    %2628 = vxpose.xlu0.b32.cont [6/16] 0.0, 128
    %2629 = vxpose.xlu0.b32.cont [7/16] 0.0, 128
    %2630 = vxpose.xlu0.b32.cont [8/16] 0.0, 128
    %2631 = vxpose.xlu0.b32.cont [9/16] 0.0, 128
    %2632 = vxpose.xlu0.b32.cont [10/16] 0.0, 128
    %2633 = vxpose.xlu0.b32.cont [11/16] 0.0, 128
    %2634 = vxpose.xlu0.b32.cont [12/16] 0.0, 128
    %2635 = vxpose.xlu0.b32.cont [13/16] 0.0, 128
    %2636 = vxpose.xlu0.b32.cont [14/16] 0.0, 128
    %2637 = vxpose.xlu0.b32.cont [15/16] 0.0, 128
    %2638 = vxpose.xlu0.b32.end [16/16] 0.0, 128
    %v2639 = vpop.trf.xlu0
    %v2640 = vpop.trf.xlu0
    %v2641 = vpop.trf.xlu0
    %v2642 = vpop.trf.xlu0
    %v2643 = vpop.trf.xlu0
    %v2644 = vpop.trf.xlu0
    %v2645 = vpop.trf.xlu0
    %v2646 = vpop.trf.xlu0
    %v2647 = vpop.trf.xlu0
    %v2648 = vpop.trf.xlu0
    %v2649 = vpop.trf.xlu0
    %v2650 = vpop.trf.xlu0
    %v2651 = vpop.trf.xlu0
    %v2652 = vpop.trf.xlu0
    %v2653 = vpop.trf.xlu0
    %v2654 = vpop.trf.xlu0
    %2656 = vrot.lane.b32.xlu0 %v1678, 96
    %v2657 = vpop.permute.xlu0 %2656
    %v2660 = vsel %vm1734, %v2639, 0
    %v2663 = vsel %vm1734, %v2640, 0
    %v2666 = vsel %vm1734, %v2641, 0
    %v2669 = vsel %vm1734, %v2642, 0
    %2671 = vmatpush.msra.mxu0 0.0
    %2672 = vmatpush.msra.mxu0 0.0
    %2673 = vmatpush.msra.mxu0 0.0
    %2674 = vmatpush.msra.mxu0 0.0
    %2675 = vmatpush.msra.mxu0 0.0
    %2676 = vmatpush.msra.mxu0 0.0
    %2677 = vmatpush.msra.mxu0 0.0
    %2678 = vmatpush.msra.mxu0 0.0
    %2679 = vmatpush.msra.mxu0 0.0
    %2680 = vmatpush.msra.mxu0 0.0
    %2681 = vmatpush.msra.mxu0 0.0
    %2682 = vmatpush.msra.mxu0 0.0
    %2683 = vmatpush.msra.mxu0 0.0
    %2684 = vmatpush.msra.mxu0 0.0
    %2685 = vmatpush.msra.mxu0 0.0
    %2686 = vmatpush.msra.mxu0 %v2657
    %2687 = vmatmul.f32.gmra.mxu0 %v2660
    %v2688 = vpop.f32.mrf.mxu0
    %v2689 = vadd.f32 0.0, %v2688
    %2690 = vmatmul.f32.gmra.mxu0 %v2663
    %v2691 = vpop.f32.mrf.mxu0
    %v2692 = vadd.f32 0.0, %v2691
    %2693 = vmatmul.f32.gmra.mxu0 %v2666
    %v2694 = vpop.f32.mrf.mxu0
    %v2695 = vadd.f32 0.0, %v2694
    %2696 = vmatmul.f32.gmra.mxu0 %v2669
    %v2697 = vpop.f32.mrf.mxu0
    %v2698 = vadd.f32 0.0, %v2697
    %2699 = vdwg.mxu0
    %2700 = vxpose.xlu0.b32.start [1/16] %v1418, 128
    %2701 = vxpose.xlu0.b32.cont [2/16] 0.0, 128
    %2702 = vxpose.xlu0.b32.cont [3/16] 0.0, 128
    %2703 = vxpose.xlu0.b32.cont [4/16] 0.0, 128
    %2704 = vxpose.xlu0.b32.cont [5/16] 0.0, 128
    %2705 = vxpose.xlu0.b32.cont [6/16] 0.0, 128
    %2706 = vxpose.xlu0.b32.cont [7/16] 0.0, 128
    %2707 = vxpose.xlu0.b32.cont [8/16] 0.0, 128
    %2708 = vxpose.xlu0.b32.cont [9/16] 0.0, 128
    %2709 = vxpose.xlu0.b32.cont [10/16] 0.0, 128
    %2710 = vxpose.xlu0.b32.cont [11/16] 0.0, 128
    %2711 = vxpose.xlu0.b32.cont [12/16] 0.0, 128
    %2712 = vxpose.xlu0.b32.cont [13/16] 0.0, 128
    %2713 = vxpose.xlu0.b32.cont [14/16] 0.0, 128
    %2714 = vxpose.xlu0.b32.cont [15/16] 0.0, 128
    %2715 = vxpose.xlu0.b32.end [16/16] 0.0, 128
    %v2716 = vpop.trf.xlu0
    %v2717 = vpop.trf.xlu0
    %v2718 = vpop.trf.xlu0
    %v2719 = vpop.trf.xlu0
    %v2720 = vpop.trf.xlu0
    %v2721 = vpop.trf.xlu0
    %v2722 = vpop.trf.xlu0
    %v2723 = vpop.trf.xlu0
    %v2724 = vpop.trf.xlu0
    %v2725 = vpop.trf.xlu0
    %v2726 = vpop.trf.xlu0
    %v2727 = vpop.trf.xlu0
    %v2728 = vpop.trf.xlu0
    %v2729 = vpop.trf.xlu0
    %v2730 = vpop.trf.xlu0
    %v2731 = vpop.trf.xlu0
    %2733 = vrot.lane.b32.xlu0 %v1679, 96
    %v2734 = vpop.permute.xlu0 %2733
    %v2737 = vsel %vm1734, %v2716, 0
    %v2740 = vsel %vm1734, %v2717, 0
    %v2743 = vsel %vm1734, %v2718, 0
    %v2746 = vsel %vm1734, %v2719, 0
    %2748 = vmatpush.msra.mxu0 0.0
    %2749 = vmatpush.msra.mxu0 0.0
    %2750 = vmatpush.msra.mxu0 0.0
    %2751 = vmatpush.msra.mxu0 0.0
    %2752 = vmatpush.msra.mxu0 0.0
    %2753 = vmatpush.msra.mxu0 0.0
    %2754 = vmatpush.msra.mxu0 0.0
    %2755 = vmatpush.msra.mxu0 0.0
    %2756 = vmatpush.msra.mxu0 0.0
    %2757 = vmatpush.msra.mxu0 0.0
    %2758 = vmatpush.msra.mxu0 0.0
    %2759 = vmatpush.msra.mxu0 0.0
    %2760 = vmatpush.msra.mxu0 0.0
    %2761 = vmatpush.msra.mxu0 0.0
    %2762 = vmatpush.msra.mxu0 0.0
    %2763 = vmatpush.msra.mxu0 %v2734
    %2764 = vmatmul.f32.gmra.mxu0 %v2737
    %v2765 = vpop.f32.mrf.mxu0
    %v2766 = vadd.f32 0.0, %v2765
    %2767 = vmatmul.f32.gmra.mxu0 %v2740
    %v2768 = vpop.f32.mrf.mxu0
    %v2769 = vadd.f32 0.0, %v2768
    %2770 = vmatmul.f32.gmra.mxu0 %v2743
    %v2771 = vpop.f32.mrf.mxu0
    %v2772 = vadd.f32 0.0, %v2771
    %2773 = vmatmul.f32.gmra.mxu0 %v2746
    %v2774 = vpop.f32.mrf.mxu0
    %v2775 = vadd.f32 0.0, %v2774
    %2776 = vdwg.mxu0
    %2777 = vxpose.xlu0.b32.start [1/16] %v1421, 128
    %2778 = vxpose.xlu0.b32.cont [2/16] 0.0, 128
    %2779 = vxpose.xlu0.b32.cont [3/16] 0.0, 128
    %2780 = vxpose.xlu0.b32.cont [4/16] 0.0, 128
    %2781 = vxpose.xlu0.b32.cont [5/16] 0.0, 128
    %2782 = vxpose.xlu0.b32.cont [6/16] 0.0, 128
    %2783 = vxpose.xlu0.b32.cont [7/16] 0.0, 128
    %2784 = vxpose.xlu0.b32.cont [8/16] 0.0, 128
    %2785 = vxpose.xlu0.b32.cont [9/16] 0.0, 128
    %2786 = vxpose.xlu0.b32.cont [10/16] 0.0, 128
    %2787 = vxpose.xlu0.b32.cont [11/16] 0.0, 128
    %2788 = vxpose.xlu0.b32.cont [12/16] 0.0, 128
    %2789 = vxpose.xlu0.b32.cont [13/16] 0.0, 128
    %2790 = vxpose.xlu0.b32.cont [14/16] 0.0, 128
    %2791 = vxpose.xlu0.b32.cont [15/16] 0.0, 128
    %2792 = vxpose.xlu0.b32.end [16/16] 0.0, 128
    %v2793 = vpop.trf.xlu0
    %v2794 = vpop.trf.xlu0
    %v2795 = vpop.trf.xlu0
    %v2796 = vpop.trf.xlu0
    %v2797 = vpop.trf.xlu0
    %v2798 = vpop.trf.xlu0
    %v2799 = vpop.trf.xlu0
    %v2800 = vpop.trf.xlu0
    %v2801 = vpop.trf.xlu0
    %v2802 = vpop.trf.xlu0
    %v2803 = vpop.trf.xlu0
    %v2804 = vpop.trf.xlu0
    %v2805 = vpop.trf.xlu0
    %v2806 = vpop.trf.xlu0
    %v2807 = vpop.trf.xlu0
    %v2808 = vpop.trf.xlu0
    %2810 = vrot.lane.b32.xlu0 %v1680, 96
    %v2811 = vpop.permute.xlu0 %2810
    %v2814 = vsel %vm1734, %v2793, 0
    %v2817 = vsel %vm1734, %v2794, 0
    %v2820 = vsel %vm1734, %v2795, 0
    %v2823 = vsel %vm1734, %v2796, 0
    %2825 = vmatpush.msra.mxu0 0.0
    %2826 = vmatpush.msra.mxu0 0.0
    %2827 = vmatpush.msra.mxu0 0.0
    %2828 = vmatpush.msra.mxu0 0.0
    %2829 = vmatpush.msra.mxu0 0.0
    %2830 = vmatpush.msra.mxu0 0.0
    %2831 = vmatpush.msra.mxu0 0.0
    %2832 = vmatpush.msra.mxu0 0.0
    %2833 = vmatpush.msra.mxu0 0.0
    %2834 = vmatpush.msra.mxu0 0.0
    %2835 = vmatpush.msra.mxu0 0.0
    %2836 = vmatpush.msra.mxu0 0.0
    %2837 = vmatpush.msra.mxu0 0.0
    %2838 = vmatpush.msra.mxu0 0.0
    %2839 = vmatpush.msra.mxu0 0.0
    %2840 = vmatpush.msra.mxu0 %v2811
    %2841 = vmatmul.f32.gmra.mxu0 %v2814
    %v2842 = vpop.f32.mrf.mxu0
    %v2843 = vadd.f32 0.0, %v2842
    %2844 = vmatmul.f32.gmra.mxu0 %v2817
    %v2845 = vpop.f32.mrf.mxu0
    %v2846 = vadd.f32 0.0, %v2845
    %2847 = vmatmul.f32.gmra.mxu0 %v2820
    %v2848 = vpop.f32.mrf.mxu0
    %v2849 = vadd.f32 0.0, %v2848
    %2850 = vmatmul.f32.gmra.mxu0 %v2823
    %v2851 = vpop.f32.mrf.mxu0
    %v2852 = vadd.f32 0.0, %v2851
    %2853 = vdwg.mxu0
    %2854 = vxpose.xlu0.b32.start [1/16] %v1424, 128
    %2855 = vxpose.xlu0.b32.cont [2/16] 0.0, 128
    %2856 = vxpose.xlu0.b32.cont [3/16] 0.0, 128
    %2857 = vxpose.xlu0.b32.cont [4/16] 0.0, 128
    %2858 = vxpose.xlu0.b32.cont [5/16] 0.0, 128
    %2859 = vxpose.xlu0.b32.cont [6/16] 0.0, 128
    %2860 = vxpose.xlu0.b32.cont [7/16] 0.0, 128
    %2861 = vxpose.xlu0.b32.cont [8/16] 0.0, 128
    %2862 = vxpose.xlu0.b32.cont [9/16] 0.0, 128
    %2863 = vxpose.xlu0.b32.cont [10/16] 0.0, 128
    %2864 = vxpose.xlu0.b32.cont [11/16] 0.0, 128
    %2865 = vxpose.xlu0.b32.cont [12/16] 0.0, 128
    %2866 = vxpose.xlu0.b32.cont [13/16] 0.0, 128
    %2867 = vxpose.xlu0.b32.cont [14/16] 0.0, 128
    %2868 = vxpose.xlu0.b32.cont [15/16] 0.0, 128
    %2869 = vxpose.xlu0.b32.end [16/16] 0.0, 128
    %v2870 = vpop.trf.xlu0
    %v2871 = vpop.trf.xlu0
    %v2872 = vpop.trf.xlu0
    %v2873 = vpop.trf.xlu0
    %v2874 = vpop.trf.xlu0
    %v2875 = vpop.trf.xlu0
    %v2876 = vpop.trf.xlu0
    %v2877 = vpop.trf.xlu0
    %v2878 = vpop.trf.xlu0
    %v2879 = vpop.trf.xlu0
    %v2880 = vpop.trf.xlu0
    %v2881 = vpop.trf.xlu0
    %v2882 = vpop.trf.xlu0
    %v2883 = vpop.trf.xlu0
    %v2884 = vpop.trf.xlu0
    %v2885 = vpop.trf.xlu0
    %2887 = vrot.lane.b32.xlu0 %v1681, 96
    %v2888 = vpop.permute.xlu0 %2887
    %v2891 = vsel %vm1734, %v2870, 0
    %v2894 = vsel %vm1734, %v2871, 0
    %v2897 = vsel %vm1734, %v2872, 0
    %v2900 = vsel %vm1734, %v2873, 0
    %2902 = vmatpush.msra.mxu0 0.0
    %2903 = vmatpush.msra.mxu0 0.0
    %2904 = vmatpush.msra.mxu0 0.0
    %2905 = vmatpush.msra.mxu0 0.0
    %2906 = vmatpush.msra.mxu0 0.0
    %2907 = vmatpush.msra.mxu0 0.0
    %2908 = vmatpush.msra.mxu0 0.0
    %2909 = vmatpush.msra.mxu0 0.0
    %2910 = vmatpush.msra.mxu0 0.0
    %2911 = vmatpush.msra.mxu0 0.0
    %2912 = vmatpush.msra.mxu0 0.0
    %2913 = vmatpush.msra.mxu0 0.0
    %2914 = vmatpush.msra.mxu0 0.0
    %2915 = vmatpush.msra.mxu0 0.0
    %2916 = vmatpush.msra.mxu0 0.0
    %2917 = vmatpush.msra.mxu0 %v2888
    %2918 = vmatmul.f32.gmra.mxu0 %v2891
    %v2919 = vpop.f32.mrf.mxu0
    %v2920 = vadd.f32 0.0, %v2919
    %2921 = vmatmul.f32.gmra.mxu0 %v2894
    %v2922 = vpop.f32.mrf.mxu0
    %v2923 = vadd.f32 0.0, %v2922
    %2924 = vmatmul.f32.gmra.mxu0 %v2897
    %v2925 = vpop.f32.mrf.mxu0
    %v2926 = vadd.f32 0.0, %v2925
    %2927 = vmatmul.f32.gmra.mxu0 %v2900
    %v2928 = vpop.f32.mrf.mxu0
    %v2929 = vadd.f32 0.0, %v2928
    %2930 = vdwg.mxu0
    %2931 = vxpose.xlu0.b32.start [1/16] %v1427, 128
    %2932 = vxpose.xlu0.b32.cont [2/16] 0.0, 128
    %2933 = vxpose.xlu0.b32.cont [3/16] 0.0, 128
    %2934 = vxpose.xlu0.b32.cont [4/16] 0.0, 128
    %2935 = vxpose.xlu0.b32.cont [5/16] 0.0, 128
    %2936 = vxpose.xlu0.b32.cont [6/16] 0.0, 128
    %2937 = vxpose.xlu0.b32.cont [7/16] 0.0, 128
    %2938 = vxpose.xlu0.b32.cont [8/16] 0.0, 128
    %2939 = vxpose.xlu0.b32.cont [9/16] 0.0, 128
    %2940 = vxpose.xlu0.b32.cont [10/16] 0.0, 128
    %2941 = vxpose.xlu0.b32.cont [11/16] 0.0, 128
    %2942 = vxpose.xlu0.b32.cont [12/16] 0.0, 128
    %2943 = vxpose.xlu0.b32.cont [13/16] 0.0, 128
    %2944 = vxpose.xlu0.b32.cont [14/16] 0.0, 128
    %2945 = vxpose.xlu0.b32.cont [15/16] 0.0, 128
    %2946 = vxpose.xlu0.b32.end [16/16] 0.0, 128
    %v2947 = vpop.trf.xlu0
    %v2948 = vpop.trf.xlu0
    %v2949 = vpop.trf.xlu0
    %v2950 = vpop.trf.xlu0
    %v2951 = vpop.trf.xlu0
    %v2952 = vpop.trf.xlu0
    %v2953 = vpop.trf.xlu0
    %v2954 = vpop.trf.xlu0
    %v2955 = vpop.trf.xlu0
    %v2956 = vpop.trf.xlu0
    %v2957 = vpop.trf.xlu0
    %v2958 = vpop.trf.xlu0
    %v2959 = vpop.trf.xlu0
    %v2960 = vpop.trf.xlu0
    %v2961 = vpop.trf.xlu0
    %v2962 = vpop.trf.xlu0
    %2964 = vrot.lane.b32.xlu0 %v1682, 96
    %v2965 = vpop.permute.xlu0 %2964
    %v2968 = vsel %vm1734, %v2947, 0
    %v2971 = vsel %vm1734, %v2948, 0
    %v2974 = vsel %vm1734, %v2949, 0
    %v2977 = vsel %vm1734, %v2950, 0
    %2979 = vmatpush.msra.mxu0 0.0
    %2980 = vmatpush.msra.mxu0 0.0
    %2981 = vmatpush.msra.mxu0 0.0
    %2982 = vmatpush.msra.mxu0 0.0
    %2983 = vmatpush.msra.mxu0 0.0
    %2984 = vmatpush.msra.mxu0 0.0
    %2985 = vmatpush.msra.mxu0 0.0
    %2986 = vmatpush.msra.mxu0 0.0
    %2987 = vmatpush.msra.mxu0 0.0
    %2988 = vmatpush.msra.mxu0 0.0
    %2989 = vmatpush.msra.mxu0 0.0
    %2990 = vmatpush.msra.mxu0 0.0
    %2991 = vmatpush.msra.mxu0 0.0
    %2992 = vmatpush.msra.mxu0 0.0
    %2993 = vmatpush.msra.mxu0 0.0
    %2994 = vmatpush.msra.mxu0 %v2965
    %2995 = vmatmul.f32.gmra.mxu0 %v2968
    %v2996 = vpop.f32.mrf.mxu0
    %v2997 = vadd.f32 0.0, %v2996
    %2998 = vmatmul.f32.gmra.mxu0 %v2971
    %v2999 = vpop.f32.mrf.mxu0
    %v3000 = vadd.f32 0.0, %v2999
    %3001 = vmatmul.f32.gmra.mxu0 %v2974
    %v3002 = vpop.f32.mrf.mxu0
    %v3003 = vadd.f32 0.0, %v3002
    %3004 = vmatmul.f32.gmra.mxu0 %v2977
    %v3005 = vpop.f32.mrf.mxu0
    %v3006 = vadd.f32 0.0, %v3005
    %3007 = vdwg.mxu0
    %3008 = vxpose.xlu0.b32.start [1/16] %v1430, 128
    %3009 = vxpose.xlu0.b32.cont [2/16] 0.0, 128
    %3010 = vxpose.xlu0.b32.cont [3/16] 0.0, 128
    %3011 = vxpose.xlu0.b32.cont [4/16] 0.0, 128
    %3012 = vxpose.xlu0.b32.cont [5/16] 0.0, 128
    %3013 = vxpose.xlu0.b32.cont [6/16] 0.0, 128
    %3014 = vxpose.xlu0.b32.cont [7/16] 0.0, 128
    %3015 = vxpose.xlu0.b32.cont [8/16] 0.0, 128
    %3016 = vxpose.xlu0.b32.cont [9/16] 0.0, 128
    %3017 = vxpose.xlu0.b32.cont [10/16] 0.0, 128
    %3018 = vxpose.xlu0.b32.cont [11/16] 0.0, 128
    %3019 = vxpose.xlu0.b32.cont [12/16] 0.0, 128
    %3020 = vxpose.xlu0.b32.cont [13/16] 0.0, 128
    %3021 = vxpose.xlu0.b32.cont [14/16] 0.0, 128
    %3022 = vxpose.xlu0.b32.cont [15/16] 0.0, 128
    %3023 = vxpose.xlu0.b32.end [16/16] 0.0, 128
    %v3024 = vpop.trf.xlu0
    %v3025 = vpop.trf.xlu0
    %v3026 = vpop.trf.xlu0
    %v3027 = vpop.trf.xlu0
    %v3028 = vpop.trf.xlu0
    %v3029 = vpop.trf.xlu0
    %v3030 = vpop.trf.xlu0
    %v3031 = vpop.trf.xlu0
    %v3032 = vpop.trf.xlu0
    %v3033 = vpop.trf.xlu0
    %v3034 = vpop.trf.xlu0
    %v3035 = vpop.trf.xlu0
    %v3036 = vpop.trf.xlu0
    %v3037 = vpop.trf.xlu0
    %v3038 = vpop.trf.xlu0
    %v3039 = vpop.trf.xlu0
    %3041 = vrot.lane.b32.xlu0 %v1683, 96
    %v3042 = vpop.permute.xlu0 %3041
    %v3045 = vsel %vm1734, %v3024, 0
    %v3048 = vsel %vm1734, %v3025, 0
    %v3051 = vsel %vm1734, %v3026, 0
    %v3054 = vsel %vm1734, %v3027, 0
    %3056 = vmatpush.msra.mxu0 0.0
    %3057 = vmatpush.msra.mxu0 0.0
    %3058 = vmatpush.msra.mxu0 0.0
    %3059 = vmatpush.msra.mxu0 0.0
    %3060 = vmatpush.msra.mxu0 0.0
    %3061 = vmatpush.msra.mxu0 0.0
    %3062 = vmatpush.msra.mxu0 0.0
    %3063 = vmatpush.msra.mxu0 0.0
    %3064 = vmatpush.msra.mxu0 0.0
    %3065 = vmatpush.msra.mxu0 0.0
    %3066 = vmatpush.msra.mxu0 0.0
    %3067 = vmatpush.msra.mxu0 0.0
    %3068 = vmatpush.msra.mxu0 0.0
    %3069 = vmatpush.msra.mxu0 0.0
    %3070 = vmatpush.msra.mxu0 0.0
    %3071 = vmatpush.msra.mxu0 %v3042
    %3072 = vmatmul.f32.gmra.mxu0 %v3045
    %v3073 = vpop.f32.mrf.mxu0
    %v3074 = vadd.f32 0.0, %v3073
    %3075 = vmatmul.f32.gmra.mxu0 %v3048
    %v3076 = vpop.f32.mrf.mxu0
    %v3077 = vadd.f32 0.0, %v3076
    %3078 = vmatmul.f32.gmra.mxu0 %v3051
    %v3079 = vpop.f32.mrf.mxu0
    %v3080 = vadd.f32 0.0, %v3079
    %3081 = vmatmul.f32.gmra.mxu0 %v3054
    %v3082 = vpop.f32.mrf.mxu0
    %v3083 = vadd.f32 0.0, %v3082
    %3084 = vdwg.mxu0
    %3085 = vxpose.xlu0.b32.start [1/16] %v1433, 128
    %3086 = vxpose.xlu0.b32.cont [2/16] 0.0, 128
    %3087 = vxpose.xlu0.b32.cont [3/16] 0.0, 128
    %3088 = vxpose.xlu0.b32.cont [4/16] 0.0, 128
    %3089 = vxpose.xlu0.b32.cont [5/16] 0.0, 128
    %3090 = vxpose.xlu0.b32.cont [6/16] 0.0, 128
    %3091 = vxpose.xlu0.b32.cont [7/16] 0.0, 128
    %3092 = vxpose.xlu0.b32.cont [8/16] 0.0, 128
    %3093 = vxpose.xlu0.b32.cont [9/16] 0.0, 128
    %3094 = vxpose.xlu0.b32.cont [10/16] 0.0, 128
    %3095 = vxpose.xlu0.b32.cont [11/16] 0.0, 128
    %3096 = vxpose.xlu0.b32.cont [12/16] 0.0, 128
    %3097 = vxpose.xlu0.b32.cont [13/16] 0.0, 128
    %3098 = vxpose.xlu0.b32.cont [14/16] 0.0, 128
    %3099 = vxpose.xlu0.b32.cont [15/16] 0.0, 128
    %3100 = vxpose.xlu0.b32.end [16/16] 0.0, 128
    %v3101 = vpop.trf.xlu0
    %v3102 = vpop.trf.xlu0
    %v3103 = vpop.trf.xlu0
    %v3104 = vpop.trf.xlu0
    %v3105 = vpop.trf.xlu0
    %v3106 = vpop.trf.xlu0
    %v3107 = vpop.trf.xlu0
    %v3108 = vpop.trf.xlu0
    %v3109 = vpop.trf.xlu0
    %v3110 = vpop.trf.xlu0
    %v3111 = vpop.trf.xlu0
    %v3112 = vpop.trf.xlu0
    %v3113 = vpop.trf.xlu0
    %v3114 = vpop.trf.xlu0
    %v3115 = vpop.trf.xlu0
    %v3116 = vpop.trf.xlu0
    %3118 = vrot.lane.b32.xlu0 %v1684, 96
    %v3119 = vpop.permute.xlu0 %3118
    %v3122 = vsel %vm1734, %v3101, 0
    %v3125 = vsel %vm1734, %v3102, 0
    %v3128 = vsel %vm1734, %v3103, 0
    %v3131 = vsel %vm1734, %v3104, 0
    %3133 = vmatpush.msra.mxu0 0.0
    %3134 = vmatpush.msra.mxu0 0.0
    %3135 = vmatpush.msra.mxu0 0.0
    %3136 = vmatpush.msra.mxu0 0.0
    %3137 = vmatpush.msra.mxu0 0.0
    %3138 = vmatpush.msra.mxu0 0.0
    %3139 = vmatpush.msra.mxu0 0.0
    %3140 = vmatpush.msra.mxu0 0.0
    %3141 = vmatpush.msra.mxu0 0.0
    %3142 = vmatpush.msra.mxu0 0.0
    %3143 = vmatpush.msra.mxu0 0.0
    %3144 = vmatpush.msra.mxu0 0.0
    %3145 = vmatpush.msra.mxu0 0.0
    %3146 = vmatpush.msra.mxu0 0.0
    %3147 = vmatpush.msra.mxu0 0.0
    %3148 = vmatpush.msra.mxu0 %v3119
    %3149 = vmatmul.f32.gmra.mxu0 %v3122
    %v3150 = vpop.f32.mrf.mxu0
    %v3151 = vadd.f32 0.0, %v3150
    %3152 = vmatmul.f32.gmra.mxu0 %v3125
    %v3153 = vpop.f32.mrf.mxu0
    %v3154 = vadd.f32 0.0, %v3153
    %3155 = vmatmul.f32.gmra.mxu0 %v3128
    %v3156 = vpop.f32.mrf.mxu0
    %v3157 = vadd.f32 0.0, %v3156
    %3158 = vmatmul.f32.gmra.mxu0 %v3131
    %v3159 = vpop.f32.mrf.mxu0
    %v3160 = vadd.f32 0.0, %v3159
    %3161 = vdwg.mxu0
    %3162 = vxpose.xlu0.b32.start [1/16] %v1436, 128
    %3163 = vxpose.xlu0.b32.cont [2/16] 0.0, 128
    %3164 = vxpose.xlu0.b32.cont [3/16] 0.0, 128
    %3165 = vxpose.xlu0.b32.cont [4/16] 0.0, 128
    %3166 = vxpose.xlu0.b32.cont [5/16] 0.0, 128
    %3167 = vxpose.xlu0.b32.cont [6/16] 0.0, 128
    %3168 = vxpose.xlu0.b32.cont [7/16] 0.0, 128
    %3169 = vxpose.xlu0.b32.cont [8/16] 0.0, 128
    %3170 = vxpose.xlu0.b32.cont [9/16] 0.0, 128
    %3171 = vxpose.xlu0.b32.cont [10/16] 0.0, 128
    %3172 = vxpose.xlu0.b32.cont [11/16] 0.0, 128
    %3173 = vxpose.xlu0.b32.cont [12/16] 0.0, 128
    %3174 = vxpose.xlu0.b32.cont [13/16] 0.0, 128
    %3175 = vxpose.xlu0.b32.cont [14/16] 0.0, 128
    %3176 = vxpose.xlu0.b32.cont [15/16] 0.0, 128
    %3177 = vxpose.xlu0.b32.end [16/16] 0.0, 128
    %v3178 = vpop.trf.xlu0
    %v3179 = vpop.trf.xlu0
    %v3180 = vpop.trf.xlu0
    %v3181 = vpop.trf.xlu0
    %v3182 = vpop.trf.xlu0
    %v3183 = vpop.trf.xlu0
    %v3184 = vpop.trf.xlu0
    %v3185 = vpop.trf.xlu0
    %v3186 = vpop.trf.xlu0
    %v3187 = vpop.trf.xlu0
    %v3188 = vpop.trf.xlu0
    %v3189 = vpop.trf.xlu0
    %v3190 = vpop.trf.xlu0
    %v3191 = vpop.trf.xlu0
    %v3192 = vpop.trf.xlu0
    %v3193 = vpop.trf.xlu0
    %3195 = vrot.lane.b32.xlu0 %v1685, 96
    %v3196 = vpop.permute.xlu0 %3195
    %v3199 = vsel %vm1734, %v3178, 0
    %v3202 = vsel %vm1734, %v3179, 0
    %v3205 = vsel %vm1734, %v3180, 0
    %v3208 = vsel %vm1734, %v3181, 0
    %3210 = vmatpush.msra.mxu0 0.0
    %3211 = vmatpush.msra.mxu0 0.0
    %3212 = vmatpush.msra.mxu0 0.0
    %3213 = vmatpush.msra.mxu0 0.0
    %3214 = vmatpush.msra.mxu0 0.0
    %3215 = vmatpush.msra.mxu0 0.0
    %3216 = vmatpush.msra.mxu0 0.0
    %3217 = vmatpush.msra.mxu0 0.0
    %3218 = vmatpush.msra.mxu0 0.0
    %3219 = vmatpush.msra.mxu0 0.0
    %3220 = vmatpush.msra.mxu0 0.0
    %3221 = vmatpush.msra.mxu0 0.0
    %3222 = vmatpush.msra.mxu0 0.0
    %3223 = vmatpush.msra.mxu0 0.0
    %3224 = vmatpush.msra.mxu0 0.0
    %3225 = vmatpush.msra.mxu0 %v3196
    %3226 = vmatmul.f32.gmra.mxu0 %v3199
    %v3227 = vpop.f32.mrf.mxu0
    %v3228 = vadd.f32 0.0, %v3227
    %3229 = vmatmul.f32.gmra.mxu0 %v3202
    %v3230 = vpop.f32.mrf.mxu0
    %v3231 = vadd.f32 0.0, %v3230
    %3232 = vmatmul.f32.gmra.mxu0 %v3205
    %v3233 = vpop.f32.mrf.mxu0
    %v3234 = vadd.f32 0.0, %v3233
    %3235 = vmatmul.f32.gmra.mxu0 %v3208
    %v3236 = vpop.f32.mrf.mxu0
    %v3237 = vadd.f32 0.0, %v3236
    %3238 = vdwg.mxu0
    %3239 = vxpose.xlu0.b32.start [1/16] %v1439, 128
    %3240 = vxpose.xlu0.b32.cont [2/16] 0.0, 128
    %3241 = vxpose.xlu0.b32.cont [3/16] 0.0, 128
    %3242 = vxpose.xlu0.b32.cont [4/16] 0.0, 128
    %3243 = vxpose.xlu0.b32.cont [5/16] 0.0, 128
    %3244 = vxpose.xlu0.b32.cont [6/16] 0.0, 128
    %3245 = vxpose.xlu0.b32.cont [7/16] 0.0, 128
    %3246 = vxpose.xlu0.b32.cont [8/16] 0.0, 128
    %3247 = vxpose.xlu0.b32.cont [9/16] 0.0, 128
    %3248 = vxpose.xlu0.b32.cont [10/16] 0.0, 128
    %3249 = vxpose.xlu0.b32.cont [11/16] 0.0, 128
    %3250 = vxpose.xlu0.b32.cont [12/16] 0.0, 128
    %3251 = vxpose.xlu0.b32.cont [13/16] 0.0, 128
    %3252 = vxpose.xlu0.b32.cont [14/16] 0.0, 128
    %3253 = vxpose.xlu0.b32.cont [15/16] 0.0, 128
    %3254 = vxpose.xlu0.b32.end [16/16] 0.0, 128
    %v3255 = vpop.trf.xlu0
    %v3256 = vpop.trf.xlu0
    %v3257 = vpop.trf.xlu0
    %v3258 = vpop.trf.xlu0
    %v3259 = vpop.trf.xlu0
    %v3260 = vpop.trf.xlu0
    %v3261 = vpop.trf.xlu0
    %v3262 = vpop.trf.xlu0
    %v3263 = vpop.trf.xlu0
    %v3264 = vpop.trf.xlu0
    %v3265 = vpop.trf.xlu0
    %v3266 = vpop.trf.xlu0
    %v3267 = vpop.trf.xlu0
    %v3268 = vpop.trf.xlu0
    %v3269 = vpop.trf.xlu0
    %v3270 = vpop.trf.xlu0
    %3272 = vrot.lane.b32.xlu0 %v1686, 96
    %v3273 = vpop.permute.xlu0 %3272
    %v3276 = vsel %vm1734, %v3255, 0
    %v3279 = vsel %vm1734, %v3256, 0
    %v3282 = vsel %vm1734, %v3257, 0
    %v3285 = vsel %vm1734, %v3258, 0
    %3287 = vmatpush.msra.mxu0 0.0
    %3288 = vmatpush.msra.mxu0 0.0
    %3289 = vmatpush.msra.mxu0 0.0
    %3290 = vmatpush.msra.mxu0 0.0
    %3291 = vmatpush.msra.mxu0 0.0
    %3292 = vmatpush.msra.mxu0 0.0
    %3293 = vmatpush.msra.mxu0 0.0
    %3294 = vmatpush.msra.mxu0 0.0
    %3295 = vmatpush.msra.mxu0 0.0
    %3296 = vmatpush.msra.mxu0 0.0
    %3297 = vmatpush.msra.mxu0 0.0
    %3298 = vmatpush.msra.mxu0 0.0
    %3299 = vmatpush.msra.mxu0 0.0
    %3300 = vmatpush.msra.mxu0 0.0
    %3301 = vmatpush.msra.mxu0 0.0
    %3302 = vmatpush.msra.mxu0 %v3273
    %3303 = vmatmul.f32.gmra.mxu0 %v3276
    %v3304 = vpop.f32.mrf.mxu0
    %v3305 = vadd.f32 0.0, %v3304
    %3306 = vmatmul.f32.gmra.mxu0 %v3279
    %v3307 = vpop.f32.mrf.mxu0
    %v3308 = vadd.f32 0.0, %v3307
    %3309 = vmatmul.f32.gmra.mxu0 %v3282
    %v3310 = vpop.f32.mrf.mxu0
    %v3311 = vadd.f32 0.0, %v3310
    %3312 = vmatmul.f32.gmra.mxu0 %v3285
    %v3313 = vpop.f32.mrf.mxu0
    %v3314 = vadd.f32 0.0, %v3313
    %3315 = vdwg.mxu0
    %3316 = vxpose.xlu0.b32.start [1/16] %v1442, 128
    %3317 = vxpose.xlu0.b32.cont [2/16] 0.0, 128
    %3318 = vxpose.xlu0.b32.cont [3/16] 0.0, 128
    %3319 = vxpose.xlu0.b32.cont [4/16] 0.0, 128
    %3320 = vxpose.xlu0.b32.cont [5/16] 0.0, 128
    %3321 = vxpose.xlu0.b32.cont [6/16] 0.0, 128
    %3322 = vxpose.xlu0.b32.cont [7/16] 0.0, 128
    %3323 = vxpose.xlu0.b32.cont [8/16] 0.0, 128
    %3324 = vxpose.xlu0.b32.cont [9/16] 0.0, 128
    %3325 = vxpose.xlu0.b32.cont [10/16] 0.0, 128
    %3326 = vxpose.xlu0.b32.cont [11/16] 0.0, 128
    %3327 = vxpose.xlu0.b32.cont [12/16] 0.0, 128
    %3328 = vxpose.xlu0.b32.cont [13/16] 0.0, 128
    %3329 = vxpose.xlu0.b32.cont [14/16] 0.0, 128
    %3330 = vxpose.xlu0.b32.cont [15/16] 0.0, 128
    %3331 = vxpose.xlu0.b32.end [16/16] 0.0, 128
    %v3332 = vpop.trf.xlu0
    %v3333 = vpop.trf.xlu0
    %v3334 = vpop.trf.xlu0
    %v3335 = vpop.trf.xlu0
    %v3336 = vpop.trf.xlu0
    %v3337 = vpop.trf.xlu0
    %v3338 = vpop.trf.xlu0
    %v3339 = vpop.trf.xlu0
    %v3340 = vpop.trf.xlu0
    %v3341 = vpop.trf.xlu0
    %v3342 = vpop.trf.xlu0
    %v3343 = vpop.trf.xlu0
    %v3344 = vpop.trf.xlu0
    %v3345 = vpop.trf.xlu0
    %v3346 = vpop.trf.xlu0
    %v3347 = vpop.trf.xlu0
    %3349 = vrot.lane.b32.xlu0 %v1687, 96
    %v3350 = vpop.permute.xlu0 %3349
    %v3353 = vsel %vm1734, %v3332, 0
    %v3356 = vsel %vm1734, %v3333, 0
    %v3359 = vsel %vm1734, %v3334, 0
    %v3362 = vsel %vm1734, %v3335, 0
    %3364 = vmatpush.msra.mxu0 0.0
    %3365 = vmatpush.msra.mxu0 0.0
    %3366 = vmatpush.msra.mxu0 0.0
    %3367 = vmatpush.msra.mxu0 0.0
    %3368 = vmatpush.msra.mxu0 0.0
    %3369 = vmatpush.msra.mxu0 0.0
    %3370 = vmatpush.msra.mxu0 0.0
    %3371 = vmatpush.msra.mxu0 0.0
    %3372 = vmatpush.msra.mxu0 0.0
    %3373 = vmatpush.msra.mxu0 0.0
    %3374 = vmatpush.msra.mxu0 0.0
    %3375 = vmatpush.msra.mxu0 0.0
    %3376 = vmatpush.msra.mxu0 0.0
    %3377 = vmatpush.msra.mxu0 0.0
    %3378 = vmatpush.msra.mxu0 0.0
    %3379 = vmatpush.msra.mxu0 %v3350
    %3380 = vmatmul.f32.gmra.mxu0 %v3353
    %v3381 = vpop.f32.mrf.mxu0
    %v3382 = vadd.f32 0.0, %v3381
    %3383 = vmatmul.f32.gmra.mxu0 %v3356
    %v3384 = vpop.f32.mrf.mxu0
    %v3385 = vadd.f32 0.0, %v3384
    %3386 = vmatmul.f32.gmra.mxu0 %v3359
    %v3387 = vpop.f32.mrf.mxu0
    %v3388 = vadd.f32 0.0, %v3387
    %3389 = vmatmul.f32.gmra.mxu0 %v3362
    %v3390 = vpop.f32.mrf.mxu0
    %v3391 = vadd.f32 0.0, %v3390
    %3392 = vdwg.mxu0
    %3393 = vxpose.xlu0.b32.start [1/16] %v1445, 128
    %3394 = vxpose.xlu0.b32.cont [2/16] 0.0, 128
    %3395 = vxpose.xlu0.b32.cont [3/16] 0.0, 128
    %3396 = vxpose.xlu0.b32.cont [4/16] 0.0, 128
    %3397 = vxpose.xlu0.b32.cont [5/16] 0.0, 128
    %3398 = vxpose.xlu0.b32.cont [6/16] 0.0, 128
    %3399 = vxpose.xlu0.b32.cont [7/16] 0.0, 128
    %3400 = vxpose.xlu0.b32.cont [8/16] 0.0, 128
    %3401 = vxpose.xlu0.b32.cont [9/16] 0.0, 128
    %3402 = vxpose.xlu0.b32.cont [10/16] 0.0, 128
    %3403 = vxpose.xlu0.b32.cont [11/16] 0.0, 128
    %3404 = vxpose.xlu0.b32.cont [12/16] 0.0, 128
    %3405 = vxpose.xlu0.b32.cont [13/16] 0.0, 128
    %3406 = vxpose.xlu0.b32.cont [14/16] 0.0, 128
    %3407 = vxpose.xlu0.b32.cont [15/16] 0.0, 128
    %3408 = vxpose.xlu0.b32.end [16/16] 0.0, 128
    %v3409 = vpop.trf.xlu0
    %v3410 = vpop.trf.xlu0
    %v3411 = vpop.trf.xlu0
    %v3412 = vpop.trf.xlu0
    %v3413 = vpop.trf.xlu0
    %v3414 = vpop.trf.xlu0
    %v3415 = vpop.trf.xlu0
    %v3416 = vpop.trf.xlu0
    %v3417 = vpop.trf.xlu0
    %v3418 = vpop.trf.xlu0
    %v3419 = vpop.trf.xlu0
    %v3420 = vpop.trf.xlu0
    %v3421 = vpop.trf.xlu0
    %v3422 = vpop.trf.xlu0
    %v3423 = vpop.trf.xlu0
    %v3424 = vpop.trf.xlu0
    %3426 = vrot.lane.b32.xlu0 %v1688, 96
    %v3427 = vpop.permute.xlu0 %3426
    %v3430 = vsel %vm1734, %v3409, 0
    %v3433 = vsel %vm1734, %v3410, 0
    %v3436 = vsel %vm1734, %v3411, 0
    %v3439 = vsel %vm1734, %v3412, 0
    %3441 = vmatpush.msra.mxu0 0.0
    %3442 = vmatpush.msra.mxu0 0.0
    %3443 = vmatpush.msra.mxu0 0.0
    %3444 = vmatpush.msra.mxu0 0.0
    %3445 = vmatpush.msra.mxu0 0.0
    %3446 = vmatpush.msra.mxu0 0.0
    %3447 = vmatpush.msra.mxu0 0.0
    %3448 = vmatpush.msra.mxu0 0.0
    %3449 = vmatpush.msra.mxu0 0.0
    %3450 = vmatpush.msra.mxu0 0.0
    %3451 = vmatpush.msra.mxu0 0.0
    %3452 = vmatpush.msra.mxu0 0.0
    %3453 = vmatpush.msra.mxu0 0.0
    %3454 = vmatpush.msra.mxu0 0.0
    %3455 = vmatpush.msra.mxu0 0.0
    %3456 = vmatpush.msra.mxu0 %v3427
    %3457 = vmatmul.f32.gmra.mxu0 %v3430
    %v3458 = vpop.f32.mrf.mxu0
    %v3459 = vadd.f32 0.0, %v3458
    %3460 = vmatmul.f32.gmra.mxu0 %v3433
    %v3461 = vpop.f32.mrf.mxu0
    %v3462 = vadd.f32 0.0, %v3461
    %3463 = vmatmul.f32.gmra.mxu0 %v3436
    %v3464 = vpop.f32.mrf.mxu0
    %v3465 = vadd.f32 0.0, %v3464
    %3466 = vmatmul.f32.gmra.mxu0 %v3439
    %v3467 = vpop.f32.mrf.mxu0
    %v3468 = vadd.f32 0.0, %v3467
    %3469 = vdwg.mxu0
    %3470 = vxpose.xlu0.b32.start [1/16] %v1448, 128
    %3471 = vxpose.xlu0.b32.cont [2/16] 0.0, 128
    %3472 = vxpose.xlu0.b32.cont [3/16] 0.0, 128
    %3473 = vxpose.xlu0.b32.cont [4/16] 0.0, 128
    %3474 = vxpose.xlu0.b32.cont [5/16] 0.0, 128
    %3475 = vxpose.xlu0.b32.cont [6/16] 0.0, 128
    %3476 = vxpose.xlu0.b32.cont [7/16] 0.0, 128
    %3477 = vxpose.xlu0.b32.cont [8/16] 0.0, 128
    %3478 = vxpose.xlu0.b32.cont [9/16] 0.0, 128
    %3479 = vxpose.xlu0.b32.cont [10/16] 0.0, 128
    %3480 = vxpose.xlu0.b32.cont [11/16] 0.0, 128
    %3481 = vxpose.xlu0.b32.cont [12/16] 0.0, 128
    %3482 = vxpose.xlu0.b32.cont [13/16] 0.0, 128
    %3483 = vxpose.xlu0.b32.cont [14/16] 0.0, 128
    %3484 = vxpose.xlu0.b32.cont [15/16] 0.0, 128
    %3485 = vxpose.xlu0.b32.end [16/16] 0.0, 128
    %v3486 = vpop.trf.xlu0
    %v3487 = vpop.trf.xlu0
    %v3488 = vpop.trf.xlu0
    %v3489 = vpop.trf.xlu0
    %v3490 = vpop.trf.xlu0
    %v3491 = vpop.trf.xlu0
    %v3492 = vpop.trf.xlu0
    %v3493 = vpop.trf.xlu0
    %v3494 = vpop.trf.xlu0
    %v3495 = vpop.trf.xlu0
    %v3496 = vpop.trf.xlu0
    %v3497 = vpop.trf.xlu0
    %v3498 = vpop.trf.xlu0
    %v3499 = vpop.trf.xlu0
    %v3500 = vpop.trf.xlu0
    %v3501 = vpop.trf.xlu0
    %3503 = vrot.lane.b32.xlu0 %v1689, 96
    %v3504 = vpop.permute.xlu0 %3503
    %v3507 = vsel %vm1734, %v3486, 0
    %v3510 = vsel %vm1734, %v3487, 0
    %v3513 = vsel %vm1734, %v3488, 0
    %v3516 = vsel %vm1734, %v3489, 0
    %3518 = vmatpush.msra.mxu0 0.0
    %3519 = vmatpush.msra.mxu0 0.0
    %3520 = vmatpush.msra.mxu0 0.0
    %3521 = vmatpush.msra.mxu0 0.0
    %3522 = vmatpush.msra.mxu0 0.0
    %3523 = vmatpush.msra.mxu0 0.0
    %3524 = vmatpush.msra.mxu0 0.0
    %3525 = vmatpush.msra.mxu0 0.0
    %3526 = vmatpush.msra.mxu0 0.0
    %3527 = vmatpush.msra.mxu0 0.0
    %3528 = vmatpush.msra.mxu0 0.0
    %3529 = vmatpush.msra.mxu0 0.0
    %3530 = vmatpush.msra.mxu0 0.0
    %3531 = vmatpush.msra.mxu0 0.0
    %3532 = vmatpush.msra.mxu0 0.0
    %3533 = vmatpush.msra.mxu0 %v3504
    %3534 = vmatmul.f32.gmra.mxu0 %v3507
    %v3535 = vpop.f32.mrf.mxu0
    %v3536 = vadd.f32 0.0, %v3535
    %3537 = vmatmul.f32.gmra.mxu0 %v3510
    %v3538 = vpop.f32.mrf.mxu0
    %v3539 = vadd.f32 0.0, %v3538
    %3540 = vmatmul.f32.gmra.mxu0 %v3513
    %v3541 = vpop.f32.mrf.mxu0
    %v3542 = vadd.f32 0.0, %v3541
    %3543 = vmatmul.f32.gmra.mxu0 %v3516
    %v3544 = vpop.f32.mrf.mxu0
    %v3545 = vadd.f32 0.0, %v3544
    %3546 = vdwg.mxu0
    %3547 = vxpose.xlu0.b32.start [1/16] %v1451, 128
    %3548 = vxpose.xlu0.b32.cont [2/16] 0.0, 128
    %3549 = vxpose.xlu0.b32.cont [3/16] 0.0, 128
    %3550 = vxpose.xlu0.b32.cont [4/16] 0.0, 128
    %3551 = vxpose.xlu0.b32.cont [5/16] 0.0, 128
    %3552 = vxpose.xlu0.b32.cont [6/16] 0.0, 128
    %3553 = vxpose.xlu0.b32.cont [7/16] 0.0, 128
    %3554 = vxpose.xlu0.b32.cont [8/16] 0.0, 128
    %3555 = vxpose.xlu0.b32.cont [9/16] 0.0, 128
    %3556 = vxpose.xlu0.b32.cont [10/16] 0.0, 128
    %3557 = vxpose.xlu0.b32.cont [11/16] 0.0, 128
    %3558 = vxpose.xlu0.b32.cont [12/16] 0.0, 128
    %3559 = vxpose.xlu0.b32.cont [13/16] 0.0, 128
    %3560 = vxpose.xlu0.b32.cont [14/16] 0.0, 128
    %3561 = vxpose.xlu0.b32.cont [15/16] 0.0, 128
    %3562 = vxpose.xlu0.b32.end [16/16] 0.0, 128
    %v3563 = vpop.trf.xlu0
    %v3564 = vpop.trf.xlu0
    %v3565 = vpop.trf.xlu0
    %v3566 = vpop.trf.xlu0
    %v3567 = vpop.trf.xlu0
    %v3568 = vpop.trf.xlu0
    %v3569 = vpop.trf.xlu0
    %v3570 = vpop.trf.xlu0
    %v3571 = vpop.trf.xlu0
    %v3572 = vpop.trf.xlu0
    %v3573 = vpop.trf.xlu0
    %v3574 = vpop.trf.xlu0
    %v3575 = vpop.trf.xlu0
    %v3576 = vpop.trf.xlu0
    %v3577 = vpop.trf.xlu0
    %v3578 = vpop.trf.xlu0
    %3580 = vrot.lane.b32.xlu0 %v1690, 96
    %v3581 = vpop.permute.xlu0 %3580
    %v3584 = vsel %vm1734, %v3563, 0
    %v3587 = vsel %vm1734, %v3564, 0
    %v3590 = vsel %vm1734, %v3565, 0
    %v3593 = vsel %vm1734, %v3566, 0
    %3595 = vmatpush.msra.mxu0 0.0
    %3596 = vmatpush.msra.mxu0 0.0
    %3597 = vmatpush.msra.mxu0 0.0
    %3598 = vmatpush.msra.mxu0 0.0
    %3599 = vmatpush.msra.mxu0 0.0
    %3600 = vmatpush.msra.mxu0 0.0
    %3601 = vmatpush.msra.mxu0 0.0
    %3602 = vmatpush.msra.mxu0 0.0
    %3603 = vmatpush.msra.mxu0 0.0
    %3604 = vmatpush.msra.mxu0 0.0
    %3605 = vmatpush.msra.mxu0 0.0
    %3606 = vmatpush.msra.mxu0 0.0
    %3607 = vmatpush.msra.mxu0 0.0
    %3608 = vmatpush.msra.mxu0 0.0
    %3609 = vmatpush.msra.mxu0 0.0
    %3610 = vmatpush.msra.mxu0 %v3581
    %3611 = vmatmul.f32.gmra.mxu0 %v3584
    %v3612 = vpop.f32.mrf.mxu0
    %v3613 = vadd.f32 0.0, %v3612
    %3614 = vmatmul.f32.gmra.mxu0 %v3587
    %v3615 = vpop.f32.mrf.mxu0
    %v3616 = vadd.f32 0.0, %v3615
    %3617 = vmatmul.f32.gmra.mxu0 %v3590
    %v3618 = vpop.f32.mrf.mxu0
    %v3619 = vadd.f32 0.0, %v3618
    %3620 = vmatmul.f32.gmra.mxu0 %v3593
    %v3621 = vpop.f32.mrf.mxu0
    %v3622 = vadd.f32 0.0, %v3621
    %3623 = vdwg.mxu0
    %3624 = vxpose.xlu0.b32.start [1/16] %v1454, 128
    %3625 = vxpose.xlu0.b32.cont [2/16] 0.0, 128
    %3626 = vxpose.xlu0.b32.cont [3/16] 0.0, 128
    %3627 = vxpose.xlu0.b32.cont [4/16] 0.0, 128
    %3628 = vxpose.xlu0.b32.cont [5/16] 0.0, 128
    %3629 = vxpose.xlu0.b32.cont [6/16] 0.0, 128
    %3630 = vxpose.xlu0.b32.cont [7/16] 0.0, 128
    %3631 = vxpose.xlu0.b32.cont [8/16] 0.0, 128
    %3632 = vxpose.xlu0.b32.cont [9/16] 0.0, 128
    %3633 = vxpose.xlu0.b32.cont [10/16] 0.0, 128
    %3634 = vxpose.xlu0.b32.cont [11/16] 0.0, 128
    %3635 = vxpose.xlu0.b32.cont [12/16] 0.0, 128
    %3636 = vxpose.xlu0.b32.cont [13/16] 0.0, 128
    %3637 = vxpose.xlu0.b32.cont [14/16] 0.0, 128
    %3638 = vxpose.xlu0.b32.cont [15/16] 0.0, 128
    %3639 = vxpose.xlu0.b32.end [16/16] 0.0, 128
    %v3640 = vpop.trf.xlu0
    %v3641 = vpop.trf.xlu0
    %v3642 = vpop.trf.xlu0
    %v3643 = vpop.trf.xlu0
    %v3644 = vpop.trf.xlu0
    %v3645 = vpop.trf.xlu0
    %v3646 = vpop.trf.xlu0
    %v3647 = vpop.trf.xlu0
    %v3648 = vpop.trf.xlu0
    %v3649 = vpop.trf.xlu0
    %v3650 = vpop.trf.xlu0
    %v3651 = vpop.trf.xlu0
    %v3652 = vpop.trf.xlu0
    %v3653 = vpop.trf.xlu0
    %v3654 = vpop.trf.xlu0
    %v3655 = vpop.trf.xlu0
    %3657 = vrot.lane.b32.xlu0 %v1691, 96
    %v3658 = vpop.permute.xlu0 %3657
    %v3661 = vsel %vm1734, %v3640, 0
    %v3664 = vsel %vm1734, %v3641, 0
    %v3667 = vsel %vm1734, %v3642, 0
    %v3670 = vsel %vm1734, %v3643, 0
    %3672 = vmatpush.msra.mxu0 0.0
    %3673 = vmatpush.msra.mxu0 0.0
    %3674 = vmatpush.msra.mxu0 0.0
    %3675 = vmatpush.msra.mxu0 0.0
    %3676 = vmatpush.msra.mxu0 0.0
    %3677 = vmatpush.msra.mxu0 0.0
    %3678 = vmatpush.msra.mxu0 0.0
    %3679 = vmatpush.msra.mxu0 0.0
    %3680 = vmatpush.msra.mxu0 0.0
    %3681 = vmatpush.msra.mxu0 0.0
    %3682 = vmatpush.msra.mxu0 0.0
    %3683 = vmatpush.msra.mxu0 0.0
    %3684 = vmatpush.msra.mxu0 0.0
    %3685 = vmatpush.msra.mxu0 0.0
    %3686 = vmatpush.msra.mxu0 0.0
    %3687 = vmatpush.msra.mxu0 %v3658
    %3688 = vmatmul.f32.gmra.mxu0 %v3661
    %v3689 = vpop.f32.mrf.mxu0
    %v3690 = vadd.f32 0.0, %v3689
    %3691 = vmatmul.f32.gmra.mxu0 %v3664
    %v3692 = vpop.f32.mrf.mxu0
    %v3693 = vadd.f32 0.0, %v3692
    %3694 = vmatmul.f32.gmra.mxu0 %v3667
    %v3695 = vpop.f32.mrf.mxu0
    %v3696 = vadd.f32 0.0, %v3695
    %3697 = vmatmul.f32.gmra.mxu0 %v3670
    %v3698 = vpop.f32.mrf.mxu0
    %v3699 = vadd.f32 0.0, %v3698
    %3700 = vdwg.mxu0
    %3701 = vxpose.xlu0.b32.start [1/16] %v1457, 128
    %3702 = vxpose.xlu0.b32.cont [2/16] 0.0, 128
    %3703 = vxpose.xlu0.b32.cont [3/16] 0.0, 128
    %3704 = vxpose.xlu0.b32.cont [4/16] 0.0, 128
    %3705 = vxpose.xlu0.b32.cont [5/16] 0.0, 128
    %3706 = vxpose.xlu0.b32.cont [6/16] 0.0, 128
    %3707 = vxpose.xlu0.b32.cont [7/16] 0.0, 128
    %3708 = vxpose.xlu0.b32.cont [8/16] 0.0, 128
    %3709 = vxpose.xlu0.b32.cont [9/16] 0.0, 128
    %3710 = vxpose.xlu0.b32.cont [10/16] 0.0, 128
    %3711 = vxpose.xlu0.b32.cont [11/16] 0.0, 128
    %3712 = vxpose.xlu0.b32.cont [12/16] 0.0, 128
    %3713 = vxpose.xlu0.b32.cont [13/16] 0.0, 128
    %3714 = vxpose.xlu0.b32.cont [14/16] 0.0, 128
    %3715 = vxpose.xlu0.b32.cont [15/16] 0.0, 128
    %3716 = vxpose.xlu0.b32.end [16/16] 0.0, 128
    %v3717 = vpop.trf.xlu0
    %v3718 = vpop.trf.xlu0
    %v3719 = vpop.trf.xlu0
    %v3720 = vpop.trf.xlu0
    %v3721 = vpop.trf.xlu0
    %v3722 = vpop.trf.xlu0
    %v3723 = vpop.trf.xlu0
    %v3724 = vpop.trf.xlu0
    %v3725 = vpop.trf.xlu0
    %v3726 = vpop.trf.xlu0
    %v3727 = vpop.trf.xlu0
    %v3728 = vpop.trf.xlu0
    %v3729 = vpop.trf.xlu0
    %v3730 = vpop.trf.xlu0
    %v3731 = vpop.trf.xlu0
    %v3732 = vpop.trf.xlu0
    %3734 = vrot.lane.b32.xlu0 %v1692, 96
    %v3735 = vpop.permute.xlu0 %3734
    %v3738 = vsel %vm1734, %v3717, 0
    %v3741 = vsel %vm1734, %v3718, 0
    %v3744 = vsel %vm1734, %v3719, 0
    %v3747 = vsel %vm1734, %v3720, 0
    %3749 = vmatpush.msra.mxu0 0.0
    %3750 = vmatpush.msra.mxu0 0.0
    %3751 = vmatpush.msra.mxu0 0.0
    %3752 = vmatpush.msra.mxu0 0.0
    %3753 = vmatpush.msra.mxu0 0.0
    %3754 = vmatpush.msra.mxu0 0.0
    %3755 = vmatpush.msra.mxu0 0.0
    %3756 = vmatpush.msra.mxu0 0.0
    %3757 = vmatpush.msra.mxu0 0.0
    %3758 = vmatpush.msra.mxu0 0.0
    %3759 = vmatpush.msra.mxu0 0.0
    %3760 = vmatpush.msra.mxu0 0.0
    %3761 = vmatpush.msra.mxu0 0.0
    %3762 = vmatpush.msra.mxu0 0.0
    %3763 = vmatpush.msra.mxu0 0.0
    %3764 = vmatpush.msra.mxu0 %v3735
    %3765 = vmatmul.f32.gmra.mxu0 %v3738
    %v3766 = vpop.f32.mrf.mxu0
    %v3767 = vadd.f32 0.0, %v3766
    %3768 = vmatmul.f32.gmra.mxu0 %v3741
    %v3769 = vpop.f32.mrf.mxu0
    %v3770 = vadd.f32 0.0, %v3769
    %3771 = vmatmul.f32.gmra.mxu0 %v3744
    %v3772 = vpop.f32.mrf.mxu0
    %v3773 = vadd.f32 0.0, %v3772
    %3774 = vmatmul.f32.gmra.mxu0 %v3747
    %v3775 = vpop.f32.mrf.mxu0
    %v3776 = vadd.f32 0.0, %v3775
    %3777 = vdwg.mxu0
    %3778 = vxpose.xlu0.b32.start [1/16] %v1460, 128
    %3779 = vxpose.xlu0.b32.cont [2/16] 0.0, 128
    %3780 = vxpose.xlu0.b32.cont [3/16] 0.0, 128
    %3781 = vxpose.xlu0.b32.cont [4/16] 0.0, 128
    %3782 = vxpose.xlu0.b32.cont [5/16] 0.0, 128
    %3783 = vxpose.xlu0.b32.cont [6/16] 0.0, 128
    %3784 = vxpose.xlu0.b32.cont [7/16] 0.0, 128
    %3785 = vxpose.xlu0.b32.cont [8/16] 0.0, 128
    %3786 = vxpose.xlu0.b32.cont [9/16] 0.0, 128
    %3787 = vxpose.xlu0.b32.cont [10/16] 0.0, 128
    %3788 = vxpose.xlu0.b32.cont [11/16] 0.0, 128
    %3789 = vxpose.xlu0.b32.cont [12/16] 0.0, 128
    %3790 = vxpose.xlu0.b32.cont [13/16] 0.0, 128
    %3791 = vxpose.xlu0.b32.cont [14/16] 0.0, 128
    %3792 = vxpose.xlu0.b32.cont [15/16] 0.0, 128
    %3793 = vxpose.xlu0.b32.end [16/16] 0.0, 128
    %v3794 = vpop.trf.xlu0
    %v3795 = vpop.trf.xlu0
    %v3796 = vpop.trf.xlu0
    %v3797 = vpop.trf.xlu0
    %v3798 = vpop.trf.xlu0
    %v3799 = vpop.trf.xlu0
    %v3800 = vpop.trf.xlu0
    %v3801 = vpop.trf.xlu0
    %v3802 = vpop.trf.xlu0
    %v3803 = vpop.trf.xlu0
    %v3804 = vpop.trf.xlu0
    %v3805 = vpop.trf.xlu0
    %v3806 = vpop.trf.xlu0
    %v3807 = vpop.trf.xlu0
    %v3808 = vpop.trf.xlu0
    %v3809 = vpop.trf.xlu0
    %3811 = vrot.lane.b32.xlu0 %v1693, 96
    %v3812 = vpop.permute.xlu0 %3811
    %v3815 = vsel %vm1734, %v3794, 0
    %v3818 = vsel %vm1734, %v3795, 0
    %v3821 = vsel %vm1734, %v3796, 0
    %v3824 = vsel %vm1734, %v3797, 0
    %3826 = vmatpush.msra.mxu0 0.0
    %3827 = vmatpush.msra.mxu0 0.0
    %3828 = vmatpush.msra.mxu0 0.0
    %3829 = vmatpush.msra.mxu0 0.0
    %3830 = vmatpush.msra.mxu0 0.0
    %3831 = vmatpush.msra.mxu0 0.0
    %3832 = vmatpush.msra.mxu0 0.0
    %3833 = vmatpush.msra.mxu0 0.0
    %3834 = vmatpush.msra.mxu0 0.0
    %3835 = vmatpush.msra.mxu0 0.0
    %3836 = vmatpush.msra.mxu0 0.0
    %3837 = vmatpush.msra.mxu0 0.0
    %3838 = vmatpush.msra.mxu0 0.0
    %3839 = vmatpush.msra.mxu0 0.0
    %3840 = vmatpush.msra.mxu0 0.0
    %3841 = vmatpush.msra.mxu0 %v3812
    %3842 = vmatmul.f32.gmra.mxu0 %v3815
    %v3843 = vpop.f32.mrf.mxu0
    %v3844 = vadd.f32 0.0, %v3843
    %3845 = vmatmul.f32.gmra.mxu0 %v3818
    %v3846 = vpop.f32.mrf.mxu0
    %v3847 = vadd.f32 0.0, %v3846
    %3848 = vmatmul.f32.gmra.mxu0 %v3821
    %v3849 = vpop.f32.mrf.mxu0
    %v3850 = vadd.f32 0.0, %v3849
    %3851 = vmatmul.f32.gmra.mxu0 %v3824
    %v3852 = vpop.f32.mrf.mxu0
    %v3853 = vadd.f32 0.0, %v3852
    %3854 = vdwg.mxu0
    %3855 = vxpose.xlu0.b32.start [1/16] %v1463, 128
    %3856 = vxpose.xlu0.b32.cont [2/16] 0.0, 128
    %3857 = vxpose.xlu0.b32.cont [3/16] 0.0, 128
    %3858 = vxpose.xlu0.b32.cont [4/16] 0.0, 128
    %3859 = vxpose.xlu0.b32.cont [5/16] 0.0, 128
    %3860 = vxpose.xlu0.b32.cont [6/16] 0.0, 128
    %3861 = vxpose.xlu0.b32.cont [7/16] 0.0, 128
    %3862 = vxpose.xlu0.b32.cont [8/16] 0.0, 128
    %3863 = vxpose.xlu0.b32.cont [9/16] 0.0, 128
    %3864 = vxpose.xlu0.b32.cont [10/16] 0.0, 128
    %3865 = vxpose.xlu0.b32.cont [11/16] 0.0, 128
    %3866 = vxpose.xlu0.b32.cont [12/16] 0.0, 128
    %3867 = vxpose.xlu0.b32.cont [13/16] 0.0, 128
    %3868 = vxpose.xlu0.b32.cont [14/16] 0.0, 128
    %3869 = vxpose.xlu0.b32.cont [15/16] 0.0, 128
    %3870 = vxpose.xlu0.b32.end [16/16] 0.0, 128
    %v3871 = vpop.trf.xlu0
    %v3872 = vpop.trf.xlu0
    %v3873 = vpop.trf.xlu0
    %v3874 = vpop.trf.xlu0
    %v3875 = vpop.trf.xlu0
    %v3876 = vpop.trf.xlu0
    %v3877 = vpop.trf.xlu0
    %v3878 = vpop.trf.xlu0
    %v3879 = vpop.trf.xlu0
    %v3880 = vpop.trf.xlu0
    %v3881 = vpop.trf.xlu0
    %v3882 = vpop.trf.xlu0
    %v3883 = vpop.trf.xlu0
    %v3884 = vpop.trf.xlu0
    %v3885 = vpop.trf.xlu0
    %v3886 = vpop.trf.xlu0
    %3888 = vrot.lane.b32.xlu0 %v1694, 96
    %v3889 = vpop.permute.xlu0 %3888
    %v3892 = vsel %vm1734, %v3871, 0
    %v3895 = vsel %vm1734, %v3872, 0
    %v3898 = vsel %vm1734, %v3873, 0
    %v3901 = vsel %vm1734, %v3874, 0
    %3903 = vmatpush.msra.mxu0 0.0
    %3904 = vmatpush.msra.mxu0 0.0
    %3905 = vmatpush.msra.mxu0 0.0
    %3906 = vmatpush.msra.mxu0 0.0
    %3907 = vmatpush.msra.mxu0 0.0
    %3908 = vmatpush.msra.mxu0 0.0
    %3909 = vmatpush.msra.mxu0 0.0
    %3910 = vmatpush.msra.mxu0 0.0
    %3911 = vmatpush.msra.mxu0 0.0
    %3912 = vmatpush.msra.mxu0 0.0
    %3913 = vmatpush.msra.mxu0 0.0
    %3914 = vmatpush.msra.mxu0 0.0
    %3915 = vmatpush.msra.mxu0 0.0
    %3916 = vmatpush.msra.mxu0 0.0
    %3917 = vmatpush.msra.mxu0 0.0
    %3918 = vmatpush.msra.mxu0 %v3889
    %3919 = vmatmul.f32.gmra.mxu0 %v3892
    %v3920 = vpop.f32.mrf.mxu0
    %v3921 = vadd.f32 0.0, %v3920
    %3922 = vmatmul.f32.gmra.mxu0 %v3895
    %v3923 = vpop.f32.mrf.mxu0
    %v3924 = vadd.f32 0.0, %v3923
    %3925 = vmatmul.f32.gmra.mxu0 %v3898
    %v3926 = vpop.f32.mrf.mxu0
    %v3927 = vadd.f32 0.0, %v3926
    %3928 = vmatmul.f32.gmra.mxu0 %v3901
    %v3929 = vpop.f32.mrf.mxu0
    %v3930 = vadd.f32 0.0, %v3929
    %3931 = vdwg.mxu0
    %3932 = vxpose.xlu0.b32.start [1/16] %v1466, 128
    %3933 = vxpose.xlu0.b32.cont [2/16] 0.0, 128
    %3934 = vxpose.xlu0.b32.cont [3/16] 0.0, 128
    %3935 = vxpose.xlu0.b32.cont [4/16] 0.0, 128
    %3936 = vxpose.xlu0.b32.cont [5/16] 0.0, 128
    %3937 = vxpose.xlu0.b32.cont [6/16] 0.0, 128
    %3938 = vxpose.xlu0.b32.cont [7/16] 0.0, 128
    %3939 = vxpose.xlu0.b32.cont [8/16] 0.0, 128
    %3940 = vxpose.xlu0.b32.cont [9/16] 0.0, 128
    %3941 = vxpose.xlu0.b32.cont [10/16] 0.0, 128
    %3942 = vxpose.xlu0.b32.cont [11/16] 0.0, 128
    %3943 = vxpose.xlu0.b32.cont [12/16] 0.0, 128
    %3944 = vxpose.xlu0.b32.cont [13/16] 0.0, 128
    %3945 = vxpose.xlu0.b32.cont [14/16] 0.0, 128
    %3946 = vxpose.xlu0.b32.cont [15/16] 0.0, 128
    %3947 = vxpose.xlu0.b32.end [16/16] 0.0, 128
    %v3948 = vpop.trf.xlu0
    %v3949 = vpop.trf.xlu0
    %v3950 = vpop.trf.xlu0
    %v3951 = vpop.trf.xlu0
    %v3952 = vpop.trf.xlu0
    %v3953 = vpop.trf.xlu0
    %v3954 = vpop.trf.xlu0
    %v3955 = vpop.trf.xlu0
    %v3956 = vpop.trf.xlu0
    %v3957 = vpop.trf.xlu0
    %v3958 = vpop.trf.xlu0
    %v3959 = vpop.trf.xlu0
    %v3960 = vpop.trf.xlu0
    %v3961 = vpop.trf.xlu0
    %v3962 = vpop.trf.xlu0
    %v3963 = vpop.trf.xlu0
    %3965 = vrot.lane.b32.xlu0 %v1695, 96
    %v3966 = vpop.permute.xlu0 %3965
    %v3969 = vsel %vm1734, %v3948, 0
    %v3972 = vsel %vm1734, %v3949, 0
    %v3975 = vsel %vm1734, %v3950, 0
    %v3978 = vsel %vm1734, %v3951, 0
    %3980 = vmatpush.msra.mxu0 0.0
    %3981 = vmatpush.msra.mxu0 0.0
    %3982 = vmatpush.msra.mxu0 0.0
    %3983 = vmatpush.msra.mxu0 0.0
    %3984 = vmatpush.msra.mxu0 0.0
    %3985 = vmatpush.msra.mxu0 0.0
    %3986 = vmatpush.msra.mxu0 0.0
    %3987 = vmatpush.msra.mxu0 0.0
    %3988 = vmatpush.msra.mxu0 0.0
    %3989 = vmatpush.msra.mxu0 0.0
    %3990 = vmatpush.msra.mxu0 0.0
    %3991 = vmatpush.msra.mxu0 0.0
    %3992 = vmatpush.msra.mxu0 0.0
    %3993 = vmatpush.msra.mxu0 0.0
    %3994 = vmatpush.msra.mxu0 0.0
    %3995 = vmatpush.msra.mxu0 %v3966
    %3996 = vmatmul.f32.gmra.mxu0 %v3969
    %v3997 = vpop.f32.mrf.mxu0
    %v3998 = vadd.f32 0.0, %v3997
    %3999 = vmatmul.f32.gmra.mxu0 %v3972
    %v4000 = vpop.f32.mrf.mxu0
    %v4001 = vadd.f32 0.0, %v4000
    %4002 = vmatmul.f32.gmra.mxu0 %v3975
    %v4003 = vpop.f32.mrf.mxu0
    %v4004 = vadd.f32 0.0, %v4003
    %4005 = vmatmul.f32.gmra.mxu0 %v3978
    %v4006 = vpop.f32.mrf.mxu0
    %v4007 = vadd.f32 0.0, %v4006
    %4008 = vdwg.mxu0
    %4009 = vxpose.xlu0.b32.start [1/16] %v1469, 128
    %4010 = vxpose.xlu0.b32.cont [2/16] 0.0, 128
    %4011 = vxpose.xlu0.b32.cont [3/16] 0.0, 128
    %4012 = vxpose.xlu0.b32.cont [4/16] 0.0, 128
    %4013 = vxpose.xlu0.b32.cont [5/16] 0.0, 128
    %4014 = vxpose.xlu0.b32.cont [6/16] 0.0, 128
    %4015 = vxpose.xlu0.b32.cont [7/16] 0.0, 128
    %4016 = vxpose.xlu0.b32.cont [8/16] 0.0, 128
    %4017 = vxpose.xlu0.b32.cont [9/16] 0.0, 128
    %4018 = vxpose.xlu0.b32.cont [10/16] 0.0, 128
    %4019 = vxpose.xlu0.b32.cont [11/16] 0.0, 128
    %4020 = vxpose.xlu0.b32.cont [12/16] 0.0, 128
    %4021 = vxpose.xlu0.b32.cont [13/16] 0.0, 128
    %4022 = vxpose.xlu0.b32.cont [14/16] 0.0, 128
    %4023 = vxpose.xlu0.b32.cont [15/16] 0.0, 128
    %4024 = vxpose.xlu0.b32.end [16/16] 0.0, 128
    %v4025 = vpop.trf.xlu0
    %v4026 = vpop.trf.xlu0
    %v4027 = vpop.trf.xlu0
    %v4028 = vpop.trf.xlu0
    %v4029 = vpop.trf.xlu0
    %v4030 = vpop.trf.xlu0
    %v4031 = vpop.trf.xlu0
    %v4032 = vpop.trf.xlu0
    %v4033 = vpop.trf.xlu0
    %v4034 = vpop.trf.xlu0
    %v4035 = vpop.trf.xlu0
    %v4036 = vpop.trf.xlu0
    %v4037 = vpop.trf.xlu0
    %v4038 = vpop.trf.xlu0
    %v4039 = vpop.trf.xlu0
    %v4040 = vpop.trf.xlu0
    %4042 = vrot.lane.b32.xlu0 %v1696, 96
    %v4043 = vpop.permute.xlu0 %4042
    %v4046 = vsel %vm1734, %v4025, 0
    %v4049 = vsel %vm1734, %v4026, 0
    %v4052 = vsel %vm1734, %v4027, 0
    %v4055 = vsel %vm1734, %v4028, 0
    %4057 = vmatpush.msra.mxu0 0.0
    %4058 = vmatpush.msra.mxu0 0.0
    %4059 = vmatpush.msra.mxu0 0.0
    %4060 = vmatpush.msra.mxu0 0.0
    %4061 = vmatpush.msra.mxu0 0.0
    %4062 = vmatpush.msra.mxu0 0.0
    %4063 = vmatpush.msra.mxu0 0.0
    %4064 = vmatpush.msra.mxu0 0.0
    %4065 = vmatpush.msra.mxu0 0.0
    %4066 = vmatpush.msra.mxu0 0.0
    %4067 = vmatpush.msra.mxu0 0.0
    %4068 = vmatpush.msra.mxu0 0.0
    %4069 = vmatpush.msra.mxu0 0.0
    %4070 = vmatpush.msra.mxu0 0.0
    %4071 = vmatpush.msra.mxu0 0.0
    %4072 = vmatpush.msra.mxu0 %v4043
    %4073 = vmatmul.f32.gmra.mxu0 %v4046
    %v4074 = vpop.f32.mrf.mxu0
    %v4075 = vadd.f32 0.0, %v4074
    %4076 = vmatmul.f32.gmra.mxu0 %v4049
    %v4077 = vpop.f32.mrf.mxu0
    %v4078 = vadd.f32 0.0, %v4077
    %4079 = vmatmul.f32.gmra.mxu0 %v4052
    %v4080 = vpop.f32.mrf.mxu0
    %v4081 = vadd.f32 0.0, %v4080
    %4082 = vmatmul.f32.gmra.mxu0 %v4055
    %v4083 = vpop.f32.mrf.mxu0
    %v4084 = vadd.f32 0.0, %v4083
    %4085 = vdwg.mxu0
    %4086 = vxpose.xlu0.b32.start [1/16] %v1472, 128
    %4087 = vxpose.xlu0.b32.cont [2/16] 0.0, 128
    %4088 = vxpose.xlu0.b32.cont [3/16] 0.0, 128
    %4089 = vxpose.xlu0.b32.cont [4/16] 0.0, 128
    %4090 = vxpose.xlu0.b32.cont [5/16] 0.0, 128
    %4091 = vxpose.xlu0.b32.cont [6/16] 0.0, 128
    %4092 = vxpose.xlu0.b32.cont [7/16] 0.0, 128
    %4093 = vxpose.xlu0.b32.cont [8/16] 0.0, 128
    %4094 = vxpose.xlu0.b32.cont [9/16] 0.0, 128
    %4095 = vxpose.xlu0.b32.cont [10/16] 0.0, 128
    %4096 = vxpose.xlu0.b32.cont [11/16] 0.0, 128
    %4097 = vxpose.xlu0.b32.cont [12/16] 0.0, 128
    %4098 = vxpose.xlu0.b32.cont [13/16] 0.0, 128
    %4099 = vxpose.xlu0.b32.cont [14/16] 0.0, 128
    %4100 = vxpose.xlu0.b32.cont [15/16] 0.0, 128
    %4101 = vxpose.xlu0.b32.end [16/16] 0.0, 128
    %v4102 = vpop.trf.xlu0
    %v4103 = vpop.trf.xlu0
    %v4104 = vpop.trf.xlu0
    %v4105 = vpop.trf.xlu0
    %v4106 = vpop.trf.xlu0
    %v4107 = vpop.trf.xlu0
    %v4108 = vpop.trf.xlu0
    %v4109 = vpop.trf.xlu0
    %v4110 = vpop.trf.xlu0
    %v4111 = vpop.trf.xlu0
    %v4112 = vpop.trf.xlu0
    %v4113 = vpop.trf.xlu0
    %v4114 = vpop.trf.xlu0
    %v4115 = vpop.trf.xlu0
    %v4116 = vpop.trf.xlu0
    %v4117 = vpop.trf.xlu0
    %4119 = vrot.lane.b32.xlu0 %v1697, 96
    %v4120 = vpop.permute.xlu0 %4119
    %v4123 = vsel %vm1734, %v4102, 0
    %v4126 = vsel %vm1734, %v4103, 0
    %v4129 = vsel %vm1734, %v4104, 0
    %v4132 = vsel %vm1734, %v4105, 0
    %4134 = vmatpush.msra.mxu0 0.0
    %4135 = vmatpush.msra.mxu0 0.0
    %4136 = vmatpush.msra.mxu0 0.0
    %4137 = vmatpush.msra.mxu0 0.0
    %4138 = vmatpush.msra.mxu0 0.0
    %4139 = vmatpush.msra.mxu0 0.0
    %4140 = vmatpush.msra.mxu0 0.0
    %4141 = vmatpush.msra.mxu0 0.0
    %4142 = vmatpush.msra.mxu0 0.0
    %4143 = vmatpush.msra.mxu0 0.0
    %4144 = vmatpush.msra.mxu0 0.0
    %4145 = vmatpush.msra.mxu0 0.0
    %4146 = vmatpush.msra.mxu0 0.0
    %4147 = vmatpush.msra.mxu0 0.0
    %4148 = vmatpush.msra.mxu0 0.0
    %4149 = vmatpush.msra.mxu0 %v4120
    %4150 = vmatmul.f32.gmra.mxu0 %v4123
    %v4151 = vpop.f32.mrf.mxu0
    %v4152 = vadd.f32 0.0, %v4151
    %4153 = vmatmul.f32.gmra.mxu0 %v4126
    %v4154 = vpop.f32.mrf.mxu0
    %v4155 = vadd.f32 0.0, %v4154
    %4156 = vmatmul.f32.gmra.mxu0 %v4129
    %v4157 = vpop.f32.mrf.mxu0
    %v4158 = vadd.f32 0.0, %v4157
    %4159 = vmatmul.f32.gmra.mxu0 %v4132
    %v4160 = vpop.f32.mrf.mxu0
    %v4161 = vadd.f32 0.0, %v4160
    %4162 = vdwg.mxu0
    %v4163 = vsel %vm85, %v1765, -inf
    %4164 = vmax.xlane.f32.xlu0 %v4163
    %v4165 = vpop.xlane.xlu0 %4164
    %v4166 = vsel %vm85, %v1768, -inf
    %4167 = vmax.xlane.f32.xlu0 %v4166
    %v4168 = vpop.xlane.xlu0 %4167
    %v4169 = vsel %vm85, %v1771, -inf
    %4170 = vmax.xlane.f32.xlu0 %v4169
    %v4171 = vpop.xlane.xlu0 %4170
    %v4172 = vsel %vm85, %v1774, -inf
    %4173 = vmax.xlane.f32.xlu0 %v4172
    %v4174 = vpop.xlane.xlu0 %4173
    %v4175 = vsel %vm85, %v1842, -inf
    %4176 = vmax.xlane.f32.xlu0 %v4175
    %v4177 = vpop.xlane.xlu0 %4176
    %v4178 = vsel %vm85, %v1845, -inf
    %4179 = vmax.xlane.f32.xlu0 %v4178
    %v4180 = vpop.xlane.xlu0 %4179
    %v4181 = vsel %vm85, %v1848, -inf
    %4182 = vmax.xlane.f32.xlu0 %v4181
    %v4183 = vpop.xlane.xlu0 %4182
    %v4184 = vsel %vm85, %v1851, -inf
    %4185 = vmax.xlane.f32.xlu0 %v4184
    %v4186 = vpop.xlane.xlu0 %4185
    %v4187 = vsel %vm85, %v1919, -inf
    %4188 = vmax.xlane.f32.xlu0 %v4187
    %v4189 = vpop.xlane.xlu0 %4188
    %v4190 = vsel %vm85, %v1922, -inf
    %4191 = vmax.xlane.f32.xlu0 %v4190
    %v4192 = vpop.xlane.xlu0 %4191
    %v4193 = vsel %vm85, %v1925, -inf
    %4194 = vmax.xlane.f32.xlu0 %v4193
    %v4195 = vpop.xlane.xlu0 %4194
    %v4196 = vsel %vm85, %v1928, -inf
    %4197 = vmax.xlane.f32.xlu0 %v4196
    %v4198 = vpop.xlane.xlu0 %4197
    %v4199 = vsel %vm85, %v1996, -inf
    %4200 = vmax.xlane.f32.xlu0 %v4199
    %v4201 = vpop.xlane.xlu0 %4200
    %v4202 = vsel %vm85, %v1999, -inf
    %4203 = vmax.xlane.f32.xlu0 %v4202
    %v4204 = vpop.xlane.xlu0 %4203
    %v4205 = vsel %vm85, %v2002, -inf
    %4206 = vmax.xlane.f32.xlu0 %v4205
    %v4207 = vpop.xlane.xlu0 %4206
    %v4208 = vsel %vm85, %v2005, -inf
    %4209 = vmax.xlane.f32.xlu0 %v4208
    %v4210 = vpop.xlane.xlu0 %4209
    %v4211 = vsel %vm85, %v2073, -inf
    %4212 = vmax.xlane.f32.xlu0 %v4211
    %v4213 = vpop.xlane.xlu0 %4212
    %v4214 = vsel %vm85, %v2076, -inf
    %4215 = vmax.xlane.f32.xlu0 %v4214
    %v4216 = vpop.xlane.xlu0 %4215
    %v4217 = vsel %vm85, %v2079, -inf
    %4218 = vmax.xlane.f32.xlu0 %v4217
    %v4219 = vpop.xlane.xlu0 %4218
    %v4220 = vsel %vm85, %v2082, -inf
    %4221 = vmax.xlane.f32.xlu0 %v4220
    %v4222 = vpop.xlane.xlu0 %4221
    %v4223 = vsel %vm85, %v2150, -inf
    %4224 = vmax.xlane.f32.xlu0 %v4223
    %v4225 = vpop.xlane.xlu0 %4224
    %v4226 = vsel %vm85, %v2153, -inf
    %4227 = vmax.xlane.f32.xlu0 %v4226
    %v4228 = vpop.xlane.xlu0 %4227
    %v4229 = vsel %vm85, %v2156, -inf
    %4230 = vmax.xlane.f32.xlu0 %v4229
    %v4231 = vpop.xlane.xlu0 %4230
    %v4232 = vsel %vm85, %v2159, -inf
    %4233 = vmax.xlane.f32.xlu0 %v4232
    %v4234 = vpop.xlane.xlu0 %4233
    %v4235 = vsel %vm85, %v2227, -inf
    %4236 = vmax.xlane.f32.xlu0 %v4235
    %v4237 = vpop.xlane.xlu0 %4236
    %v4238 = vsel %vm85, %v2230, -inf
    %4239 = vmax.xlane.f32.xlu0 %v4238
    %v4240 = vpop.xlane.xlu0 %4239
    %v4241 = vsel %vm85, %v2233, -inf
    %4242 = vmax.xlane.f32.xlu0 %v4241
    %v4243 = vpop.xlane.xlu0 %4242
    %v4244 = vsel %vm85, %v2236, -inf
    %4245 = vmax.xlane.f32.xlu0 %v4244
    %v4246 = vpop.xlane.xlu0 %4245
    %v4247 = vsel %vm85, %v2304, -inf
    %4248 = vmax.xlane.f32.xlu0 %v4247
    %v4249 = vpop.xlane.xlu0 %4248
    %v4250 = vsel %vm85, %v2307, -inf
    %4251 = vmax.xlane.f32.xlu0 %v4250
    %v4252 = vpop.xlane.xlu0 %4251
    %v4253 = vsel %vm85, %v2310, -inf
    %4254 = vmax.xlane.f32.xlu0 %v4253
    %v4255 = vpop.xlane.xlu0 %4254
    %v4256 = vsel %vm85, %v2313, -inf
    %4257 = vmax.xlane.f32.xlu0 %v4256
    %v4258 = vpop.xlane.xlu0 %4257
    %v4259 = vsel %vm85, %v2381, -inf
    %4260 = vmax.xlane.f32.xlu0 %v4259
    %v4261 = vpop.xlane.xlu0 %4260
    %v4262 = vsel %vm85, %v2384, -inf
    %4263 = vmax.xlane.f32.xlu0 %v4262
    %v4264 = vpop.xlane.xlu0 %4263
    %v4265 = vsel %vm85, %v2387, -inf
    %4266 = vmax.xlane.f32.xlu0 %v4265
    %v4267 = vpop.xlane.xlu0 %4266
    %v4268 = vsel %vm85, %v2390, -inf
    %4269 = vmax.xlane.f32.xlu0 %v4268
    %v4270 = vpop.xlane.xlu0 %4269
    %v4271 = vsel %vm85, %v2458, -inf
    %4272 = vmax.xlane.f32.xlu0 %v4271
    %v4273 = vpop.xlane.xlu0 %4272
    %v4274 = vsel %vm85, %v2461, -inf
    %4275 = vmax.xlane.f32.xlu0 %v4274
    %v4276 = vpop.xlane.xlu0 %4275
    %v4277 = vsel %vm85, %v2464, -inf
    %4278 = vmax.xlane.f32.xlu0 %v4277
    %v4279 = vpop.xlane.xlu0 %4278
    %v4280 = vsel %vm85, %v2467, -inf
    %4281 = vmax.xlane.f32.xlu0 %v4280
    %v4282 = vpop.xlane.xlu0 %4281
    %v4283 = vsel %vm85, %v2535, -inf
    %4284 = vmax.xlane.f32.xlu0 %v4283
    %v4285 = vpop.xlane.xlu0 %4284
    %v4286 = vsel %vm85, %v2538, -inf
    %4287 = vmax.xlane.f32.xlu0 %v4286
    %v4288 = vpop.xlane.xlu0 %4287
    %v4289 = vsel %vm85, %v2541, -inf
    %4290 = vmax.xlane.f32.xlu0 %v4289
    %v4291 = vpop.xlane.xlu0 %4290
    %v4292 = vsel %vm85, %v2544, -inf
    %4293 = vmax.xlane.f32.xlu0 %v4292
    %v4294 = vpop.xlane.xlu0 %4293
    %v4295 = vsel %vm85, %v2612, -inf
    %4296 = vmax.xlane.f32.xlu0 %v4295
    %v4297 = vpop.xlane.xlu0 %4296
    %v4298 = vsel %vm85, %v2615, -inf
    %4299 = vmax.xlane.f32.xlu0 %v4298
    %v4300 = vpop.xlane.xlu0 %4299
    %v4301 = vsel %vm85, %v2618, -inf
    %4302 = vmax.xlane.f32.xlu0 %v4301
    %v4303 = vpop.xlane.xlu0 %4302
    %v4304 = vsel %vm85, %v2621, -inf
    %4305 = vmax.xlane.f32.xlu0 %v4304
    %v4306 = vpop.xlane.xlu0 %4305
    %v4307 = vsel %vm85, %v2689, -inf
    %4308 = vmax.xlane.f32.xlu0 %v4307
    %v4309 = vpop.xlane.xlu0 %4308
    %v4310 = vsel %vm85, %v2692, -inf
    %4311 = vmax.xlane.f32.xlu0 %v4310
    %v4312 = vpop.xlane.xlu0 %4311
    %v4313 = vsel %vm85, %v2695, -inf
    %4314 = vmax.xlane.f32.xlu0 %v4313
    %v4315 = vpop.xlane.xlu0 %4314
    %v4316 = vsel %vm85, %v2698, -inf
    %4317 = vmax.xlane.f32.xlu0 %v4316
    %v4318 = vpop.xlane.xlu0 %4317
    %v4319 = vsel %vm85, %v2766, -inf
    %4320 = vmax.xlane.f32.xlu0 %v4319
    %v4321 = vpop.xlane.xlu0 %4320
    %v4322 = vsel %vm85, %v2769, -inf
    %4323 = vmax.xlane.f32.xlu0 %v4322
    %v4324 = vpop.xlane.xlu0 %4323
    %v4325 = vsel %vm85, %v2772, -inf
    %4326 = vmax.xlane.f32.xlu0 %v4325
    %v4327 = vpop.xlane.xlu0 %4326
    %v4328 = vsel %vm85, %v2775, -inf
    %4329 = vmax.xlane.f32.xlu0 %v4328
    %v4330 = vpop.xlane.xlu0 %4329
    %v4331 = vsel %vm85, %v2843, -inf
    %4332 = vmax.xlane.f32.xlu0 %v4331
    %v4333 = vpop.xlane.xlu0 %4332
    %v4334 = vsel %vm85, %v2846, -inf
    %4335 = vmax.xlane.f32.xlu0 %v4334
    %v4336 = vpop.xlane.xlu0 %4335
    %v4337 = vsel %vm85, %v2849, -inf
    %4338 = vmax.xlane.f32.xlu0 %v4337
    %v4339 = vpop.xlane.xlu0 %4338
    %v4340 = vsel %vm85, %v2852, -inf
    %4341 = vmax.xlane.f32.xlu0 %v4340
    %v4342 = vpop.xlane.xlu0 %4341
    %v4343 = vsel %vm85, %v2920, -inf
    %4344 = vmax.xlane.f32.xlu0 %v4343
    %v4345 = vpop.xlane.xlu0 %4344
    %v4346 = vsel %vm85, %v2923, -inf
    %4347 = vmax.xlane.f32.xlu0 %v4346
    %v4348 = vpop.xlane.xlu0 %4347
    %v4349 = vsel %vm85, %v2926, -inf
    %4350 = vmax.xlane.f32.xlu0 %v4349
    %v4351 = vpop.xlane.xlu0 %4350
    %v4352 = vsel %vm85, %v2929, -inf
    %4353 = vmax.xlane.f32.xlu0 %v4352
    %v4354 = vpop.xlane.xlu0 %4353
    %v4355 = vsel %vm85, %v2997, -inf
    %4356 = vmax.xlane.f32.xlu0 %v4355
    %v4357 = vpop.xlane.xlu0 %4356
    %v4358 = vsel %vm85, %v3000, -inf
    %4359 = vmax.xlane.f32.xlu0 %v4358
    %v4360 = vpop.xlane.xlu0 %4359
    %v4361 = vsel %vm85, %v3003, -inf
    %4362 = vmax.xlane.f32.xlu0 %v4361
    %v4363 = vpop.xlane.xlu0 %4362
    %v4364 = vsel %vm85, %v3006, -inf
    %4365 = vmax.xlane.f32.xlu0 %v4364
    %v4366 = vpop.xlane.xlu0 %4365
    %v4367 = vsel %vm85, %v3074, -inf
    %4368 = vmax.xlane.f32.xlu0 %v4367
    %v4369 = vpop.xlane.xlu0 %4368
    %v4370 = vsel %vm85, %v3077, -inf
    %4371 = vmax.xlane.f32.xlu0 %v4370
    %v4372 = vpop.xlane.xlu0 %4371
    %v4373 = vsel %vm85, %v3080, -inf
    %4374 = vmax.xlane.f32.xlu0 %v4373
    %v4375 = vpop.xlane.xlu0 %4374
    %v4376 = vsel %vm85, %v3083, -inf
    %4377 = vmax.xlane.f32.xlu0 %v4376
    %v4378 = vpop.xlane.xlu0 %4377
    %v4379 = vsel %vm85, %v3151, -inf
    %4380 = vmax.xlane.f32.xlu0 %v4379
    %v4381 = vpop.xlane.xlu0 %4380
    %v4382 = vsel %vm85, %v3154, -inf
    %4383 = vmax.xlane.f32.xlu0 %v4382
    %v4384 = vpop.xlane.xlu0 %4383
    %v4385 = vsel %vm85, %v3157, -inf
    %4386 = vmax.xlane.f32.xlu0 %v4385
    %v4387 = vpop.xlane.xlu0 %4386
    %v4388 = vsel %vm85, %v3160, -inf
    %4389 = vmax.xlane.f32.xlu0 %v4388
    %v4390 = vpop.xlane.xlu0 %4389
    %v4391 = vsel %vm85, %v3228, -inf
    %4392 = vmax.xlane.f32.xlu0 %v4391
    %v4393 = vpop.xlane.xlu0 %4392
    %v4394 = vsel %vm85, %v3231, -inf
    %4395 = vmax.xlane.f32.xlu0 %v4394
    %v4396 = vpop.xlane.xlu0 %4395
    %v4397 = vsel %vm85, %v3234, -inf
    %4398 = vmax.xlane.f32.xlu0 %v4397
    %v4399 = vpop.xlane.xlu0 %4398
    %v4400 = vsel %vm85, %v3237, -inf
    %4401 = vmax.xlane.f32.xlu0 %v4400
    %v4402 = vpop.xlane.xlu0 %4401
    %v4403 = vsel %vm85, %v3305, -inf
    %4404 = vmax.xlane.f32.xlu0 %v4403
    %v4405 = vpop.xlane.xlu0 %4404
    %v4406 = vsel %vm85, %v3308, -inf
    %4407 = vmax.xlane.f32.xlu0 %v4406
    %v4408 = vpop.xlane.xlu0 %4407
    %v4409 = vsel %vm85, %v3311, -inf
    %4410 = vmax.xlane.f32.xlu0 %v4409
    %v4411 = vpop.xlane.xlu0 %4410
    %v4412 = vsel %vm85, %v3314, -inf
    %4413 = vmax.xlane.f32.xlu0 %v4412
    %v4414 = vpop.xlane.xlu0 %4413
    %v4415 = vsel %vm85, %v3382, -inf
    %4416 = vmax.xlane.f32.xlu0 %v4415
    %v4417 = vpop.xlane.xlu0 %4416
    %v4418 = vsel %vm85, %v3385, -inf
    %4419 = vmax.xlane.f32.xlu0 %v4418
    %v4420 = vpop.xlane.xlu0 %4419
    %v4421 = vsel %vm85, %v3388, -inf
    %4422 = vmax.xlane.f32.xlu0 %v4421
    %v4423 = vpop.xlane.xlu0 %4422
    %v4424 = vsel %vm85, %v3391, -inf
    %4425 = vmax.xlane.f32.xlu0 %v4424
    %v4426 = vpop.xlane.xlu0 %4425
    %v4427 = vsel %vm85, %v3459, -inf
    %4428 = vmax.xlane.f32.xlu0 %v4427
    %v4429 = vpop.xlane.xlu0 %4428
    %v4430 = vsel %vm85, %v3462, -inf
    %4431 = vmax.xlane.f32.xlu0 %v4430
    %v4432 = vpop.xlane.xlu0 %4431
    %v4433 = vsel %vm85, %v3465, -inf
    %4434 = vmax.xlane.f32.xlu0 %v4433
    %v4435 = vpop.xlane.xlu0 %4434
    %v4436 = vsel %vm85, %v3468, -inf
    %4437 = vmax.xlane.f32.xlu0 %v4436
    %v4438 = vpop.xlane.xlu0 %4437
    %v4439 = vsel %vm85, %v3536, -inf
    %4440 = vmax.xlane.f32.xlu0 %v4439
    %v4441 = vpop.xlane.xlu0 %4440
    %v4442 = vsel %vm85, %v3539, -inf
    %4443 = vmax.xlane.f32.xlu0 %v4442
    %v4444 = vpop.xlane.xlu0 %4443
    %v4445 = vsel %vm85, %v3542, -inf
    %4446 = vmax.xlane.f32.xlu0 %v4445
    %v4447 = vpop.xlane.xlu0 %4446
    %v4448 = vsel %vm85, %v3545, -inf
    %4449 = vmax.xlane.f32.xlu0 %v4448
    %v4450 = vpop.xlane.xlu0 %4449
    %v4451 = vsel %vm85, %v3613, -inf
    %4452 = vmax.xlane.f32.xlu0 %v4451
    %v4453 = vpop.xlane.xlu0 %4452
    %v4454 = vsel %vm85, %v3616, -inf
    %4455 = vmax.xlane.f32.xlu0 %v4454
    %v4456 = vpop.xlane.xlu0 %4455
    %v4457 = vsel %vm85, %v3619, -inf
    %4458 = vmax.xlane.f32.xlu0 %v4457
    %v4459 = vpop.xlane.xlu0 %4458
    %v4460 = vsel %vm85, %v3622, -inf
    %4461 = vmax.xlane.f32.xlu0 %v4460
    %v4462 = vpop.xlane.xlu0 %4461
    %v4463 = vsel %vm85, %v3690, -inf
    %4464 = vmax.xlane.f32.xlu0 %v4463
    %v4465 = vpop.xlane.xlu0 %4464
    %v4466 = vsel %vm85, %v3693, -inf
    %4467 = vmax.xlane.f32.xlu0 %v4466
    %v4468 = vpop.xlane.xlu0 %4467
    %v4469 = vsel %vm85, %v3696, -inf
    %4470 = vmax.xlane.f32.xlu0 %v4469
    %v4471 = vpop.xlane.xlu0 %4470
    %v4472 = vsel %vm85, %v3699, -inf
    %4473 = vmax.xlane.f32.xlu0 %v4472
    %v4474 = vpop.xlane.xlu0 %4473
    %v4475 = vsel %vm85, %v3767, -inf
    %4476 = vmax.xlane.f32.xlu0 %v4475
    %v4477 = vpop.xlane.xlu0 %4476
    %v4478 = vsel %vm85, %v3770, -inf
    %4479 = vmax.xlane.f32.xlu0 %v4478
    %v4480 = vpop.xlane.xlu0 %4479
    %v4481 = vsel %vm85, %v3773, -inf
    %4482 = vmax.xlane.f32.xlu0 %v4481
    %v4483 = vpop.xlane.xlu0 %4482
    %v4484 = vsel %vm85, %v3776, -inf
    %4485 = vmax.xlane.f32.xlu0 %v4484
    %v4486 = vpop.xlane.xlu0 %4485
    %v4487 = vsel %vm85, %v3844, -inf
    %4488 = vmax.xlane.f32.xlu0 %v4487
    %v4489 = vpop.xlane.xlu0 %4488
    %v4490 = vsel %vm85, %v3847, -inf
    %4491 = vmax.xlane.f32.xlu0 %v4490
    %v4492 = vpop.xlane.xlu0 %4491
    %v4493 = vsel %vm85, %v3850, -inf
    %4494 = vmax.xlane.f32.xlu0 %v4493
    %v4495 = vpop.xlane.xlu0 %4494
    %v4496 = vsel %vm85, %v3853, -inf
    %4497 = vmax.xlane.f32.xlu0 %v4496
    %v4498 = vpop.xlane.xlu0 %4497
    %v4499 = vsel %vm85, %v3921, -inf
    %4500 = vmax.xlane.f32.xlu0 %v4499
    %v4501 = vpop.xlane.xlu0 %4500
    %v4502 = vsel %vm85, %v3924, -inf
    %4503 = vmax.xlane.f32.xlu0 %v4502
    %v4504 = vpop.xlane.xlu0 %4503
    %v4505 = vsel %vm85, %v3927, -inf
    %4506 = vmax.xlane.f32.xlu0 %v4505
    %v4507 = vpop.xlane.xlu0 %4506
    %v4508 = vsel %vm85, %v3930, -inf
    %4509 = vmax.xlane.f32.xlu0 %v4508
    %v4510 = vpop.xlane.xlu0 %4509
    %v4511 = vsel %vm85, %v3998, -inf
    %4512 = vmax.xlane.f32.xlu0 %v4511
    %v4513 = vpop.xlane.xlu0 %4512
    %v4514 = vsel %vm85, %v4001, -inf
    %4515 = vmax.xlane.f32.xlu0 %v4514
    %v4516 = vpop.xlane.xlu0 %4515
    %v4517 = vsel %vm85, %v4004, -inf
    %4518 = vmax.xlane.f32.xlu0 %v4517
    %v4519 = vpop.xlane.xlu0 %4518
    %v4520 = vsel %vm85, %v4007, -inf
    %4521 = vmax.xlane.f32.xlu0 %v4520
    %v4522 = vpop.xlane.xlu0 %4521
    %v4523 = vsel %vm85, %v4075, -inf
    %4524 = vmax.xlane.f32.xlu0 %v4523
    %v4525 = vpop.xlane.xlu0 %4524
    %v4526 = vsel %vm85, %v4078, -inf
    %4527 = vmax.xlane.f32.xlu0 %v4526
    %v4528 = vpop.xlane.xlu0 %4527
    %v4529 = vsel %vm85, %v4081, -inf
    %4530 = vmax.xlane.f32.xlu0 %v4529
    %v4531 = vpop.xlane.xlu0 %4530
    %v4532 = vsel %vm85, %v4084, -inf
    %4533 = vmax.xlane.f32.xlu0 %v4532
    %v4534 = vpop.xlane.xlu0 %4533
    %v4535 = vsel %vm85, %v4152, -inf
    %4536 = vmax.xlane.f32.xlu0 %v4535
    %v4537 = vpop.xlane.xlu0 %4536
    %v4538 = vsel %vm85, %v4155, -inf
    %4539 = vmax.xlane.f32.xlu0 %v4538
    %v4540 = vpop.xlane.xlu0 %4539
    %v4541 = vsel %vm85, %v4158, -inf
    %4542 = vmax.xlane.f32.xlu0 %v4541
    %v4543 = vpop.xlane.xlu0 %4542
    %v4544 = vsel %vm85, %v4161, -inf
    %4545 = vmax.xlane.f32.xlu0 %v4544
    %v4546 = vpop.xlane.xlu0 %4545
    %v4547 = vsub.f32 %v1765, %v4165
    %v4548 = vsub.f32 %v1768, %v4168
    %v4549 = vsub.f32 %v1771, %v4171
    %v4550 = vsub.f32 %v1774, %v4174
    %v4551 = vsub.f32 %v1842, %v4177
    %v4552 = vsub.f32 %v1845, %v4180
    %v4553 = vsub.f32 %v1848, %v4183
    %v4554 = vsub.f32 %v1851, %v4186
    %v4555 = vsub.f32 %v1919, %v4189
    %v4556 = vsub.f32 %v1922, %v4192
    %v4557 = vsub.f32 %v1925, %v4195
    %v4558 = vsub.f32 %v1928, %v4198
    %v4559 = vsub.f32 %v1996, %v4201
    %v4560 = vsub.f32 %v1999, %v4204
    %v4561 = vsub.f32 %v2002, %v4207
    %v4562 = vsub.f32 %v2005, %v4210
    %v4563 = vsub.f32 %v2073, %v4213
    %v4564 = vsub.f32 %v2076, %v4216
    %v4565 = vsub.f32 %v2079, %v4219
    %v4566 = vsub.f32 %v2082, %v4222
    %v4567 = vsub.f32 %v2150, %v4225
    %v4568 = vsub.f32 %v2153, %v4228
    %v4569 = vsub.f32 %v2156, %v4231
    %v4570 = vsub.f32 %v2159, %v4234
    %v4571 = vsub.f32 %v2227, %v4237
    %v4572 = vsub.f32 %v2230, %v4240
    %v4573 = vsub.f32 %v2233, %v4243
    %v4574 = vsub.f32 %v2236, %v4246
    %v4575 = vsub.f32 %v2304, %v4249
    %v4576 = vsub.f32 %v2307, %v4252
    %v4577 = vsub.f32 %v2310, %v4255
    %v4578 = vsub.f32 %v2313, %v4258
    %v4579 = vsub.f32 %v2381, %v4261
    %v4580 = vsub.f32 %v2384, %v4264
    %v4581 = vsub.f32 %v2387, %v4267
    %v4582 = vsub.f32 %v2390, %v4270
    %v4583 = vsub.f32 %v2458, %v4273
    %v4584 = vsub.f32 %v2461, %v4276
    %v4585 = vsub.f32 %v2464, %v4279
    %v4586 = vsub.f32 %v2467, %v4282
    %v4587 = vsub.f32 %v2535, %v4285
    %v4588 = vsub.f32 %v2538, %v4288
    %v4589 = vsub.f32 %v2541, %v4291
    %v4590 = vsub.f32 %v2544, %v4294
    %v4591 = vsub.f32 %v2612, %v4297
    %v4592 = vsub.f32 %v2615, %v4300
    %v4593 = vsub.f32 %v2618, %v4303
    %v4594 = vsub.f32 %v2621, %v4306
    %v4595 = vsub.f32 %v2689, %v4309
    %v4596 = vsub.f32 %v2692, %v4312
    %v4597 = vsub.f32 %v2695, %v4315
    %v4598 = vsub.f32 %v2698, %v4318
    %v4599 = vsub.f32 %v2766, %v4321
    %v4600 = vsub.f32 %v2769, %v4324
    %v4601 = vsub.f32 %v2772, %v4327
    %v4602 = vsub.f32 %v2775, %v4330
    %v4603 = vsub.f32 %v2843, %v4333
    %v4604 = vsub.f32 %v2846, %v4336
    %v4605 = vsub.f32 %v2849, %v4339
    %v4606 = vsub.f32 %v2852, %v4342
    %v4607 = vsub.f32 %v2920, %v4345
    %v4608 = vsub.f32 %v2923, %v4348
    %v4609 = vsub.f32 %v2926, %v4351
    %v4610 = vsub.f32 %v2929, %v4354
    %v4611 = vsub.f32 %v2997, %v4357
    %v4612 = vsub.f32 %v3000, %v4360
    %v4613 = vsub.f32 %v3003, %v4363
    %v4614 = vsub.f32 %v3006, %v4366
    %v4615 = vsub.f32 %v3074, %v4369
    %v4616 = vsub.f32 %v3077, %v4372
    %v4617 = vsub.f32 %v3080, %v4375
    %v4618 = vsub.f32 %v3083, %v4378
    %v4619 = vsub.f32 %v3151, %v4381
    %v4620 = vsub.f32 %v3154, %v4384
    %v4621 = vsub.f32 %v3157, %v4387
    %v4622 = vsub.f32 %v3160, %v4390
    %v4623 = vsub.f32 %v3228, %v4393
    %v4624 = vsub.f32 %v3231, %v4396
    %v4625 = vsub.f32 %v3234, %v4399
    %v4626 = vsub.f32 %v3237, %v4402
    %v4627 = vsub.f32 %v3305, %v4405
    %v4628 = vsub.f32 %v3308, %v4408
    %v4629 = vsub.f32 %v3311, %v4411
    %v4630 = vsub.f32 %v3314, %v4414
    %v4631 = vsub.f32 %v3382, %v4417
    %v4632 = vsub.f32 %v3385, %v4420
    %v4633 = vsub.f32 %v3388, %v4423
    %v4634 = vsub.f32 %v3391, %v4426
    %v4635 = vsub.f32 %v3459, %v4429
    %v4636 = vsub.f32 %v3462, %v4432
    %v4637 = vsub.f32 %v3465, %v4435
    %v4638 = vsub.f32 %v3468, %v4438
    %v4639 = vsub.f32 %v3536, %v4441
    %v4640 = vsub.f32 %v3539, %v4444
    %v4641 = vsub.f32 %v3542, %v4447
    %v4642 = vsub.f32 %v3545, %v4450
    %v4643 = vsub.f32 %v3613, %v4453
    %v4644 = vsub.f32 %v3616, %v4456
    %v4645 = vsub.f32 %v3619, %v4459
    %v4646 = vsub.f32 %v3622, %v4462
    %v4647 = vsub.f32 %v3690, %v4465
    %v4648 = vsub.f32 %v3693, %v4468
    %v4649 = vsub.f32 %v3696, %v4471
    %v4650 = vsub.f32 %v3699, %v4474
    %v4651 = vsub.f32 %v3767, %v4477
    %v4652 = vsub.f32 %v3770, %v4480
    %v4653 = vsub.f32 %v3773, %v4483
    %v4654 = vsub.f32 %v3776, %v4486
    %v4655 = vsub.f32 %v3844, %v4489
    %v4656 = vsub.f32 %v3847, %v4492
    %v4657 = vsub.f32 %v3850, %v4495
    %v4658 = vsub.f32 %v3853, %v4498
    %v4659 = vsub.f32 %v3921, %v4501
    %v4660 = vsub.f32 %v3924, %v4504
    %v4661 = vsub.f32 %v3927, %v4507
    %v4662 = vsub.f32 %v3930, %v4510
    %v4663 = vsub.f32 %v3998, %v4513
    %v4664 = vsub.f32 %v4001, %v4516
    %v4665 = vsub.f32 %v4004, %v4519
    %v4666 = vsub.f32 %v4007, %v4522
    %v4667 = vsub.f32 %v4075, %v4525
    %v4668 = vsub.f32 %v4078, %v4528
    %v4669 = vsub.f32 %v4081, %v4531
    %v4670 = vsub.f32 %v4084, %v4534
    %v4671 = vsub.f32 %v4152, %v4537
    %v4672 = vsub.f32 %v4155, %v4540
    %v4673 = vsub.f32 %v4158, %v4543
    %v4674 = vsub.f32 %v4161, %v4546
    %v4675 = vmul.f32 %v4547, 1.442695
    %v4676 = vpow.pop %v4675
    %v4677 = vmul.f32 %v4548, 1.442695
    %v4678 = vpow.pop %v4677
    %v4679 = vmul.f32 %v4549, 1.442695
    %v4680 = vpow.pop %v4679
    %v4681 = vmul.f32 %v4550, 1.442695
    %v4682 = vpow.pop %v4681
    %v4683 = vmul.f32 %v4551, 1.442695
    %v4684 = vpow.pop %v4683
    %v4685 = vmul.f32 %v4552, 1.442695
    %v4686 = vpow.pop %v4685
    %v4687 = vmul.f32 %v4553, 1.442695
    %v4688 = vpow.pop %v4687
    %v4689 = vmul.f32 %v4554, 1.442695
    %v4690 = vpow.pop %v4689
    %v4691 = vmul.f32 %v4555, 1.442695
    %v4692 = vpow.pop %v4691
    %v4693 = vmul.f32 %v4556, 1.442695
    %v4694 = vpow.pop %v4693
    %v4695 = vmul.f32 %v4557, 1.442695
    %v4696 = vpow.pop %v4695
    %v4697 = vmul.f32 %v4558, 1.442695
    %v4698 = vpow.pop %v4697
    %v4699 = vmul.f32 %v4559, 1.442695
    %v4700 = vpow.pop %v4699
    %v4701 = vmul.f32 %v4560, 1.442695
    %v4702 = vpow.pop %v4701
    %v4703 = vmul.f32 %v4561, 1.442695
    %v4704 = vpow.pop %v4703
    %v4705 = vmul.f32 %v4562, 1.442695
    %v4706 = vpow.pop %v4705
    %v4707 = vmul.f32 %v4563, 1.442695
    %v4708 = vpow.pop %v4707
    %v4709 = vmul.f32 %v4564, 1.442695
    %v4710 = vpow.pop %v4709
    %v4711 = vmul.f32 %v4565, 1.442695
    %v4712 = vpow.pop %v4711
    %v4713 = vmul.f32 %v4566, 1.442695
    %v4714 = vpow.pop %v4713
    %v4715 = vmul.f32 %v4567, 1.442695
    %v4716 = vpow.pop %v4715
    %v4717 = vmul.f32 %v4568, 1.442695
    %v4718 = vpow.pop %v4717
    %v4719 = vmul.f32 %v4569, 1.442695
    %v4720 = vpow.pop %v4719
    %v4721 = vmul.f32 %v4570, 1.442695
    %v4722 = vpow.pop %v4721
    %v4723 = vmul.f32 %v4571, 1.442695
    %v4724 = vpow.pop %v4723
    %v4725 = vmul.f32 %v4572, 1.442695
    %v4726 = vpow.pop %v4725
    %v4727 = vmul.f32 %v4573, 1.442695
    %v4728 = vpow.pop %v4727
    %v4729 = vmul.f32 %v4574, 1.442695
    %v4730 = vpow.pop %v4729
    %v4731 = vmul.f32 %v4575, 1.442695
    %v4732 = vpow.pop %v4731
    %v4733 = vmul.f32 %v4576, 1.442695
    %v4734 = vpow.pop %v4733
    %v4735 = vmul.f32 %v4577, 1.442695
    %v4736 = vpow.pop %v4735
    %v4737 = vmul.f32 %v4578, 1.442695
    %v4738 = vpow.pop %v4737
    %v4739 = vmul.f32 %v4579, 1.442695
    %v4740 = vpow.pop %v4739
    %v4741 = vmul.f32 %v4580, 1.442695
    %v4742 = vpow.pop %v4741
    %v4743 = vmul.f32 %v4581, 1.442695
    %v4744 = vpow.pop %v4743
    %v4745 = vmul.f32 %v4582, 1.442695
    %v4746 = vpow.pop %v4745
    %v4747 = vmul.f32 %v4583, 1.442695
    %v4748 = vpow.pop %v4747
    %v4749 = vmul.f32 %v4584, 1.442695
    %v4750 = vpow.pop %v4749
    %v4751 = vmul.f32 %v4585, 1.442695
    %v4752 = vpow.pop %v4751
    %v4753 = vmul.f32 %v4586, 1.442695
    %v4754 = vpow.pop %v4753
    %v4755 = vmul.f32 %v4587, 1.442695
    %v4756 = vpow.pop %v4755
    %v4757 = vmul.f32 %v4588, 1.442695
    %v4758 = vpow.pop %v4757
    %v4759 = vmul.f32 %v4589, 1.442695
    %v4760 = vpow.pop %v4759
    %v4761 = vmul.f32 %v4590, 1.442695
    %v4762 = vpow.pop %v4761
    %v4763 = vmul.f32 %v4591, 1.442695
    %v4764 = vpow.pop %v4763
    %v4765 = vmul.f32 %v4592, 1.442695
    %v4766 = vpow.pop %v4765
    %v4767 = vmul.f32 %v4593, 1.442695
    %v4768 = vpow.pop %v4767
    %v4769 = vmul.f32 %v4594, 1.442695
    %v4770 = vpow.pop %v4769
    %v4771 = vmul.f32 %v4595, 1.442695
    %v4772 = vpow.pop %v4771
    %v4773 = vmul.f32 %v4596, 1.442695
    %v4774 = vpow.pop %v4773
    %v4775 = vmul.f32 %v4597, 1.442695
    %v4776 = vpow.pop %v4775
    %v4777 = vmul.f32 %v4598, 1.442695
    %v4778 = vpow.pop %v4777
    %v4779 = vmul.f32 %v4599, 1.442695
    %v4780 = vpow.pop %v4779
    %v4781 = vmul.f32 %v4600, 1.442695
    %v4782 = vpow.pop %v4781
    %v4783 = vmul.f32 %v4601, 1.442695
    %v4784 = vpow.pop %v4783
    %v4785 = vmul.f32 %v4602, 1.442695
    %v4786 = vpow.pop %v4785
    %v4787 = vmul.f32 %v4603, 1.442695
    %v4788 = vpow.pop %v4787
    %v4789 = vmul.f32 %v4604, 1.442695
    %v4790 = vpow.pop %v4789
    %v4791 = vmul.f32 %v4605, 1.442695
    %v4792 = vpow.pop %v4791
    %v4793 = vmul.f32 %v4606, 1.442695
    %v4794 = vpow.pop %v4793
    %v4795 = vmul.f32 %v4607, 1.442695
    %v4796 = vpow.pop %v4795
    %v4797 = vmul.f32 %v4608, 1.442695
    %v4798 = vpow.pop %v4797
    %v4799 = vmul.f32 %v4609, 1.442695
    %v4800 = vpow.pop %v4799
    %v4801 = vmul.f32 %v4610, 1.442695
    %v4802 = vpow.pop %v4801
    %v4803 = vmul.f32 %v4611, 1.442695
    %v4804 = vpow.pop %v4803
    %v4805 = vmul.f32 %v4612, 1.442695
    %v4806 = vpow.pop %v4805
    %v4807 = vmul.f32 %v4613, 1.442695
    %v4808 = vpow.pop %v4807
    %v4809 = vmul.f32 %v4614, 1.442695
    %v4810 = vpow.pop %v4809
    %v4811 = vmul.f32 %v4615, 1.442695
    %v4812 = vpow.pop %v4811
    %v4813 = vmul.f32 %v4616, 1.442695
    %v4814 = vpow.pop %v4813
    %v4815 = vmul.f32 %v4617, 1.442695
    %v4816 = vpow.pop %v4815
    %v4817 = vmul.f32 %v4618, 1.442695
    %v4818 = vpow.pop %v4817
    %v4819 = vmul.f32 %v4619, 1.442695
    %v4820 = vpow.pop %v4819
    %v4821 = vmul.f32 %v4620, 1.442695
    %v4822 = vpow.pop %v4821
    %v4823 = vmul.f32 %v4621, 1.442695
    %v4824 = vpow.pop %v4823
    %v4825 = vmul.f32 %v4622, 1.442695
    %v4826 = vpow.pop %v4825
    %v4827 = vmul.f32 %v4623, 1.442695
    %v4828 = vpow.pop %v4827
    %v4829 = vmul.f32 %v4624, 1.442695
    %v4830 = vpow.pop %v4829
    %v4831 = vmul.f32 %v4625, 1.442695
    %v4832 = vpow.pop %v4831
    %v4833 = vmul.f32 %v4626, 1.442695
    %v4834 = vpow.pop %v4833
    %v4835 = vmul.f32 %v4627, 1.442695
    %v4836 = vpow.pop %v4835
    %v4837 = vmul.f32 %v4628, 1.442695
    %v4838 = vpow.pop %v4837
    %v4839 = vmul.f32 %v4629, 1.442695
    %v4840 = vpow.pop %v4839
    %v4841 = vmul.f32 %v4630, 1.442695
    %v4842 = vpow.pop %v4841
    %v4843 = vmul.f32 %v4631, 1.442695
    %v4844 = vpow.pop %v4843
    %v4845 = vmul.f32 %v4632, 1.442695
    %v4846 = vpow.pop %v4845
    %v4847 = vmul.f32 %v4633, 1.442695
    %v4848 = vpow.pop %v4847
    %v4849 = vmul.f32 %v4634, 1.442695
    %v4850 = vpow.pop %v4849
    %v4851 = vmul.f32 %v4635, 1.442695
    %v4852 = vpow.pop %v4851
    %v4853 = vmul.f32 %v4636, 1.442695
    %v4854 = vpow.pop %v4853
    %v4855 = vmul.f32 %v4637, 1.442695
    %v4856 = vpow.pop %v4855
    %v4857 = vmul.f32 %v4638, 1.442695
    %v4858 = vpow.pop %v4857
    %v4859 = vmul.f32 %v4639, 1.442695
    %v4860 = vpow.pop %v4859
    %v4861 = vmul.f32 %v4640, 1.442695
    %v4862 = vpow.pop %v4861
    %v4863 = vmul.f32 %v4641, 1.442695
    %v4864 = vpow.pop %v4863
    %v4865 = vmul.f32 %v4642, 1.442695
    %v4866 = vpow.pop %v4865
    %v4867 = vmul.f32 %v4643, 1.442695
    %v4868 = vpow.pop %v4867
    %v4869 = vmul.f32 %v4644, 1.442695
    %v4870 = vpow.pop %v4869
    %v4871 = vmul.f32 %v4645, 1.442695
    %v4872 = vpow.pop %v4871
    %v4873 = vmul.f32 %v4646, 1.442695
    %v4874 = vpow.pop %v4873
    %v4875 = vmul.f32 %v4647, 1.442695
    %v4876 = vpow.pop %v4875
    %v4877 = vmul.f32 %v4648, 1.442695
    %v4878 = vpow.pop %v4877
    %v4879 = vmul.f32 %v4649, 1.442695
    %v4880 = vpow.pop %v4879
    %v4881 = vmul.f32 %v4650, 1.442695
    %v4882 = vpow.pop %v4881
    %v4883 = vmul.f32 %v4651, 1.442695
    %v4884 = vpow.pop %v4883
    %v4885 = vmul.f32 %v4652, 1.442695
    %v4886 = vpow.pop %v4885
    %v4887 = vmul.f32 %v4653, 1.442695
    %v4888 = vpow.pop %v4887
    %v4889 = vmul.f32 %v4654, 1.442695
    %v4890 = vpow.pop %v4889
    %v4891 = vmul.f32 %v4655, 1.442695
    %v4892 = vpow.pop %v4891
    %v4893 = vmul.f32 %v4656, 1.442695
    %v4894 = vpow.pop %v4893
    %v4895 = vmul.f32 %v4657, 1.442695
    %v4896 = vpow.pop %v4895
    %v4897 = vmul.f32 %v4658, 1.442695
    %v4898 = vpow.pop %v4897
    %v4899 = vmul.f32 %v4659, 1.442695
    %v4900 = vpow.pop %v4899
    %v4901 = vmul.f32 %v4660, 1.442695
    %v4902 = vpow.pop %v4901
    %v4903 = vmul.f32 %v4661, 1.442695
    %v4904 = vpow.pop %v4903
    %v4905 = vmul.f32 %v4662, 1.442695
    %v4906 = vpow.pop %v4905
    %v4907 = vmul.f32 %v4663, 1.442695
    %v4908 = vpow.pop %v4907
    %v4909 = vmul.f32 %v4664, 1.442695
    %v4910 = vpow.pop %v4909
    %v4911 = vmul.f32 %v4665, 1.442695
    %v4912 = vpow.pop %v4911
    %v4913 = vmul.f32 %v4666, 1.442695
    %v4914 = vpow.pop %v4913
    %v4915 = vmul.f32 %v4667, 1.442695
    %v4916 = vpow.pop %v4915
    %v4917 = vmul.f32 %v4668, 1.442695
    %v4918 = vpow.pop %v4917
    %v4919 = vmul.f32 %v4669, 1.442695
    %v4920 = vpow.pop %v4919
    %v4921 = vmul.f32 %v4670, 1.442695
    %v4922 = vpow.pop %v4921
    %v4923 = vmul.f32 %v4671, 1.442695
    %v4924 = vpow.pop %v4923
    %v4925 = vmul.f32 %v4672, 1.442695
    %v4926 = vpow.pop %v4925
    %v4927 = vmul.f32 %v4673, 1.442695
    %v4928 = vpow.pop %v4927
    %v4929 = vmul.f32 %v4674, 1.442695
    %v4930 = vpow.pop %v4929
    %v4931 = vsel %vm85, %v4676, 0.0
    %4932 = vadd.xlane.f32.xlu0 %v4931
    %v4933 = vpop.xlane.xlu0 %4932
    %v4934 = vsel %vm85, %v4678, 0.0
    %4935 = vadd.xlane.f32.xlu0 %v4934
    %v4936 = vpop.xlane.xlu0 %4935
    %v4937 = vsel %vm85, %v4680, 0.0
    %4938 = vadd.xlane.f32.xlu0 %v4937
    %v4939 = vpop.xlane.xlu0 %4938
    %v4940 = vsel %vm85, %v4682, 0.0
    %4941 = vadd.xlane.f32.xlu0 %v4940
    %v4942 = vpop.xlane.xlu0 %4941
    %v4943 = vsel %vm85, %v4684, 0.0
    %4944 = vadd.xlane.f32.xlu0 %v4943
    %v4945 = vpop.xlane.xlu0 %4944
    %v4946 = vsel %vm85, %v4686, 0.0
    %4947 = vadd.xlane.f32.xlu0 %v4946
    %v4948 = vpop.xlane.xlu0 %4947
    %v4949 = vsel %vm85, %v4688, 0.0
    %4950 = vadd.xlane.f32.xlu0 %v4949
    %v4951 = vpop.xlane.xlu0 %4950
    %v4952 = vsel %vm85, %v4690, 0.0
    %4953 = vadd.xlane.f32.xlu0 %v4952
    %v4954 = vpop.xlane.xlu0 %4953
    %v4955 = vsel %vm85, %v4692, 0.0
    %4956 = vadd.xlane.f32.xlu0 %v4955
    %v4957 = vpop.xlane.xlu0 %4956
    %v4958 = vsel %vm85, %v4694, 0.0
    %4959 = vadd.xlane.f32.xlu0 %v4958
    %v4960 = vpop.xlane.xlu0 %4959
    %v4961 = vsel %vm85, %v4696, 0.0
    %4962 = vadd.xlane.f32.xlu0 %v4961
    %v4963 = vpop.xlane.xlu0 %4962
    %v4964 = vsel %vm85, %v4698, 0.0
    %4965 = vadd.xlane.f32.xlu0 %v4964
    %v4966 = vpop.xlane.xlu0 %4965
    %v4967 = vsel %vm85, %v4700, 0.0
    %4968 = vadd.xlane.f32.xlu0 %v4967
    %v4969 = vpop.xlane.xlu0 %4968
    %v4970 = vsel %vm85, %v4702, 0.0
    %4971 = vadd.xlane.f32.xlu0 %v4970
    %v4972 = vpop.xlane.xlu0 %4971
    %v4973 = vsel %vm85, %v4704, 0.0
    %4974 = vadd.xlane.f32.xlu0 %v4973
    %v4975 = vpop.xlane.xlu0 %4974
    %v4976 = vsel %vm85, %v4706, 0.0
    %4977 = vadd.xlane.f32.xlu0 %v4976
    %v4978 = vpop.xlane.xlu0 %4977
    %v4979 = vsel %vm85, %v4708, 0.0
    %4980 = vadd.xlane.f32.xlu0 %v4979
    %v4981 = vpop.xlane.xlu0 %4980
    %v4982 = vsel %vm85, %v4710, 0.0
    %4983 = vadd.xlane.f32.xlu0 %v4982
    %v4984 = vpop.xlane.xlu0 %4983
    %v4985 = vsel %vm85, %v4712, 0.0
    %4986 = vadd.xlane.f32.xlu0 %v4985
    %v4987 = vpop.xlane.xlu0 %4986
    %v4988 = vsel %vm85, %v4714, 0.0
    %4989 = vadd.xlane.f32.xlu0 %v4988
    %v4990 = vpop.xlane.xlu0 %4989
    %v4991 = vsel %vm85, %v4716, 0.0
    %4992 = vadd.xlane.f32.xlu0 %v4991
    %v4993 = vpop.xlane.xlu0 %4992
    %v4994 = vsel %vm85, %v4718, 0.0
    %4995 = vadd.xlane.f32.xlu0 %v4994
    %v4996 = vpop.xlane.xlu0 %4995
    %v4997 = vsel %vm85, %v4720, 0.0
    %4998 = vadd.xlane.f32.xlu0 %v4997
    %v4999 = vpop.xlane.xlu0 %4998
    %v5000 = vsel %vm85, %v4722, 0.0
    %5001 = vadd.xlane.f32.xlu0 %v5000
    %v5002 = vpop.xlane.xlu0 %5001
    %v5003 = vsel %vm85, %v4724, 0.0
    %5004 = vadd.xlane.f32.xlu0 %v5003
    %v5005 = vpop.xlane.xlu0 %5004
    %v5006 = vsel %vm85, %v4726, 0.0
    %5007 = vadd.xlane.f32.xlu0 %v5006
    %v5008 = vpop.xlane.xlu0 %5007
    %v5009 = vsel %vm85, %v4728, 0.0
    %5010 = vadd.xlane.f32.xlu0 %v5009
    %v5011 = vpop.xlane.xlu0 %5010
    %v5012 = vsel %vm85, %v4730, 0.0
    %5013 = vadd.xlane.f32.xlu0 %v5012
    %v5014 = vpop.xlane.xlu0 %5013
    %v5015 = vsel %vm85, %v4732, 0.0
    %5016 = vadd.xlane.f32.xlu0 %v5015
    %v5017 = vpop.xlane.xlu0 %5016
    %v5018 = vsel %vm85, %v4734, 0.0
    %5019 = vadd.xlane.f32.xlu0 %v5018
    %v5020 = vpop.xlane.xlu0 %5019
    %v5021 = vsel %vm85, %v4736, 0.0
    %5022 = vadd.xlane.f32.xlu0 %v5021
    %v5023 = vpop.xlane.xlu0 %5022
    %v5024 = vsel %vm85, %v4738, 0.0
    %5025 = vadd.xlane.f32.xlu0 %v5024
    %v5026 = vpop.xlane.xlu0 %5025
    %v5027 = vsel %vm85, %v4740, 0.0
    %5028 = vadd.xlane.f32.xlu0 %v5027
    %v5029 = vpop.xlane.xlu0 %5028
    %v5030 = vsel %vm85, %v4742, 0.0
    %5031 = vadd.xlane.f32.xlu0 %v5030
    %v5032 = vpop.xlane.xlu0 %5031
    %v5033 = vsel %vm85, %v4744, 0.0
    %5034 = vadd.xlane.f32.xlu0 %v5033
    %v5035 = vpop.xlane.xlu0 %5034
    %v5036 = vsel %vm85, %v4746, 0.0
    %5037 = vadd.xlane.f32.xlu0 %v5036
    %v5038 = vpop.xlane.xlu0 %5037
    %v5039 = vsel %vm85, %v4748, 0.0
    %5040 = vadd.xlane.f32.xlu0 %v5039
    %v5041 = vpop.xlane.xlu0 %5040
    %v5042 = vsel %vm85, %v4750, 0.0
    %5043 = vadd.xlane.f32.xlu0 %v5042
    %v5044 = vpop.xlane.xlu0 %5043
    %v5045 = vsel %vm85, %v4752, 0.0
    %5046 = vadd.xlane.f32.xlu0 %v5045
    %v5047 = vpop.xlane.xlu0 %5046
    %v5048 = vsel %vm85, %v4754, 0.0
    %5049 = vadd.xlane.f32.xlu0 %v5048
    %v5050 = vpop.xlane.xlu0 %5049
    %v5051 = vsel %vm85, %v4756, 0.0
    %5052 = vadd.xlane.f32.xlu0 %v5051
    %v5053 = vpop.xlane.xlu0 %5052
    %v5054 = vsel %vm85, %v4758, 0.0
    %5055 = vadd.xlane.f32.xlu0 %v5054
    %v5056 = vpop.xlane.xlu0 %5055
    %v5057 = vsel %vm85, %v4760, 0.0
    %5058 = vadd.xlane.f32.xlu0 %v5057
    %v5059 = vpop.xlane.xlu0 %5058
    %v5060 = vsel %vm85, %v4762, 0.0
    %5061 = vadd.xlane.f32.xlu0 %v5060
    %v5062 = vpop.xlane.xlu0 %5061
    %v5063 = vsel %vm85, %v4764, 0.0
    %5064 = vadd.xlane.f32.xlu0 %v5063
    %v5065 = vpop.xlane.xlu0 %5064
    %v5066 = vsel %vm85, %v4766, 0.0
    %5067 = vadd.xlane.f32.xlu0 %v5066
    %v5068 = vpop.xlane.xlu0 %5067
    %v5069 = vsel %vm85, %v4768, 0.0
    %5070 = vadd.xlane.f32.xlu0 %v5069
    %v5071 = vpop.xlane.xlu0 %5070
    %v5072 = vsel %vm85, %v4770, 0.0
    %5073 = vadd.xlane.f32.xlu0 %v5072
    %v5074 = vpop.xlane.xlu0 %5073
    %v5075 = vsel %vm85, %v4772, 0.0
    %5076 = vadd.xlane.f32.xlu0 %v5075
    %v5077 = vpop.xlane.xlu0 %5076
    %v5078 = vsel %vm85, %v4774, 0.0
    %5079 = vadd.xlane.f32.xlu0 %v5078
    %v5080 = vpop.xlane.xlu0 %5079
    %v5081 = vsel %vm85, %v4776, 0.0
    %5082 = vadd.xlane.f32.xlu0 %v5081
    %v5083 = vpop.xlane.xlu0 %5082
    %v5084 = vsel %vm85, %v4778, 0.0
    %5085 = vadd.xlane.f32.xlu0 %v5084
    %v5086 = vpop.xlane.xlu0 %5085
    %v5087 = vsel %vm85, %v4780, 0.0
    %5088 = vadd.xlane.f32.xlu0 %v5087
    %v5089 = vpop.xlane.xlu0 %5088
    %v5090 = vsel %vm85, %v4782, 0.0
    %5091 = vadd.xlane.f32.xlu0 %v5090
    %v5092 = vpop.xlane.xlu0 %5091
    %v5093 = vsel %vm85, %v4784, 0.0
    %5094 = vadd.xlane.f32.xlu0 %v5093
    %v5095 = vpop.xlane.xlu0 %5094
    %v5096 = vsel %vm85, %v4786, 0.0
    %5097 = vadd.xlane.f32.xlu0 %v5096
    %v5098 = vpop.xlane.xlu0 %5097
    %v5099 = vsel %vm85, %v4788, 0.0
    %5100 = vadd.xlane.f32.xlu0 %v5099
    %v5101 = vpop.xlane.xlu0 %5100
    %v5102 = vsel %vm85, %v4790, 0.0
    %5103 = vadd.xlane.f32.xlu0 %v5102
    %v5104 = vpop.xlane.xlu0 %5103
    %v5105 = vsel %vm85, %v4792, 0.0
    %5106 = vadd.xlane.f32.xlu0 %v5105
    %v5107 = vpop.xlane.xlu0 %5106
    %v5108 = vsel %vm85, %v4794, 0.0
    %5109 = vadd.xlane.f32.xlu0 %v5108
    %v5110 = vpop.xlane.xlu0 %5109
    %v5111 = vsel %vm85, %v4796, 0.0
    %5112 = vadd.xlane.f32.xlu0 %v5111
    %v5113 = vpop.xlane.xlu0 %5112
    %v5114 = vsel %vm85, %v4798, 0.0
    %5115 = vadd.xlane.f32.xlu0 %v5114
    %v5116 = vpop.xlane.xlu0 %5115
    %v5117 = vsel %vm85, %v4800, 0.0
    %5118 = vadd.xlane.f32.xlu0 %v5117
    %v5119 = vpop.xlane.xlu0 %5118
    %v5120 = vsel %vm85, %v4802, 0.0
    %5121 = vadd.xlane.f32.xlu0 %v5120
    %v5122 = vpop.xlane.xlu0 %5121
    %v5123 = vsel %vm85, %v4804, 0.0
    %5124 = vadd.xlane.f32.xlu0 %v5123
    %v5125 = vpop.xlane.xlu0 %5124
    %v5126 = vsel %vm85, %v4806, 0.0
    %5127 = vadd.xlane.f32.xlu0 %v5126
    %v5128 = vpop.xlane.xlu0 %5127
    %v5129 = vsel %vm85, %v4808, 0.0
    %5130 = vadd.xlane.f32.xlu0 %v5129
    %v5131 = vpop.xlane.xlu0 %5130
    %v5132 = vsel %vm85, %v4810, 0.0
    %5133 = vadd.xlane.f32.xlu0 %v5132
    %v5134 = vpop.xlane.xlu0 %5133
    %v5135 = vsel %vm85, %v4812, 0.0
    %5136 = vadd.xlane.f32.xlu0 %v5135
    %v5137 = vpop.xlane.xlu0 %5136
    %v5138 = vsel %vm85, %v4814, 0.0
    %5139 = vadd.xlane.f32.xlu0 %v5138
    %v5140 = vpop.xlane.xlu0 %5139
    %v5141 = vsel %vm85, %v4816, 0.0
    %5142 = vadd.xlane.f32.xlu0 %v5141
    %v5143 = vpop.xlane.xlu0 %5142
    %v5144 = vsel %vm85, %v4818, 0.0
    %5145 = vadd.xlane.f32.xlu0 %v5144
    %v5146 = vpop.xlane.xlu0 %5145
    %v5147 = vsel %vm85, %v4820, 0.0
    %5148 = vadd.xlane.f32.xlu0 %v5147
    %v5149 = vpop.xlane.xlu0 %5148
    %v5150 = vsel %vm85, %v4822, 0.0
    %5151 = vadd.xlane.f32.xlu0 %v5150
    %v5152 = vpop.xlane.xlu0 %5151
    %v5153 = vsel %vm85, %v4824, 0.0
    %5154 = vadd.xlane.f32.xlu0 %v5153
    %v5155 = vpop.xlane.xlu0 %5154
    %v5156 = vsel %vm85, %v4826, 0.0
    %5157 = vadd.xlane.f32.xlu0 %v5156
    %v5158 = vpop.xlane.xlu0 %5157
    %v5159 = vsel %vm85, %v4828, 0.0
    %5160 = vadd.xlane.f32.xlu0 %v5159
    %v5161 = vpop.xlane.xlu0 %5160
    %v5162 = vsel %vm85, %v4830, 0.0
    %5163 = vadd.xlane.f32.xlu0 %v5162
    %v5164 = vpop.xlane.xlu0 %5163
    %v5165 = vsel %vm85, %v4832, 0.0
    %5166 = vadd.xlane.f32.xlu0 %v5165
    %v5167 = vpop.xlane.xlu0 %5166
    %v5168 = vsel %vm85, %v4834, 0.0
    %5169 = vadd.xlane.f32.xlu0 %v5168
    %v5170 = vpop.xlane.xlu0 %5169
    %v5171 = vsel %vm85, %v4836, 0.0
    %5172 = vadd.xlane.f32.xlu0 %v5171
    %v5173 = vpop.xlane.xlu0 %5172
    %v5174 = vsel %vm85, %v4838, 0.0
    %5175 = vadd.xlane.f32.xlu0 %v5174
    %v5176 = vpop.xlane.xlu0 %5175
    %v5177 = vsel %vm85, %v4840, 0.0
    %5178 = vadd.xlane.f32.xlu0 %v5177
    %v5179 = vpop.xlane.xlu0 %5178
    %v5180 = vsel %vm85, %v4842, 0.0
    %5181 = vadd.xlane.f32.xlu0 %v5180
    %v5182 = vpop.xlane.xlu0 %5181
    %v5183 = vsel %vm85, %v4844, 0.0
    %5184 = vadd.xlane.f32.xlu0 %v5183
    %v5185 = vpop.xlane.xlu0 %5184
    %v5186 = vsel %vm85, %v4846, 0.0
    %5187 = vadd.xlane.f32.xlu0 %v5186
    %v5188 = vpop.xlane.xlu0 %5187
    %v5189 = vsel %vm85, %v4848, 0.0
    %5190 = vadd.xlane.f32.xlu0 %v5189
    %v5191 = vpop.xlane.xlu0 %5190
    %v5192 = vsel %vm85, %v4850, 0.0
    %5193 = vadd.xlane.f32.xlu0 %v5192
    %v5194 = vpop.xlane.xlu0 %5193
    %v5195 = vsel %vm85, %v4852, 0.0
    %5196 = vadd.xlane.f32.xlu0 %v5195
    %v5197 = vpop.xlane.xlu0 %5196
    %v5198 = vsel %vm85, %v4854, 0.0
    %5199 = vadd.xlane.f32.xlu0 %v5198
    %v5200 = vpop.xlane.xlu0 %5199
    %v5201 = vsel %vm85, %v4856, 0.0
    %5202 = vadd.xlane.f32.xlu0 %v5201
    %v5203 = vpop.xlane.xlu0 %5202
    %v5204 = vsel %vm85, %v4858, 0.0
    %5205 = vadd.xlane.f32.xlu0 %v5204
    %v5206 = vpop.xlane.xlu0 %5205
    %v5207 = vsel %vm85, %v4860, 0.0
    %5208 = vadd.xlane.f32.xlu0 %v5207
    %v5209 = vpop.xlane.xlu0 %5208
    %v5210 = vsel %vm85, %v4862, 0.0
    %5211 = vadd.xlane.f32.xlu0 %v5210
    %v5212 = vpop.xlane.xlu0 %5211
    %v5213 = vsel %vm85, %v4864, 0.0
    %5214 = vadd.xlane.f32.xlu0 %v5213
    %v5215 = vpop.xlane.xlu0 %5214
    %v5216 = vsel %vm85, %v4866, 0.0
    %5217 = vadd.xlane.f32.xlu0 %v5216
    %v5218 = vpop.xlane.xlu0 %5217
    %v5219 = vsel %vm85, %v4868, 0.0
    %5220 = vadd.xlane.f32.xlu0 %v5219
    %v5221 = vpop.xlane.xlu0 %5220
    %v5222 = vsel %vm85, %v4870, 0.0
    %5223 = vadd.xlane.f32.xlu0 %v5222
    %v5224 = vpop.xlane.xlu0 %5223
    %v5225 = vsel %vm85, %v4872, 0.0
    %5226 = vadd.xlane.f32.xlu0 %v5225
    %v5227 = vpop.xlane.xlu0 %5226
    %v5228 = vsel %vm85, %v4874, 0.0
    %5229 = vadd.xlane.f32.xlu0 %v5228
    %v5230 = vpop.xlane.xlu0 %5229
    %v5231 = vsel %vm85, %v4876, 0.0
    %5232 = vadd.xlane.f32.xlu0 %v5231
    %v5233 = vpop.xlane.xlu0 %5232
    %v5234 = vsel %vm85, %v4878, 0.0
    %5235 = vadd.xlane.f32.xlu0 %v5234
    %v5236 = vpop.xlane.xlu0 %5235
    %v5237 = vsel %vm85, %v4880, 0.0
    %5238 = vadd.xlane.f32.xlu0 %v5237
    %v5239 = vpop.xlane.xlu0 %5238
    %v5240 = vsel %vm85, %v4882, 0.0
    %5241 = vadd.xlane.f32.xlu0 %v5240
    %v5242 = vpop.xlane.xlu0 %5241
    %v5243 = vsel %vm85, %v4884, 0.0
    %5244 = vadd.xlane.f32.xlu0 %v5243
    %v5245 = vpop.xlane.xlu0 %5244
    %v5246 = vsel %vm85, %v4886, 0.0
    %5247 = vadd.xlane.f32.xlu0 %v5246
    %v5248 = vpop.xlane.xlu0 %5247
    %v5249 = vsel %vm85, %v4888, 0.0
    %5250 = vadd.xlane.f32.xlu0 %v5249
    %v5251 = vpop.xlane.xlu0 %5250
    %v5252 = vsel %vm85, %v4890, 0.0
    %5253 = vadd.xlane.f32.xlu0 %v5252
    %v5254 = vpop.xlane.xlu0 %5253
    %v5255 = vsel %vm85, %v4892, 0.0
    %5256 = vadd.xlane.f32.xlu0 %v5255
    %v5257 = vpop.xlane.xlu0 %5256
    %v5258 = vsel %vm85, %v4894, 0.0
    %5259 = vadd.xlane.f32.xlu0 %v5258
    %v5260 = vpop.xlane.xlu0 %5259
    %v5261 = vsel %vm85, %v4896, 0.0
    %5262 = vadd.xlane.f32.xlu0 %v5261
    %v5263 = vpop.xlane.xlu0 %5262
    %v5264 = vsel %vm85, %v4898, 0.0
    %5265 = vadd.xlane.f32.xlu0 %v5264
    %v5266 = vpop.xlane.xlu0 %5265
    %v5267 = vsel %vm85, %v4900, 0.0
    %5268 = vadd.xlane.f32.xlu0 %v5267
    %v5269 = vpop.xlane.xlu0 %5268
    %v5270 = vsel %vm85, %v4902, 0.0
    %5271 = vadd.xlane.f32.xlu0 %v5270
    %v5272 = vpop.xlane.xlu0 %5271
    %v5273 = vsel %vm85, %v4904, 0.0
    %5274 = vadd.xlane.f32.xlu0 %v5273
    %v5275 = vpop.xlane.xlu0 %5274
    %v5276 = vsel %vm85, %v4906, 0.0
    %5277 = vadd.xlane.f32.xlu0 %v5276
    %v5278 = vpop.xlane.xlu0 %5277
    %v5279 = vsel %vm85, %v4908, 0.0
    %5280 = vadd.xlane.f32.xlu0 %v5279
    %v5281 = vpop.xlane.xlu0 %5280
    %v5282 = vsel %vm85, %v4910, 0.0
    %5283 = vadd.xlane.f32.xlu0 %v5282
    %v5284 = vpop.xlane.xlu0 %5283
    %v5285 = vsel %vm85, %v4912, 0.0
    %5286 = vadd.xlane.f32.xlu0 %v5285
    %v5287 = vpop.xlane.xlu0 %5286
    %v5288 = vsel %vm85, %v4914, 0.0
    %5289 = vadd.xlane.f32.xlu0 %v5288
    %v5290 = vpop.xlane.xlu0 %5289
    %v5291 = vsel %vm85, %v4916, 0.0
    %5292 = vadd.xlane.f32.xlu0 %v5291
    %v5293 = vpop.xlane.xlu0 %5292
    %v5294 = vsel %vm85, %v4918, 0.0
    %5295 = vadd.xlane.f32.xlu0 %v5294
    %v5296 = vpop.xlane.xlu0 %5295
    %v5297 = vsel %vm85, %v4920, 0.0
    %5298 = vadd.xlane.f32.xlu0 %v5297
    %v5299 = vpop.xlane.xlu0 %5298
    %v5300 = vsel %vm85, %v4922, 0.0
    %5301 = vadd.xlane.f32.xlu0 %v5300
    %v5302 = vpop.xlane.xlu0 %5301
    %v5303 = vsel %vm85, %v4924, 0.0
    %5304 = vadd.xlane.f32.xlu0 %v5303
    %v5305 = vpop.xlane.xlu0 %5304
    %v5306 = vsel %vm85, %v4926, 0.0
    %5307 = vadd.xlane.f32.xlu0 %v5306
    %v5308 = vpop.xlane.xlu0 %5307
    %v5309 = vsel %vm85, %v4928, 0.0
    %5310 = vadd.xlane.f32.xlu0 %v5309
    %v5311 = vpop.xlane.xlu0 %5310
    %v5312 = vsel %vm85, %v4930, 0.0
    %5313 = vadd.xlane.f32.xlu0 %v5312
    %v5314 = vpop.xlane.xlu0 %5313
    %v5315 = vrcp.pop %v4933
    %v5316 = vmul.f32 %v4933, %v5315
    %v5317 = vsub.f32 1.0, %v5316
    %v5318 = vmul.f32 %v5315, %v5317
    %v5319 = vadd.f32 %v5315, %v5318
    %vm5320 = vweird.f32 %v4933
    %vm5321 = vweird.f32 %v5315
    %vm5322 = vmor %vm5320, %vm5321
    %v5323 = vsel %vm5322, %v5315, %v5319
    %v5324 = vand.u32 2147483647, %v4933
    %vm5325 = vcmp.eq.f32.partialorder %v5324, 8.507059e+37
    %v5326 = vand.u32 %v4933, 2147483648
    %v5327 = vor.u32 1.1754944e-38, %v5326
    %v5328 = vsel %vm5325, %v5327, %v5323
    %v5329 = vmul.f32 %v4676, %v5328
    %v5330 = vrcp.pop %v4936
    %v5331 = vmul.f32 %v4936, %v5330
    %v5332 = vsub.f32 1.0, %v5331
    %v5333 = vmul.f32 %v5330, %v5332
    %v5334 = vadd.f32 %v5330, %v5333
    %vm5335 = vweird.f32 %v4936
    %vm5336 = vweird.f32 %v5330
    %vm5337 = vmor %vm5335, %vm5336
    %v5338 = vsel %vm5337, %v5330, %v5334
    %v5339 = vand.u32 2147483647, %v4936
    %vm5340 = vcmp.eq.f32.partialorder %v5339, 8.507059e+37
    %v5341 = vand.u32 %v4936, 2147483648
    %v5342 = vor.u32 1.1754944e-38, %v5341
    %v5343 = vsel %vm5340, %v5342, %v5338
    %v5344 = vmul.f32 %v4678, %v5343
    %v5345 = vrcp.pop %v4939
    %v5346 = vmul.f32 %v4939, %v5345
    %v5347 = vsub.f32 1.0, %v5346
    %v5348 = vmul.f32 %v5345, %v5347
    %v5349 = vadd.f32 %v5345, %v5348
    %vm5350 = vweird.f32 %v4939
    %vm5351 = vweird.f32 %v5345
    %vm5352 = vmor %vm5350, %vm5351
    %v5353 = vsel %vm5352, %v5345, %v5349
    %v5354 = vand.u32 2147483647, %v4939
    %vm5355 = vcmp.eq.f32.partialorder %v5354, 8.507059e+37
    %v5356 = vand.u32 %v4939, 2147483648
    %v5357 = vor.u32 1.1754944e-38, %v5356
    %v5358 = vsel %vm5355, %v5357, %v5353
    %v5359 = vmul.f32 %v4680, %v5358
    %v5360 = vrcp.pop %v4942
    %v5361 = vmul.f32 %v4942, %v5360
    %v5362 = vsub.f32 1.0, %v5361
    %v5363 = vmul.f32 %v5360, %v5362
    %v5364 = vadd.f32 %v5360, %v5363
    %vm5365 = vweird.f32 %v4942
    %vm5366 = vweird.f32 %v5360
    %vm5367 = vmor %vm5365, %vm5366
    %v5368 = vsel %vm5367, %v5360, %v5364
    %v5369 = vand.u32 2147483647, %v4942
    %vm5370 = vcmp.eq.f32.partialorder %v5369, 8.507059e+37
    %v5371 = vand.u32 %v4942, 2147483648
    %v5372 = vor.u32 1.1754944e-38, %v5371
    %v5373 = vsel %vm5370, %v5372, %v5368
    %v5374 = vmul.f32 %v4682, %v5373
    %v5375 = vrcp.pop %v4945
    %v5376 = vmul.f32 %v4945, %v5375
    %v5377 = vsub.f32 1.0, %v5376
    %v5378 = vmul.f32 %v5375, %v5377
    %v5379 = vadd.f32 %v5375, %v5378
    %vm5380 = vweird.f32 %v4945
    %vm5381 = vweird.f32 %v5375
    %vm5382 = vmor %vm5380, %vm5381
    %v5383 = vsel %vm5382, %v5375, %v5379
    %v5384 = vand.u32 2147483647, %v4945
    %vm5385 = vcmp.eq.f32.partialorder %v5384, 8.507059e+37
    %v5386 = vand.u32 %v4945, 2147483648
    %v5387 = vor.u32 1.1754944e-38, %v5386
    %v5388 = vsel %vm5385, %v5387, %v5383
    %v5389 = vmul.f32 %v4684, %v5388
    %v5390 = vrcp.pop %v4948
    %v5391 = vmul.f32 %v4948, %v5390
    %v5392 = vsub.f32 1.0, %v5391
    %v5393 = vmul.f32 %v5390, %v5392
    %v5394 = vadd.f32 %v5390, %v5393
    %vm5395 = vweird.f32 %v4948
    %vm5396 = vweird.f32 %v5390
    %vm5397 = vmor %vm5395, %vm5396
    %v5398 = vsel %vm5397, %v5390, %v5394
    %v5399 = vand.u32 2147483647, %v4948
    %vm5400 = vcmp.eq.f32.partialorder %v5399, 8.507059e+37
    %v5401 = vand.u32 %v4948, 2147483648
    %v5402 = vor.u32 1.1754944e-38, %v5401
    %v5403 = vsel %vm5400, %v5402, %v5398
    %v5404 = vmul.f32 %v4686, %v5403
    %v5405 = vrcp.pop %v4951
    %v5406 = vmul.f32 %v4951, %v5405
    %v5407 = vsub.f32 1.0, %v5406
    %v5408 = vmul.f32 %v5405, %v5407
    %v5409 = vadd.f32 %v5405, %v5408
    %vm5410 = vweird.f32 %v4951
    %vm5411 = vweird.f32 %v5405
    %vm5412 = vmor %vm5410, %vm5411
    %v5413 = vsel %vm5412, %v5405, %v5409
    %v5414 = vand.u32 2147483647, %v4951
    %vm5415 = vcmp.eq.f32.partialorder %v5414, 8.507059e+37
    %v5416 = vand.u32 %v4951, 2147483648
    %v5417 = vor.u32 1.1754944e-38, %v5416
    %v5418 = vsel %vm5415, %v5417, %v5413
    %v5419 = vmul.f32 %v4688, %v5418
    %v5420 = vrcp.pop %v4954
    %v5421 = vmul.f32 %v4954, %v5420
    %v5422 = vsub.f32 1.0, %v5421
    %v5423 = vmul.f32 %v5420, %v5422
    %v5424 = vadd.f32 %v5420, %v5423
    %vm5425 = vweird.f32 %v4954
    %vm5426 = vweird.f32 %v5420
    %vm5427 = vmor %vm5425, %vm5426
    %v5428 = vsel %vm5427, %v5420, %v5424
    %v5429 = vand.u32 2147483647, %v4954
    %vm5430 = vcmp.eq.f32.partialorder %v5429, 8.507059e+37
    %v5431 = vand.u32 %v4954, 2147483648
    %v5432 = vor.u32 1.1754944e-38, %v5431
    %v5433 = vsel %vm5430, %v5432, %v5428
    %v5434 = vmul.f32 %v4690, %v5433
    %v5435 = vrcp.pop %v4957
    %v5436 = vmul.f32 %v4957, %v5435
    %v5437 = vsub.f32 1.0, %v5436
    %v5438 = vmul.f32 %v5435, %v5437
    %v5439 = vadd.f32 %v5435, %v5438
    %vm5440 = vweird.f32 %v4957
    %vm5441 = vweird.f32 %v5435
    %vm5442 = vmor %vm5440, %vm5441
    %v5443 = vsel %vm5442, %v5435, %v5439
    %v5444 = vand.u32 2147483647, %v4957
    %vm5445 = vcmp.eq.f32.partialorder %v5444, 8.507059e+37
    %v5446 = vand.u32 %v4957, 2147483648
    %v5447 = vor.u32 1.1754944e-38, %v5446
    %v5448 = vsel %vm5445, %v5447, %v5443
    %v5449 = vmul.f32 %v4692, %v5448
    %v5450 = vrcp.pop %v4960
    %v5451 = vmul.f32 %v4960, %v5450
    %v5452 = vsub.f32 1.0, %v5451
    %v5453 = vmul.f32 %v5450, %v5452
    %v5454 = vadd.f32 %v5450, %v5453
    %vm5455 = vweird.f32 %v4960
    %vm5456 = vweird.f32 %v5450
    %vm5457 = vmor %vm5455, %vm5456
    %v5458 = vsel %vm5457, %v5450, %v5454
    %v5459 = vand.u32 2147483647, %v4960
    %vm5460 = vcmp.eq.f32.partialorder %v5459, 8.507059e+37
    %v5461 = vand.u32 %v4960, 2147483648
    %v5462 = vor.u32 1.1754944e-38, %v5461
    %v5463 = vsel %vm5460, %v5462, %v5458
    %v5464 = vmul.f32 %v4694, %v5463
    %v5465 = vrcp.pop %v4963
    %v5466 = vmul.f32 %v4963, %v5465
    %v5467 = vsub.f32 1.0, %v5466
    %v5468 = vmul.f32 %v5465, %v5467
    %v5469 = vadd.f32 %v5465, %v5468
    %vm5470 = vweird.f32 %v4963
    %vm5471 = vweird.f32 %v5465
    %vm5472 = vmor %vm5470, %vm5471
    %v5473 = vsel %vm5472, %v5465, %v5469
    %v5474 = vand.u32 2147483647, %v4963
    %vm5475 = vcmp.eq.f32.partialorder %v5474, 8.507059e+37
    %v5476 = vand.u32 %v4963, 2147483648
    %v5477 = vor.u32 1.1754944e-38, %v5476
    %v5478 = vsel %vm5475, %v5477, %v5473
    %v5479 = vmul.f32 %v4696, %v5478
    %v5480 = vrcp.pop %v4966
    %v5481 = vmul.f32 %v4966, %v5480
    %v5482 = vsub.f32 1.0, %v5481
    %v5483 = vmul.f32 %v5480, %v5482
    %v5484 = vadd.f32 %v5480, %v5483
    %vm5485 = vweird.f32 %v4966
    %vm5486 = vweird.f32 %v5480
    %vm5487 = vmor %vm5485, %vm5486
    %v5488 = vsel %vm5487, %v5480, %v5484
    %v5489 = vand.u32 2147483647, %v4966
    %vm5490 = vcmp.eq.f32.partialorder %v5489, 8.507059e+37
    %v5491 = vand.u32 %v4966, 2147483648
    %v5492 = vor.u32 1.1754944e-38, %v5491
    %v5493 = vsel %vm5490, %v5492, %v5488
    %v5494 = vmul.f32 %v4698, %v5493
    %v5495 = vrcp.pop %v4969
    %v5496 = vmul.f32 %v4969, %v5495
    %v5497 = vsub.f32 1.0, %v5496
    %v5498 = vmul.f32 %v5495, %v5497
    %v5499 = vadd.f32 %v5495, %v5498
    %vm5500 = vweird.f32 %v4969
    %vm5501 = vweird.f32 %v5495
    %vm5502 = vmor %vm5500, %vm5501
    %v5503 = vsel %vm5502, %v5495, %v5499
    %v5504 = vand.u32 2147483647, %v4969
    %vm5505 = vcmp.eq.f32.partialorder %v5504, 8.507059e+37
    %v5506 = vand.u32 %v4969, 2147483648
    %v5507 = vor.u32 1.1754944e-38, %v5506
    %v5508 = vsel %vm5505, %v5507, %v5503
    %v5509 = vmul.f32 %v4700, %v5508
    %v5510 = vrcp.pop %v4972
    %v5511 = vmul.f32 %v4972, %v5510
    %v5512 = vsub.f32 1.0, %v5511
    %v5513 = vmul.f32 %v5510, %v5512
    %v5514 = vadd.f32 %v5510, %v5513
    %vm5515 = vweird.f32 %v4972
    %vm5516 = vweird.f32 %v5510
    %vm5517 = vmor %vm5515, %vm5516
    %v5518 = vsel %vm5517, %v5510, %v5514
    %v5519 = vand.u32 2147483647, %v4972
    %vm5520 = vcmp.eq.f32.partialorder %v5519, 8.507059e+37
    %v5521 = vand.u32 %v4972, 2147483648
    %v5522 = vor.u32 1.1754944e-38, %v5521
    %v5523 = vsel %vm5520, %v5522, %v5518
    %v5524 = vmul.f32 %v4702, %v5523
    %v5525 = vrcp.pop %v4975
    %v5526 = vmul.f32 %v4975, %v5525
    %v5527 = vsub.f32 1.0, %v5526
    %v5528 = vmul.f32 %v5525, %v5527
    %v5529 = vadd.f32 %v5525, %v5528
    %vm5530 = vweird.f32 %v4975
    %vm5531 = vweird.f32 %v5525
    %vm5532 = vmor %vm5530, %vm5531
    %v5533 = vsel %vm5532, %v5525, %v5529
    %v5534 = vand.u32 2147483647, %v4975
    %vm5535 = vcmp.eq.f32.partialorder %v5534, 8.507059e+37
    %v5536 = vand.u32 %v4975, 2147483648
    %v5537 = vor.u32 1.1754944e-38, %v5536
    %v5538 = vsel %vm5535, %v5537, %v5533
    %v5539 = vmul.f32 %v4704, %v5538
    %v5540 = vrcp.pop %v4978
    %v5541 = vmul.f32 %v4978, %v5540
    %v5542 = vsub.f32 1.0, %v5541
    %v5543 = vmul.f32 %v5540, %v5542
    %v5544 = vadd.f32 %v5540, %v5543
    %vm5545 = vweird.f32 %v4978
    %vm5546 = vweird.f32 %v5540
    %vm5547 = vmor %vm5545, %vm5546
    %v5548 = vsel %vm5547, %v5540, %v5544
    %v5549 = vand.u32 2147483647, %v4978
    %vm5550 = vcmp.eq.f32.partialorder %v5549, 8.507059e+37
    %v5551 = vand.u32 %v4978, 2147483648
    %v5552 = vor.u32 1.1754944e-38, %v5551
    %v5553 = vsel %vm5550, %v5552, %v5548
    %v5554 = vmul.f32 %v4706, %v5553
    %v5555 = vrcp.pop %v4981
    %v5556 = vmul.f32 %v4981, %v5555
    %v5557 = vsub.f32 1.0, %v5556
    %v5558 = vmul.f32 %v5555, %v5557
    %v5559 = vadd.f32 %v5555, %v5558
    %vm5560 = vweird.f32 %v4981
    %vm5561 = vweird.f32 %v5555
    %vm5562 = vmor %vm5560, %vm5561
    %v5563 = vsel %vm5562, %v5555, %v5559
    %v5564 = vand.u32 2147483647, %v4981
    %vm5565 = vcmp.eq.f32.partialorder %v5564, 8.507059e+37
    %v5566 = vand.u32 %v4981, 2147483648
    %v5567 = vor.u32 1.1754944e-38, %v5566
    %v5568 = vsel %vm5565, %v5567, %v5563
    %v5569 = vmul.f32 %v4708, %v5568
    %v5570 = vrcp.pop %v4984
    %v5571 = vmul.f32 %v4984, %v5570
    %v5572 = vsub.f32 1.0, %v5571
    %v5573 = vmul.f32 %v5570, %v5572
    %v5574 = vadd.f32 %v5570, %v5573
    %vm5575 = vweird.f32 %v4984
    %vm5576 = vweird.f32 %v5570
    %vm5577 = vmor %vm5575, %vm5576
    %v5578 = vsel %vm5577, %v5570, %v5574
    %v5579 = vand.u32 2147483647, %v4984
    %vm5580 = vcmp.eq.f32.partialorder %v5579, 8.507059e+37
    %v5581 = vand.u32 %v4984, 2147483648
    %v5582 = vor.u32 1.1754944e-38, %v5581
    %v5583 = vsel %vm5580, %v5582, %v5578
    %v5584 = vmul.f32 %v4710, %v5583
    %v5585 = vrcp.pop %v4987
    %v5586 = vmul.f32 %v4987, %v5585
    %v5587 = vsub.f32 1.0, %v5586
    %v5588 = vmul.f32 %v5585, %v5587
    %v5589 = vadd.f32 %v5585, %v5588
    %vm5590 = vweird.f32 %v4987
    %vm5591 = vweird.f32 %v5585
    %vm5592 = vmor %vm5590, %vm5591
    %v5593 = vsel %vm5592, %v5585, %v5589
    %v5594 = vand.u32 2147483647, %v4987
    %vm5595 = vcmp.eq.f32.partialorder %v5594, 8.507059e+37
    %v5596 = vand.u32 %v4987, 2147483648
    %v5597 = vor.u32 1.1754944e-38, %v5596
    %v5598 = vsel %vm5595, %v5597, %v5593
    %v5599 = vmul.f32 %v4712, %v5598
    %v5600 = vrcp.pop %v4990
    %v5601 = vmul.f32 %v4990, %v5600
    %v5602 = vsub.f32 1.0, %v5601
    %v5603 = vmul.f32 %v5600, %v5602
    %v5604 = vadd.f32 %v5600, %v5603
    %vm5605 = vweird.f32 %v4990
    %vm5606 = vweird.f32 %v5600
    %vm5607 = vmor %vm5605, %vm5606
    %v5608 = vsel %vm5607, %v5600, %v5604
    %v5609 = vand.u32 2147483647, %v4990
    %vm5610 = vcmp.eq.f32.partialorder %v5609, 8.507059e+37
    %v5611 = vand.u32 %v4990, 2147483648
    %v5612 = vor.u32 1.1754944e-38, %v5611
    %v5613 = vsel %vm5610, %v5612, %v5608
    %v5614 = vmul.f32 %v4714, %v5613
    %v5615 = vrcp.pop %v4993
    %v5616 = vmul.f32 %v4993, %v5615
    %v5617 = vsub.f32 1.0, %v5616
    %v5618 = vmul.f32 %v5615, %v5617
    %v5619 = vadd.f32 %v5615, %v5618
    %vm5620 = vweird.f32 %v4993
    %vm5621 = vweird.f32 %v5615
    %vm5622 = vmor %vm5620, %vm5621
    %v5623 = vsel %vm5622, %v5615, %v5619
    %v5624 = vand.u32 2147483647, %v4993
    %vm5625 = vcmp.eq.f32.partialorder %v5624, 8.507059e+37
    %v5626 = vand.u32 %v4993, 2147483648
    %v5627 = vor.u32 1.1754944e-38, %v5626
    %v5628 = vsel %vm5625, %v5627, %v5623
    %v5629 = vmul.f32 %v4716, %v5628
    %v5630 = vrcp.pop %v4996
    %v5631 = vmul.f32 %v4996, %v5630
    %v5632 = vsub.f32 1.0, %v5631
    %v5633 = vmul.f32 %v5630, %v5632
    %v5634 = vadd.f32 %v5630, %v5633
    %vm5635 = vweird.f32 %v4996
    %vm5636 = vweird.f32 %v5630
    %vm5637 = vmor %vm5635, %vm5636
    %v5638 = vsel %vm5637, %v5630, %v5634
    %v5639 = vand.u32 2147483647, %v4996
    %vm5640 = vcmp.eq.f32.partialorder %v5639, 8.507059e+37
    %v5641 = vand.u32 %v4996, 2147483648
    %v5642 = vor.u32 1.1754944e-38, %v5641
    %v5643 = vsel %vm5640, %v5642, %v5638
    %v5644 = vmul.f32 %v4718, %v5643
    %v5645 = vrcp.pop %v4999
    %v5646 = vmul.f32 %v4999, %v5645
    %v5647 = vsub.f32 1.0, %v5646
    %v5648 = vmul.f32 %v5645, %v5647
    %v5649 = vadd.f32 %v5645, %v5648
    %vm5650 = vweird.f32 %v4999
    %vm5651 = vweird.f32 %v5645
    %vm5652 = vmor %vm5650, %vm5651
    %v5653 = vsel %vm5652, %v5645, %v5649
    %v5654 = vand.u32 2147483647, %v4999
    %vm5655 = vcmp.eq.f32.partialorder %v5654, 8.507059e+37
    %v5656 = vand.u32 %v4999, 2147483648
    %v5657 = vor.u32 1.1754944e-38, %v5656
    %v5658 = vsel %vm5655, %v5657, %v5653
    %v5659 = vmul.f32 %v4720, %v5658
    %v5660 = vrcp.pop %v5002
    %v5661 = vmul.f32 %v5002, %v5660
    %v5662 = vsub.f32 1.0, %v5661
    %v5663 = vmul.f32 %v5660, %v5662
    %v5664 = vadd.f32 %v5660, %v5663
    %vm5665 = vweird.f32 %v5002
    %vm5666 = vweird.f32 %v5660
    %vm5667 = vmor %vm5665, %vm5666
    %v5668 = vsel %vm5667, %v5660, %v5664
    %v5669 = vand.u32 2147483647, %v5002
    %vm5670 = vcmp.eq.f32.partialorder %v5669, 8.507059e+37
    %v5671 = vand.u32 %v5002, 2147483648
    %v5672 = vor.u32 1.1754944e-38, %v5671
    %v5673 = vsel %vm5670, %v5672, %v5668
    %v5674 = vmul.f32 %v4722, %v5673
    %v5675 = vrcp.pop %v5005
    %v5676 = vmul.f32 %v5005, %v5675
    %v5677 = vsub.f32 1.0, %v5676
    %v5678 = vmul.f32 %v5675, %v5677
    %v5679 = vadd.f32 %v5675, %v5678
    %vm5680 = vweird.f32 %v5005
    %vm5681 = vweird.f32 %v5675
    %vm5682 = vmor %vm5680, %vm5681
    %v5683 = vsel %vm5682, %v5675, %v5679
    %v5684 = vand.u32 2147483647, %v5005
    %vm5685 = vcmp.eq.f32.partialorder %v5684, 8.507059e+37
    %v5686 = vand.u32 %v5005, 2147483648
    %v5687 = vor.u32 1.1754944e-38, %v5686
    %v5688 = vsel %vm5685, %v5687, %v5683
    %v5689 = vmul.f32 %v4724, %v5688
    %v5690 = vrcp.pop %v5008
    %v5691 = vmul.f32 %v5008, %v5690
    %v5692 = vsub.f32 1.0, %v5691
    %v5693 = vmul.f32 %v5690, %v5692
    %v5694 = vadd.f32 %v5690, %v5693
    %vm5695 = vweird.f32 %v5008
    %vm5696 = vweird.f32 %v5690
    %vm5697 = vmor %vm5695, %vm5696
    %v5698 = vsel %vm5697, %v5690, %v5694
    %v5699 = vand.u32 2147483647, %v5008
    %vm5700 = vcmp.eq.f32.partialorder %v5699, 8.507059e+37
    %v5701 = vand.u32 %v5008, 2147483648
    %v5702 = vor.u32 1.1754944e-38, %v5701
    %v5703 = vsel %vm5700, %v5702, %v5698
    %v5704 = vmul.f32 %v4726, %v5703
    %v5705 = vrcp.pop %v5011
    %v5706 = vmul.f32 %v5011, %v5705
    %v5707 = vsub.f32 1.0, %v5706
    %v5708 = vmul.f32 %v5705, %v5707
    %v5709 = vadd.f32 %v5705, %v5708
    %vm5710 = vweird.f32 %v5011
    %vm5711 = vweird.f32 %v5705
    %vm5712 = vmor %vm5710, %vm5711
    %v5713 = vsel %vm5712, %v5705, %v5709
    %v5714 = vand.u32 2147483647, %v5011
    %vm5715 = vcmp.eq.f32.partialorder %v5714, 8.507059e+37
    %v5716 = vand.u32 %v5011, 2147483648
    %v5717 = vor.u32 1.1754944e-38, %v5716
    %v5718 = vsel %vm5715, %v5717, %v5713
    %v5719 = vmul.f32 %v4728, %v5718
    %v5720 = vrcp.pop %v5014
    %v5721 = vmul.f32 %v5014, %v5720
    %v5722 = vsub.f32 1.0, %v5721
    %v5723 = vmul.f32 %v5720, %v5722
    %v5724 = vadd.f32 %v5720, %v5723
    %vm5725 = vweird.f32 %v5014
    %vm5726 = vweird.f32 %v5720
    %vm5727 = vmor %vm5725, %vm5726
    %v5728 = vsel %vm5727, %v5720, %v5724
    %v5729 = vand.u32 2147483647, %v5014
    %vm5730 = vcmp.eq.f32.partialorder %v5729, 8.507059e+37
    %v5731 = vand.u32 %v5014, 2147483648
    %v5732 = vor.u32 1.1754944e-38, %v5731
    %v5733 = vsel %vm5730, %v5732, %v5728
    %v5734 = vmul.f32 %v4730, %v5733
    %v5735 = vrcp.pop %v5017
    %v5736 = vmul.f32 %v5017, %v5735
    %v5737 = vsub.f32 1.0, %v5736
    %v5738 = vmul.f32 %v5735, %v5737
    %v5739 = vadd.f32 %v5735, %v5738
    %vm5740 = vweird.f32 %v5017
    %vm5741 = vweird.f32 %v5735
    %vm5742 = vmor %vm5740, %vm5741
    %v5743 = vsel %vm5742, %v5735, %v5739
    %v5744 = vand.u32 2147483647, %v5017
    %vm5745 = vcmp.eq.f32.partialorder %v5744, 8.507059e+37
    %v5746 = vand.u32 %v5017, 2147483648
    %v5747 = vor.u32 1.1754944e-38, %v5746
    %v5748 = vsel %vm5745, %v5747, %v5743
    %v5749 = vmul.f32 %v4732, %v5748
    %v5750 = vrcp.pop %v5020
    %v5751 = vmul.f32 %v5020, %v5750
    %v5752 = vsub.f32 1.0, %v5751
    %v5753 = vmul.f32 %v5750, %v5752
    %v5754 = vadd.f32 %v5750, %v5753
    %vm5755 = vweird.f32 %v5020
    %vm5756 = vweird.f32 %v5750
    %vm5757 = vmor %vm5755, %vm5756
    %v5758 = vsel %vm5757, %v5750, %v5754
    %v5759 = vand.u32 2147483647, %v5020
    %vm5760 = vcmp.eq.f32.partialorder %v5759, 8.507059e+37
    %v5761 = vand.u32 %v5020, 2147483648
    %v5762 = vor.u32 1.1754944e-38, %v5761
    %v5763 = vsel %vm5760, %v5762, %v5758
    %v5764 = vmul.f32 %v4734, %v5763
    %v5765 = vrcp.pop %v5023
    %v5766 = vmul.f32 %v5023, %v5765
    %v5767 = vsub.f32 1.0, %v5766
    %v5768 = vmul.f32 %v5765, %v5767
    %v5769 = vadd.f32 %v5765, %v5768
    %vm5770 = vweird.f32 %v5023
    %vm5771 = vweird.f32 %v5765
    %vm5772 = vmor %vm5770, %vm5771
    %v5773 = vsel %vm5772, %v5765, %v5769
    %v5774 = vand.u32 2147483647, %v5023
    %vm5775 = vcmp.eq.f32.partialorder %v5774, 8.507059e+37
    %v5776 = vand.u32 %v5023, 2147483648
    %v5777 = vor.u32 1.1754944e-38, %v5776
    %v5778 = vsel %vm5775, %v5777, %v5773
    %v5779 = vmul.f32 %v4736, %v5778
    %v5780 = vrcp.pop %v5026
    %v5781 = vmul.f32 %v5026, %v5780
    %v5782 = vsub.f32 1.0, %v5781
    %v5783 = vmul.f32 %v5780, %v5782
    %v5784 = vadd.f32 %v5780, %v5783
    %vm5785 = vweird.f32 %v5026
    %vm5786 = vweird.f32 %v5780
    %vm5787 = vmor %vm5785, %vm5786
    %v5788 = vsel %vm5787, %v5780, %v5784
    %v5789 = vand.u32 2147483647, %v5026
    %vm5790 = vcmp.eq.f32.partialorder %v5789, 8.507059e+37
    %v5791 = vand.u32 %v5026, 2147483648
    %v5792 = vor.u32 1.1754944e-38, %v5791
    %v5793 = vsel %vm5790, %v5792, %v5788
    %v5794 = vmul.f32 %v4738, %v5793
    %v5795 = vrcp.pop %v5029
    %v5796 = vmul.f32 %v5029, %v5795
    %v5797 = vsub.f32 1.0, %v5796
    %v5798 = vmul.f32 %v5795, %v5797
    %v5799 = vadd.f32 %v5795, %v5798
    %vm5800 = vweird.f32 %v5029
    %vm5801 = vweird.f32 %v5795
    %vm5802 = vmor %vm5800, %vm5801
    %v5803 = vsel %vm5802, %v5795, %v5799
    %v5804 = vand.u32 2147483647, %v5029
    %vm5805 = vcmp.eq.f32.partialorder %v5804, 8.507059e+37
    %v5806 = vand.u32 %v5029, 2147483648
    %v5807 = vor.u32 1.1754944e-38, %v5806
    %v5808 = vsel %vm5805, %v5807, %v5803
    %v5809 = vmul.f32 %v4740, %v5808
    %v5810 = vrcp.pop %v5032
    %v5811 = vmul.f32 %v5032, %v5810
    %v5812 = vsub.f32 1.0, %v5811
    %v5813 = vmul.f32 %v5810, %v5812
    %v5814 = vadd.f32 %v5810, %v5813
    %vm5815 = vweird.f32 %v5032
    %vm5816 = vweird.f32 %v5810
    %vm5817 = vmor %vm5815, %vm5816
    %v5818 = vsel %vm5817, %v5810, %v5814
    %v5819 = vand.u32 2147483647, %v5032
    %vm5820 = vcmp.eq.f32.partialorder %v5819, 8.507059e+37
    %v5821 = vand.u32 %v5032, 2147483648
    %v5822 = vor.u32 1.1754944e-38, %v5821
    %v5823 = vsel %vm5820, %v5822, %v5818
    %v5824 = vmul.f32 %v4742, %v5823
    %v5825 = vrcp.pop %v5035
    %v5826 = vmul.f32 %v5035, %v5825
    %v5827 = vsub.f32 1.0, %v5826
    %v5828 = vmul.f32 %v5825, %v5827
    %v5829 = vadd.f32 %v5825, %v5828
    %vm5830 = vweird.f32 %v5035
    %vm5831 = vweird.f32 %v5825
    %vm5832 = vmor %vm5830, %vm5831
    %v5833 = vsel %vm5832, %v5825, %v5829
    %v5834 = vand.u32 2147483647, %v5035
    %vm5835 = vcmp.eq.f32.partialorder %v5834, 8.507059e+37
    %v5836 = vand.u32 %v5035, 2147483648
    %v5837 = vor.u32 1.1754944e-38, %v5836
    %v5838 = vsel %vm5835, %v5837, %v5833
    %v5839 = vmul.f32 %v4744, %v5838
    %v5840 = vrcp.pop %v5038
    %v5841 = vmul.f32 %v5038, %v5840
    %v5842 = vsub.f32 1.0, %v5841
    %v5843 = vmul.f32 %v5840, %v5842
    %v5844 = vadd.f32 %v5840, %v5843
    %vm5845 = vweird.f32 %v5038
    %vm5846 = vweird.f32 %v5840
    %vm5847 = vmor %vm5845, %vm5846
    %v5848 = vsel %vm5847, %v5840, %v5844
    %v5849 = vand.u32 2147483647, %v5038
    %vm5850 = vcmp.eq.f32.partialorder %v5849, 8.507059e+37
    %v5851 = vand.u32 %v5038, 2147483648
    %v5852 = vor.u32 1.1754944e-38, %v5851
    %v5853 = vsel %vm5850, %v5852, %v5848
    %v5854 = vmul.f32 %v4746, %v5853
    %v5855 = vrcp.pop %v5041
    %v5856 = vmul.f32 %v5041, %v5855
    %v5857 = vsub.f32 1.0, %v5856
    %v5858 = vmul.f32 %v5855, %v5857
    %v5859 = vadd.f32 %v5855, %v5858
    %vm5860 = vweird.f32 %v5041
    %vm5861 = vweird.f32 %v5855
    %vm5862 = vmor %vm5860, %vm5861
    %v5863 = vsel %vm5862, %v5855, %v5859
    %v5864 = vand.u32 2147483647, %v5041
    %vm5865 = vcmp.eq.f32.partialorder %v5864, 8.507059e+37
    %v5866 = vand.u32 %v5041, 2147483648
    %v5867 = vor.u32 1.1754944e-38, %v5866
    %v5868 = vsel %vm5865, %v5867, %v5863
    %v5869 = vmul.f32 %v4748, %v5868
    %v5870 = vrcp.pop %v5044
    %v5871 = vmul.f32 %v5044, %v5870
    %v5872 = vsub.f32 1.0, %v5871
    %v5873 = vmul.f32 %v5870, %v5872
    %v5874 = vadd.f32 %v5870, %v5873
    %vm5875 = vweird.f32 %v5044
    %vm5876 = vweird.f32 %v5870
    %vm5877 = vmor %vm5875, %vm5876
    %v5878 = vsel %vm5877, %v5870, %v5874
    %v5879 = vand.u32 2147483647, %v5044
    %vm5880 = vcmp.eq.f32.partialorder %v5879, 8.507059e+37
    %v5881 = vand.u32 %v5044, 2147483648
    %v5882 = vor.u32 1.1754944e-38, %v5881
    %v5883 = vsel %vm5880, %v5882, %v5878
    %v5884 = vmul.f32 %v4750, %v5883
    %v5885 = vrcp.pop %v5047
    %v5886 = vmul.f32 %v5047, %v5885
    %v5887 = vsub.f32 1.0, %v5886
    %v5888 = vmul.f32 %v5885, %v5887
    %v5889 = vadd.f32 %v5885, %v5888
    %vm5890 = vweird.f32 %v5047
    %vm5891 = vweird.f32 %v5885
    %vm5892 = vmor %vm5890, %vm5891
    %v5893 = vsel %vm5892, %v5885, %v5889
    %v5894 = vand.u32 2147483647, %v5047
    %vm5895 = vcmp.eq.f32.partialorder %v5894, 8.507059e+37
    %v5896 = vand.u32 %v5047, 2147483648
    %v5897 = vor.u32 1.1754944e-38, %v5896
    %v5898 = vsel %vm5895, %v5897, %v5893
    %v5899 = vmul.f32 %v4752, %v5898
    %v5900 = vrcp.pop %v5050
    %v5901 = vmul.f32 %v5050, %v5900
    %v5902 = vsub.f32 1.0, %v5901
    %v5903 = vmul.f32 %v5900, %v5902
    %v5904 = vadd.f32 %v5900, %v5903
    %vm5905 = vweird.f32 %v5050
    %vm5906 = vweird.f32 %v5900
    %vm5907 = vmor %vm5905, %vm5906
    %v5908 = vsel %vm5907, %v5900, %v5904
    %v5909 = vand.u32 2147483647, %v5050
    %vm5910 = vcmp.eq.f32.partialorder %v5909, 8.507059e+37
    %v5911 = vand.u32 %v5050, 2147483648
    %v5912 = vor.u32 1.1754944e-38, %v5911
    %v5913 = vsel %vm5910, %v5912, %v5908
    %v5914 = vmul.f32 %v4754, %v5913
    %v5915 = vrcp.pop %v5053
    %v5916 = vmul.f32 %v5053, %v5915
    %v5917 = vsub.f32 1.0, %v5916
    %v5918 = vmul.f32 %v5915, %v5917
    %v5919 = vadd.f32 %v5915, %v5918
    %vm5920 = vweird.f32 %v5053
    %vm5921 = vweird.f32 %v5915
    %vm5922 = vmor %vm5920, %vm5921
    %v5923 = vsel %vm5922, %v5915, %v5919
    %v5924 = vand.u32 2147483647, %v5053
    %vm5925 = vcmp.eq.f32.partialorder %v5924, 8.507059e+37
    %v5926 = vand.u32 %v5053, 2147483648
    %v5927 = vor.u32 1.1754944e-38, %v5926
    %v5928 = vsel %vm5925, %v5927, %v5923
    %v5929 = vmul.f32 %v4756, %v5928
    %v5930 = vrcp.pop %v5056
    %v5931 = vmul.f32 %v5056, %v5930
    %v5932 = vsub.f32 1.0, %v5931
    %v5933 = vmul.f32 %v5930, %v5932
    %v5934 = vadd.f32 %v5930, %v5933
    %vm5935 = vweird.f32 %v5056
    %vm5936 = vweird.f32 %v5930
    %vm5937 = vmor %vm5935, %vm5936
    %v5938 = vsel %vm5937, %v5930, %v5934
    %v5939 = vand.u32 2147483647, %v5056
    %vm5940 = vcmp.eq.f32.partialorder %v5939, 8.507059e+37
    %v5941 = vand.u32 %v5056, 2147483648
    %v5942 = vor.u32 1.1754944e-38, %v5941
    %v5943 = vsel %vm5940, %v5942, %v5938
    %v5944 = vmul.f32 %v4758, %v5943
    %v5945 = vrcp.pop %v5059
    %v5946 = vmul.f32 %v5059, %v5945
    %v5947 = vsub.f32 1.0, %v5946
    %v5948 = vmul.f32 %v5945, %v5947
    %v5949 = vadd.f32 %v5945, %v5948
    %vm5950 = vweird.f32 %v5059
    %vm5951 = vweird.f32 %v5945
    %vm5952 = vmor %vm5950, %vm5951
    %v5953 = vsel %vm5952, %v5945, %v5949
    %v5954 = vand.u32 2147483647, %v5059
    %vm5955 = vcmp.eq.f32.partialorder %v5954, 8.507059e+37
    %v5956 = vand.u32 %v5059, 2147483648
    %v5957 = vor.u32 1.1754944e-38, %v5956
    %v5958 = vsel %vm5955, %v5957, %v5953
    %v5959 = vmul.f32 %v4760, %v5958
    %v5960 = vrcp.pop %v5062
    %v5961 = vmul.f32 %v5062, %v5960
    %v5962 = vsub.f32 1.0, %v5961
    %v5963 = vmul.f32 %v5960, %v5962
    %v5964 = vadd.f32 %v5960, %v5963
    %vm5965 = vweird.f32 %v5062
    %vm5966 = vweird.f32 %v5960
    %vm5967 = vmor %vm5965, %vm5966
    %v5968 = vsel %vm5967, %v5960, %v5964
    %v5969 = vand.u32 2147483647, %v5062
    %vm5970 = vcmp.eq.f32.partialorder %v5969, 8.507059e+37
    %v5971 = vand.u32 %v5062, 2147483648
    %v5972 = vor.u32 1.1754944e-38, %v5971
    %v5973 = vsel %vm5970, %v5972, %v5968
    %v5974 = vmul.f32 %v4762, %v5973
    %v5975 = vrcp.pop %v5065
    %v5976 = vmul.f32 %v5065, %v5975
    %v5977 = vsub.f32 1.0, %v5976
    %v5978 = vmul.f32 %v5975, %v5977
    %v5979 = vadd.f32 %v5975, %v5978
    %vm5980 = vweird.f32 %v5065
    %vm5981 = vweird.f32 %v5975
    %vm5982 = vmor %vm5980, %vm5981
    %v5983 = vsel %vm5982, %v5975, %v5979
    %v5984 = vand.u32 2147483647, %v5065
    %vm5985 = vcmp.eq.f32.partialorder %v5984, 8.507059e+37
    %v5986 = vand.u32 %v5065, 2147483648
    %v5987 = vor.u32 1.1754944e-38, %v5986
    %v5988 = vsel %vm5985, %v5987, %v5983
    %v5989 = vmul.f32 %v4764, %v5988
    %v5990 = vrcp.pop %v5068
    %v5991 = vmul.f32 %v5068, %v5990
    %v5992 = vsub.f32 1.0, %v5991
    %v5993 = vmul.f32 %v5990, %v5992
    %v5994 = vadd.f32 %v5990, %v5993
    %vm5995 = vweird.f32 %v5068
    %vm5996 = vweird.f32 %v5990
    %vm5997 = vmor %vm5995, %vm5996
    %v5998 = vsel %vm5997, %v5990, %v5994
    %v5999 = vand.u32 2147483647, %v5068
    %vm6000 = vcmp.eq.f32.partialorder %v5999, 8.507059e+37
    %v6001 = vand.u32 %v5068, 2147483648
    %v6002 = vor.u32 1.1754944e-38, %v6001
    %v6003 = vsel %vm6000, %v6002, %v5998
    %v6004 = vmul.f32 %v4766, %v6003
    %v6005 = vrcp.pop %v5071
    %v6006 = vmul.f32 %v5071, %v6005
    %v6007 = vsub.f32 1.0, %v6006
    %v6008 = vmul.f32 %v6005, %v6007
    %v6009 = vadd.f32 %v6005, %v6008
    %vm6010 = vweird.f32 %v5071
    %vm6011 = vweird.f32 %v6005
    %vm6012 = vmor %vm6010, %vm6011
    %v6013 = vsel %vm6012, %v6005, %v6009
    %v6014 = vand.u32 2147483647, %v5071
    %vm6015 = vcmp.eq.f32.partialorder %v6014, 8.507059e+37
    %v6016 = vand.u32 %v5071, 2147483648
    %v6017 = vor.u32 1.1754944e-38, %v6016
    %v6018 = vsel %vm6015, %v6017, %v6013
    %v6019 = vmul.f32 %v4768, %v6018
    %v6020 = vrcp.pop %v5074
    %v6021 = vmul.f32 %v5074, %v6020
    %v6022 = vsub.f32 1.0, %v6021
    %v6023 = vmul.f32 %v6020, %v6022
    %v6024 = vadd.f32 %v6020, %v6023
    %vm6025 = vweird.f32 %v5074
    %vm6026 = vweird.f32 %v6020
    %vm6027 = vmor %vm6025, %vm6026
    %v6028 = vsel %vm6027, %v6020, %v6024
    %v6029 = vand.u32 2147483647, %v5074
    %vm6030 = vcmp.eq.f32.partialorder %v6029, 8.507059e+37
    %v6031 = vand.u32 %v5074, 2147483648
    %v6032 = vor.u32 1.1754944e-38, %v6031
    %v6033 = vsel %vm6030, %v6032, %v6028
    %v6034 = vmul.f32 %v4770, %v6033
    %v6035 = vrcp.pop %v5077
    %v6036 = vmul.f32 %v5077, %v6035
    %v6037 = vsub.f32 1.0, %v6036
    %v6038 = vmul.f32 %v6035, %v6037
    %v6039 = vadd.f32 %v6035, %v6038
    %vm6040 = vweird.f32 %v5077
    %vm6041 = vweird.f32 %v6035
    %vm6042 = vmor %vm6040, %vm6041
    %v6043 = vsel %vm6042, %v6035, %v6039
    %v6044 = vand.u32 2147483647, %v5077
    %vm6045 = vcmp.eq.f32.partialorder %v6044, 8.507059e+37
    %v6046 = vand.u32 %v5077, 2147483648
    %v6047 = vor.u32 1.1754944e-38, %v6046
    %v6048 = vsel %vm6045, %v6047, %v6043
    %v6049 = vmul.f32 %v4772, %v6048
    %v6050 = vrcp.pop %v5080
    %v6051 = vmul.f32 %v5080, %v6050
    %v6052 = vsub.f32 1.0, %v6051
    %v6053 = vmul.f32 %v6050, %v6052
    %v6054 = vadd.f32 %v6050, %v6053
    %vm6055 = vweird.f32 %v5080
    %vm6056 = vweird.f32 %v6050
    %vm6057 = vmor %vm6055, %vm6056
    %v6058 = vsel %vm6057, %v6050, %v6054
    %v6059 = vand.u32 2147483647, %v5080
    %vm6060 = vcmp.eq.f32.partialorder %v6059, 8.507059e+37
    %v6061 = vand.u32 %v5080, 2147483648
    %v6062 = vor.u32 1.1754944e-38, %v6061
    %v6063 = vsel %vm6060, %v6062, %v6058
    %v6064 = vmul.f32 %v4774, %v6063
    %v6065 = vrcp.pop %v5083
    %v6066 = vmul.f32 %v5083, %v6065
    %v6067 = vsub.f32 1.0, %v6066
    %v6068 = vmul.f32 %v6065, %v6067
    %v6069 = vadd.f32 %v6065, %v6068
    %vm6070 = vweird.f32 %v5083
    %vm6071 = vweird.f32 %v6065
    %vm6072 = vmor %vm6070, %vm6071
    %v6073 = vsel %vm6072, %v6065, %v6069
    %v6074 = vand.u32 2147483647, %v5083
    %vm6075 = vcmp.eq.f32.partialorder %v6074, 8.507059e+37
    %v6076 = vand.u32 %v5083, 2147483648
    %v6077 = vor.u32 1.1754944e-38, %v6076
    %v6078 = vsel %vm6075, %v6077, %v6073
    %v6079 = vmul.f32 %v4776, %v6078
    %v6080 = vrcp.pop %v5086
    %v6081 = vmul.f32 %v5086, %v6080
    %v6082 = vsub.f32 1.0, %v6081
    %v6083 = vmul.f32 %v6080, %v6082
    %v6084 = vadd.f32 %v6080, %v6083
    %vm6085 = vweird.f32 %v5086
    %vm6086 = vweird.f32 %v6080
    %vm6087 = vmor %vm6085, %vm6086
    %v6088 = vsel %vm6087, %v6080, %v6084
    %v6089 = vand.u32 2147483647, %v5086
    %vm6090 = vcmp.eq.f32.partialorder %v6089, 8.507059e+37
    %v6091 = vand.u32 %v5086, 2147483648
    %v6092 = vor.u32 1.1754944e-38, %v6091
    %v6093 = vsel %vm6090, %v6092, %v6088
    %v6094 = vmul.f32 %v4778, %v6093
    %v6095 = vrcp.pop %v5089
    %v6096 = vmul.f32 %v5089, %v6095
    %v6097 = vsub.f32 1.0, %v6096
    %v6098 = vmul.f32 %v6095, %v6097
    %v6099 = vadd.f32 %v6095, %v6098
    %vm6100 = vweird.f32 %v5089
    %vm6101 = vweird.f32 %v6095
    %vm6102 = vmor %vm6100, %vm6101
    %v6103 = vsel %vm6102, %v6095, %v6099
    %v6104 = vand.u32 2147483647, %v5089
    %vm6105 = vcmp.eq.f32.partialorder %v6104, 8.507059e+37
    %v6106 = vand.u32 %v5089, 2147483648
    %v6107 = vor.u32 1.1754944e-38, %v6106
    %v6108 = vsel %vm6105, %v6107, %v6103
    %v6109 = vmul.f32 %v4780, %v6108
    %v6110 = vrcp.pop %v5092
    %v6111 = vmul.f32 %v5092, %v6110
    %v6112 = vsub.f32 1.0, %v6111
    %v6113 = vmul.f32 %v6110, %v6112
    %v6114 = vadd.f32 %v6110, %v6113
    %vm6115 = vweird.f32 %v5092
    %vm6116 = vweird.f32 %v6110
    %vm6117 = vmor %vm6115, %vm6116
    %v6118 = vsel %vm6117, %v6110, %v6114
    %v6119 = vand.u32 2147483647, %v5092
    %vm6120 = vcmp.eq.f32.partialorder %v6119, 8.507059e+37
    %v6121 = vand.u32 %v5092, 2147483648
    %v6122 = vor.u32 1.1754944e-38, %v6121
    %v6123 = vsel %vm6120, %v6122, %v6118
    %v6124 = vmul.f32 %v4782, %v6123
    %v6125 = vrcp.pop %v5095
    %v6126 = vmul.f32 %v5095, %v6125
    %v6127 = vsub.f32 1.0, %v6126
    %v6128 = vmul.f32 %v6125, %v6127
    %v6129 = vadd.f32 %v6125, %v6128
    %vm6130 = vweird.f32 %v5095
    %vm6131 = vweird.f32 %v6125
    %vm6132 = vmor %vm6130, %vm6131
    %v6133 = vsel %vm6132, %v6125, %v6129
    %v6134 = vand.u32 2147483647, %v5095
    %vm6135 = vcmp.eq.f32.partialorder %v6134, 8.507059e+37
    %v6136 = vand.u32 %v5095, 2147483648
    %v6137 = vor.u32 1.1754944e-38, %v6136
    %v6138 = vsel %vm6135, %v6137, %v6133
    %v6139 = vmul.f32 %v4784, %v6138
    %v6140 = vrcp.pop %v5098
    %v6141 = vmul.f32 %v5098, %v6140
    %v6142 = vsub.f32 1.0, %v6141
    %v6143 = vmul.f32 %v6140, %v6142
    %v6144 = vadd.f32 %v6140, %v6143
    %vm6145 = vweird.f32 %v5098
    %vm6146 = vweird.f32 %v6140
    %vm6147 = vmor %vm6145, %vm6146
    %v6148 = vsel %vm6147, %v6140, %v6144
    %v6149 = vand.u32 2147483647, %v5098
    %vm6150 = vcmp.eq.f32.partialorder %v6149, 8.507059e+37
    %v6151 = vand.u32 %v5098, 2147483648
    %v6152 = vor.u32 1.1754944e-38, %v6151
    %v6153 = vsel %vm6150, %v6152, %v6148
    %v6154 = vmul.f32 %v4786, %v6153
    %v6155 = vrcp.pop %v5101
    %v6156 = vmul.f32 %v5101, %v6155
    %v6157 = vsub.f32 1.0, %v6156
    %v6158 = vmul.f32 %v6155, %v6157
    %v6159 = vadd.f32 %v6155, %v6158
    %vm6160 = vweird.f32 %v5101
    %vm6161 = vweird.f32 %v6155
    %vm6162 = vmor %vm6160, %vm6161
    %v6163 = vsel %vm6162, %v6155, %v6159
    %v6164 = vand.u32 2147483647, %v5101
    %vm6165 = vcmp.eq.f32.partialorder %v6164, 8.507059e+37
    %v6166 = vand.u32 %v5101, 2147483648
    %v6167 = vor.u32 1.1754944e-38, %v6166
    %v6168 = vsel %vm6165, %v6167, %v6163
    %v6169 = vmul.f32 %v4788, %v6168
    %v6170 = vrcp.pop %v5104
    %v6171 = vmul.f32 %v5104, %v6170
    %v6172 = vsub.f32 1.0, %v6171
    %v6173 = vmul.f32 %v6170, %v6172
    %v6174 = vadd.f32 %v6170, %v6173
    %vm6175 = vweird.f32 %v5104
    %vm6176 = vweird.f32 %v6170
    %vm6177 = vmor %vm6175, %vm6176
    %v6178 = vsel %vm6177, %v6170, %v6174
    %v6179 = vand.u32 2147483647, %v5104
    %vm6180 = vcmp.eq.f32.partialorder %v6179, 8.507059e+37
    %v6181 = vand.u32 %v5104, 2147483648
    %v6182 = vor.u32 1.1754944e-38, %v6181
    %v6183 = vsel %vm6180, %v6182, %v6178
    %v6184 = vmul.f32 %v4790, %v6183
    %v6185 = vrcp.pop %v5107
    %v6186 = vmul.f32 %v5107, %v6185
    %v6187 = vsub.f32 1.0, %v6186
    %v6188 = vmul.f32 %v6185, %v6187
    %v6189 = vadd.f32 %v6185, %v6188
    %vm6190 = vweird.f32 %v5107
    %vm6191 = vweird.f32 %v6185
    %vm6192 = vmor %vm6190, %vm6191
    %v6193 = vsel %vm6192, %v6185, %v6189
    %v6194 = vand.u32 2147483647, %v5107
    %vm6195 = vcmp.eq.f32.partialorder %v6194, 8.507059e+37
    %v6196 = vand.u32 %v5107, 2147483648
    %v6197 = vor.u32 1.1754944e-38, %v6196
    %v6198 = vsel %vm6195, %v6197, %v6193
    %v6199 = vmul.f32 %v4792, %v6198
    %v6200 = vrcp.pop %v5110
    %v6201 = vmul.f32 %v5110, %v6200
    %v6202 = vsub.f32 1.0, %v6201
    %v6203 = vmul.f32 %v6200, %v6202
    %v6204 = vadd.f32 %v6200, %v6203
    %vm6205 = vweird.f32 %v5110
    %vm6206 = vweird.f32 %v6200
    %vm6207 = vmor %vm6205, %vm6206
    %v6208 = vsel %vm6207, %v6200, %v6204
    %v6209 = vand.u32 2147483647, %v5110
    %vm6210 = vcmp.eq.f32.partialorder %v6209, 8.507059e+37
    %v6211 = vand.u32 %v5110, 2147483648
    %v6212 = vor.u32 1.1754944e-38, %v6211
    %v6213 = vsel %vm6210, %v6212, %v6208
    %v6214 = vmul.f32 %v4794, %v6213
    %v6215 = vrcp.pop %v5113
    %v6216 = vmul.f32 %v5113, %v6215
    %v6217 = vsub.f32 1.0, %v6216
    %v6218 = vmul.f32 %v6215, %v6217
    %v6219 = vadd.f32 %v6215, %v6218
    %vm6220 = vweird.f32 %v5113
    %vm6221 = vweird.f32 %v6215
    %vm6222 = vmor %vm6220, %vm6221
    %v6223 = vsel %vm6222, %v6215, %v6219
    %v6224 = vand.u32 2147483647, %v5113
    %vm6225 = vcmp.eq.f32.partialorder %v6224, 8.507059e+37
    %v6226 = vand.u32 %v5113, 2147483648
    %v6227 = vor.u32 1.1754944e-38, %v6226
    %v6228 = vsel %vm6225, %v6227, %v6223
    %v6229 = vmul.f32 %v4796, %v6228
    %v6230 = vrcp.pop %v5116
    %v6231 = vmul.f32 %v5116, %v6230
    %v6232 = vsub.f32 1.0, %v6231
    %v6233 = vmul.f32 %v6230, %v6232
    %v6234 = vadd.f32 %v6230, %v6233
    %vm6235 = vweird.f32 %v5116
    %vm6236 = vweird.f32 %v6230
    %vm6237 = vmor %vm6235, %vm6236
    %v6238 = vsel %vm6237, %v6230, %v6234
    %v6239 = vand.u32 2147483647, %v5116
    %vm6240 = vcmp.eq.f32.partialorder %v6239, 8.507059e+37
    %v6241 = vand.u32 %v5116, 2147483648
    %v6242 = vor.u32 1.1754944e-38, %v6241
    %v6243 = vsel %vm6240, %v6242, %v6238
    %v6244 = vmul.f32 %v4798, %v6243
    %v6245 = vrcp.pop %v5119
    %v6246 = vmul.f32 %v5119, %v6245
    %v6247 = vsub.f32 1.0, %v6246
    %v6248 = vmul.f32 %v6245, %v6247
    %v6249 = vadd.f32 %v6245, %v6248
    %vm6250 = vweird.f32 %v5119
    %vm6251 = vweird.f32 %v6245
    %vm6252 = vmor %vm6250, %vm6251
    %v6253 = vsel %vm6252, %v6245, %v6249
    %v6254 = vand.u32 2147483647, %v5119
    %vm6255 = vcmp.eq.f32.partialorder %v6254, 8.507059e+37
    %v6256 = vand.u32 %v5119, 2147483648
    %v6257 = vor.u32 1.1754944e-38, %v6256
    %v6258 = vsel %vm6255, %v6257, %v6253
    %v6259 = vmul.f32 %v4800, %v6258
    %v6260 = vrcp.pop %v5122
    %v6261 = vmul.f32 %v5122, %v6260
    %v6262 = vsub.f32 1.0, %v6261
    %v6263 = vmul.f32 %v6260, %v6262
    %v6264 = vadd.f32 %v6260, %v6263
    %vm6265 = vweird.f32 %v5122
    %vm6266 = vweird.f32 %v6260
    %vm6267 = vmor %vm6265, %vm6266
    %v6268 = vsel %vm6267, %v6260, %v6264
    %v6269 = vand.u32 2147483647, %v5122
    %vm6270 = vcmp.eq.f32.partialorder %v6269, 8.507059e+37
    %v6271 = vand.u32 %v5122, 2147483648
    %v6272 = vor.u32 1.1754944e-38, %v6271
    %v6273 = vsel %vm6270, %v6272, %v6268
    %v6274 = vmul.f32 %v4802, %v6273
    %v6275 = vrcp.pop %v5125
    %v6276 = vmul.f32 %v5125, %v6275
    %v6277 = vsub.f32 1.0, %v6276
    %v6278 = vmul.f32 %v6275, %v6277
    %v6279 = vadd.f32 %v6275, %v6278
    %vm6280 = vweird.f32 %v5125
    %vm6281 = vweird.f32 %v6275
    %vm6282 = vmor %vm6280, %vm6281
    %v6283 = vsel %vm6282, %v6275, %v6279
    %v6284 = vand.u32 2147483647, %v5125
    %vm6285 = vcmp.eq.f32.partialorder %v6284, 8.507059e+37
    %v6286 = vand.u32 %v5125, 2147483648
    %v6287 = vor.u32 1.1754944e-38, %v6286
    %v6288 = vsel %vm6285, %v6287, %v6283
    %v6289 = vmul.f32 %v4804, %v6288
    %v6290 = vrcp.pop %v5128
    %v6291 = vmul.f32 %v5128, %v6290
    %v6292 = vsub.f32 1.0, %v6291
    %v6293 = vmul.f32 %v6290, %v6292
    %v6294 = vadd.f32 %v6290, %v6293
    %vm6295 = vweird.f32 %v5128
    %vm6296 = vweird.f32 %v6290
    %vm6297 = vmor %vm6295, %vm6296
    %v6298 = vsel %vm6297, %v6290, %v6294
    %v6299 = vand.u32 2147483647, %v5128
    %vm6300 = vcmp.eq.f32.partialorder %v6299, 8.507059e+37
    %v6301 = vand.u32 %v5128, 2147483648
    %v6302 = vor.u32 1.1754944e-38, %v6301
    %v6303 = vsel %vm6300, %v6302, %v6298
    %v6304 = vmul.f32 %v4806, %v6303
    %v6305 = vrcp.pop %v5131
    %v6306 = vmul.f32 %v5131, %v6305
    %v6307 = vsub.f32 1.0, %v6306
    %v6308 = vmul.f32 %v6305, %v6307
    %v6309 = vadd.f32 %v6305, %v6308
    %vm6310 = vweird.f32 %v5131
    %vm6311 = vweird.f32 %v6305
    %vm6312 = vmor %vm6310, %vm6311
    %v6313 = vsel %vm6312, %v6305, %v6309
    %v6314 = vand.u32 2147483647, %v5131
    %vm6315 = vcmp.eq.f32.partialorder %v6314, 8.507059e+37
    %v6316 = vand.u32 %v5131, 2147483648
    %v6317 = vor.u32 1.1754944e-38, %v6316
    %v6318 = vsel %vm6315, %v6317, %v6313
    %v6319 = vmul.f32 %v4808, %v6318
    %v6320 = vrcp.pop %v5134
    %v6321 = vmul.f32 %v5134, %v6320
    %v6322 = vsub.f32 1.0, %v6321
    %v6323 = vmul.f32 %v6320, %v6322
    %v6324 = vadd.f32 %v6320, %v6323
    %vm6325 = vweird.f32 %v5134
    %vm6326 = vweird.f32 %v6320
    %vm6327 = vmor %vm6325, %vm6326
    %v6328 = vsel %vm6327, %v6320, %v6324
    %v6329 = vand.u32 2147483647, %v5134
    %vm6330 = vcmp.eq.f32.partialorder %v6329, 8.507059e+37
    %v6331 = vand.u32 %v5134, 2147483648
    %v6332 = vor.u32 1.1754944e-38, %v6331
    %v6333 = vsel %vm6330, %v6332, %v6328
    %v6334 = vmul.f32 %v4810, %v6333
    %v6335 = vrcp.pop %v5137
    %v6336 = vmul.f32 %v5137, %v6335
    %v6337 = vsub.f32 1.0, %v6336
    %v6338 = vmul.f32 %v6335, %v6337
    %v6339 = vadd.f32 %v6335, %v6338
    %vm6340 = vweird.f32 %v5137
    %vm6341 = vweird.f32 %v6335
    %vm6342 = vmor %vm6340, %vm6341
    %v6343 = vsel %vm6342, %v6335, %v6339
    %v6344 = vand.u32 2147483647, %v5137
    %vm6345 = vcmp.eq.f32.partialorder %v6344, 8.507059e+37
    %v6346 = vand.u32 %v5137, 2147483648
    %v6347 = vor.u32 1.1754944e-38, %v6346
    %v6348 = vsel %vm6345, %v6347, %v6343
    %v6349 = vmul.f32 %v4812, %v6348
    %v6350 = vrcp.pop %v5140
    %v6351 = vmul.f32 %v5140, %v6350
    %v6352 = vsub.f32 1.0, %v6351
    %v6353 = vmul.f32 %v6350, %v6352
    %v6354 = vadd.f32 %v6350, %v6353
    %vm6355 = vweird.f32 %v5140
    %vm6356 = vweird.f32 %v6350
    %vm6357 = vmor %vm6355, %vm6356
    %v6358 = vsel %vm6357, %v6350, %v6354
    %v6359 = vand.u32 2147483647, %v5140
    %vm6360 = vcmp.eq.f32.partialorder %v6359, 8.507059e+37
    %v6361 = vand.u32 %v5140, 2147483648
    %v6362 = vor.u32 1.1754944e-38, %v6361
    %v6363 = vsel %vm6360, %v6362, %v6358
    %v6364 = vmul.f32 %v4814, %v6363
    %v6365 = vrcp.pop %v5143
    %v6366 = vmul.f32 %v5143, %v6365
    %v6367 = vsub.f32 1.0, %v6366
    %v6368 = vmul.f32 %v6365, %v6367
    %v6369 = vadd.f32 %v6365, %v6368
    %vm6370 = vweird.f32 %v5143
    %vm6371 = vweird.f32 %v6365
    %vm6372 = vmor %vm6370, %vm6371
    %v6373 = vsel %vm6372, %v6365, %v6369
    %v6374 = vand.u32 2147483647, %v5143
    %vm6375 = vcmp.eq.f32.partialorder %v6374, 8.507059e+37
    %v6376 = vand.u32 %v5143, 2147483648
    %v6377 = vor.u32 1.1754944e-38, %v6376
    %v6378 = vsel %vm6375, %v6377, %v6373
    %v6379 = vmul.f32 %v4816, %v6378
    %v6380 = vrcp.pop %v5146
    %v6381 = vmul.f32 %v5146, %v6380
    %v6382 = vsub.f32 1.0, %v6381
    %v6383 = vmul.f32 %v6380, %v6382
    %v6384 = vadd.f32 %v6380, %v6383
    %vm6385 = vweird.f32 %v5146
    %vm6386 = vweird.f32 %v6380
    %vm6387 = vmor %vm6385, %vm6386
    %v6388 = vsel %vm6387, %v6380, %v6384
    %v6389 = vand.u32 2147483647, %v5146
    %vm6390 = vcmp.eq.f32.partialorder %v6389, 8.507059e+37
    %v6391 = vand.u32 %v5146, 2147483648
    %v6392 = vor.u32 1.1754944e-38, %v6391
    %v6393 = vsel %vm6390, %v6392, %v6388
    %v6394 = vmul.f32 %v4818, %v6393
    %v6395 = vrcp.pop %v5149
    %v6396 = vmul.f32 %v5149, %v6395
    %v6397 = vsub.f32 1.0, %v6396
    %v6398 = vmul.f32 %v6395, %v6397
    %v6399 = vadd.f32 %v6395, %v6398
    %vm6400 = vweird.f32 %v5149
    %vm6401 = vweird.f32 %v6395
    %vm6402 = vmor %vm6400, %vm6401
    %v6403 = vsel %vm6402, %v6395, %v6399
    %v6404 = vand.u32 2147483647, %v5149
    %vm6405 = vcmp.eq.f32.partialorder %v6404, 8.507059e+37
    %v6406 = vand.u32 %v5149, 2147483648
    %v6407 = vor.u32 1.1754944e-38, %v6406
    %v6408 = vsel %vm6405, %v6407, %v6403
    %v6409 = vmul.f32 %v4820, %v6408
    %v6410 = vrcp.pop %v5152
    %v6411 = vmul.f32 %v5152, %v6410
    %v6412 = vsub.f32 1.0, %v6411
    %v6413 = vmul.f32 %v6410, %v6412
    %v6414 = vadd.f32 %v6410, %v6413
    %vm6415 = vweird.f32 %v5152
    %vm6416 = vweird.f32 %v6410
    %vm6417 = vmor %vm6415, %vm6416
    %v6418 = vsel %vm6417, %v6410, %v6414
    %v6419 = vand.u32 2147483647, %v5152
    %vm6420 = vcmp.eq.f32.partialorder %v6419, 8.507059e+37
    %v6421 = vand.u32 %v5152, 2147483648
    %v6422 = vor.u32 1.1754944e-38, %v6421
    %v6423 = vsel %vm6420, %v6422, %v6418
    %v6424 = vmul.f32 %v4822, %v6423
    %v6425 = vrcp.pop %v5155
    %v6426 = vmul.f32 %v5155, %v6425
    %v6427 = vsub.f32 1.0, %v6426
    %v6428 = vmul.f32 %v6425, %v6427
    %v6429 = vadd.f32 %v6425, %v6428
    %vm6430 = vweird.f32 %v5155
    %vm6431 = vweird.f32 %v6425
    %vm6432 = vmor %vm6430, %vm6431
    %v6433 = vsel %vm6432, %v6425, %v6429
    %v6434 = vand.u32 2147483647, %v5155
    %vm6435 = vcmp.eq.f32.partialorder %v6434, 8.507059e+37
    %v6436 = vand.u32 %v5155, 2147483648
    %v6437 = vor.u32 1.1754944e-38, %v6436
    %v6438 = vsel %vm6435, %v6437, %v6433
    %v6439 = vmul.f32 %v4824, %v6438
    %v6440 = vrcp.pop %v5158
    %v6441 = vmul.f32 %v5158, %v6440
    %v6442 = vsub.f32 1.0, %v6441
    %v6443 = vmul.f32 %v6440, %v6442
    %v6444 = vadd.f32 %v6440, %v6443
    %vm6445 = vweird.f32 %v5158
    %vm6446 = vweird.f32 %v6440
    %vm6447 = vmor %vm6445, %vm6446
    %v6448 = vsel %vm6447, %v6440, %v6444
    %v6449 = vand.u32 2147483647, %v5158
    %vm6450 = vcmp.eq.f32.partialorder %v6449, 8.507059e+37
    %v6451 = vand.u32 %v5158, 2147483648
    %v6452 = vor.u32 1.1754944e-38, %v6451
    %v6453 = vsel %vm6450, %v6452, %v6448
    %v6454 = vmul.f32 %v4826, %v6453
    %v6455 = vrcp.pop %v5161
    %v6456 = vmul.f32 %v5161, %v6455
    %v6457 = vsub.f32 1.0, %v6456
    %v6458 = vmul.f32 %v6455, %v6457
    %v6459 = vadd.f32 %v6455, %v6458
    %vm6460 = vweird.f32 %v5161
    %vm6461 = vweird.f32 %v6455
    %vm6462 = vmor %vm6460, %vm6461
    %v6463 = vsel %vm6462, %v6455, %v6459
    %v6464 = vand.u32 2147483647, %v5161
    %vm6465 = vcmp.eq.f32.partialorder %v6464, 8.507059e+37
    %v6466 = vand.u32 %v5161, 2147483648
    %v6467 = vor.u32 1.1754944e-38, %v6466
    %v6468 = vsel %vm6465, %v6467, %v6463
    %v6469 = vmul.f32 %v4828, %v6468
    %v6470 = vrcp.pop %v5164
    %v6471 = vmul.f32 %v5164, %v6470
    %v6472 = vsub.f32 1.0, %v6471
    %v6473 = vmul.f32 %v6470, %v6472
    %v6474 = vadd.f32 %v6470, %v6473
    %vm6475 = vweird.f32 %v5164
    %vm6476 = vweird.f32 %v6470
    %vm6477 = vmor %vm6475, %vm6476
    %v6478 = vsel %vm6477, %v6470, %v6474
    %v6479 = vand.u32 2147483647, %v5164
    %vm6480 = vcmp.eq.f32.partialorder %v6479, 8.507059e+37
    %v6481 = vand.u32 %v5164, 2147483648
    %v6482 = vor.u32 1.1754944e-38, %v6481
    %v6483 = vsel %vm6480, %v6482, %v6478
    %v6484 = vmul.f32 %v4830, %v6483
    %v6485 = vrcp.pop %v5167
    %v6486 = vmul.f32 %v5167, %v6485
    %v6487 = vsub.f32 1.0, %v6486
    %v6488 = vmul.f32 %v6485, %v6487
    %v6489 = vadd.f32 %v6485, %v6488
    %vm6490 = vweird.f32 %v5167
    %vm6491 = vweird.f32 %v6485
    %vm6492 = vmor %vm6490, %vm6491
    %v6493 = vsel %vm6492, %v6485, %v6489
    %v6494 = vand.u32 2147483647, %v5167
    %vm6495 = vcmp.eq.f32.partialorder %v6494, 8.507059e+37
    %v6496 = vand.u32 %v5167, 2147483648
    %v6497 = vor.u32 1.1754944e-38, %v6496
    %v6498 = vsel %vm6495, %v6497, %v6493
    %v6499 = vmul.f32 %v4832, %v6498
    %v6500 = vrcp.pop %v5170
    %v6501 = vmul.f32 %v5170, %v6500
    %v6502 = vsub.f32 1.0, %v6501
    %v6503 = vmul.f32 %v6500, %v6502
    %v6504 = vadd.f32 %v6500, %v6503
    %vm6505 = vweird.f32 %v5170
    %vm6506 = vweird.f32 %v6500
    %vm6507 = vmor %vm6505, %vm6506
    %v6508 = vsel %vm6507, %v6500, %v6504
    %v6509 = vand.u32 2147483647, %v5170
    %vm6510 = vcmp.eq.f32.partialorder %v6509, 8.507059e+37
    %v6511 = vand.u32 %v5170, 2147483648
    %v6512 = vor.u32 1.1754944e-38, %v6511
    %v6513 = vsel %vm6510, %v6512, %v6508
    %v6514 = vmul.f32 %v4834, %v6513
    %v6515 = vrcp.pop %v5173
    %v6516 = vmul.f32 %v5173, %v6515
    %v6517 = vsub.f32 1.0, %v6516
    %v6518 = vmul.f32 %v6515, %v6517
    %v6519 = vadd.f32 %v6515, %v6518
    %vm6520 = vweird.f32 %v5173
    %vm6521 = vweird.f32 %v6515
    %vm6522 = vmor %vm6520, %vm6521
    %v6523 = vsel %vm6522, %v6515, %v6519
    %v6524 = vand.u32 2147483647, %v5173
    %vm6525 = vcmp.eq.f32.partialorder %v6524, 8.507059e+37
    %v6526 = vand.u32 %v5173, 2147483648
    %v6527 = vor.u32 1.1754944e-38, %v6526
    %v6528 = vsel %vm6525, %v6527, %v6523
    %v6529 = vmul.f32 %v4836, %v6528
    %v6530 = vrcp.pop %v5176
    %v6531 = vmul.f32 %v5176, %v6530
    %v6532 = vsub.f32 1.0, %v6531
    %v6533 = vmul.f32 %v6530, %v6532
    %v6534 = vadd.f32 %v6530, %v6533
    %vm6535 = vweird.f32 %v5176
    %vm6536 = vweird.f32 %v6530
    %vm6537 = vmor %vm6535, %vm6536
    %v6538 = vsel %vm6537, %v6530, %v6534
    %v6539 = vand.u32 2147483647, %v5176
    %vm6540 = vcmp.eq.f32.partialorder %v6539, 8.507059e+37
    %v6541 = vand.u32 %v5176, 2147483648
    %v6542 = vor.u32 1.1754944e-38, %v6541
    %v6543 = vsel %vm6540, %v6542, %v6538
    %v6544 = vmul.f32 %v4838, %v6543
    %v6545 = vrcp.pop %v5179
    %v6546 = vmul.f32 %v5179, %v6545
    %v6547 = vsub.f32 1.0, %v6546
    %v6548 = vmul.f32 %v6545, %v6547
    %v6549 = vadd.f32 %v6545, %v6548
    %vm6550 = vweird.f32 %v5179
    %vm6551 = vweird.f32 %v6545
    %vm6552 = vmor %vm6550, %vm6551
    %v6553 = vsel %vm6552, %v6545, %v6549
    %v6554 = vand.u32 2147483647, %v5179
    %vm6555 = vcmp.eq.f32.partialorder %v6554, 8.507059e+37
    %v6556 = vand.u32 %v5179, 2147483648
    %v6557 = vor.u32 1.1754944e-38, %v6556
    %v6558 = vsel %vm6555, %v6557, %v6553
    %v6559 = vmul.f32 %v4840, %v6558
    %v6560 = vrcp.pop %v5182
    %v6561 = vmul.f32 %v5182, %v6560
    %v6562 = vsub.f32 1.0, %v6561
    %v6563 = vmul.f32 %v6560, %v6562
    %v6564 = vadd.f32 %v6560, %v6563
    %vm6565 = vweird.f32 %v5182
    %vm6566 = vweird.f32 %v6560
    %vm6567 = vmor %vm6565, %vm6566
    %v6568 = vsel %vm6567, %v6560, %v6564
    %v6569 = vand.u32 2147483647, %v5182
    %vm6570 = vcmp.eq.f32.partialorder %v6569, 8.507059e+37
    %v6571 = vand.u32 %v5182, 2147483648
    %v6572 = vor.u32 1.1754944e-38, %v6571
    %v6573 = vsel %vm6570, %v6572, %v6568
    %v6574 = vmul.f32 %v4842, %v6573
    %v6575 = vrcp.pop %v5185
    %v6576 = vmul.f32 %v5185, %v6575
    %v6577 = vsub.f32 1.0, %v6576
    %v6578 = vmul.f32 %v6575, %v6577
    %v6579 = vadd.f32 %v6575, %v6578
    %vm6580 = vweird.f32 %v5185
    %vm6581 = vweird.f32 %v6575
    %vm6582 = vmor %vm6580, %vm6581
    %v6583 = vsel %vm6582, %v6575, %v6579
    %v6584 = vand.u32 2147483647, %v5185
    %vm6585 = vcmp.eq.f32.partialorder %v6584, 8.507059e+37
    %v6586 = vand.u32 %v5185, 2147483648
    %v6587 = vor.u32 1.1754944e-38, %v6586
    %v6588 = vsel %vm6585, %v6587, %v6583
    %v6589 = vmul.f32 %v4844, %v6588
    %v6590 = vrcp.pop %v5188
    %v6591 = vmul.f32 %v5188, %v6590
    %v6592 = vsub.f32 1.0, %v6591
    %v6593 = vmul.f32 %v6590, %v6592
    %v6594 = vadd.f32 %v6590, %v6593
    %vm6595 = vweird.f32 %v5188
    %vm6596 = vweird.f32 %v6590
    %vm6597 = vmor %vm6595, %vm6596
    %v6598 = vsel %vm6597, %v6590, %v6594
    %v6599 = vand.u32 2147483647, %v5188
    %vm6600 = vcmp.eq.f32.partialorder %v6599, 8.507059e+37
    %v6601 = vand.u32 %v5188, 2147483648
    %v6602 = vor.u32 1.1754944e-38, %v6601
    %v6603 = vsel %vm6600, %v6602, %v6598
    %v6604 = vmul.f32 %v4846, %v6603
    %v6605 = vrcp.pop %v5191
    %v6606 = vmul.f32 %v5191, %v6605
    %v6607 = vsub.f32 1.0, %v6606
    %v6608 = vmul.f32 %v6605, %v6607
    %v6609 = vadd.f32 %v6605, %v6608
    %vm6610 = vweird.f32 %v5191
    %vm6611 = vweird.f32 %v6605
    %vm6612 = vmor %vm6610, %vm6611
    %v6613 = vsel %vm6612, %v6605, %v6609
    %v6614 = vand.u32 2147483647, %v5191
    %vm6615 = vcmp.eq.f32.partialorder %v6614, 8.507059e+37
    %v6616 = vand.u32 %v5191, 2147483648
    %v6617 = vor.u32 1.1754944e-38, %v6616
    %v6618 = vsel %vm6615, %v6617, %v6613
    %v6619 = vmul.f32 %v4848, %v6618
    %v6620 = vrcp.pop %v5194
    %v6621 = vmul.f32 %v5194, %v6620
    %v6622 = vsub.f32 1.0, %v6621
    %v6623 = vmul.f32 %v6620, %v6622
    %v6624 = vadd.f32 %v6620, %v6623
    %vm6625 = vweird.f32 %v5194
    %vm6626 = vweird.f32 %v6620
    %vm6627 = vmor %vm6625, %vm6626
    %v6628 = vsel %vm6627, %v6620, %v6624
    %v6629 = vand.u32 2147483647, %v5194
    %vm6630 = vcmp.eq.f32.partialorder %v6629, 8.507059e+37
    %v6631 = vand.u32 %v5194, 2147483648
    %v6632 = vor.u32 1.1754944e-38, %v6631
    %v6633 = vsel %vm6630, %v6632, %v6628
    %v6634 = vmul.f32 %v4850, %v6633
    %v6635 = vrcp.pop %v5197
    %v6636 = vmul.f32 %v5197, %v6635
    %v6637 = vsub.f32 1.0, %v6636
    %v6638 = vmul.f32 %v6635, %v6637
    %v6639 = vadd.f32 %v6635, %v6638
    %vm6640 = vweird.f32 %v5197
    %vm6641 = vweird.f32 %v6635
    %vm6642 = vmor %vm6640, %vm6641
    %v6643 = vsel %vm6642, %v6635, %v6639
    %v6644 = vand.u32 2147483647, %v5197
    %vm6645 = vcmp.eq.f32.partialorder %v6644, 8.507059e+37
    %v6646 = vand.u32 %v5197, 2147483648
    %v6647 = vor.u32 1.1754944e-38, %v6646
    %v6648 = vsel %vm6645, %v6647, %v6643
    %v6649 = vmul.f32 %v4852, %v6648
    %v6650 = vrcp.pop %v5200
    %v6651 = vmul.f32 %v5200, %v6650
    %v6652 = vsub.f32 1.0, %v6651
    %v6653 = vmul.f32 %v6650, %v6652
    %v6654 = vadd.f32 %v6650, %v6653
    %vm6655 = vweird.f32 %v5200
    %vm6656 = vweird.f32 %v6650
    %vm6657 = vmor %vm6655, %vm6656
    %v6658 = vsel %vm6657, %v6650, %v6654
    %v6659 = vand.u32 2147483647, %v5200
    %vm6660 = vcmp.eq.f32.partialorder %v6659, 8.507059e+37
    %v6661 = vand.u32 %v5200, 2147483648
    %v6662 = vor.u32 1.1754944e-38, %v6661
    %v6663 = vsel %vm6660, %v6662, %v6658
    %v6664 = vmul.f32 %v4854, %v6663
    %v6665 = vrcp.pop %v5203
    %v6666 = vmul.f32 %v5203, %v6665
    %v6667 = vsub.f32 1.0, %v6666
    %v6668 = vmul.f32 %v6665, %v6667
    %v6669 = vadd.f32 %v6665, %v6668
    %vm6670 = vweird.f32 %v5203
    %vm6671 = vweird.f32 %v6665
    %vm6672 = vmor %vm6670, %vm6671
    %v6673 = vsel %vm6672, %v6665, %v6669
    %v6674 = vand.u32 2147483647, %v5203
    %vm6675 = vcmp.eq.f32.partialorder %v6674, 8.507059e+37
    %v6676 = vand.u32 %v5203, 2147483648
    %v6677 = vor.u32 1.1754944e-38, %v6676
    %v6678 = vsel %vm6675, %v6677, %v6673
    %v6679 = vmul.f32 %v4856, %v6678
    %v6680 = vrcp.pop %v5206
    %v6681 = vmul.f32 %v5206, %v6680
    %v6682 = vsub.f32 1.0, %v6681
    %v6683 = vmul.f32 %v6680, %v6682
    %v6684 = vadd.f32 %v6680, %v6683
    %vm6685 = vweird.f32 %v5206
    %vm6686 = vweird.f32 %v6680
    %vm6687 = vmor %vm6685, %vm6686
    %v6688 = vsel %vm6687, %v6680, %v6684
    %v6689 = vand.u32 2147483647, %v5206
    %vm6690 = vcmp.eq.f32.partialorder %v6689, 8.507059e+37
    %v6691 = vand.u32 %v5206, 2147483648
    %v6692 = vor.u32 1.1754944e-38, %v6691
    %v6693 = vsel %vm6690, %v6692, %v6688
    %v6694 = vmul.f32 %v4858, %v6693
    %v6695 = vrcp.pop %v5209
    %v6696 = vmul.f32 %v5209, %v6695
    %v6697 = vsub.f32 1.0, %v6696
    %v6698 = vmul.f32 %v6695, %v6697
    %v6699 = vadd.f32 %v6695, %v6698
    %vm6700 = vweird.f32 %v5209
    %vm6701 = vweird.f32 %v6695
    %vm6702 = vmor %vm6700, %vm6701
    %v6703 = vsel %vm6702, %v6695, %v6699
    %v6704 = vand.u32 2147483647, %v5209
    %vm6705 = vcmp.eq.f32.partialorder %v6704, 8.507059e+37
    %v6706 = vand.u32 %v5209, 2147483648
    %v6707 = vor.u32 1.1754944e-38, %v6706
    %v6708 = vsel %vm6705, %v6707, %v6703
    %v6709 = vmul.f32 %v4860, %v6708
    %v6710 = vrcp.pop %v5212
    %v6711 = vmul.f32 %v5212, %v6710
    %v6712 = vsub.f32 1.0, %v6711
    %v6713 = vmul.f32 %v6710, %v6712
    %v6714 = vadd.f32 %v6710, %v6713
    %vm6715 = vweird.f32 %v5212
    %vm6716 = vweird.f32 %v6710
    %vm6717 = vmor %vm6715, %vm6716
    %v6718 = vsel %vm6717, %v6710, %v6714
    %v6719 = vand.u32 2147483647, %v5212
    %vm6720 = vcmp.eq.f32.partialorder %v6719, 8.507059e+37
    %v6721 = vand.u32 %v5212, 2147483648
    %v6722 = vor.u32 1.1754944e-38, %v6721
    %v6723 = vsel %vm6720, %v6722, %v6718
    %v6724 = vmul.f32 %v4862, %v6723
    %v6725 = vrcp.pop %v5215
    %v6726 = vmul.f32 %v5215, %v6725
    %v6727 = vsub.f32 1.0, %v6726
    %v6728 = vmul.f32 %v6725, %v6727
    %v6729 = vadd.f32 %v6725, %v6728
    %vm6730 = vweird.f32 %v5215
    %vm6731 = vweird.f32 %v6725
    %vm6732 = vmor %vm6730, %vm6731
    %v6733 = vsel %vm6732, %v6725, %v6729
    %v6734 = vand.u32 2147483647, %v5215
    %vm6735 = vcmp.eq.f32.partialorder %v6734, 8.507059e+37
    %v6736 = vand.u32 %v5215, 2147483648
    %v6737 = vor.u32 1.1754944e-38, %v6736
    %v6738 = vsel %vm6735, %v6737, %v6733
    %v6739 = vmul.f32 %v4864, %v6738
    %v6740 = vrcp.pop %v5218
    %v6741 = vmul.f32 %v5218, %v6740
    %v6742 = vsub.f32 1.0, %v6741
    %v6743 = vmul.f32 %v6740, %v6742
    %v6744 = vadd.f32 %v6740, %v6743
    %vm6745 = vweird.f32 %v5218
    %vm6746 = vweird.f32 %v6740
    %vm6747 = vmor %vm6745, %vm6746
    %v6748 = vsel %vm6747, %v6740, %v6744
    %v6749 = vand.u32 2147483647, %v5218
    %vm6750 = vcmp.eq.f32.partialorder %v6749, 8.507059e+37
    %v6751 = vand.u32 %v5218, 2147483648
    %v6752 = vor.u32 1.1754944e-38, %v6751
    %v6753 = vsel %vm6750, %v6752, %v6748
    %v6754 = vmul.f32 %v4866, %v6753
    %v6755 = vrcp.pop %v5221
    %v6756 = vmul.f32 %v5221, %v6755
    %v6757 = vsub.f32 1.0, %v6756
    %v6758 = vmul.f32 %v6755, %v6757
    %v6759 = vadd.f32 %v6755, %v6758
    %vm6760 = vweird.f32 %v5221
    %vm6761 = vweird.f32 %v6755
    %vm6762 = vmor %vm6760, %vm6761
    %v6763 = vsel %vm6762, %v6755, %v6759
    %v6764 = vand.u32 2147483647, %v5221
    %vm6765 = vcmp.eq.f32.partialorder %v6764, 8.507059e+37
    %v6766 = vand.u32 %v5221, 2147483648
    %v6767 = vor.u32 1.1754944e-38, %v6766
    %v6768 = vsel %vm6765, %v6767, %v6763
    %v6769 = vmul.f32 %v4868, %v6768
    %v6770 = vrcp.pop %v5224
    %v6771 = vmul.f32 %v5224, %v6770
    %v6772 = vsub.f32 1.0, %v6771
    %v6773 = vmul.f32 %v6770, %v6772
    %v6774 = vadd.f32 %v6770, %v6773
    %vm6775 = vweird.f32 %v5224
    %vm6776 = vweird.f32 %v6770
    %vm6777 = vmor %vm6775, %vm6776
    %v6778 = vsel %vm6777, %v6770, %v6774
    %v6779 = vand.u32 2147483647, %v5224
    %vm6780 = vcmp.eq.f32.partialorder %v6779, 8.507059e+37
    %v6781 = vand.u32 %v5224, 2147483648
    %v6782 = vor.u32 1.1754944e-38, %v6781
    %v6783 = vsel %vm6780, %v6782, %v6778
    %v6784 = vmul.f32 %v4870, %v6783
    %v6785 = vrcp.pop %v5227
    %v6786 = vmul.f32 %v5227, %v6785
    %v6787 = vsub.f32 1.0, %v6786
    %v6788 = vmul.f32 %v6785, %v6787
    %v6789 = vadd.f32 %v6785, %v6788
    %vm6790 = vweird.f32 %v5227
    %vm6791 = vweird.f32 %v6785
    %vm6792 = vmor %vm6790, %vm6791
    %v6793 = vsel %vm6792, %v6785, %v6789
    %v6794 = vand.u32 2147483647, %v5227
    %vm6795 = vcmp.eq.f32.partialorder %v6794, 8.507059e+37
    %v6796 = vand.u32 %v5227, 2147483648
    %v6797 = vor.u32 1.1754944e-38, %v6796
    %v6798 = vsel %vm6795, %v6797, %v6793
    %v6799 = vmul.f32 %v4872, %v6798
    %v6800 = vrcp.pop %v5230
    %v6801 = vmul.f32 %v5230, %v6800
    %v6802 = vsub.f32 1.0, %v6801
    %v6803 = vmul.f32 %v6800, %v6802
    %v6804 = vadd.f32 %v6800, %v6803
    %vm6805 = vweird.f32 %v5230
    %vm6806 = vweird.f32 %v6800
    %vm6807 = vmor %vm6805, %vm6806
    %v6808 = vsel %vm6807, %v6800, %v6804
    %v6809 = vand.u32 2147483647, %v5230
    %vm6810 = vcmp.eq.f32.partialorder %v6809, 8.507059e+37
    %v6811 = vand.u32 %v5230, 2147483648
    %v6812 = vor.u32 1.1754944e-38, %v6811
    %v6813 = vsel %vm6810, %v6812, %v6808
    %v6814 = vmul.f32 %v4874, %v6813
    %v6815 = vrcp.pop %v5233
    %v6816 = vmul.f32 %v5233, %v6815
    %v6817 = vsub.f32 1.0, %v6816
    %v6818 = vmul.f32 %v6815, %v6817
    %v6819 = vadd.f32 %v6815, %v6818
    %vm6820 = vweird.f32 %v5233
    %vm6821 = vweird.f32 %v6815
    %vm6822 = vmor %vm6820, %vm6821
    %v6823 = vsel %vm6822, %v6815, %v6819
    %v6824 = vand.u32 2147483647, %v5233
    %vm6825 = vcmp.eq.f32.partialorder %v6824, 8.507059e+37
    %v6826 = vand.u32 %v5233, 2147483648
    %v6827 = vor.u32 1.1754944e-38, %v6826
    %v6828 = vsel %vm6825, %v6827, %v6823
    %v6829 = vmul.f32 %v4876, %v6828
    %v6830 = vrcp.pop %v5236
    %v6831 = vmul.f32 %v5236, %v6830
    %v6832 = vsub.f32 1.0, %v6831
    %v6833 = vmul.f32 %v6830, %v6832
    %v6834 = vadd.f32 %v6830, %v6833
    %vm6835 = vweird.f32 %v5236
    %vm6836 = vweird.f32 %v6830
    %vm6837 = vmor %vm6835, %vm6836
    %v6838 = vsel %vm6837, %v6830, %v6834
    %v6839 = vand.u32 2147483647, %v5236
    %vm6840 = vcmp.eq.f32.partialorder %v6839, 8.507059e+37
    %v6841 = vand.u32 %v5236, 2147483648
    %v6842 = vor.u32 1.1754944e-38, %v6841
    %v6843 = vsel %vm6840, %v6842, %v6838
    %v6844 = vmul.f32 %v4878, %v6843
    %v6845 = vrcp.pop %v5239
    %v6846 = vmul.f32 %v5239, %v6845
    %v6847 = vsub.f32 1.0, %v6846
    %v6848 = vmul.f32 %v6845, %v6847
    %v6849 = vadd.f32 %v6845, %v6848
    %vm6850 = vweird.f32 %v5239
    %vm6851 = vweird.f32 %v6845
    %vm6852 = vmor %vm6850, %vm6851
    %v6853 = vsel %vm6852, %v6845, %v6849
    %v6854 = vand.u32 2147483647, %v5239
    %vm6855 = vcmp.eq.f32.partialorder %v6854, 8.507059e+37
    %v6856 = vand.u32 %v5239, 2147483648
    %v6857 = vor.u32 1.1754944e-38, %v6856
    %v6858 = vsel %vm6855, %v6857, %v6853
    %v6859 = vmul.f32 %v4880, %v6858
    %v6860 = vrcp.pop %v5242
    %v6861 = vmul.f32 %v5242, %v6860
    %v6862 = vsub.f32 1.0, %v6861
    %v6863 = vmul.f32 %v6860, %v6862
    %v6864 = vadd.f32 %v6860, %v6863
    %vm6865 = vweird.f32 %v5242
    %vm6866 = vweird.f32 %v6860
    %vm6867 = vmor %vm6865, %vm6866
    %v6868 = vsel %vm6867, %v6860, %v6864
    %v6869 = vand.u32 2147483647, %v5242
    %vm6870 = vcmp.eq.f32.partialorder %v6869, 8.507059e+37
    %v6871 = vand.u32 %v5242, 2147483648
    %v6872 = vor.u32 1.1754944e-38, %v6871
    %v6873 = vsel %vm6870, %v6872, %v6868
    %v6874 = vmul.f32 %v4882, %v6873
    %v6875 = vrcp.pop %v5245
    %v6876 = vmul.f32 %v5245, %v6875
    %v6877 = vsub.f32 1.0, %v6876
    %v6878 = vmul.f32 %v6875, %v6877
    %v6879 = vadd.f32 %v6875, %v6878
    %vm6880 = vweird.f32 %v5245
    %vm6881 = vweird.f32 %v6875
    %vm6882 = vmor %vm6880, %vm6881
    %v6883 = vsel %vm6882, %v6875, %v6879
    %v6884 = vand.u32 2147483647, %v5245
    %vm6885 = vcmp.eq.f32.partialorder %v6884, 8.507059e+37
    %v6886 = vand.u32 %v5245, 2147483648
    %v6887 = vor.u32 1.1754944e-38, %v6886
    %v6888 = vsel %vm6885, %v6887, %v6883
    %v6889 = vmul.f32 %v4884, %v6888
    %v6890 = vrcp.pop %v5248
    %v6891 = vmul.f32 %v5248, %v6890
    %v6892 = vsub.f32 1.0, %v6891
    %v6893 = vmul.f32 %v6890, %v6892
    %v6894 = vadd.f32 %v6890, %v6893
    %vm6895 = vweird.f32 %v5248
    %vm6896 = vweird.f32 %v6890
    %vm6897 = vmor %vm6895, %vm6896
    %v6898 = vsel %vm6897, %v6890, %v6894
    %v6899 = vand.u32 2147483647, %v5248
    %vm6900 = vcmp.eq.f32.partialorder %v6899, 8.507059e+37
    %v6901 = vand.u32 %v5248, 2147483648
    %v6902 = vor.u32 1.1754944e-38, %v6901
    %v6903 = vsel %vm6900, %v6902, %v6898
    %v6904 = vmul.f32 %v4886, %v6903
    %v6905 = vrcp.pop %v5251
    %v6906 = vmul.f32 %v5251, %v6905
    %v6907 = vsub.f32 1.0, %v6906
    %v6908 = vmul.f32 %v6905, %v6907
    %v6909 = vadd.f32 %v6905, %v6908
    %vm6910 = vweird.f32 %v5251
    %vm6911 = vweird.f32 %v6905
    %vm6912 = vmor %vm6910, %vm6911
    %v6913 = vsel %vm6912, %v6905, %v6909
    %v6914 = vand.u32 2147483647, %v5251
    %vm6915 = vcmp.eq.f32.partialorder %v6914, 8.507059e+37
    %v6916 = vand.u32 %v5251, 2147483648
    %v6917 = vor.u32 1.1754944e-38, %v6916
    %v6918 = vsel %vm6915, %v6917, %v6913
    %v6919 = vmul.f32 %v4888, %v6918
    %v6920 = vrcp.pop %v5254
    %v6921 = vmul.f32 %v5254, %v6920
    %v6922 = vsub.f32 1.0, %v6921
    %v6923 = vmul.f32 %v6920, %v6922
    %v6924 = vadd.f32 %v6920, %v6923
    %vm6925 = vweird.f32 %v5254
    %vm6926 = vweird.f32 %v6920
    %vm6927 = vmor %vm6925, %vm6926
    %v6928 = vsel %vm6927, %v6920, %v6924
    %v6929 = vand.u32 2147483647, %v5254
    %vm6930 = vcmp.eq.f32.partialorder %v6929, 8.507059e+37
    %v6931 = vand.u32 %v5254, 2147483648
    %v6932 = vor.u32 1.1754944e-38, %v6931
    %v6933 = vsel %vm6930, %v6932, %v6928
    %v6934 = vmul.f32 %v4890, %v6933
    %v6935 = vrcp.pop %v5257
    %v6936 = vmul.f32 %v5257, %v6935
    %v6937 = vsub.f32 1.0, %v6936
    %v6938 = vmul.f32 %v6935, %v6937
    %v6939 = vadd.f32 %v6935, %v6938
    %vm6940 = vweird.f32 %v5257
    %vm6941 = vweird.f32 %v6935
    %vm6942 = vmor %vm6940, %vm6941
    %v6943 = vsel %vm6942, %v6935, %v6939
    %v6944 = vand.u32 2147483647, %v5257
    %vm6945 = vcmp.eq.f32.partialorder %v6944, 8.507059e+37
    %v6946 = vand.u32 %v5257, 2147483648
    %v6947 = vor.u32 1.1754944e-38, %v6946
    %v6948 = vsel %vm6945, %v6947, %v6943
    %v6949 = vmul.f32 %v4892, %v6948
    %v6950 = vrcp.pop %v5260
    %v6951 = vmul.f32 %v5260, %v6950
    %v6952 = vsub.f32 1.0, %v6951
    %v6953 = vmul.f32 %v6950, %v6952
    %v6954 = vadd.f32 %v6950, %v6953
    %vm6955 = vweird.f32 %v5260
    %vm6956 = vweird.f32 %v6950
    %vm6957 = vmor %vm6955, %vm6956
    %v6958 = vsel %vm6957, %v6950, %v6954
    %v6959 = vand.u32 2147483647, %v5260
    %vm6960 = vcmp.eq.f32.partialorder %v6959, 8.507059e+37
    %v6961 = vand.u32 %v5260, 2147483648
    %v6962 = vor.u32 1.1754944e-38, %v6961
    %v6963 = vsel %vm6960, %v6962, %v6958
    %v6964 = vmul.f32 %v4894, %v6963
    %v6965 = vrcp.pop %v5263
    %v6966 = vmul.f32 %v5263, %v6965
    %v6967 = vsub.f32 1.0, %v6966
    %v6968 = vmul.f32 %v6965, %v6967
    %v6969 = vadd.f32 %v6965, %v6968
    %vm6970 = vweird.f32 %v5263
    %vm6971 = vweird.f32 %v6965
    %vm6972 = vmor %vm6970, %vm6971
    %v6973 = vsel %vm6972, %v6965, %v6969
    %v6974 = vand.u32 2147483647, %v5263
    %vm6975 = vcmp.eq.f32.partialorder %v6974, 8.507059e+37
    %v6976 = vand.u32 %v5263, 2147483648
    %v6977 = vor.u32 1.1754944e-38, %v6976
    %v6978 = vsel %vm6975, %v6977, %v6973
    %v6979 = vmul.f32 %v4896, %v6978
    %v6980 = vrcp.pop %v5266
    %v6981 = vmul.f32 %v5266, %v6980
    %v6982 = vsub.f32 1.0, %v6981
    %v6983 = vmul.f32 %v6980, %v6982
    %v6984 = vadd.f32 %v6980, %v6983
    %vm6985 = vweird.f32 %v5266
    %vm6986 = vweird.f32 %v6980
    %vm6987 = vmor %vm6985, %vm6986
    %v6988 = vsel %vm6987, %v6980, %v6984
    %v6989 = vand.u32 2147483647, %v5266
    %vm6990 = vcmp.eq.f32.partialorder %v6989, 8.507059e+37
    %v6991 = vand.u32 %v5266, 2147483648
    %v6992 = vor.u32 1.1754944e-38, %v6991
    %v6993 = vsel %vm6990, %v6992, %v6988
    %v6994 = vmul.f32 %v4898, %v6993
    %v6995 = vrcp.pop %v5269
    %v6996 = vmul.f32 %v5269, %v6995
    %v6997 = vsub.f32 1.0, %v6996
    %v6998 = vmul.f32 %v6995, %v6997
    %v6999 = vadd.f32 %v6995, %v6998
    %vm7000 = vweird.f32 %v5269
    %vm7001 = vweird.f32 %v6995
    %vm7002 = vmor %vm7000, %vm7001
    %v7003 = vsel %vm7002, %v6995, %v6999
    %v7004 = vand.u32 2147483647, %v5269
    %vm7005 = vcmp.eq.f32.partialorder %v7004, 8.507059e+37
    %v7006 = vand.u32 %v5269, 2147483648
    %v7007 = vor.u32 1.1754944e-38, %v7006
    %v7008 = vsel %vm7005, %v7007, %v7003
    %v7009 = vmul.f32 %v4900, %v7008
    %v7010 = vrcp.pop %v5272
    %v7011 = vmul.f32 %v5272, %v7010
    %v7012 = vsub.f32 1.0, %v7011
    %v7013 = vmul.f32 %v7010, %v7012
    %v7014 = vadd.f32 %v7010, %v7013
    %vm7015 = vweird.f32 %v5272
    %vm7016 = vweird.f32 %v7010
    %vm7017 = vmor %vm7015, %vm7016
    %v7018 = vsel %vm7017, %v7010, %v7014
    %v7019 = vand.u32 2147483647, %v5272
    %vm7020 = vcmp.eq.f32.partialorder %v7019, 8.507059e+37
    %v7021 = vand.u32 %v5272, 2147483648
    %v7022 = vor.u32 1.1754944e-38, %v7021
    %v7023 = vsel %vm7020, %v7022, %v7018
    %v7024 = vmul.f32 %v4902, %v7023
    %v7025 = vrcp.pop %v5275
    %v7026 = vmul.f32 %v5275, %v7025
    %v7027 = vsub.f32 1.0, %v7026
    %v7028 = vmul.f32 %v7025, %v7027
    %v7029 = vadd.f32 %v7025, %v7028
    %vm7030 = vweird.f32 %v5275
    %vm7031 = vweird.f32 %v7025
    %vm7032 = vmor %vm7030, %vm7031
    %v7033 = vsel %vm7032, %v7025, %v7029
    %v7034 = vand.u32 2147483647, %v5275
    %vm7035 = vcmp.eq.f32.partialorder %v7034, 8.507059e+37
    %v7036 = vand.u32 %v5275, 2147483648
    %v7037 = vor.u32 1.1754944e-38, %v7036
    %v7038 = vsel %vm7035, %v7037, %v7033
    %v7039 = vmul.f32 %v4904, %v7038
    %v7040 = vrcp.pop %v5278
    %v7041 = vmul.f32 %v5278, %v7040
    %v7042 = vsub.f32 1.0, %v7041
    %v7043 = vmul.f32 %v7040, %v7042
    %v7044 = vadd.f32 %v7040, %v7043
    %vm7045 = vweird.f32 %v5278
    %vm7046 = vweird.f32 %v7040
    %vm7047 = vmor %vm7045, %vm7046
    %v7048 = vsel %vm7047, %v7040, %v7044
    %v7049 = vand.u32 2147483647, %v5278
    %vm7050 = vcmp.eq.f32.partialorder %v7049, 8.507059e+37
    %v7051 = vand.u32 %v5278, 2147483648
    %v7052 = vor.u32 1.1754944e-38, %v7051
    %v7053 = vsel %vm7050, %v7052, %v7048
    %v7054 = vmul.f32 %v4906, %v7053
    %v7055 = vrcp.pop %v5281
    %v7056 = vmul.f32 %v5281, %v7055
    %v7057 = vsub.f32 1.0, %v7056
    %v7058 = vmul.f32 %v7055, %v7057
    %v7059 = vadd.f32 %v7055, %v7058
    %vm7060 = vweird.f32 %v5281
    %vm7061 = vweird.f32 %v7055
    %vm7062 = vmor %vm7060, %vm7061
    %v7063 = vsel %vm7062, %v7055, %v7059
    %v7064 = vand.u32 2147483647, %v5281
    %vm7065 = vcmp.eq.f32.partialorder %v7064, 8.507059e+37
    %v7066 = vand.u32 %v5281, 2147483648
    %v7067 = vor.u32 1.1754944e-38, %v7066
    %v7068 = vsel %vm7065, %v7067, %v7063
    %v7069 = vmul.f32 %v4908, %v7068
    %v7070 = vrcp.pop %v5284
    %v7071 = vmul.f32 %v5284, %v7070
    %v7072 = vsub.f32 1.0, %v7071
    %v7073 = vmul.f32 %v7070, %v7072
    %v7074 = vadd.f32 %v7070, %v7073
    %vm7075 = vweird.f32 %v5284
    %vm7076 = vweird.f32 %v7070
    %vm7077 = vmor %vm7075, %vm7076
    %v7078 = vsel %vm7077, %v7070, %v7074
    %v7079 = vand.u32 2147483647, %v5284
    %vm7080 = vcmp.eq.f32.partialorder %v7079, 8.507059e+37
    %v7081 = vand.u32 %v5284, 2147483648
    %v7082 = vor.u32 1.1754944e-38, %v7081
    %v7083 = vsel %vm7080, %v7082, %v7078
    %v7084 = vmul.f32 %v4910, %v7083
    %v7085 = vrcp.pop %v5287
    %v7086 = vmul.f32 %v5287, %v7085
    %v7087 = vsub.f32 1.0, %v7086
    %v7088 = vmul.f32 %v7085, %v7087
    %v7089 = vadd.f32 %v7085, %v7088
    %vm7090 = vweird.f32 %v5287
    %vm7091 = vweird.f32 %v7085
    %vm7092 = vmor %vm7090, %vm7091
    %v7093 = vsel %vm7092, %v7085, %v7089
    %v7094 = vand.u32 2147483647, %v5287
    %vm7095 = vcmp.eq.f32.partialorder %v7094, 8.507059e+37
    %v7096 = vand.u32 %v5287, 2147483648
    %v7097 = vor.u32 1.1754944e-38, %v7096
    %v7098 = vsel %vm7095, %v7097, %v7093
    %v7099 = vmul.f32 %v4912, %v7098
    %v7100 = vrcp.pop %v5290
    %v7101 = vmul.f32 %v5290, %v7100
    %v7102 = vsub.f32 1.0, %v7101
    %v7103 = vmul.f32 %v7100, %v7102
    %v7104 = vadd.f32 %v7100, %v7103
    %vm7105 = vweird.f32 %v5290
    %vm7106 = vweird.f32 %v7100
    %vm7107 = vmor %vm7105, %vm7106
    %v7108 = vsel %vm7107, %v7100, %v7104
    %v7109 = vand.u32 2147483647, %v5290
    %vm7110 = vcmp.eq.f32.partialorder %v7109, 8.507059e+37
    %v7111 = vand.u32 %v5290, 2147483648
    %v7112 = vor.u32 1.1754944e-38, %v7111
    %v7113 = vsel %vm7110, %v7112, %v7108
    %v7114 = vmul.f32 %v4914, %v7113
    %v7115 = vrcp.pop %v5293
    %v7116 = vmul.f32 %v5293, %v7115
    %v7117 = vsub.f32 1.0, %v7116
    %v7118 = vmul.f32 %v7115, %v7117
    %v7119 = vadd.f32 %v7115, %v7118
    %vm7120 = vweird.f32 %v5293
    %vm7121 = vweird.f32 %v7115
    %vm7122 = vmor %vm7120, %vm7121
    %v7123 = vsel %vm7122, %v7115, %v7119
    %v7124 = vand.u32 2147483647, %v5293
    %vm7125 = vcmp.eq.f32.partialorder %v7124, 8.507059e+37
    %v7126 = vand.u32 %v5293, 2147483648
    %v7127 = vor.u32 1.1754944e-38, %v7126
    %v7128 = vsel %vm7125, %v7127, %v7123
    %v7129 = vmul.f32 %v4916, %v7128
    %v7130 = vrcp.pop %v5296
    %v7131 = vmul.f32 %v5296, %v7130
    %v7132 = vsub.f32 1.0, %v7131
    %v7133 = vmul.f32 %v7130, %v7132
    %v7134 = vadd.f32 %v7130, %v7133
    %vm7135 = vweird.f32 %v5296
    %vm7136 = vweird.f32 %v7130
    %vm7137 = vmor %vm7135, %vm7136
    %v7138 = vsel %vm7137, %v7130, %v7134
    %v7139 = vand.u32 2147483647, %v5296
    %vm7140 = vcmp.eq.f32.partialorder %v7139, 8.507059e+37
    %v7141 = vand.u32 %v5296, 2147483648
    %v7142 = vor.u32 1.1754944e-38, %v7141
    %v7143 = vsel %vm7140, %v7142, %v7138
    %v7144 = vmul.f32 %v4918, %v7143
    %v7145 = vrcp.pop %v5299
    %v7146 = vmul.f32 %v5299, %v7145
    %v7147 = vsub.f32 1.0, %v7146
    %v7148 = vmul.f32 %v7145, %v7147
    %v7149 = vadd.f32 %v7145, %v7148
    %vm7150 = vweird.f32 %v5299
    %vm7151 = vweird.f32 %v7145
    %vm7152 = vmor %vm7150, %vm7151
    %v7153 = vsel %vm7152, %v7145, %v7149
    %v7154 = vand.u32 2147483647, %v5299
    %vm7155 = vcmp.eq.f32.partialorder %v7154, 8.507059e+37
    %v7156 = vand.u32 %v5299, 2147483648
    %v7157 = vor.u32 1.1754944e-38, %v7156
    %v7158 = vsel %vm7155, %v7157, %v7153
    %v7159 = vmul.f32 %v4920, %v7158
    %v7160 = vrcp.pop %v5302
    %v7161 = vmul.f32 %v5302, %v7160
    %v7162 = vsub.f32 1.0, %v7161
    %v7163 = vmul.f32 %v7160, %v7162
    %v7164 = vadd.f32 %v7160, %v7163
    %vm7165 = vweird.f32 %v5302
    %vm7166 = vweird.f32 %v7160
    %vm7167 = vmor %vm7165, %vm7166
    %v7168 = vsel %vm7167, %v7160, %v7164
    %v7169 = vand.u32 2147483647, %v5302
    %vm7170 = vcmp.eq.f32.partialorder %v7169, 8.507059e+37
    %v7171 = vand.u32 %v5302, 2147483648
    %v7172 = vor.u32 1.1754944e-38, %v7171
    %v7173 = vsel %vm7170, %v7172, %v7168
    %v7174 = vmul.f32 %v4922, %v7173
    %v7175 = vrcp.pop %v5305
    %v7176 = vmul.f32 %v5305, %v7175
    %v7177 = vsub.f32 1.0, %v7176
    %v7178 = vmul.f32 %v7175, %v7177
    %v7179 = vadd.f32 %v7175, %v7178
    %vm7180 = vweird.f32 %v5305
    %vm7181 = vweird.f32 %v7175
    %vm7182 = vmor %vm7180, %vm7181
    %v7183 = vsel %vm7182, %v7175, %v7179
    %v7184 = vand.u32 2147483647, %v5305
    %vm7185 = vcmp.eq.f32.partialorder %v7184, 8.507059e+37
    %v7186 = vand.u32 %v5305, 2147483648
    %v7187 = vor.u32 1.1754944e-38, %v7186
    %v7188 = vsel %vm7185, %v7187, %v7183
    %v7189 = vmul.f32 %v4924, %v7188
    %v7190 = vrcp.pop %v5308
    %v7191 = vmul.f32 %v5308, %v7190
    %v7192 = vsub.f32 1.0, %v7191
    %v7193 = vmul.f32 %v7190, %v7192
    %v7194 = vadd.f32 %v7190, %v7193
    %vm7195 = vweird.f32 %v5308
    %vm7196 = vweird.f32 %v7190
    %vm7197 = vmor %vm7195, %vm7196
    %v7198 = vsel %vm7197, %v7190, %v7194
    %v7199 = vand.u32 2147483647, %v5308
    %vm7200 = vcmp.eq.f32.partialorder %v7199, 8.507059e+37
    %v7201 = vand.u32 %v5308, 2147483648
    %v7202 = vor.u32 1.1754944e-38, %v7201
    %v7203 = vsel %vm7200, %v7202, %v7198
    %v7204 = vmul.f32 %v4926, %v7203
    %v7205 = vrcp.pop %v5311
    %v7206 = vmul.f32 %v5311, %v7205
    %v7207 = vsub.f32 1.0, %v7206
    %v7208 = vmul.f32 %v7205, %v7207
    %v7209 = vadd.f32 %v7205, %v7208
    %vm7210 = vweird.f32 %v5311
    %vm7211 = vweird.f32 %v7205
    %vm7212 = vmor %vm7210, %vm7211
    %v7213 = vsel %vm7212, %v7205, %v7209
    %v7214 = vand.u32 2147483647, %v5311
    %vm7215 = vcmp.eq.f32.partialorder %v7214, 8.507059e+37
    %v7216 = vand.u32 %v5311, 2147483648
    %v7217 = vor.u32 1.1754944e-38, %v7216
    %v7218 = vsel %vm7215, %v7217, %v7213
    %v7219 = vmul.f32 %v4928, %v7218
    %v7220 = vrcp.pop %v5314
    %v7221 = vmul.f32 %v5314, %v7220
    %v7222 = vsub.f32 1.0, %v7221
    %v7223 = vmul.f32 %v7220, %v7222
    %v7224 = vadd.f32 %v7220, %v7223
    %vm7225 = vweird.f32 %v5314
    %vm7226 = vweird.f32 %v7220
    %vm7227 = vmor %vm7225, %vm7226
    %v7228 = vsel %vm7227, %v7220, %v7224
    %v7229 = vand.u32 2147483647, %v5314
    %vm7230 = vcmp.eq.f32.partialorder %v7229, 8.507059e+37
    %v7231 = vand.u32 %v5314, 2147483648
    %v7232 = vor.u32 1.1754944e-38, %v7231
    %v7233 = vsel %vm7230, %v7232, %v7228
    %v7234 = vmul.f32 %v4930, %v7233
    %7235 = vrot.lane.b32.xlu0 %v1666, 64
    %v7236 = vpop.permute.xlu0 %7235
    %v7237 = vsel %vm85, %v7236, 0
    %v7240 = vsel %vm85, %v5329, 0
    %v7243 = vsel %vm85, %v5344, 0
    %v7246 = vsel %vm85, %v5359, 0
    %v7249 = vsel %vm85, %v5374, 0
    %7251 = vmatpush.xpose.msra.mxu0 0.0
    %7252 = vmatpush.xpose.msra.mxu0 0.0
    %7253 = vmatpush.xpose.msra.mxu0 0.0
    %7254 = vmatpush.xpose.msra.mxu0 0.0
    %7255 = vmatpush.xpose.msra.mxu0 0.0
    %7256 = vmatpush.xpose.msra.mxu0 0.0
    %7257 = vmatpush.xpose.msra.mxu0 0.0
    %7258 = vmatpush.xpose.msra.mxu0 0.0
    %7259 = vmatpush.xpose.msra.mxu0 0.0
    %7260 = vmatpush.xpose.msra.mxu0 0.0
    %7261 = vmatpush.xpose.msra.mxu0 0.0
    %7262 = vmatpush.xpose.msra.mxu0 0.0
    %7263 = vmatpush.xpose.msra.mxu0 %v7249
    %7264 = vmatpush.xpose.msra.mxu0 %v7246
    %7265 = vmatpush.xpose.msra.mxu0 %v7243
    %7266 = vmatpush.xpose.msra.mxu0 %v7240
    %7267 = vmatmul.f32.gmra.mxu0 %v7237
    %v7268 = vpop.f32.mrf.mxu0
    %v7269 = vadd.f32 0.0, %v7268
    %7270 = vdwg.mxu0
    %7271 = vrot.lane.b32.xlu0 %v1667, 64
    %v7272 = vpop.permute.xlu0 %7271
    %v7273 = vsel %vm85, %v7272, 0
    %v7276 = vsel %vm85, %v5389, 0
    %v7279 = vsel %vm85, %v5404, 0
    %v7282 = vsel %vm85, %v5419, 0
    %v7285 = vsel %vm85, %v5434, 0
    %7287 = vmatpush.xpose.msra.mxu0 0.0
    %7288 = vmatpush.xpose.msra.mxu0 0.0
    %7289 = vmatpush.xpose.msra.mxu0 0.0
    %7290 = vmatpush.xpose.msra.mxu0 0.0
    %7291 = vmatpush.xpose.msra.mxu0 0.0
    %7292 = vmatpush.xpose.msra.mxu0 0.0
    %7293 = vmatpush.xpose.msra.mxu0 0.0
    %7294 = vmatpush.xpose.msra.mxu0 0.0
    %7295 = vmatpush.xpose.msra.mxu0 0.0
    %7296 = vmatpush.xpose.msra.mxu0 0.0
    %7297 = vmatpush.xpose.msra.mxu0 0.0
    %7298 = vmatpush.xpose.msra.mxu0 0.0
    %7299 = vmatpush.xpose.msra.mxu0 %v7285
    %7300 = vmatpush.xpose.msra.mxu0 %v7282
    %7301 = vmatpush.xpose.msra.mxu0 %v7279
    %7302 = vmatpush.xpose.msra.mxu0 %v7276
    %7303 = vmatmul.f32.gmra.mxu0 %v7273
    %v7304 = vpop.f32.mrf.mxu0
    %v7305 = vadd.f32 0.0, %v7304
    %7306 = vdwg.mxu0
    %7307 = vrot.lane.b32.xlu0 %v1668, 64
    %v7308 = vpop.permute.xlu0 %7307
    %v7309 = vsel %vm85, %v7308, 0
    %v7312 = vsel %vm85, %v5449, 0
    %v7315 = vsel %vm85, %v5464, 0
    %v7318 = vsel %vm85, %v5479, 0
    %v7321 = vsel %vm85, %v5494, 0
    %7323 = vmatpush.xpose.msra.mxu0 0.0
    %7324 = vmatpush.xpose.msra.mxu0 0.0
    %7325 = vmatpush.xpose.msra.mxu0 0.0
    %7326 = vmatpush.xpose.msra.mxu0 0.0
    %7327 = vmatpush.xpose.msra.mxu0 0.0
    %7328 = vmatpush.xpose.msra.mxu0 0.0
    %7329 = vmatpush.xpose.msra.mxu0 0.0
    %7330 = vmatpush.xpose.msra.mxu0 0.0
    %7331 = vmatpush.xpose.msra.mxu0 0.0
    %7332 = vmatpush.xpose.msra.mxu0 0.0
    %7333 = vmatpush.xpose.msra.mxu0 0.0
    %7334 = vmatpush.xpose.msra.mxu0 0.0
    %7335 = vmatpush.xpose.msra.mxu0 %v7321
    %7336 = vmatpush.xpose.msra.mxu0 %v7318
    %7337 = vmatpush.xpose.msra.mxu0 %v7315
    %7338 = vmatpush.xpose.msra.mxu0 %v7312
    %7339 = vmatmul.f32.gmra.mxu0 %v7309
    %v7340 = vpop.f32.mrf.mxu0
    %v7341 = vadd.f32 0.0, %v7340
    %7342 = vdwg.mxu0
    %7343 = vrot.lane.b32.xlu0 %v1669, 64
    %v7344 = vpop.permute.xlu0 %7343
    %v7345 = vsel %vm85, %v7344, 0
    %v7348 = vsel %vm85, %v5509, 0
    %v7351 = vsel %vm85, %v5524, 0
    %v7354 = vsel %vm85, %v5539, 0
    %v7357 = vsel %vm85, %v5554, 0
    %7359 = vmatpush.xpose.msra.mxu0 0.0
    %7360 = vmatpush.xpose.msra.mxu0 0.0
    %7361 = vmatpush.xpose.msra.mxu0 0.0
    %7362 = vmatpush.xpose.msra.mxu0 0.0
    %7363 = vmatpush.xpose.msra.mxu0 0.0
    %7364 = vmatpush.xpose.msra.mxu0 0.0
    %7365 = vmatpush.xpose.msra.mxu0 0.0
    %7366 = vmatpush.xpose.msra.mxu0 0.0
    %7367 = vmatpush.xpose.msra.mxu0 0.0
    %7368 = vmatpush.xpose.msra.mxu0 0.0
    %7369 = vmatpush.xpose.msra.mxu0 0.0
    %7370 = vmatpush.xpose.msra.mxu0 0.0
    %7371 = vmatpush.xpose.msra.mxu0 %v7357
    %7372 = vmatpush.xpose.msra.mxu0 %v7354
    %7373 = vmatpush.xpose.msra.mxu0 %v7351
    %7374 = vmatpush.xpose.msra.mxu0 %v7348
    %7375 = vmatmul.f32.gmra.mxu0 %v7345
    %v7376 = vpop.f32.mrf.mxu0
    %v7377 = vadd.f32 0.0, %v7376
    %7378 = vdwg.mxu0
    %7379 = vrot.lane.b32.xlu0 %v1670, 64
    %v7380 = vpop.permute.xlu0 %7379
    %v7381 = vsel %vm85, %v7380, 0
    %v7384 = vsel %vm85, %v5569, 0
    %v7387 = vsel %vm85, %v5584, 0
    %v7390 = vsel %vm85, %v5599, 0
    %v7393 = vsel %vm85, %v5614, 0
    %7395 = vmatpush.xpose.msra.mxu0 0.0
    %7396 = vmatpush.xpose.msra.mxu0 0.0
    %7397 = vmatpush.xpose.msra.mxu0 0.0
    %7398 = vmatpush.xpose.msra.mxu0 0.0
    %7399 = vmatpush.xpose.msra.mxu0 0.0
    %7400 = vmatpush.xpose.msra.mxu0 0.0
    %7401 = vmatpush.xpose.msra.mxu0 0.0
    %7402 = vmatpush.xpose.msra.mxu0 0.0
    %7403 = vmatpush.xpose.msra.mxu0 0.0
    %7404 = vmatpush.xpose.msra.mxu0 0.0
    %7405 = vmatpush.xpose.msra.mxu0 0.0
    %7406 = vmatpush.xpose.msra.mxu0 0.0
    %7407 = vmatpush.xpose.msra.mxu0 %v7393
    %7408 = vmatpush.xpose.msra.mxu0 %v7390
    %7409 = vmatpush.xpose.msra.mxu0 %v7387
    %7410 = vmatpush.xpose.msra.mxu0 %v7384
    %7411 = vmatmul.f32.gmra.mxu0 %v7381
    %v7412 = vpop.f32.mrf.mxu0
    %v7413 = vadd.f32 0.0, %v7412
    %7414 = vdwg.mxu0
    %7415 = vrot.lane.b32.xlu0 %v1671, 64
    %v7416 = vpop.permute.xlu0 %7415
    %v7417 = vsel %vm85, %v7416, 0
    %v7420 = vsel %vm85, %v5629, 0
    %v7423 = vsel %vm85, %v5644, 0
    %v7426 = vsel %vm85, %v5659, 0
    %v7429 = vsel %vm85, %v5674, 0
    %7431 = vmatpush.xpose.msra.mxu0 0.0
    %7432 = vmatpush.xpose.msra.mxu0 0.0
    %7433 = vmatpush.xpose.msra.mxu0 0.0
    %7434 = vmatpush.xpose.msra.mxu0 0.0
    %7435 = vmatpush.xpose.msra.mxu0 0.0
    %7436 = vmatpush.xpose.msra.mxu0 0.0
    %7437 = vmatpush.xpose.msra.mxu0 0.0
    %7438 = vmatpush.xpose.msra.mxu0 0.0
    %7439 = vmatpush.xpose.msra.mxu0 0.0
    %7440 = vmatpush.xpose.msra.mxu0 0.0
    %7441 = vmatpush.xpose.msra.mxu0 0.0
    %7442 = vmatpush.xpose.msra.mxu0 0.0
    %7443 = vmatpush.xpose.msra.mxu0 %v7429
    %7444 = vmatpush.xpose.msra.mxu0 %v7426
    %7445 = vmatpush.xpose.msra.mxu0 %v7423
    %7446 = vmatpush.xpose.msra.mxu0 %v7420
    %7447 = vmatmul.f32.gmra.mxu0 %v7417
    %v7448 = vpop.f32.mrf.mxu0
    %v7449 = vadd.f32 0.0, %v7448
    %7450 = vdwg.mxu0
    %7451 = vrot.lane.b32.xlu0 %v1672, 64
    %v7452 = vpop.permute.xlu0 %7451
    %v7453 = vsel %vm85, %v7452, 0
    %v7456 = vsel %vm85, %v5689, 0
    %v7459 = vsel %vm85, %v5704, 0
    %v7462 = vsel %vm85, %v5719, 0
    %v7465 = vsel %vm85, %v5734, 0
    %7467 = vmatpush.xpose.msra.mxu0 0.0
    %7468 = vmatpush.xpose.msra.mxu0 0.0
    %7469 = vmatpush.xpose.msra.mxu0 0.0
    %7470 = vmatpush.xpose.msra.mxu0 0.0
    %7471 = vmatpush.xpose.msra.mxu0 0.0
    %7472 = vmatpush.xpose.msra.mxu0 0.0
    %7473 = vmatpush.xpose.msra.mxu0 0.0
    %7474 = vmatpush.xpose.msra.mxu0 0.0
    %7475 = vmatpush.xpose.msra.mxu0 0.0
    %7476 = vmatpush.xpose.msra.mxu0 0.0
    %7477 = vmatpush.xpose.msra.mxu0 0.0
    %7478 = vmatpush.xpose.msra.mxu0 0.0
    %7479 = vmatpush.xpose.msra.mxu0 %v7465
    %7480 = vmatpush.xpose.msra.mxu0 %v7462
    %7481 = vmatpush.xpose.msra.mxu0 %v7459
    %7482 = vmatpush.xpose.msra.mxu0 %v7456
    %7483 = vmatmul.f32.gmra.mxu0 %v7453
    %v7484 = vpop.f32.mrf.mxu0
    %v7485 = vadd.f32 0.0, %v7484
    %7486 = vdwg.mxu0
    %7487 = vrot.lane.b32.xlu0 %v1673, 64
    %v7488 = vpop.permute.xlu0 %7487
    %v7489 = vsel %vm85, %v7488, 0
    %v7492 = vsel %vm85, %v5749, 0
    %v7495 = vsel %vm85, %v5764, 0
    %v7498 = vsel %vm85, %v5779, 0
    %v7501 = vsel %vm85, %v5794, 0
    %7503 = vmatpush.xpose.msra.mxu0 0.0
    %7504 = vmatpush.xpose.msra.mxu0 0.0
    %7505 = vmatpush.xpose.msra.mxu0 0.0
    %7506 = vmatpush.xpose.msra.mxu0 0.0
    %7507 = vmatpush.xpose.msra.mxu0 0.0
    %7508 = vmatpush.xpose.msra.mxu0 0.0
    %7509 = vmatpush.xpose.msra.mxu0 0.0
    %7510 = vmatpush.xpose.msra.mxu0 0.0
    %7511 = vmatpush.xpose.msra.mxu0 0.0
    %7512 = vmatpush.xpose.msra.mxu0 0.0
    %7513 = vmatpush.xpose.msra.mxu0 0.0
    %7514 = vmatpush.xpose.msra.mxu0 0.0
    %7515 = vmatpush.xpose.msra.mxu0 %v7501
    %7516 = vmatpush.xpose.msra.mxu0 %v7498
    %7517 = vmatpush.xpose.msra.mxu0 %v7495
    %7518 = vmatpush.xpose.msra.mxu0 %v7492
    %7519 = vmatmul.f32.gmra.mxu0 %v7489
    %v7520 = vpop.f32.mrf.mxu0
    %v7521 = vadd.f32 0.0, %v7520
    %7522 = vdwg.mxu0
    %7523 = vrot.lane.b32.xlu0 %v1674, 64
    %v7524 = vpop.permute.xlu0 %7523
    %v7525 = vsel %vm85, %v7524, 0
    %v7528 = vsel %vm85, %v5809, 0
    %v7531 = vsel %vm85, %v5824, 0
    %v7534 = vsel %vm85, %v5839, 0
    %v7537 = vsel %vm85, %v5854, 0
    %7539 = vmatpush.xpose.msra.mxu0 0.0
    %7540 = vmatpush.xpose.msra.mxu0 0.0
    %7541 = vmatpush.xpose.msra.mxu0 0.0
    %7542 = vmatpush.xpose.msra.mxu0 0.0
    %7543 = vmatpush.xpose.msra.mxu0 0.0
    %7544 = vmatpush.xpose.msra.mxu0 0.0
    %7545 = vmatpush.xpose.msra.mxu0 0.0
    %7546 = vmatpush.xpose.msra.mxu0 0.0
    %7547 = vmatpush.xpose.msra.mxu0 0.0
    %7548 = vmatpush.xpose.msra.mxu0 0.0
    %7549 = vmatpush.xpose.msra.mxu0 0.0
    %7550 = vmatpush.xpose.msra.mxu0 0.0
    %7551 = vmatpush.xpose.msra.mxu0 %v7537
    %7552 = vmatpush.xpose.msra.mxu0 %v7534
    %7553 = vmatpush.xpose.msra.mxu0 %v7531
    %7554 = vmatpush.xpose.msra.mxu0 %v7528
    %7555 = vmatmul.f32.gmra.mxu0 %v7525
    %v7556 = vpop.f32.mrf.mxu0
    %v7557 = vadd.f32 0.0, %v7556
    %7558 = vdwg.mxu0
    %7559 = vrot.lane.b32.xlu0 %v1675, 64
    %v7560 = vpop.permute.xlu0 %7559
    %v7561 = vsel %vm85, %v7560, 0
    %v7564 = vsel %vm85, %v5869, 0
    %v7567 = vsel %vm85, %v5884, 0
    %v7570 = vsel %vm85, %v5899, 0
    %v7573 = vsel %vm85, %v5914, 0
    %7575 = vmatpush.xpose.msra.mxu0 0.0
    %7576 = vmatpush.xpose.msra.mxu0 0.0
    %7577 = vmatpush.xpose.msra.mxu0 0.0
    %7578 = vmatpush.xpose.msra.mxu0 0.0
    %7579 = vmatpush.xpose.msra.mxu0 0.0
    %7580 = vmatpush.xpose.msra.mxu0 0.0
    %7581 = vmatpush.xpose.msra.mxu0 0.0
    %7582 = vmatpush.xpose.msra.mxu0 0.0
    %7583 = vmatpush.xpose.msra.mxu0 0.0
    %7584 = vmatpush.xpose.msra.mxu0 0.0
    %7585 = vmatpush.xpose.msra.mxu0 0.0
    %7586 = vmatpush.xpose.msra.mxu0 0.0
    %7587 = vmatpush.xpose.msra.mxu0 %v7573
    %7588 = vmatpush.xpose.msra.mxu0 %v7570
    %7589 = vmatpush.xpose.msra.mxu0 %v7567
    %7590 = vmatpush.xpose.msra.mxu0 %v7564
    %7591 = vmatmul.f32.gmra.mxu0 %v7561
    %v7592 = vpop.f32.mrf.mxu0
    %v7593 = vadd.f32 0.0, %v7592
    %7594 = vdwg.mxu0
    %7595 = vrot.lane.b32.xlu0 %v1676, 64
    %v7596 = vpop.permute.xlu0 %7595
    %v7597 = vsel %vm85, %v7596, 0
    %v7600 = vsel %vm85, %v5929, 0
    %v7603 = vsel %vm85, %v5944, 0
    %v7606 = vsel %vm85, %v5959, 0
    %v7609 = vsel %vm85, %v5974, 0
    %7611 = vmatpush.xpose.msra.mxu0 0.0
    %7612 = vmatpush.xpose.msra.mxu0 0.0
    %7613 = vmatpush.xpose.msra.mxu0 0.0
    %7614 = vmatpush.xpose.msra.mxu0 0.0
    %7615 = vmatpush.xpose.msra.mxu0 0.0
    %7616 = vmatpush.xpose.msra.mxu0 0.0
    %7617 = vmatpush.xpose.msra.mxu0 0.0
    %7618 = vmatpush.xpose.msra.mxu0 0.0
    %7619 = vmatpush.xpose.msra.mxu0 0.0
    %7620 = vmatpush.xpose.msra.mxu0 0.0
    %7621 = vmatpush.xpose.msra.mxu0 0.0
    %7622 = vmatpush.xpose.msra.mxu0 0.0
    %7623 = vmatpush.xpose.msra.mxu0 %v7609
    %7624 = vmatpush.xpose.msra.mxu0 %v7606
    %7625 = vmatpush.xpose.msra.mxu0 %v7603
    %7626 = vmatpush.xpose.msra.mxu0 %v7600
    %7627 = vmatmul.f32.gmra.mxu0 %v7597
    %v7628 = vpop.f32.mrf.mxu0
    %v7629 = vadd.f32 0.0, %v7628
    %7630 = vdwg.mxu0
    %7631 = vrot.lane.b32.xlu0 %v1677, 64
    %v7632 = vpop.permute.xlu0 %7631
    %v7633 = vsel %vm85, %v7632, 0
    %v7636 = vsel %vm85, %v5989, 0
    %v7639 = vsel %vm85, %v6004, 0
    %v7642 = vsel %vm85, %v6019, 0
    %v7645 = vsel %vm85, %v6034, 0
    %7647 = vmatpush.xpose.msra.mxu0 0.0
    %7648 = vmatpush.xpose.msra.mxu0 0.0
    %7649 = vmatpush.xpose.msra.mxu0 0.0
    %7650 = vmatpush.xpose.msra.mxu0 0.0
    %7651 = vmatpush.xpose.msra.mxu0 0.0
    %7652 = vmatpush.xpose.msra.mxu0 0.0
    %7653 = vmatpush.xpose.msra.mxu0 0.0
    %7654 = vmatpush.xpose.msra.mxu0 0.0
    %7655 = vmatpush.xpose.msra.mxu0 0.0
    %7656 = vmatpush.xpose.msra.mxu0 0.0
    %7657 = vmatpush.xpose.msra.mxu0 0.0
    %7658 = vmatpush.xpose.msra.mxu0 0.0
    %7659 = vmatpush.xpose.msra.mxu0 %v7645
    %7660 = vmatpush.xpose.msra.mxu0 %v7642
    %7661 = vmatpush.xpose.msra.mxu0 %v7639
    %7662 = vmatpush.xpose.msra.mxu0 %v7636
    %7663 = vmatmul.f32.gmra.mxu0 %v7633
    %v7664 = vpop.f32.mrf.mxu0
    %v7665 = vadd.f32 0.0, %v7664
    %7666 = vdwg.mxu0
    %7667 = vrot.lane.b32.xlu0 %v1678, 64
    %v7668 = vpop.permute.xlu0 %7667
    %v7669 = vsel %vm85, %v7668, 0
    %v7672 = vsel %vm85, %v6049, 0
    %v7675 = vsel %vm85, %v6064, 0
    %v7678 = vsel %vm85, %v6079, 0
    %v7681 = vsel %vm85, %v6094, 0
    %7683 = vmatpush.xpose.msra.mxu0 0.0
    %7684 = vmatpush.xpose.msra.mxu0 0.0
    %7685 = vmatpush.xpose.msra.mxu0 0.0
    %7686 = vmatpush.xpose.msra.mxu0 0.0
    %7687 = vmatpush.xpose.msra.mxu0 0.0
    %7688 = vmatpush.xpose.msra.mxu0 0.0
    %7689 = vmatpush.xpose.msra.mxu0 0.0
    %7690 = vmatpush.xpose.msra.mxu0 0.0
    %7691 = vmatpush.xpose.msra.mxu0 0.0
    %7692 = vmatpush.xpose.msra.mxu0 0.0
    %7693 = vmatpush.xpose.msra.mxu0 0.0
    %7694 = vmatpush.xpose.msra.mxu0 0.0
    %7695 = vmatpush.xpose.msra.mxu0 %v7681
    %7696 = vmatpush.xpose.msra.mxu0 %v7678
    %7697 = vmatpush.xpose.msra.mxu0 %v7675
    %7698 = vmatpush.xpose.msra.mxu0 %v7672
    %7699 = vmatmul.f32.gmra.mxu0 %v7669
    %v7700 = vpop.f32.mrf.mxu0
    %v7701 = vadd.f32 0.0, %v7700
    %7702 = vdwg.mxu0
    %7703 = vrot.lane.b32.xlu0 %v1679, 64
    %v7704 = vpop.permute.xlu0 %7703
    %v7705 = vsel %vm85, %v7704, 0
    %v7708 = vsel %vm85, %v6109, 0
    %v7711 = vsel %vm85, %v6124, 0
    %v7714 = vsel %vm85, %v6139, 0
    %v7717 = vsel %vm85, %v6154, 0
    %7719 = vmatpush.xpose.msra.mxu0 0.0
    %7720 = vmatpush.xpose.msra.mxu0 0.0
    %7721 = vmatpush.xpose.msra.mxu0 0.0
    %7722 = vmatpush.xpose.msra.mxu0 0.0
    %7723 = vmatpush.xpose.msra.mxu0 0.0
    %7724 = vmatpush.xpose.msra.mxu0 0.0
    %7725 = vmatpush.xpose.msra.mxu0 0.0
    %7726 = vmatpush.xpose.msra.mxu0 0.0
    %7727 = vmatpush.xpose.msra.mxu0 0.0
    %7728 = vmatpush.xpose.msra.mxu0 0.0
    %7729 = vmatpush.xpose.msra.mxu0 0.0
    %7730 = vmatpush.xpose.msra.mxu0 0.0
    %7731 = vmatpush.xpose.msra.mxu0 %v7717
    %7732 = vmatpush.xpose.msra.mxu0 %v7714
    %7733 = vmatpush.xpose.msra.mxu0 %v7711
    %7734 = vmatpush.xpose.msra.mxu0 %v7708
    %7735 = vmatmul.f32.gmra.mxu0 %v7705
    %v7736 = vpop.f32.mrf.mxu0
    %v7737 = vadd.f32 0.0, %v7736
    %7738 = vdwg.mxu0
    %7739 = vrot.lane.b32.xlu0 %v1680, 64
    %v7740 = vpop.permute.xlu0 %7739
    %v7741 = vsel %vm85, %v7740, 0
    %v7744 = vsel %vm85, %v6169, 0
    %v7747 = vsel %vm85, %v6184, 0
    %v7750 = vsel %vm85, %v6199, 0
    %v7753 = vsel %vm85, %v6214, 0
    %7755 = vmatpush.xpose.msra.mxu0 0.0
    %7756 = vmatpush.xpose.msra.mxu0 0.0
    %7757 = vmatpush.xpose.msra.mxu0 0.0
    %7758 = vmatpush.xpose.msra.mxu0 0.0
    %7759 = vmatpush.xpose.msra.mxu0 0.0
    %7760 = vmatpush.xpose.msra.mxu0 0.0
    %7761 = vmatpush.xpose.msra.mxu0 0.0
    %7762 = vmatpush.xpose.msra.mxu0 0.0
    %7763 = vmatpush.xpose.msra.mxu0 0.0
    %7764 = vmatpush.xpose.msra.mxu0 0.0
    %7765 = vmatpush.xpose.msra.mxu0 0.0
    %7766 = vmatpush.xpose.msra.mxu0 0.0
    %7767 = vmatpush.xpose.msra.mxu0 %v7753
    %7768 = vmatpush.xpose.msra.mxu0 %v7750
    %7769 = vmatpush.xpose.msra.mxu0 %v7747
    %7770 = vmatpush.xpose.msra.mxu0 %v7744
    %7771 = vmatmul.f32.gmra.mxu0 %v7741
    %v7772 = vpop.f32.mrf.mxu0
    %v7773 = vadd.f32 0.0, %v7772
    %7774 = vdwg.mxu0
    %7775 = vrot.lane.b32.xlu0 %v1681, 64
    %v7776 = vpop.permute.xlu0 %7775
    %v7777 = vsel %vm85, %v7776, 0
    %v7780 = vsel %vm85, %v6229, 0
    %v7783 = vsel %vm85, %v6244, 0
    %v7786 = vsel %vm85, %v6259, 0
    %v7789 = vsel %vm85, %v6274, 0
    %7791 = vmatpush.xpose.msra.mxu0 0.0
    %7792 = vmatpush.xpose.msra.mxu0 0.0
    %7793 = vmatpush.xpose.msra.mxu0 0.0
    %7794 = vmatpush.xpose.msra.mxu0 0.0
    %7795 = vmatpush.xpose.msra.mxu0 0.0
    %7796 = vmatpush.xpose.msra.mxu0 0.0
    %7797 = vmatpush.xpose.msra.mxu0 0.0
    %7798 = vmatpush.xpose.msra.mxu0 0.0
    %7799 = vmatpush.xpose.msra.mxu0 0.0
    %7800 = vmatpush.xpose.msra.mxu0 0.0
    %7801 = vmatpush.xpose.msra.mxu0 0.0
    %7802 = vmatpush.xpose.msra.mxu0 0.0
    %7803 = vmatpush.xpose.msra.mxu0 %v7789
    %7804 = vmatpush.xpose.msra.mxu0 %v7786
    %7805 = vmatpush.xpose.msra.mxu0 %v7783
    %7806 = vmatpush.xpose.msra.mxu0 %v7780
    %7807 = vmatmul.f32.gmra.mxu0 %v7777
    %v7808 = vpop.f32.mrf.mxu0
    %v7809 = vadd.f32 0.0, %v7808
    %7810 = vdwg.mxu0
    %7811 = vrot.lane.b32.xlu0 %v1682, 64
    %v7812 = vpop.permute.xlu0 %7811
    %v7813 = vsel %vm85, %v7812, 0
    %v7816 = vsel %vm85, %v6289, 0
    %v7819 = vsel %vm85, %v6304, 0
    %v7822 = vsel %vm85, %v6319, 0
    %v7825 = vsel %vm85, %v6334, 0
    %7827 = vmatpush.xpose.msra.mxu0 0.0
    %7828 = vmatpush.xpose.msra.mxu0 0.0
    %7829 = vmatpush.xpose.msra.mxu0 0.0
    %7830 = vmatpush.xpose.msra.mxu0 0.0
    %7831 = vmatpush.xpose.msra.mxu0 0.0
    %7832 = vmatpush.xpose.msra.mxu0 0.0
    %7833 = vmatpush.xpose.msra.mxu0 0.0
    %7834 = vmatpush.xpose.msra.mxu0 0.0
    %7835 = vmatpush.xpose.msra.mxu0 0.0
    %7836 = vmatpush.xpose.msra.mxu0 0.0
    %7837 = vmatpush.xpose.msra.mxu0 0.0
    %7838 = vmatpush.xpose.msra.mxu0 0.0
    %7839 = vmatpush.xpose.msra.mxu0 %v7825
    %7840 = vmatpush.xpose.msra.mxu0 %v7822
    %7841 = vmatpush.xpose.msra.mxu0 %v7819
    %7842 = vmatpush.xpose.msra.mxu0 %v7816
    %7843 = vmatmul.f32.gmra.mxu0 %v7813
    %v7844 = vpop.f32.mrf.mxu0
    %v7845 = vadd.f32 0.0, %v7844
    %7846 = vdwg.mxu0
    %7847 = vrot.lane.b32.xlu0 %v1683, 64
    %v7848 = vpop.permute.xlu0 %7847
    %v7849 = vsel %vm85, %v7848, 0
    %v7852 = vsel %vm85, %v6349, 0
    %v7855 = vsel %vm85, %v6364, 0
    %v7858 = vsel %vm85, %v6379, 0
    %v7861 = vsel %vm85, %v6394, 0
    %7863 = vmatpush.xpose.msra.mxu0 0.0
    %7864 = vmatpush.xpose.msra.mxu0 0.0
    %7865 = vmatpush.xpose.msra.mxu0 0.0
    %7866 = vmatpush.xpose.msra.mxu0 0.0
    %7867 = vmatpush.xpose.msra.mxu0 0.0
    %7868 = vmatpush.xpose.msra.mxu0 0.0
    %7869 = vmatpush.xpose.msra.mxu0 0.0
    %7870 = vmatpush.xpose.msra.mxu0 0.0
    %7871 = vmatpush.xpose.msra.mxu0 0.0
    %7872 = vmatpush.xpose.msra.mxu0 0.0
    %7873 = vmatpush.xpose.msra.mxu0 0.0
    %7874 = vmatpush.xpose.msra.mxu0 0.0
    %7875 = vmatpush.xpose.msra.mxu0 %v7861
    %7876 = vmatpush.xpose.msra.mxu0 %v7858
    %7877 = vmatpush.xpose.msra.mxu0 %v7855
    %7878 = vmatpush.xpose.msra.mxu0 %v7852
    %7879 = vmatmul.f32.gmra.mxu0 %v7849
    %v7880 = vpop.f32.mrf.mxu0
    %v7881 = vadd.f32 0.0, %v7880
    %7882 = vdwg.mxu0
    %7883 = vrot.lane.b32.xlu0 %v1684, 64
    %v7884 = vpop.permute.xlu0 %7883
    %v7885 = vsel %vm85, %v7884, 0
    %v7888 = vsel %vm85, %v6409, 0
    %v7891 = vsel %vm85, %v6424, 0
    %v7894 = vsel %vm85, %v6439, 0
    %v7897 = vsel %vm85, %v6454, 0
    %7899 = vmatpush.xpose.msra.mxu0 0.0
    %7900 = vmatpush.xpose.msra.mxu0 0.0
    %7901 = vmatpush.xpose.msra.mxu0 0.0
    %7902 = vmatpush.xpose.msra.mxu0 0.0
    %7903 = vmatpush.xpose.msra.mxu0 0.0
    %7904 = vmatpush.xpose.msra.mxu0 0.0
    %7905 = vmatpush.xpose.msra.mxu0 0.0
    %7906 = vmatpush.xpose.msra.mxu0 0.0
    %7907 = vmatpush.xpose.msra.mxu0 0.0
    %7908 = vmatpush.xpose.msra.mxu0 0.0
    %7909 = vmatpush.xpose.msra.mxu0 0.0
    %7910 = vmatpush.xpose.msra.mxu0 0.0
    %7911 = vmatpush.xpose.msra.mxu0 %v7897
    %7912 = vmatpush.xpose.msra.mxu0 %v7894
    %7913 = vmatpush.xpose.msra.mxu0 %v7891
    %7914 = vmatpush.xpose.msra.mxu0 %v7888
    %7915 = vmatmul.f32.gmra.mxu0 %v7885
    %v7916 = vpop.f32.mrf.mxu0
    %v7917 = vadd.f32 0.0, %v7916
    %7918 = vdwg.mxu0
    %7919 = vrot.lane.b32.xlu0 %v1685, 64
    %v7920 = vpop.permute.xlu0 %7919
    %v7921 = vsel %vm85, %v7920, 0
    %v7924 = vsel %vm85, %v6469, 0
    %v7927 = vsel %vm85, %v6484, 0
    %v7930 = vsel %vm85, %v6499, 0
    %v7933 = vsel %vm85, %v6514, 0
    %7935 = vmatpush.xpose.msra.mxu0 0.0
    %7936 = vmatpush.xpose.msra.mxu0 0.0
    %7937 = vmatpush.xpose.msra.mxu0 0.0
    %7938 = vmatpush.xpose.msra.mxu0 0.0
    %7939 = vmatpush.xpose.msra.mxu0 0.0
    %7940 = vmatpush.xpose.msra.mxu0 0.0
    %7941 = vmatpush.xpose.msra.mxu0 0.0
    %7942 = vmatpush.xpose.msra.mxu0 0.0
    %7943 = vmatpush.xpose.msra.mxu0 0.0
    %7944 = vmatpush.xpose.msra.mxu0 0.0
    %7945 = vmatpush.xpose.msra.mxu0 0.0
    %7946 = vmatpush.xpose.msra.mxu0 0.0
    %7947 = vmatpush.xpose.msra.mxu0 %v7933
    %7948 = vmatpush.xpose.msra.mxu0 %v7930
    %7949 = vmatpush.xpose.msra.mxu0 %v7927
    %7950 = vmatpush.xpose.msra.mxu0 %v7924
    %7951 = vmatmul.f32.gmra.mxu0 %v7921
    %v7952 = vpop.f32.mrf.mxu0
    %v7953 = vadd.f32 0.0, %v7952
    %7954 = vdwg.mxu0
    %7955 = vrot.lane.b32.xlu0 %v1686, 64
    %v7956 = vpop.permute.xlu0 %7955
    %v7957 = vsel %vm85, %v7956, 0
    %v7960 = vsel %vm85, %v6529, 0
    %v7963 = vsel %vm85, %v6544, 0
    %v7966 = vsel %vm85, %v6559, 0
    %v7969 = vsel %vm85, %v6574, 0
    %7971 = vmatpush.xpose.msra.mxu0 0.0
    %7972 = vmatpush.xpose.msra.mxu0 0.0
    %7973 = vmatpush.xpose.msra.mxu0 0.0
    %7974 = vmatpush.xpose.msra.mxu0 0.0
    %7975 = vmatpush.xpose.msra.mxu0 0.0
    %7976 = vmatpush.xpose.msra.mxu0 0.0
    %7977 = vmatpush.xpose.msra.mxu0 0.0
    %7978 = vmatpush.xpose.msra.mxu0 0.0
    %7979 = vmatpush.xpose.msra.mxu0 0.0
    %7980 = vmatpush.xpose.msra.mxu0 0.0
    %7981 = vmatpush.xpose.msra.mxu0 0.0
    %7982 = vmatpush.xpose.msra.mxu0 0.0
    %7983 = vmatpush.xpose.msra.mxu0 %v7969
    %7984 = vmatpush.xpose.msra.mxu0 %v7966
    %7985 = vmatpush.xpose.msra.mxu0 %v7963
    %7986 = vmatpush.xpose.msra.mxu0 %v7960
    %7987 = vmatmul.f32.gmra.mxu0 %v7957
    %v7988 = vpop.f32.mrf.mxu0
    %v7989 = vadd.f32 0.0, %v7988
    %7990 = vdwg.mxu0
    %7991 = vrot.lane.b32.xlu0 %v1687, 64
    %v7992 = vpop.permute.xlu0 %7991
    %v7993 = vsel %vm85, %v7992, 0
    %v7996 = vsel %vm85, %v6589, 0
    %v7999 = vsel %vm85, %v6604, 0
    %v8002 = vsel %vm85, %v6619, 0
    %v8005 = vsel %vm85, %v6634, 0
    %8007 = vmatpush.xpose.msra.mxu0 0.0
    %8008 = vmatpush.xpose.msra.mxu0 0.0
    %8009 = vmatpush.xpose.msra.mxu0 0.0
    %8010 = vmatpush.xpose.msra.mxu0 0.0
    %8011 = vmatpush.xpose.msra.mxu0 0.0
    %8012 = vmatpush.xpose.msra.mxu0 0.0
    %8013 = vmatpush.xpose.msra.mxu0 0.0
    %8014 = vmatpush.xpose.msra.mxu0 0.0
    %8015 = vmatpush.xpose.msra.mxu0 0.0
    %8016 = vmatpush.xpose.msra.mxu0 0.0
    %8017 = vmatpush.xpose.msra.mxu0 0.0
    %8018 = vmatpush.xpose.msra.mxu0 0.0
    %8019 = vmatpush.xpose.msra.mxu0 %v8005
    %8020 = vmatpush.xpose.msra.mxu0 %v8002
    %8021 = vmatpush.xpose.msra.mxu0 %v7999
    %8022 = vmatpush.xpose.msra.mxu0 %v7996
    %8023 = vmatmul.f32.gmra.mxu0 %v7993
    %v8024 = vpop.f32.mrf.mxu0
    %v8025 = vadd.f32 0.0, %v8024
    %8026 = vdwg.mxu0
    %8027 = vrot.lane.b32.xlu0 %v1688, 64
    %v8028 = vpop.permute.xlu0 %8027
    %v8029 = vsel %vm85, %v8028, 0
    %v8032 = vsel %vm85, %v6649, 0
    %v8035 = vsel %vm85, %v6664, 0
    %v8038 = vsel %vm85, %v6679, 0
    %v8041 = vsel %vm85, %v6694, 0
    %8043 = vmatpush.xpose.msra.mxu0 0.0
    %8044 = vmatpush.xpose.msra.mxu0 0.0
    %8045 = vmatpush.xpose.msra.mxu0 0.0
    %8046 = vmatpush.xpose.msra.mxu0 0.0
    %8047 = vmatpush.xpose.msra.mxu0 0.0
    %8048 = vmatpush.xpose.msra.mxu0 0.0
    %8049 = vmatpush.xpose.msra.mxu0 0.0
    %8050 = vmatpush.xpose.msra.mxu0 0.0
    %8051 = vmatpush.xpose.msra.mxu0 0.0
    %8052 = vmatpush.xpose.msra.mxu0 0.0
    %8053 = vmatpush.xpose.msra.mxu0 0.0
    %8054 = vmatpush.xpose.msra.mxu0 0.0
    %8055 = vmatpush.xpose.msra.mxu0 %v8041
    %8056 = vmatpush.xpose.msra.mxu0 %v8038
    %8057 = vmatpush.xpose.msra.mxu0 %v8035
    %8058 = vmatpush.xpose.msra.mxu0 %v8032
    %8059 = vmatmul.f32.gmra.mxu0 %v8029
    %v8060 = vpop.f32.mrf.mxu0
    %v8061 = vadd.f32 0.0, %v8060
    %8062 = vdwg.mxu0
    %8063 = vrot.lane.b32.xlu0 %v1689, 64
    %v8064 = vpop.permute.xlu0 %8063
    %v8065 = vsel %vm85, %v8064, 0
    %v8068 = vsel %vm85, %v6709, 0
    %v8071 = vsel %vm85, %v6724, 0
    %v8074 = vsel %vm85, %v6739, 0
    %v8077 = vsel %vm85, %v6754, 0
    %8079 = vmatpush.xpose.msra.mxu0 0.0
    %8080 = vmatpush.xpose.msra.mxu0 0.0
    %8081 = vmatpush.xpose.msra.mxu0 0.0
    %8082 = vmatpush.xpose.msra.mxu0 0.0
    %8083 = vmatpush.xpose.msra.mxu0 0.0
    %8084 = vmatpush.xpose.msra.mxu0 0.0
    %8085 = vmatpush.xpose.msra.mxu0 0.0
    %8086 = vmatpush.xpose.msra.mxu0 0.0
    %8087 = vmatpush.xpose.msra.mxu0 0.0
    %8088 = vmatpush.xpose.msra.mxu0 0.0
    %8089 = vmatpush.xpose.msra.mxu0 0.0
    %8090 = vmatpush.xpose.msra.mxu0 0.0
    %8091 = vmatpush.xpose.msra.mxu0 %v8077
    %8092 = vmatpush.xpose.msra.mxu0 %v8074
    %8093 = vmatpush.xpose.msra.mxu0 %v8071
    %8094 = vmatpush.xpose.msra.mxu0 %v8068
    %8095 = vmatmul.f32.gmra.mxu0 %v8065
    %v8096 = vpop.f32.mrf.mxu0
    %v8097 = vadd.f32 0.0, %v8096
    %8098 = vdwg.mxu0
    %8099 = vrot.lane.b32.xlu0 %v1690, 64
    %v8100 = vpop.permute.xlu0 %8099
    %v8101 = vsel %vm85, %v8100, 0
    %v8104 = vsel %vm85, %v6769, 0
    %v8107 = vsel %vm85, %v6784, 0
    %v8110 = vsel %vm85, %v6799, 0
    %v8113 = vsel %vm85, %v6814, 0
    %8115 = vmatpush.xpose.msra.mxu0 0.0
    %8116 = vmatpush.xpose.msra.mxu0 0.0
    %8117 = vmatpush.xpose.msra.mxu0 0.0
    %8118 = vmatpush.xpose.msra.mxu0 0.0
    %8119 = vmatpush.xpose.msra.mxu0 0.0
    %8120 = vmatpush.xpose.msra.mxu0 0.0
    %8121 = vmatpush.xpose.msra.mxu0 0.0
    %8122 = vmatpush.xpose.msra.mxu0 0.0
    %8123 = vmatpush.xpose.msra.mxu0 0.0
    %8124 = vmatpush.xpose.msra.mxu0 0.0
    %8125 = vmatpush.xpose.msra.mxu0 0.0
    %8126 = vmatpush.xpose.msra.mxu0 0.0
    %8127 = vmatpush.xpose.msra.mxu0 %v8113
    %8128 = vmatpush.xpose.msra.mxu0 %v8110
    %8129 = vmatpush.xpose.msra.mxu0 %v8107
    %8130 = vmatpush.xpose.msra.mxu0 %v8104
    %8131 = vmatmul.f32.gmra.mxu0 %v8101
    %v8132 = vpop.f32.mrf.mxu0
    %v8133 = vadd.f32 0.0, %v8132
    %8134 = vdwg.mxu0
    %8135 = vrot.lane.b32.xlu0 %v1691, 64
    %v8136 = vpop.permute.xlu0 %8135
    %v8137 = vsel %vm85, %v8136, 0
    %v8140 = vsel %vm85, %v6829, 0
    %v8143 = vsel %vm85, %v6844, 0
    %v8146 = vsel %vm85, %v6859, 0
    %v8149 = vsel %vm85, %v6874, 0
    %8151 = vmatpush.xpose.msra.mxu0 0.0
    %8152 = vmatpush.xpose.msra.mxu0 0.0
    %8153 = vmatpush.xpose.msra.mxu0 0.0
    %8154 = vmatpush.xpose.msra.mxu0 0.0
    %8155 = vmatpush.xpose.msra.mxu0 0.0
    %8156 = vmatpush.xpose.msra.mxu0 0.0
    %8157 = vmatpush.xpose.msra.mxu0 0.0
    %8158 = vmatpush.xpose.msra.mxu0 0.0
    %8159 = vmatpush.xpose.msra.mxu0 0.0
    %8160 = vmatpush.xpose.msra.mxu0 0.0
    %8161 = vmatpush.xpose.msra.mxu0 0.0
    %8162 = vmatpush.xpose.msra.mxu0 0.0
    %8163 = vmatpush.xpose.msra.mxu0 %v8149
    %8164 = vmatpush.xpose.msra.mxu0 %v8146
    %8165 = vmatpush.xpose.msra.mxu0 %v8143
    %8166 = vmatpush.xpose.msra.mxu0 %v8140
    %8167 = vmatmul.f32.gmra.mxu0 %v8137
    %v8168 = vpop.f32.mrf.mxu0
    %v8169 = vadd.f32 0.0, %v8168
    %8170 = vdwg.mxu0
    %8171 = vrot.lane.b32.xlu0 %v1692, 64
    %v8172 = vpop.permute.xlu0 %8171
    %v8173 = vsel %vm85, %v8172, 0
    %v8176 = vsel %vm85, %v6889, 0
    %v8179 = vsel %vm85, %v6904, 0
    %v8182 = vsel %vm85, %v6919, 0
    %v8185 = vsel %vm85, %v6934, 0
    %8187 = vmatpush.xpose.msra.mxu0 0.0
    %8188 = vmatpush.xpose.msra.mxu0 0.0
    %8189 = vmatpush.xpose.msra.mxu0 0.0
    %8190 = vmatpush.xpose.msra.mxu0 0.0
    %8191 = vmatpush.xpose.msra.mxu0 0.0
    %8192 = vmatpush.xpose.msra.mxu0 0.0
    %8193 = vmatpush.xpose.msra.mxu0 0.0
    %8194 = vmatpush.xpose.msra.mxu0 0.0
    %8195 = vmatpush.xpose.msra.mxu0 0.0
    %8196 = vmatpush.xpose.msra.mxu0 0.0
    %8197 = vmatpush.xpose.msra.mxu0 0.0
    %8198 = vmatpush.xpose.msra.mxu0 0.0
    %8199 = vmatpush.xpose.msra.mxu0 %v8185
    %8200 = vmatpush.xpose.msra.mxu0 %v8182
    %8201 = vmatpush.xpose.msra.mxu0 %v8179
    %8202 = vmatpush.xpose.msra.mxu0 %v8176
    %8203 = vmatmul.f32.gmra.mxu0 %v8173
    %v8204 = vpop.f32.mrf.mxu0
    %v8205 = vadd.f32 0.0, %v8204
    %8206 = vdwg.mxu0
    %8207 = vrot.lane.b32.xlu0 %v1693, 64
    %v8208 = vpop.permute.xlu0 %8207
    %v8209 = vsel %vm85, %v8208, 0
    %v8212 = vsel %vm85, %v6949, 0
    %v8215 = vsel %vm85, %v6964, 0
    %v8218 = vsel %vm85, %v6979, 0
    %v8221 = vsel %vm85, %v6994, 0
    %8223 = vmatpush.xpose.msra.mxu0 0.0
    %8224 = vmatpush.xpose.msra.mxu0 0.0
    %8225 = vmatpush.xpose.msra.mxu0 0.0
    %8226 = vmatpush.xpose.msra.mxu0 0.0
    %8227 = vmatpush.xpose.msra.mxu0 0.0
    %8228 = vmatpush.xpose.msra.mxu0 0.0
    %8229 = vmatpush.xpose.msra.mxu0 0.0
    %8230 = vmatpush.xpose.msra.mxu0 0.0
    %8231 = vmatpush.xpose.msra.mxu0 0.0
    %8232 = vmatpush.xpose.msra.mxu0 0.0
    %8233 = vmatpush.xpose.msra.mxu0 0.0
    %8234 = vmatpush.xpose.msra.mxu0 0.0
    %8235 = vmatpush.xpose.msra.mxu0 %v8221
    %8236 = vmatpush.xpose.msra.mxu0 %v8218
    %8237 = vmatpush.xpose.msra.mxu0 %v8215
    %8238 = vmatpush.xpose.msra.mxu0 %v8212
    %8239 = vmatmul.f32.gmra.mxu0 %v8209
    %v8240 = vpop.f32.mrf.mxu0
    %v8241 = vadd.f32 0.0, %v8240
    %8242 = vdwg.mxu0
    %8243 = vrot.lane.b32.xlu0 %v1694, 64
    %v8244 = vpop.permute.xlu0 %8243
    %v8245 = vsel %vm85, %v8244, 0
    %v8248 = vsel %vm85, %v7009, 0
    %v8251 = vsel %vm85, %v7024, 0
    %v8254 = vsel %vm85, %v7039, 0
    %v8257 = vsel %vm85, %v7054, 0
    %8259 = vmatpush.xpose.msra.mxu0 0.0
    %8260 = vmatpush.xpose.msra.mxu0 0.0
    %8261 = vmatpush.xpose.msra.mxu0 0.0
    %8262 = vmatpush.xpose.msra.mxu0 0.0
    %8263 = vmatpush.xpose.msra.mxu0 0.0
    %8264 = vmatpush.xpose.msra.mxu0 0.0
    %8265 = vmatpush.xpose.msra.mxu0 0.0
    %8266 = vmatpush.xpose.msra.mxu0 0.0
    %8267 = vmatpush.xpose.msra.mxu0 0.0
    %8268 = vmatpush.xpose.msra.mxu0 0.0
    %8269 = vmatpush.xpose.msra.mxu0 0.0
    %8270 = vmatpush.xpose.msra.mxu0 0.0
    %8271 = vmatpush.xpose.msra.mxu0 %v8257
    %8272 = vmatpush.xpose.msra.mxu0 %v8254
    %8273 = vmatpush.xpose.msra.mxu0 %v8251
    %8274 = vmatpush.xpose.msra.mxu0 %v8248
    %8275 = vmatmul.f32.gmra.mxu0 %v8245
    %v8276 = vpop.f32.mrf.mxu0
    %v8277 = vadd.f32 0.0, %v8276
    %8278 = vdwg.mxu0
    %8279 = vrot.lane.b32.xlu0 %v1695, 64
    %v8280 = vpop.permute.xlu0 %8279
    %v8281 = vsel %vm85, %v8280, 0
    %v8284 = vsel %vm85, %v7069, 0
    %v8287 = vsel %vm85, %v7084, 0
    %v8290 = vsel %vm85, %v7099, 0
    %v8293 = vsel %vm85, %v7114, 0
    %8295 = vmatpush.xpose.msra.mxu0 0.0
    %8296 = vmatpush.xpose.msra.mxu0 0.0
    %8297 = vmatpush.xpose.msra.mxu0 0.0
    %8298 = vmatpush.xpose.msra.mxu0 0.0
    %8299 = vmatpush.xpose.msra.mxu0 0.0
    %8300 = vmatpush.xpose.msra.mxu0 0.0
    %8301 = vmatpush.xpose.msra.mxu0 0.0
    %8302 = vmatpush.xpose.msra.mxu0 0.0
    %8303 = vmatpush.xpose.msra.mxu0 0.0
    %8304 = vmatpush.xpose.msra.mxu0 0.0
    %8305 = vmatpush.xpose.msra.mxu0 0.0
    %8306 = vmatpush.xpose.msra.mxu0 0.0
    %8307 = vmatpush.xpose.msra.mxu0 %v8293
    %8308 = vmatpush.xpose.msra.mxu0 %v8290
    %8309 = vmatpush.xpose.msra.mxu0 %v8287
    %8310 = vmatpush.xpose.msra.mxu0 %v8284
    %8311 = vmatmul.f32.gmra.mxu0 %v8281
    %v8312 = vpop.f32.mrf.mxu0
    %v8313 = vadd.f32 0.0, %v8312
    %8314 = vdwg.mxu0
    %8315 = vrot.lane.b32.xlu0 %v1696, 64
    %v8316 = vpop.permute.xlu0 %8315
    %v8317 = vsel %vm85, %v8316, 0
    %v8320 = vsel %vm85, %v7129, 0
    %v8323 = vsel %vm85, %v7144, 0
    %v8326 = vsel %vm85, %v7159, 0
    %v8329 = vsel %vm85, %v7174, 0
    %8331 = vmatpush.xpose.msra.mxu0 0.0
    %8332 = vmatpush.xpose.msra.mxu0 0.0
    %8333 = vmatpush.xpose.msra.mxu0 0.0
    %8334 = vmatpush.xpose.msra.mxu0 0.0
    %8335 = vmatpush.xpose.msra.mxu0 0.0
    %8336 = vmatpush.xpose.msra.mxu0 0.0
    %8337 = vmatpush.xpose.msra.mxu0 0.0
    %8338 = vmatpush.xpose.msra.mxu0 0.0
    %8339 = vmatpush.xpose.msra.mxu0 0.0
    %8340 = vmatpush.xpose.msra.mxu0 0.0
    %8341 = vmatpush.xpose.msra.mxu0 0.0
    %8342 = vmatpush.xpose.msra.mxu0 0.0
    %8343 = vmatpush.xpose.msra.mxu0 %v8329
    %8344 = vmatpush.xpose.msra.mxu0 %v8326
    %8345 = vmatpush.xpose.msra.mxu0 %v8323
    %8346 = vmatpush.xpose.msra.mxu0 %v8320
    %8347 = vmatmul.f32.gmra.mxu0 %v8317
    %v8348 = vpop.f32.mrf.mxu0
    %v8349 = vadd.f32 0.0, %v8348
    %8350 = vdwg.mxu0
    %8351 = vrot.lane.b32.xlu0 %v1697, 64
    %v8352 = vpop.permute.xlu0 %8351
    %v8353 = vsel %vm85, %v8352, 0
    %v8356 = vsel %vm85, %v7189, 0
    %v8359 = vsel %vm85, %v7204, 0
    %v8362 = vsel %vm85, %v7219, 0
    %v8365 = vsel %vm85, %v7234, 0
    %8367 = vmatpush.xpose.msra.mxu0 0.0
    %8368 = vmatpush.xpose.msra.mxu0 0.0
    %8369 = vmatpush.xpose.msra.mxu0 0.0
    %8370 = vmatpush.xpose.msra.mxu0 0.0
    %8371 = vmatpush.xpose.msra.mxu0 0.0
    %8372 = vmatpush.xpose.msra.mxu0 0.0
    %8373 = vmatpush.xpose.msra.mxu0 0.0
    %8374 = vmatpush.xpose.msra.mxu0 0.0
    %8375 = vmatpush.xpose.msra.mxu0 0.0
    %8376 = vmatpush.xpose.msra.mxu0 0.0
    %8377 = vmatpush.xpose.msra.mxu0 0.0
    %8378 = vmatpush.xpose.msra.mxu0 0.0
    %8379 = vmatpush.xpose.msra.mxu0 %v8365
    %8380 = vmatpush.xpose.msra.mxu0 %v8362
    %8381 = vmatpush.xpose.msra.mxu0 %v8359
    %8382 = vmatpush.xpose.msra.mxu0 %v8356
    %8383 = vmatmul.f32.gmra.mxu0 %v8353
    %v8384 = vpop.f32.mrf.mxu0
    %v8385 = vadd.f32 0.0, %v8384
    %8386 = vdwg.mxu0
    %v8387 = vld [vmem:[%s7] sm:$0xff]
    %v8388 = vld [vmem:[%s7 + $0x8] sm:$0xff]
    %v8389 = vld [vmem:[%s7 + $0x10] sm:$0xff]
    %v8390 = vld [vmem:[%s7 + $0x18] sm:$0xff]
    %v8391 = vld [vmem:[%s8] sm:$0xff]
    %v8392 = vld [vmem:[%s8 + $0x8] sm:$0xff]
    %v8393 = vld [vmem:[%s8 + $0x10] sm:$0xff]
    %v8394 = vld [vmem:[%s8 + $0x18] sm:$0xff]
    %8396 = vset.pattern.permute.xlu0 0
    %8397 = vperm.xlu0 %8396, %v8391
    %v8398 = vpop.permute.xlu0 %8397
    %8401 = vset.pattern.permute.xlu0 0
    %8402 = vperm.xlu0 %8401, %v8392
    %v8403 = vpop.permute.xlu0 %8402
    %8406 = vset.pattern.permute.xlu0 0
    %8407 = vperm.xlu0 %8406, %v8393
    %v8408 = vpop.permute.xlu0 %8407
    %8411 = vset.pattern.permute.xlu0 0
    %8412 = vperm.xlu0 %8411, %v8394
    %v8413 = vpop.permute.xlu0 %8412
    %v8416 = vsel %vm85, %v8387, 0
    %v8419 = vsel %vm85, %v8388, 0
    %v8422 = vsel %vm85, %v8389, 0
    %v8425 = vsel %vm85, %v8390, 0
    %v8428 = vsel %vm85, %v7269, 0
    %v8431 = vsel %vm85, %v7305, 0
    %v8434 = vsel %vm85, %v7341, 0
    %v8437 = vsel %vm85, %v7377, 0
    %v8440 = vsel %vm85, %v7413, 0
    %v8443 = vsel %vm85, %v7449, 0
    %v8446 = vsel %vm85, %v7485, 0
    %v8449 = vsel %vm85, %v7521, 0
    %8451 = vmatpush.xpose.msra.mxu0 0.0
    %8452 = vmatpush.xpose.msra.mxu0 0.0
    %8453 = vmatpush.xpose.msra.mxu0 0.0
    %8454 = vmatpush.xpose.msra.mxu0 0.0
    %8455 = vmatpush.xpose.msra.mxu0 0.0
    %8456 = vmatpush.xpose.msra.mxu0 0.0
    %8457 = vmatpush.xpose.msra.mxu0 0.0
    %8458 = vmatpush.xpose.msra.mxu0 0.0
    %8459 = vmatpush.xpose.msra.mxu0 %v8449
    %8460 = vmatpush.xpose.msra.mxu0 %v8446
    %8461 = vmatpush.xpose.msra.mxu0 %v8443
    %8462 = vmatpush.xpose.msra.mxu0 %v8440
    %8463 = vmatpush.xpose.msra.mxu0 %v8437
    %8464 = vmatpush.xpose.msra.mxu0 %v8434
    %8465 = vmatpush.xpose.msra.mxu0 %v8431
    %8466 = vmatpush.xpose.msra.mxu0 %v8428
    %8467 = vmatmul.f32.gmra.mxu0 %v8416
    %v8468 = vpop.f32.mrf.mxu0
    %v8469 = vadd.f32 %v8398, %v8468
    %8470 = vmatmul.f32.gmra.mxu0 %v8419
    %v8471 = vpop.f32.mrf.mxu0
    %v8472 = vadd.f32 %v8403, %v8471
    %8473 = vmatmul.f32.gmra.mxu0 %v8422
    %v8474 = vpop.f32.mrf.mxu0
    %v8475 = vadd.f32 %v8408, %v8474
    %8476 = vmatmul.f32.gmra.mxu0 %v8425
    %v8477 = vpop.f32.mrf.mxu0
    %v8478 = vadd.f32 %v8413, %v8477
    %8479 = vdwg.mxu0
    %v8481 = vsel %vm85, %v7557, 0
    %v8484 = vsel %vm85, %v7593, 0
    %v8487 = vsel %vm85, %v7629, 0
    %v8490 = vsel %vm85, %v7665, 0
    %v8493 = vsel %vm85, %v7701, 0
    %v8496 = vsel %vm85, %v7737, 0
    %v8499 = vsel %vm85, %v7773, 0
    %v8502 = vsel %vm85, %v7809, 0
    %8504 = vmatpush.xpose.msra.mxu0 0.0
    %8505 = vmatpush.xpose.msra.mxu0 0.0
    %8506 = vmatpush.xpose.msra.mxu0 0.0
    %8507 = vmatpush.xpose.msra.mxu0 0.0
    %8508 = vmatpush.xpose.msra.mxu0 0.0
    %8509 = vmatpush.xpose.msra.mxu0 0.0
    %8510 = vmatpush.xpose.msra.mxu0 0.0
    %8511 = vmatpush.xpose.msra.mxu0 0.0
    %8512 = vmatpush.xpose.msra.mxu0 %v8502
    %8513 = vmatpush.xpose.msra.mxu0 %v8499
    %8514 = vmatpush.xpose.msra.mxu0 %v8496
    %8515 = vmatpush.xpose.msra.mxu0 %v8493
    %8516 = vmatpush.xpose.msra.mxu0 %v8490
    %8517 = vmatpush.xpose.msra.mxu0 %v8487
    %8518 = vmatpush.xpose.msra.mxu0 %v8484
    %8519 = vmatpush.xpose.msra.mxu0 %v8481
    %8520 = vmatmul.f32.gmra.mxu0 %v8416
    %v8521 = vpop.f32.mrf.mxu0
    %v8522 = vadd.f32 %v8398, %v8521
    %8523 = vmatmul.f32.gmra.mxu0 %v8419
    %v8524 = vpop.f32.mrf.mxu0
    %v8525 = vadd.f32 %v8403, %v8524
    %8526 = vmatmul.f32.gmra.mxu0 %v8422
    %v8527 = vpop.f32.mrf.mxu0
    %v8528 = vadd.f32 %v8408, %v8527
    %8529 = vmatmul.f32.gmra.mxu0 %v8425
    %v8530 = vpop.f32.mrf.mxu0
    %v8531 = vadd.f32 %v8413, %v8530
    %8532 = vdwg.mxu0
    %v8534 = vsel %vm85, %v7845, 0
    %v8537 = vsel %vm85, %v7881, 0
    %v8540 = vsel %vm85, %v7917, 0
    %v8543 = vsel %vm85, %v7953, 0
    %v8546 = vsel %vm85, %v7989, 0
    %v8549 = vsel %vm85, %v8025, 0
    %v8552 = vsel %vm85, %v8061, 0
    %v8555 = vsel %vm85, %v8097, 0
    %8557 = vmatpush.xpose.msra.mxu0 0.0
    %8558 = vmatpush.xpose.msra.mxu0 0.0
    %8559 = vmatpush.xpose.msra.mxu0 0.0
    %8560 = vmatpush.xpose.msra.mxu0 0.0
    %8561 = vmatpush.xpose.msra.mxu0 0.0
    %8562 = vmatpush.xpose.msra.mxu0 0.0
    %8563 = vmatpush.xpose.msra.mxu0 0.0
    %8564 = vmatpush.xpose.msra.mxu0 0.0
    %8565 = vmatpush.xpose.msra.mxu0 %v8555
    %8566 = vmatpush.xpose.msra.mxu0 %v8552
    %8567 = vmatpush.xpose.msra.mxu0 %v8549
    %8568 = vmatpush.xpose.msra.mxu0 %v8546
    %8569 = vmatpush.xpose.msra.mxu0 %v8543
    %8570 = vmatpush.xpose.msra.mxu0 %v8540
    %8571 = vmatpush.xpose.msra.mxu0 %v8537
    %8572 = vmatpush.xpose.msra.mxu0 %v8534
    %8573 = vmatmul.f32.gmra.mxu0 %v8416
    %v8574 = vpop.f32.mrf.mxu0
    %v8575 = vadd.f32 %v8398, %v8574
    %8576 = vmatmul.f32.gmra.mxu0 %v8419
    %v8577 = vpop.f32.mrf.mxu0
    %v8578 = vadd.f32 %v8403, %v8577
    %8579 = vmatmul.f32.gmra.mxu0 %v8422
    %v8580 = vpop.f32.mrf.mxu0
    %v8581 = vadd.f32 %v8408, %v8580
    %8582 = vmatmul.f32.gmra.mxu0 %v8425
    %v8583 = vpop.f32.mrf.mxu0
    %v8584 = vadd.f32 %v8413, %v8583
    %8585 = vdwg.mxu0
    %v8587 = vsel %vm85, %v8133, 0
    %v8590 = vsel %vm85, %v8169, 0
    %v8593 = vsel %vm85, %v8205, 0
    %v8596 = vsel %vm85, %v8241, 0
    %v8599 = vsel %vm85, %v8277, 0
    %v8602 = vsel %vm85, %v8313, 0
    %v8605 = vsel %vm85, %v8349, 0
    %v8608 = vsel %vm85, %v8385, 0
    %8610 = vmatpush.xpose.msra.mxu0 0.0
    %8611 = vmatpush.xpose.msra.mxu0 0.0
    %8612 = vmatpush.xpose.msra.mxu0 0.0
    %8613 = vmatpush.xpose.msra.mxu0 0.0
    %8614 = vmatpush.xpose.msra.mxu0 0.0
    %8615 = vmatpush.xpose.msra.mxu0 0.0
    %8616 = vmatpush.xpose.msra.mxu0 0.0
    %8617 = vmatpush.xpose.msra.mxu0 0.0
    %8618 = vmatpush.xpose.msra.mxu0 %v8608
    %8619 = vmatpush.xpose.msra.mxu0 %v8605
    %8620 = vmatpush.xpose.msra.mxu0 %v8602
    %8621 = vmatpush.xpose.msra.mxu0 %v8599
    %8622 = vmatpush.xpose.msra.mxu0 %v8596
    %8623 = vmatpush.xpose.msra.mxu0 %v8593
    %8624 = vmatpush.xpose.msra.mxu0 %v8590
    %8625 = vmatpush.xpose.msra.mxu0 %v8587
    %8626 = vmatmul.f32.gmra.mxu0 %v8416
    %v8627 = vpop.f32.mrf.mxu0
    %v8628 = vadd.f32 %v8398, %v8627
    %8629 = vmatmul.f32.gmra.mxu0 %v8419
    %v8630 = vpop.f32.mrf.mxu0
    %v8631 = vadd.f32 %v8403, %v8630
    %8632 = vmatmul.f32.gmra.mxu0 %v8422
    %v8633 = vpop.f32.mrf.mxu0
    %v8634 = vadd.f32 %v8408, %v8633
    %8635 = vmatmul.f32.gmra.mxu0 %v8425
    %v8636 = vpop.f32.mrf.mxu0
    %v8637 = vadd.f32 %v8413, %v8636
    %8638 = vdwg.mxu0
    %vm8639 = vcmask 523264
    %8640 = vst.msk [vmem:[#allocation2] sm:$0xff] %vm8639, %v8469
    %8641 = vst.msk [vmem:[#allocation2 + $0x8] sm:$0xff] %vm8639, %v8472
    %8642 = vst.msk [vmem:[#allocation2 + $0x10] sm:$0xff] %vm8639, %v8475
    %8643 = vst.msk [vmem:[#allocation2 + $0x18] sm:$0xff] %vm8639, %v8478
    %8644 = vst.msk [vmem:[#allocation2 + $0x20] sm:$0xff] %vm8639, %v8522
    %8645 = vst.msk [vmem:[#allocation2 + $0x28] sm:$0xff] %vm8639, %v8525
    %8646 = vst.msk [vmem:[#allocation2 + $0x30] sm:$0xff] %vm8639, %v8528
    %8647 = vst.msk [vmem:[#allocation2 + $0x38] sm:$0xff] %vm8639, %v8531
    %8648 = vst.msk [vmem:[#allocation2 + $0x40] sm:$0xff] %vm8639, %v8575
    %8649 = vst.msk [vmem:[#allocation2 + $0x48] sm:$0xff] %vm8639, %v8578
    %8650 = vst.msk [vmem:[#allocation2 + $0x50] sm:$0xff] %vm8639, %v8581
    %8651 = vst.msk [vmem:[#allocation2 + $0x58] sm:$0xff] %vm8639, %v8584
    %8652 = vst.msk [vmem:[#allocation2 + $0x60] sm:$0xff] %vm8639, %v8628
    %8653 = vst.msk [vmem:[#allocation2 + $0x68] sm:$0xff] %vm8639, %v8631
    %8654 = vst.msk [vmem:[#allocation2 + $0x70] sm:$0xff] %vm8639, %v8634
    %8655 = vst.msk [vmem:[#allocation2 + $0x78] sm:$0xff] %vm8639, %v8637
    // Predicated region
    $region38: #{tpu_custom_call.1} parent=1 // pred_check
      _
    $region39: #{tpu_custom_call.1} parent=1 // pred_check_branch
      %8657 = sbr.rel (0) target = $region41
    $region40: #{tpu_custom_call.1} parent=1 // pred_region
      %8659 = vsyncadd [#allocation3], 0
      %s8660 = sshll.u32 [#allocation2], 4
      %s8661 = int_to_ptr.vmem [resolvable:$true] %s8660
      %s8662 = sshll.u32 %s9, 4
      %s8663 = int_to_ptr.hbm [resolvable:$true] %s8662
      %8668 = dma.vmem_to_hbm [thread:$0]  %s8661, 2048, %s8663, [#allocation3], 128, 128, 8
    $region41: #{tpu_custom_call.1} parent=1 // pred_fallthru
      _
    // Predicated region
    $region42: #{tpu_custom_call.1} parent=1 // pred_check
      _
    $region43: #{tpu_custom_call.1} parent=1 // pred_check_branch
      %8670 = sbr.rel (0) target = $region45
    $region44: #{tpu_custom_call.1} parent=1 // pred_region
      %8672 = dma.done [#allocation3], 2048
    $region45: #{tpu_custom_call.1} parent=1 // pred_fallthru
      _
    %8673 = vsyncpa [#allocation3], 1

</llo_original>
